<compile_context>
chip_gen: v7x
topology: tpu7x:2x2x1
jax: 0.10.0
libtpu: 0.0.40
codegen_flags: <defaults>
</compile_context>

<pallas_src>
import math

import jax
import jax.numpy as jnp
from jax.experimental import pallas as pl
from jax.experimental.pallas import tpu as pltpu

NUM_HEADS = 4
DIM_HEAD = 32
INNER = NUM_HEADS * DIM_HEAD          # 128
ATTN_SCALE = DIM_HEAD ** (-0.5)
_SQRT2 = math.sqrt(2.0)


def _erf(x):
    # Abramowitz & Stegun 7.1.26 polynomial erf (max abs err ~1.5e-7); only uses
    # ops that lower on Mosaic.  Matches torch's exact (erf-based) GELU in f32.
    a1, a2, a3, a4, a5 = 0.254829592, -0.284496736, 1.421413741, -1.453152027, 1.061405429
    p = 0.3275911
    sign = jnp.where(x >= 0.0, 1.0, -1.0)
    ax = jnp.abs(x)
    t = 1.0 / (1.0 + p * ax)
    poly = ((((a5 * t + a4) * t + a3) * t + a2) * t + a1) * t
    return sign * (1.0 - poly * jnp.exp(-ax * ax))


def _gelu(x):
    # exact GELU: 0.5 * x * (1 + erf(x / sqrt(2)))  (torch F.gelu default)
    return 0.5 * x * (1.0 + _erf(x / _SQRT2))


def pos_extraction_kernel(x_ref, w1_ref, b1_ref, w2_ref, b2_ref,
                          wqkv_ref, wout_ref, bout_ref, wffn_ref, bffn_ref,
                          o_ref):
    bt = x_ref.shape[0]
    w1 = w1_ref[...]; b1 = b1_ref[...]
    w2 = w2_ref[...]; b2 = b2_ref[...]
    wqkv = wqkv_ref[...]
    wout = wout_ref[...]; bout = bout_ref[...]
    wffn = wffn_ref[...]; bffn = bffn_ref[...]

    for b in range(bt):                                     # static unroll (bt is 1 or 2)
        x = x_ref[b]                                        # [D, G] channel-major

        # ---- FCBNReLU1DRes: gelu(BN2(Conv2(gelu(BN1(Conv1(x))))) + x) ----
        h = jnp.dot(w1, x, preferred_element_type=jnp.float32) + b1
        h = _gelu(h)
        h = jnp.dot(w2, h, preferred_element_type=jnp.float32) + b2
        y = _gelu(h + x)                                    # [D, G]

        # ---- Attention (heads=4, dim_head=32), channel-major ----
        qkv = jnp.dot(wqkv, y, preferred_element_type=jnp.float32)   # [3*INNER, G]
        q_cm = qkv[0:INNER, :]                              # [INNER, G] (sublane slice)
        k_cm = qkv[INNER:2 * INNER, :]
        v_cm = qkv[2 * INNER:3 * INNER, :]
        k_pm = k_cm.T                                       # [G, INNER]  (single transpose)

        head_outs = []
        for hd in range(NUM_HEADS):
            lo = hd * DIM_HEAD
            q_h = q_cm[lo:lo + DIM_HEAD, :]                 # [32, G] free sublane slice
            v_h = v_cm[lo:lo + DIM_HEAD, :]                 # [32, G] free sublane slice
            k_h = k_pm[:, lo:lo + DIM_HEAD]                 # [G, 32]
            # transposed scores: s[j, i] = <k_j, q_i> * scale
            s = jnp.dot(k_h, q_h, preferred_element_type=jnp.float32) * ATTN_SCALE
            s = s - jnp.max(s, axis=0, keepdims=True)       # softmax over keys (axis 0)
            e = jnp.exp(s)
            denom = jnp.sum(e, axis=0, keepdims=True)       # [1, G]
            o_h = jnp.dot(v_h, e, preferred_element_type=jnp.float32)   # [32, G]
            head_outs.append(o_h * pl.reciprocal(denom, approx=True))
        out_cm = jnp.concatenate(head_outs, axis=0)         # [INNER, G]
        # single fused K=128 head-output projection (to_out conv, BN folded)
        att = jnp.dot(wout, out_cm, preferred_element_type=jnp.float32) + bout   # [D, G]

        # ---- TransformerBlock residuals + ffn ----
        att = _gelu(att + y)
        ffn = jnp.dot(wffn, att, preferred_element_type=jnp.float32) + bffn
        o_ref[b] = _gelu(att + ffn)                         # lane-dense store (last dim = G)


def _tensorcores_per_device():
    try:
        kind = str(jax.devices()[0].device_kind).lower()
    except Exception:
        return 1
    # dual-TensorCore generations share one JAX device between 2 TensorCores
    return 2 if any(tag in kind for tag in ("v4", "v5p", "v7")) else 1


def _pick_batch_tile(B, D, G, n_tc):
    # Fold batches into as few grid steps as possible (amortize per-step overhead)
    # but keep >= n_tc grid steps so both TensorCores get work on dual-TC chips,
    # and keep the per-step activation footprint modest.
    steps = max(1, min(B, n_tc))
    bt = max(1, B // steps)
    bytes_per_batch = 4 * D * G
    cap = max(1, (4 << 20) // max(1, 4 * bytes_per_batch))   # in+out, double-buffered
    bt = min(bt, cap)
    while B % bt != 0:
        bt -= 1
    return max(bt, 1)


def pos_extraction(x, params):
    """x: [B, D, G] (PyTorch [b, d, g]).  Returns [B, D, G]."""
    B, D, G = x.shape
    assert G % 128 == 0, "G (points) must be a multiple of 128 for lane-dense tiles"
    assert D % 8 == 0, "D (channels) must be a multiple of 8"
    w1, b1, w2, b2, wqkv, wout, bout, wffn, bffn = params
    bt = _pick_batch_tile(B, D, G, _tensorcores_per_device())

    def const_spec(arr):
        nd = arr.ndim
        return pl.BlockSpec(arr.shape, lambda b, _nd=nd: (0,) * _nd)

    return pl.pallas_call(
        pos_extraction_kernel,
        out_shape=jax.ShapeDtypeStruct((B, D, G), jnp.float32),
        grid=(B // bt,),
        in_specs=[
            pl.BlockSpec((bt, D, G), lambda b: (b, 0, 0)),
            const_spec(w1), const_spec(b1),
            const_spec(w2), const_spec(b2),
            const_spec(wqkv), const_spec(wout), const_spec(bout),
            const_spec(wffn), const_spec(bffn),
        ],
        out_specs=pl.BlockSpec((bt, D, G), lambda b: (b, 0, 0)),
        compiler_params=pltpu.CompilerParams(dimension_semantics=("parallel",)),
    )(x, w1, b1, w2, b2, wqkv, wout, bout, wffn, bffn)


def init_params(key, D):
    """Deterministic synthetic parameters; BN folded into adjacent conv/linear.

    All weights are stored channel-major ([out_channels, in_channels]) so the
    kernel applies them as W @ X without any transposes; biases are [D, 1]
    columns that broadcast along the lane (G) axis.
    """
    ks = list(jax.random.split(key, 10))

    def conv_w(k, out_c, in_c):
        bound = 1.0 / math.sqrt(in_c)
        return jax.random.uniform(k, (out_c, in_c), jnp.float32, -bound, bound)

    def bn_fold(k, c, eps=1e-5):
        kg, kb, km, kv = jax.random.split(k, 4)
        gamma = 1.0 + 0.1 * jax.random.normal(kg, (c,), jnp.float32)
        beta = 0.1 * jax.random.normal(kb, (c,), jnp.float32)
        mean = 0.1 * jax.random.normal(km, (c,), jnp.float32)
        var = 1.0 + 0.1 * jax.random.uniform(kv, (c,), jnp.float32)
        scale = gamma / jnp.sqrt(var + eps)
        shift = beta - mean * scale
        return scale, shift

    # FCBNReLU1DRes: conv1(no bias)+BN1, conv2(no bias)+BN2
    W1 = conv_w(ks[0], D, D); s1, t1 = bn_fold(ks[1], D)
    W2 = conv_w(ks[2], D, D); s2, t2 = bn_fold(ks[3], D)
    w1 = s1[:, None] * W1; b1 = t1[:, None]
    w2 = s2[:, None] * W2; b2 = t2[:, None]

    # Attention: to_qkv Linear(D, 3*INNER, bias=False); to_out = Conv1d(INNER, D, 1) + BN
    Wqkv = conv_w(ks[4], 3 * INNER, D)                      # nn.Linear weight [out, in]
    Wout = conv_w(ks[5], D, INNER)
    bconv = jax.random.uniform(ks[6], (D,), jnp.float32,
                               -1.0 / math.sqrt(INNER), 1.0 / math.sqrt(INNER))
    so, to = bn_fold(ks[7], D)
    wout = so[:, None] * Wout                               # [D, INNER]
    bout = (so * bconv + to)[:, None]                       # [D, 1]

    # ffn: Conv1d(D, D, 1, bias=False) + BN (+ Dropout = identity in eval)
    Wffn = conv_w(ks[8], D, D); sf, tf = bn_fold(ks[9], D)
    wffn = sf[:, None] * Wffn; bffn = tf[:, None]

    return (w1, b1, w2, b2, Wqkv, wout, bout, wffn, bffn)


def reference(x, params):
    """Pure-JAX reference (point-major, mirrors the PyTorch module)."""
    w1, b1, w2, b2, wqkv, wout, bout, wffn, bffn = params
    B, D, G = x.shape
    xt = jnp.transpose(x, (0, 2, 1))                        # [B, G, D]
    h = _gelu(xt @ w1.T + b1[:, 0])
    h = h @ w2.T + b2[:, 0]
    y = _gelu(h + xt)
    qkv = y @ wqkv.T                                        # [B, G, 3*INNER]
    q, k, v = jnp.split(qkv, 3, axis=-1)

    def heads(t):
        return t.reshape(B, G, NUM_HEADS, DIM_HEAD).transpose(0, 2, 1, 3)

    q, k, v = heads(q), heads(k), heads(v)
    dots = jnp.einsum('bhid,bhjd->bhij', q, k) * ATTN_SCALE
    attn = jax.nn.softmax(dots, axis=-1)
    out = jnp.einsum('bhij,bhjd->bhid', attn, v)
    out = out.transpose(0, 2, 1, 3).reshape(B, G, INNER)
    att = out @ wout.T + bout[:, 0]
    att = _gelu(att + y)
    ffn = att @ wffn.T + bffn[:, 0]
    res = _gelu(att + ffn)
    return jnp.transpose(res, (0, 2, 1))


if __name__ == "__main__":
    key = jax.random.PRNGKey(0)
    kx, kp = jax.random.split(key)
    B, D, G = 2, 64, 128                                    # [b, d, g]
    x = jax.random.normal(kx, (B, D, G), jnp.float32)
    params = init_params(kp, D)

    out = jax.block_until_ready(pos_extraction(x, params))
    assert out.shape == (B, D, G)

    ref = reference(x, params)
    err = float(jnp.max(jnp.abs(out - ref)))
    # 2e-3 budget: EUP approx reciprocal in the softmax normalization plus f32
    # summation-order differences; the erf-poly GELU is identical on both sides.
    assert err < 2e-3, f"max abs err {err}"
    print("KERNEL_OK")
</pallas_src>

<mosaic_0001>
module attributes {stable_mosaic.version = 11 : i64} {
  func.func @pos_extraction_kernel(%arg0: i32, %arg1: memref<2x64x128xf32, #tpu.memory_space<vmem>>, %arg2: memref<64x64xf32, #tpu.memory_space<vmem>>, %arg3: memref<64x1xf32, #tpu.memory_space<vmem>>, %arg4: memref<64x64xf32, #tpu.memory_space<vmem>>, %arg5: memref<64x1xf32, #tpu.memory_space<vmem>>, %arg6: memref<384x64xf32, #tpu.memory_space<vmem>>, %arg7: memref<64x128xf32, #tpu.memory_space<vmem>>, %arg8: memref<64x1xf32, #tpu.memory_space<vmem>>, %arg9: memref<64x64xf32, #tpu.memory_space<vmem>>, %arg10: memref<64x1xf32, #tpu.memory_space<vmem>>, %arg11: memref<2x64x128xf32, #tpu.memory_space<vmem>>) attributes {dimension_semantics = [#tpu.dimension_semantics<parallel>], iteration_bounds = array<i64: 1>, scalar_prefetch = 0 : i64, scratch_operands = 0 : i64, tpu.core_type = #tpu.core_type<tc>, window_params = [{transform_indices = @transform_0, window_bounds = array<i64: 2, 64, 128>}, {pipeline_mode = #tpu.pipeline_mode<synchronous>, transform_indices = @transform_1, window_bounds = array<i64: 64, 64>}, {pipeline_mode = #tpu.pipeline_mode<synchronous>, transform_indices = @transform_2, window_bounds = array<i64: 64, 1>}, {pipeline_mode = #tpu.pipeline_mode<synchronous>, transform_indices = @transform_3, window_bounds = array<i64: 64, 64>}, {pipeline_mode = #tpu.pipeline_mode<synchronous>, transform_indices = @transform_4, window_bounds = array<i64: 64, 1>}, {pipeline_mode = #tpu.pipeline_mode<synchronous>, transform_indices = @transform_5, window_bounds = array<i64: 384, 64>}, {pipeline_mode = #tpu.pipeline_mode<synchronous>, transform_indices = @transform_6, window_bounds = array<i64: 64, 128>}, {pipeline_mode = #tpu.pipeline_mode<synchronous>, transform_indices = @transform_7, window_bounds = array<i64: 64, 1>}, {pipeline_mode = #tpu.pipeline_mode<synchronous>, transform_indices = @transform_8, window_bounds = array<i64: 64, 64>}, {pipeline_mode = #tpu.pipeline_mode<synchronous>, transform_indices = @transform_9, window_bounds = array<i64: 64, 1>}, {transform_indices = @transform_10, window_bounds = array<i64: 2, 64, 128>}]} {
    %c0 = arith.constant 0 : index
    %c0_0 = arith.constant 0 : index
    %0 = vector.load %arg2[%c0, %c0_0] : memref<64x64xf32, #tpu.memory_space<vmem>>, vector<64x64xf32>
    %c0_1 = arith.constant 0 : index
    %c0_2 = arith.constant 0 : index
    %1 = vector.load %arg3[%c0_1, %c0_2] : memref<64x1xf32, #tpu.memory_space<vmem>>, vector<64x1xf32>
    %c0_3 = arith.constant 0 : index
    %c0_4 = arith.constant 0 : index
    %2 = vector.load %arg4[%c0_3, %c0_4] : memref<64x64xf32, #tpu.memory_space<vmem>>, vector<64x64xf32>
    %c0_5 = arith.constant 0 : index
    %c0_6 = arith.constant 0 : index
    %3 = vector.load %arg5[%c0_5, %c0_6] : memref<64x1xf32, #tpu.memory_space<vmem>>, vector<64x1xf32>
    %c0_7 = arith.constant 0 : index
    %c0_8 = arith.constant 0 : index
    %4 = vector.load %arg6[%c0_7, %c0_8] : memref<384x64xf32, #tpu.memory_space<vmem>>, vector<384x64xf32>
    %c0_9 = arith.constant 0 : index
    %c0_10 = arith.constant 0 : index
    %5 = vector.load %arg7[%c0_9, %c0_10] : memref<64x128xf32, #tpu.memory_space<vmem>>, vector<64x128xf32>
    %c0_11 = arith.constant 0 : index
    %c0_12 = arith.constant 0 : index
    %6 = vector.load %arg8[%c0_11, %c0_12] : memref<64x1xf32, #tpu.memory_space<vmem>>, vector<64x1xf32>
    %c0_13 = arith.constant 0 : index
    %c0_14 = arith.constant 0 : index
    %7 = vector.load %arg9[%c0_13, %c0_14] : memref<64x64xf32, #tpu.memory_space<vmem>>, vector<64x64xf32>
    %c0_15 = arith.constant 0 : index
    %c0_16 = arith.constant 0 : index
    %8 = vector.load %arg10[%c0_15, %c0_16] : memref<64x1xf32, #tpu.memory_space<vmem>>, vector<64x1xf32>
    %c0_17 = arith.constant 0 : index
    %c0_18 = arith.constant 0 : index
    %c0_19 = arith.constant 0 : index
    %9 = vector.load %arg1[%c0_17, %c0_18, %c0_19] : memref<2x64x128xf32, #tpu.memory_space<vmem>>, vector<1x64x128xf32>
    %10 = vector.shape_cast %9 : vector<1x64x128xf32> to vector<64x128xf32>
    %cst = arith.constant dense<0.000000e+00> : vector<64x128xf32>
    %11 = tpu.matmul %0, %10, %cst {dimension_numbers = #tpu.dot_dimension_numbers<[1], [0], [0], [1], [0, 0, 1, 1], [], []>} : vector<64x64xf32>, vector<64x128xf32>, vector<64x128xf32> -> vector<64x128xf32>
    %12 = vector.broadcast %1 : vector<64x1xf32> to vector<64x128xf32>
    %13 = arith.addf %11, %12 : vector<64x128xf32>
    %cst_20 = arith.constant 5.000000e-01 : f32
    %14 = vector.broadcast %cst_20 : f32 to vector<64x128xf32>
    %15 = arith.mulf %14, %13 : vector<64x128xf32>
    %cst_21 = arith.constant 1.41421354 : f32
    %16 = vector.broadcast %cst_21 : f32 to vector<64x128xf32>
    %17 = arith.divf %13, %16 : vector<64x128xf32>
    %cst_22 = arith.constant 0.000000e+00 : f32
    %18 = vector.broadcast %cst_22 : f32 to vector<64x128xf32>
    %19 = arith.cmpf oge, %17, %18 : vector<64x128xf32>
    %cst_23 = arith.constant 1.000000e+00 : f32
    %cst_24 = arith.constant -1.000000e+00 : f32
    %20 = vector.broadcast %cst_23 : f32 to vector<64x128xf32>
    %21 = vector.broadcast %cst_24 : f32 to vector<64x128xf32>
    %22 = arith.select %19, %20, %21 : vector<64x128xi1>, vector<64x128xf32>
    %23 = math.absf %17 : vector<64x128xf32>
    %cst_25 = arith.constant 0.327591091 : f32
    %24 = vector.broadcast %cst_25 : f32 to vector<64x128xf32>
    %25 = arith.mulf %24, %23 : vector<64x128xf32>
    %cst_26 = arith.constant 1.000000e+00 : f32
    %26 = vector.broadcast %cst_26 : f32 to vector<64x128xf32>
    %27 = arith.addf %26, %25 : vector<64x128xf32>
    %cst_27 = arith.constant 1.000000e+00 : f32
    %28 = vector.broadcast %cst_27 : f32 to vector<64x128xf32>
    %29 = arith.divf %28, %27 : vector<64x128xf32>
    %cst_28 = arith.constant 1.06140542 : f32
    %30 = vector.broadcast %cst_28 : f32 to vector<64x128xf32>
    %31 = arith.mulf %30, %29 : vector<64x128xf32>
    %cst_29 = arith.constant -1.45315206 : f32
    %32 = vector.broadcast %cst_29 : f32 to vector<64x128xf32>
    %33 = arith.addf %31, %32 : vector<64x128xf32>
    %34 = arith.mulf %33, %29 : vector<64x128xf32>
    %cst_30 = arith.constant 1.42141378 : f32
    %35 = vector.broadcast %cst_30 : f32 to vector<64x128xf32>
    %36 = arith.addf %34, %35 : vector<64x128xf32>
    %37 = arith.mulf %36, %29 : vector<64x128xf32>
    %cst_31 = arith.constant -0.284496725 : f32
    %38 = vector.broadcast %cst_31 : f32 to vector<64x128xf32>
    %39 = arith.addf %37, %38 : vector<64x128xf32>
    %40 = arith.mulf %39, %29 : vector<64x128xf32>
    %cst_32 = arith.constant 0.254829586 : f32
    %41 = vector.broadcast %cst_32 : f32 to vector<64x128xf32>
    %42 = arith.addf %40, %41 : vector<64x128xf32>
    %43 = arith.mulf %42, %29 : vector<64x128xf32>
    %cst_33 = arith.constant 0.000000e+00 : f32
    %44 = vector.broadcast %cst_33 : f32 to vector<64x128xf32>
    %45 = arith.subf %44, %23 : vector<64x128xf32>
    %46 = arith.mulf %45, %23 : vector<64x128xf32>
    %47 = math.exp %46 : vector<64x128xf32>
    %48 = arith.mulf %43, %47 : vector<64x128xf32>
    %cst_34 = arith.constant 1.000000e+00 : f32
    %49 = vector.broadcast %cst_34 : f32 to vector<64x128xf32>
    %50 = arith.subf %49, %48 : vector<64x128xf32>
    %51 = arith.mulf %22, %50 : vector<64x128xf32>
    %cst_35 = arith.constant 1.000000e+00 : f32
    %52 = vector.broadcast %cst_35 : f32 to vector<64x128xf32>
    %53 = arith.addf %52, %51 : vector<64x128xf32>
    %54 = arith.mulf %15, %53 : vector<64x128xf32>
    %cst_36 = arith.constant dense<0.000000e+00> : vector<64x128xf32>
    %55 = tpu.matmul %2, %54, %cst_36 {dimension_numbers = #tpu.dot_dimension_numbers<[1], [0], [0], [1], [0, 0, 1, 1], [], []>} : vector<64x64xf32>, vector<64x128xf32>, vector<64x128xf32> -> vector<64x128xf32>
    %56 = vector.broadcast %3 : vector<64x1xf32> to vector<64x128xf32>
    %57 = arith.addf %55, %56 : vector<64x128xf32>
    %58 = arith.addf %57, %10 : vector<64x128xf32>
    %cst_37 = arith.constant 5.000000e-01 : f32
    %59 = vector.broadcast %cst_37 : f32 to vector<64x128xf32>
    %60 = arith.mulf %59, %58 : vector<64x128xf32>
    %cst_38 = arith.constant 1.41421354 : f32
    %61 = vector.broadcast %cst_38 : f32 to vector<64x128xf32>
    %62 = arith.divf %58, %61 : vector<64x128xf32>
    %cst_39 = arith.constant 0.000000e+00 : f32
    %63 = vector.broadcast %cst_39 : f32 to vector<64x128xf32>
    %64 = arith.cmpf oge, %62, %63 : vector<64x128xf32>
    %cst_40 = arith.constant 1.000000e+00 : f32
    %cst_41 = arith.constant -1.000000e+00 : f32
    %65 = vector.broadcast %cst_40 : f32 to vector<64x128xf32>
    %66 = vector.broadcast %cst_41 : f32 to vector<64x128xf32>
    %67 = arith.select %64, %65, %66 : vector<64x128xi1>, vector<64x128xf32>
    %68 = math.absf %62 : vector<64x128xf32>
    %cst_42 = arith.constant 0.327591091 : f32
    %69 = vector.broadcast %cst_42 : f32 to vector<64x128xf32>
    %70 = arith.mulf %69, %68 : vector<64x128xf32>
    %cst_43 = arith.constant 1.000000e+00 : f32
    %71 = vector.broadcast %cst_43 : f32 to vector<64x128xf32>
    %72 = arith.addf %71, %70 : vector<64x128xf32>
    %cst_44 = arith.constant 1.000000e+00 : f32
    %73 = vector.broadcast %cst_44 : f32 to vector<64x128xf32>
    %74 = arith.divf %73, %72 : vector<64x128xf32>
    %cst_45 = arith.constant 1.06140542 : f32
    %75 = vector.broadcast %cst_45 : f32 to vector<64x128xf32>
    %76 = arith.mulf %75, %74 : vector<64x128xf32>
    %cst_46 = arith.constant -1.45315206 : f32
    %77 = vector.broadcast %cst_46 : f32 to vector<64x128xf32>
    %78 = arith.addf %76, %77 : vector<64x128xf32>
    %79 = arith.mulf %78, %74 : vector<64x128xf32>
    %cst_47 = arith.constant 1.42141378 : f32
    %80 = vector.broadcast %cst_47 : f32 to vector<64x128xf32>
    %81 = arith.addf %79, %80 : vector<64x128xf32>
    %82 = arith.mulf %81, %74 : vector<64x128xf32>
    %cst_48 = arith.constant -0.284496725 : f32
    %83 = vector.broadcast %cst_48 : f32 to vector<64x128xf32>
    %84 = arith.addf %82, %83 : vector<64x128xf32>
    %85 = arith.mulf %84, %74 : vector<64x128xf32>
    %cst_49 = arith.constant 0.254829586 : f32
    %86 = vector.broadcast %cst_49 : f32 to vector<64x128xf32>
    %87 = arith.addf %85, %86 : vector<64x128xf32>
    %88 = arith.mulf %87, %74 : vector<64x128xf32>
    %cst_50 = arith.constant 0.000000e+00 : f32
    %89 = vector.broadcast %cst_50 : f32 to vector<64x128xf32>
    %90 = arith.subf %89, %68 : vector<64x128xf32>
    %91 = arith.mulf %90, %68 : vector<64x128xf32>
    %92 = math.exp %91 : vector<64x128xf32>
    %93 = arith.mulf %88, %92 : vector<64x128xf32>
    %cst_51 = arith.constant 1.000000e+00 : f32
    %94 = vector.broadcast %cst_51 : f32 to vector<64x128xf32>
    %95 = arith.subf %94, %93 : vector<64x128xf32>
    %96 = arith.mulf %67, %95 : vector<64x128xf32>
    %cst_52 = arith.constant 1.000000e+00 : f32
    %97 = vector.broadcast %cst_52 : f32 to vector<64x128xf32>
    %98 = arith.addf %97, %96 : vector<64x128xf32>
    %99 = arith.mulf %60, %98 : vector<64x128xf32>
    %cst_53 = arith.constant dense<0.000000e+00> : vector<384x128xf32>
    %100 = tpu.matmul %4, %99, %cst_53 {dimension_numbers = #tpu.dot_dimension_numbers<[1], [0], [0], [1], [0, 0, 1, 1], [], []>} : vector<384x64xf32>, vector<64x128xf32>, vector<384x128xf32> -> vector<384x128xf32>
    %101 = vector.extract_strided_slice %100 {offsets = [0, 0], sizes = [128, 128], strides = [1, 1]} : vector<384x128xf32> to vector<128x128xf32>
    %102 = vector.extract_strided_slice %100 {offsets = [128, 0], sizes = [128, 128], strides = [1, 1]} : vector<384x128xf32> to vector<128x128xf32>
    %103 = vector.extract_strided_slice %100 {offsets = [256, 0], sizes = [128, 128], strides = [1, 1]} : vector<384x128xf32> to vector<128x128xf32>
    %104 = tpu.transpose %102, [1, 0] : vector<128x128xf32> -> vector<128x128xf32>
    %105 = vector.extract_strided_slice %101 {offsets = [0, 0], sizes = [32, 128], strides = [1, 1]} : vector<128x128xf32> to vector<32x128xf32>
    %106 = vector.extract_strided_slice %103 {offsets = [0, 0], sizes = [32, 128], strides = [1, 1]} : vector<128x128xf32> to vector<32x128xf32>
    %107 = vector.extract_strided_slice %104 {offsets = [0, 0], sizes = [128, 32], strides = [1, 1]} : vector<128x128xf32> to vector<128x32xf32>
    %cst_54 = arith.constant dense<0.000000e+00> : vector<128x128xf32>
    %108 = tpu.matmul %107, %105, %cst_54 {dimension_numbers = #tpu.dot_dimension_numbers<[1], [0], [0], [1], [0, 0, 1, 1], [], []>} : vector<128x32xf32>, vector<32x128xf32>, vector<128x128xf32> -> vector<128x128xf32>
    %cst_55 = arith.constant 0.176776692 : f32
    %109 = vector.broadcast %cst_55 : f32 to vector<128x128xf32>
    %110 = arith.mulf %108, %109 : vector<128x128xf32>
    %cst_56 = arith.constant dense<0xFF800000> : vector<128xf32>
    %111 = vector.multi_reduction <maximumf>, %110, %cst_56 [0] : vector<128x128xf32> to vector<128xf32>
    %112 = vector.shape_cast %111 : vector<128xf32> to vector<1x128xf32>
    %113 = vector.broadcast %112 : vector<1x128xf32> to vector<128x128xf32>
    %114 = arith.subf %110, %113 : vector<128x128xf32>
    %115 = math.exp %114 : vector<128x128xf32>
    %cst_57 = arith.constant dense<0.000000e+00> : vector<128xf32>
    %116 = vector.multi_reduction <add>, %115, %cst_57 [0] : vector<128x128xf32> to vector<128xf32>
    %117 = vector.shape_cast %116 : vector<128xf32> to vector<1x128xf32>
    %cst_58 = arith.constant dense<0.000000e+00> : vector<32x128xf32>
    %118 = tpu.matmul %106, %115, %cst_58 {dimension_numbers = #tpu.dot_dimension_numbers<[1], [0], [0], [1], [0, 0, 1, 1], [], []>} : vector<32x128xf32>, vector<128x128xf32>, vector<32x128xf32> -> vector<32x128xf32>
    %119 = tpu.reciprocal %117 {approx = true} : vector<1x128xf32> -> vector<1x128xf32>
    %120 = vector.broadcast %119 : vector<1x128xf32> to vector<32x128xf32>
    %121 = arith.mulf %118, %120 : vector<32x128xf32>
    %122 = vector.extract_strided_slice %101 {offsets = [32, 0], sizes = [32, 128], strides = [1, 1]} : vector<128x128xf32> to vector<32x128xf32>
    %123 = vector.extract_strided_slice %103 {offsets = [32, 0], sizes = [32, 128], strides = [1, 1]} : vector<128x128xf32> to vector<32x128xf32>
    %124 = vector.extract_strided_slice %104 {offsets = [0, 32], sizes = [128, 32], strides = [1, 1]} : vector<128x128xf32> to vector<128x32xf32>
    %cst_59 = arith.constant dense<0.000000e+00> : vector<128x128xf32>
    %125 = tpu.matmul %124, %122, %cst_59 {dimension_numbers = #tpu.dot_dimension_numbers<[1], [0], [0], [1], [0, 0, 1, 1], [], []>} : vector<128x32xf32>, vector<32x128xf32>, vector<128x128xf32> -> vector<128x128xf32>
    %cst_60 = arith.constant 0.176776692 : f32
    %126 = vector.broadcast %cst_60 : f32 to vector<128x128xf32>
    %127 = arith.mulf %125, %126 : vector<128x128xf32>
    %cst_61 = arith.constant dense<0xFF800000> : vector<128xf32>
    %128 = vector.multi_reduction <maximumf>, %127, %cst_61 [0] : vector<128x128xf32> to vector<128xf32>
    %129 = vector.shape_cast %128 : vector<128xf32> to vector<1x128xf32>
    %130 = vector.broadcast %129 : vector<1x128xf32> to vector<128x128xf32>
    %131 = arith.subf %127, %130 : vector<128x128xf32>
    %132 = math.exp %131 : vector<128x128xf32>
    %cst_62 = arith.constant dense<0.000000e+00> : vector<128xf32>
    %133 = vector.multi_reduction <add>, %132, %cst_62 [0] : vector<128x128xf32> to vector<128xf32>
    %134 = vector.shape_cast %133 : vector<128xf32> to vector<1x128xf32>
    %cst_63 = arith.constant dense<0.000000e+00> : vector<32x128xf32>
    %135 = tpu.matmul %123, %132, %cst_63 {dimension_numbers = #tpu.dot_dimension_numbers<[1], [0], [0], [1], [0, 0, 1, 1], [], []>} : vector<32x128xf32>, vector<128x128xf32>, vector<32x128xf32> -> vector<32x128xf32>
    %136 = tpu.reciprocal %134 {approx = true} : vector<1x128xf32> -> vector<1x128xf32>
    %137 = vector.broadcast %136 : vector<1x128xf32> to vector<32x128xf32>
    %138 = arith.mulf %135, %137 : vector<32x128xf32>
    %139 = vector.extract_strided_slice %101 {offsets = [64, 0], sizes = [32, 128], strides = [1, 1]} : vector<128x128xf32> to vector<32x128xf32>
    %140 = vector.extract_strided_slice %103 {offsets = [64, 0], sizes = [32, 128], strides = [1, 1]} : vector<128x128xf32> to vector<32x128xf32>
    %141 = vector.extract_strided_slice %104 {offsets = [0, 64], sizes = [128, 32], strides = [1, 1]} : vector<128x128xf32> to vector<128x32xf32>
    %cst_64 = arith.constant dense<0.000000e+00> : vector<128x128xf32>
    %142 = tpu.matmul %141, %139, %cst_64 {dimension_numbers = #tpu.dot_dimension_numbers<[1], [0], [0], [1], [0, 0, 1, 1], [], []>} : vector<128x32xf32>, vector<32x128xf32>, vector<128x128xf32> -> vector<128x128xf32>
    %cst_65 = arith.constant 0.176776692 : f32
    %143 = vector.broadcast %cst_65 : f32 to vector<128x128xf32>
    %144 = arith.mulf %142, %143 : vector<128x128xf32>
    %cst_66 = arith.constant dense<0xFF800000> : vector<128xf32>
    %145 = vector.multi_reduction <maximumf>, %144, %cst_66 [0] : vector<128x128xf32> to vector<128xf32>
    %146 = vector.shape_cast %145 : vector<128xf32> to vector<1x128xf32>
    %147 = vector.broadcast %146 : vector<1x128xf32> to vector<128x128xf32>
    %148 = arith.subf %144, %147 : vector<128x128xf32>
    %149 = math.exp %148 : vector<128x128xf32>
    %cst_67 = arith.constant dense<0.000000e+00> : vector<128xf32>
    %150 = vector.multi_reduction <add>, %149, %cst_67 [0] : vector<128x128xf32> to vector<128xf32>
    %151 = vector.shape_cast %150 : vector<128xf32> to vector<1x128xf32>
    %cst_68 = arith.constant dense<0.000000e+00> : vector<32x128xf32>
    %152 = tpu.matmul %140, %149, %cst_68 {dimension_numbers = #tpu.dot_dimension_numbers<[1], [0], [0], [1], [0, 0, 1, 1], [], []>} : vector<32x128xf32>, vector<128x128xf32>, vector<32x128xf32> -> vector<32x128xf32>
    %153 = tpu.reciprocal %151 {approx = true} : vector<1x128xf32> -> vector<1x128xf32>
    %154 = vector.broadcast %153 : vector<1x128xf32> to vector<32x128xf32>
    %155 = arith.mulf %152, %154 : vector<32x128xf32>
    %156 = vector.extract_strided_slice %101 {offsets = [96, 0], sizes = [32, 128], strides = [1, 1]} : vector<128x128xf32> to vector<32x128xf32>
    %157 = vector.extract_strided_slice %103 {offsets = [96, 0], sizes = [32, 128], strides = [1, 1]} : vector<128x128xf32> to vector<32x128xf32>
    %158 = vector.extract_strided_slice %104 {offsets = [0, 96], sizes = [128, 32], strides = [1, 1]} : vector<128x128xf32> to vector<128x32xf32>
    %cst_69 = arith.constant dense<0.000000e+00> : vector<128x128xf32>
    %159 = tpu.matmul %158, %156, %cst_69 {dimension_numbers = #tpu.dot_dimension_numbers<[1], [0], [0], [1], [0, 0, 1, 1], [], []>} : vector<128x32xf32>, vector<32x128xf32>, vector<128x128xf32> -> vector<128x128xf32>
    %cst_70 = arith.constant 0.176776692 : f32
    %160 = vector.broadcast %cst_70 : f32 to vector<128x128xf32>
    %161 = arith.mulf %159, %160 : vector<128x128xf32>
    %cst_71 = arith.constant dense<0xFF800000> : vector<128xf32>
    %162 = vector.multi_reduction <maximumf>, %161, %cst_71 [0] : vector<128x128xf32> to vector<128xf32>
    %163 = vector.shape_cast %162 : vector<128xf32> to vector<1x128xf32>
    %164 = vector.broadcast %163 : vector<1x128xf32> to vector<128x128xf32>
    %165 = arith.subf %161, %164 : vector<128x128xf32>
    %166 = math.exp %165 : vector<128x128xf32>
    %cst_72 = arith.constant dense<0.000000e+00> : vector<128xf32>
    %167 = vector.multi_reduction <add>, %166, %cst_72 [0] : vector<128x128xf32> to vector<128xf32>
    %168 = vector.shape_cast %167 : vector<128xf32> to vector<1x128xf32>
    %cst_73 = arith.constant dense<0.000000e+00> : vector<32x128xf32>
    %169 = tpu.matmul %157, %166, %cst_73 {dimension_numbers = #tpu.dot_dimension_numbers<[1], [0], [0], [1], [0, 0, 1, 1], [], []>} : vector<32x128xf32>, vector<128x128xf32>, vector<32x128xf32> -> vector<32x128xf32>
    %170 = tpu.reciprocal %168 {approx = true} : vector<1x128xf32> -> vector<1x128xf32>
    %171 = vector.broadcast %170 : vector<1x128xf32> to vector<32x128xf32>
    %172 = arith.mulf %169, %171 : vector<32x128xf32>
    %173 = tpu.concatenate %121, %138, %155, %172 in 0 : vector<32x128xf32>, vector<32x128xf32>, vector<32x128xf32>, vector<32x128xf32> -> vector<128x128xf32>
    %cst_74 = arith.constant dense<0.000000e+00> : vector<64x128xf32>
    %174 = tpu.matmul %5, %173, %cst_74 {dimension_numbers = #tpu.dot_dimension_numbers<[1], [0], [0], [1], [0, 0, 1, 1], [], []>} : vector<64x128xf32>, vector<128x128xf32>, vector<64x128xf32> -> vector<64x128xf32>
    %175 = vector.broadcast %6 : vector<64x1xf32> to vector<64x128xf32>
    %176 = arith.addf %174, %175 : vector<64x128xf32>
    %177 = arith.addf %176, %99 : vector<64x128xf32>
    %cst_75 = arith.constant 5.000000e-01 : f32
    %178 = vector.broadcast %cst_75 : f32 to vector<64x128xf32>
    %179 = arith.mulf %178, %177 : vector<64x128xf32>
    %cst_76 = arith.constant 1.41421354 : f32
    %180 = vector.broadcast %cst_76 : f32 to vector<64x128xf32>
    %181 = arith.divf %177, %180 : vector<64x128xf32>
    %cst_77 = arith.constant 0.000000e+00 : f32
    %182 = vector.broadcast %cst_77 : f32 to vector<64x128xf32>
    %183 = arith.cmpf oge, %181, %182 : vector<64x128xf32>
    %cst_78 = arith.constant 1.000000e+00 : f32
    %cst_79 = arith.constant -1.000000e+00 : f32
    %184 = vector.broadcast %cst_78 : f32 to vector<64x128xf32>
    %185 = vector.broadcast %cst_79 : f32 to vector<64x128xf32>
    %186 = arith.select %183, %184, %185 : vector<64x128xi1>, vector<64x128xf32>
    %187 = math.absf %181 : vector<64x128xf32>
    %cst_80 = arith.constant 0.327591091 : f32
    %188 = vector.broadcast %cst_80 : f32 to vector<64x128xf32>
    %189 = arith.mulf %188, %187 : vector<64x128xf32>
    %cst_81 = arith.constant 1.000000e+00 : f32
    %190 = vector.broadcast %cst_81 : f32 to vector<64x128xf32>
    %191 = arith.addf %190, %189 : vector<64x128xf32>
    %cst_82 = arith.constant 1.000000e+00 : f32
    %192 = vector.broadcast %cst_82 : f32 to vector<64x128xf32>
    %193 = arith.divf %192, %191 : vector<64x128xf32>
    %cst_83 = arith.constant 1.06140542 : f32
    %194 = vector.broadcast %cst_83 : f32 to vector<64x128xf32>
    %195 = arith.mulf %194, %193 : vector<64x128xf32>
    %cst_84 = arith.constant -1.45315206 : f32
    %196 = vector.broadcast %cst_84 : f32 to vector<64x128xf32>
    %197 = arith.addf %195, %196 : vector<64x128xf32>
    %198 = arith.mulf %197, %193 : vector<64x128xf32>
    %cst_85 = arith.constant 1.42141378 : f32
    %199 = vector.broadcast %cst_85 : f32 to vector<64x128xf32>
    %200 = arith.addf %198, %199 : vector<64x128xf32>
    %201 = arith.mulf %200, %193 : vector<64x128xf32>
    %cst_86 = arith.constant -0.284496725 : f32
    %202 = vector.broadcast %cst_86 : f32 to vector<64x128xf32>
    %203 = arith.addf %201, %202 : vector<64x128xf32>
    %204 = arith.mulf %203, %193 : vector<64x128xf32>
    %cst_87 = arith.constant 0.254829586 : f32
    %205 = vector.broadcast %cst_87 : f32 to vector<64x128xf32>
    %206 = arith.addf %204, %205 : vector<64x128xf32>
    %207 = arith.mulf %206, %193 : vector<64x128xf32>
    %cst_88 = arith.constant 0.000000e+00 : f32
    %208 = vector.broadcast %cst_88 : f32 to vector<64x128xf32>
    %209 = arith.subf %208, %187 : vector<64x128xf32>
    %210 = arith.mulf %209, %187 : vector<64x128xf32>
    %211 = math.exp %210 : vector<64x128xf32>
    %212 = arith.mulf %207, %211 : vector<64x128xf32>
    %cst_89 = arith.constant 1.000000e+00 : f32
    %213 = vector.broadcast %cst_89 : f32 to vector<64x128xf32>
    %214 = arith.subf %213, %212 : vector<64x128xf32>
    %215 = arith.mulf %186, %214 : vector<64x128xf32>
    %cst_90 = arith.constant 1.000000e+00 : f32
    %216 = vector.broadcast %cst_90 : f32 to vector<64x128xf32>
    %217 = arith.addf %216, %215 : vector<64x128xf32>
    %218 = arith.mulf %179, %217 : vector<64x128xf32>
    %cst_91 = arith.constant dense<0.000000e+00> : vector<64x128xf32>
    %219 = tpu.matmul %7, %218, %cst_91 {dimension_numbers = #tpu.dot_dimension_numbers<[1], [0], [0], [1], [0, 0, 1, 1], [], []>} : vector<64x64xf32>, vector<64x128xf32>, vector<64x128xf32> -> vector<64x128xf32>
    %220 = vector.broadcast %8 : vector<64x1xf32> to vector<64x128xf32>
    %221 = arith.addf %219, %220 : vector<64x128xf32>
    %222 = arith.addf %218, %221 : vector<64x128xf32>
    %cst_92 = arith.constant 5.000000e-01 : f32
    %223 = vector.broadcast %cst_92 : f32 to vector<64x128xf32>
    %224 = arith.mulf %223, %222 : vector<64x128xf32>
    %cst_93 = arith.constant 1.41421354 : f32
    %225 = vector.broadcast %cst_93 : f32 to vector<64x128xf32>
    %226 = arith.divf %222, %225 : vector<64x128xf32>
    %cst_94 = arith.constant 0.000000e+00 : f32
    %227 = vector.broadcast %cst_94 : f32 to vector<64x128xf32>
    %228 = arith.cmpf oge, %226, %227 : vector<64x128xf32>
    %cst_95 = arith.constant 1.000000e+00 : f32
    %cst_96 = arith.constant -1.000000e+00 : f32
    %229 = vector.broadcast %cst_95 : f32 to vector<64x128xf32>
    %230 = vector.broadcast %cst_96 : f32 to vector<64x128xf32>
    %231 = arith.select %228, %229, %230 : vector<64x128xi1>, vector<64x128xf32>
    %232 = math.absf %226 : vector<64x128xf32>
    %cst_97 = arith.constant 0.327591091 : f32
    %233 = vector.broadcast %cst_97 : f32 to vector<64x128xf32>
    %234 = arith.mulf %233, %232 : vector<64x128xf32>
    %cst_98 = arith.constant 1.000000e+00 : f32
    %235 = vector.broadcast %cst_98 : f32 to vector<64x128xf32>
    %236 = arith.addf %235, %234 : vector<64x128xf32>
    %cst_99 = arith.constant 1.000000e+00 : f32
    %237 = vector.broadcast %cst_99 : f32 to vector<64x128xf32>
    %238 = arith.divf %237, %236 : vector<64x128xf32>
    %cst_100 = arith.constant 1.06140542 : f32
    %239 = vector.broadcast %cst_100 : f32 to vector<64x128xf32>
    %240 = arith.mulf %239, %238 : vector<64x128xf32>
    %cst_101 = arith.constant -1.45315206 : f32
    %241 = vector.broadcast %cst_101 : f32 to vector<64x128xf32>
    %242 = arith.addf %240, %241 : vector<64x128xf32>
    %243 = arith.mulf %242, %238 : vector<64x128xf32>
    %cst_102 = arith.constant 1.42141378 : f32
    %244 = vector.broadcast %cst_102 : f32 to vector<64x128xf32>
    %245 = arith.addf %243, %244 : vector<64x128xf32>
    %246 = arith.mulf %245, %238 : vector<64x128xf32>
    %cst_103 = arith.constant -0.284496725 : f32
    %247 = vector.broadcast %cst_103 : f32 to vector<64x128xf32>
    %248 = arith.addf %246, %247 : vector<64x128xf32>
    %249 = arith.mulf %248, %238 : vector<64x128xf32>
    %cst_104 = arith.constant 0.254829586 : f32
    %250 = vector.broadcast %cst_104 : f32 to vector<64x128xf32>
    %251 = arith.addf %249, %250 : vector<64x128xf32>
    %252 = arith.mulf %251, %238 : vector<64x128xf32>
    %cst_105 = arith.constant 0.000000e+00 : f32
    %253 = vector.broadcast %cst_105 : f32 to vector<64x128xf32>
    %254 = arith.subf %253, %232 : vector<64x128xf32>
    %255 = arith.mulf %254, %232 : vector<64x128xf32>
    %256 = math.exp %255 : vector<64x128xf32>
    %257 = arith.mulf %252, %256 : vector<64x128xf32>
    %cst_106 = arith.constant 1.000000e+00 : f32
    %258 = vector.broadcast %cst_106 : f32 to vector<64x128xf32>
    %259 = arith.subf %258, %257 : vector<64x128xf32>
    %260 = arith.mulf %231, %259 : vector<64x128xf32>
    %cst_107 = arith.constant 1.000000e+00 : f32
    %261 = vector.broadcast %cst_107 : f32 to vector<64x128xf32>
    %262 = arith.addf %261, %260 : vector<64x128xf32>
    %263 = arith.mulf %224, %262 : vector<64x128xf32>
    %c0_108 = arith.constant 0 : index
    %c0_109 = arith.constant 0 : index
    %c0_110 = arith.constant 0 : index
    %264 = vector.load %arg11[%c0_108, %c0_109, %c0_110] : memref<2x64x128xf32, #tpu.memory_space<vmem>>, vector<1x64x128xf32>
    %265 = vector.shape_cast %264 : vector<1x64x128xf32> to vector<64x128xf32>
    %266 = vector.shape_cast %263 : vector<64x128xf32> to vector<1x64x128xf32>
    tpu.vector_store %arg11[%c0_108, %c0_109, %c0_110], %266 {strides = array<i32>} : memref<2x64x128xf32, #tpu.memory_space<vmem>>, vector<1x64x128xf32>,
    %c1 = arith.constant 1 : index
    %c0_111 = arith.constant 0 : index
    %c0_112 = arith.constant 0 : index
    %267 = vector.load %arg1[%c1, %c0_111, %c0_112] : memref<2x64x128xf32, #tpu.memory_space<vmem>>, vector<1x64x128xf32>
    %268 = vector.shape_cast %267 : vector<1x64x128xf32> to vector<64x128xf32>
    %cst_113 = arith.constant dense<0.000000e+00> : vector<64x128xf32>
    %269 = tpu.matmul %0, %268, %cst_113 {dimension_numbers = #tpu.dot_dimension_numbers<[1], [0], [0], [1], [0, 0, 1, 1], [], []>} : vector<64x64xf32>, vector<64x128xf32>, vector<64x128xf32> -> vector<64x128xf32>
    %270 = vector.broadcast %1 : vector<64x1xf32> to vector<64x128xf32>
    %271 = arith.addf %269, %270 : vector<64x128xf32>
    %cst_114 = arith.constant 5.000000e-01 : f32
    %272 = vector.broadcast %cst_114 : f32 to vector<64x128xf32>
    %273 = arith.mulf %272, %271 : vector<64x128xf32>
    %cst_115 = arith.constant 1.41421354 : f32
    %274 = vector.broadcast %cst_115 : f32 to vector<64x128xf32>
    %275 = arith.divf %271, %274 : vector<64x128xf32>
    %cst_116 = arith.constant 0.000000e+00 : f32
    %276 = vector.broadcast %cst_116 : f32 to vector<64x128xf32>
    %277 = arith.cmpf oge, %275, %276 : vector<64x128xf32>
    %cst_117 = arith.constant 1.000000e+00 : f32
    %cst_118 = arith.constant -1.000000e+00 : f32
    %278 = vector.broadcast %cst_117 : f32 to vector<64x128xf32>
    %279 = vector.broadcast %cst_118 : f32 to vector<64x128xf32>
    %280 = arith.select %277, %278, %279 : vector<64x128xi1>, vector<64x128xf32>
    %281 = math.absf %275 : vector<64x128xf32>
    %cst_119 = arith.constant 0.327591091 : f32
    %282 = vector.broadcast %cst_119 : f32 to vector<64x128xf32>
    %283 = arith.mulf %282, %281 : vector<64x128xf32>
    %cst_120 = arith.constant 1.000000e+00 : f32
    %284 = vector.broadcast %cst_120 : f32 to vector<64x128xf32>
    %285 = arith.addf %284, %283 : vector<64x128xf32>
    %cst_121 = arith.constant 1.000000e+00 : f32
    %286 = vector.broadcast %cst_121 : f32 to vector<64x128xf32>
    %287 = arith.divf %286, %285 : vector<64x128xf32>
    %cst_122 = arith.constant 1.06140542 : f32
    %288 = vector.broadcast %cst_122 : f32 to vector<64x128xf32>
    %289 = arith.mulf %288, %287 : vector<64x128xf32>
    %cst_123 = arith.constant -1.45315206 : f32
    %290 = vector.broadcast %cst_123 : f32 to vector<64x128xf32>
    %291 = arith.addf %289, %290 : vector<64x128xf32>
    %292 = arith.mulf %291, %287 : vector<64x128xf32>
    %cst_124 = arith.constant 1.42141378 : f32
    %293 = vector.broadcast %cst_124 : f32 to vector<64x128xf32>
    %294 = arith.addf %292, %293 : vector<64x128xf32>
    %295 = arith.mulf %294, %287 : vector<64x128xf32>
    %cst_125 = arith.constant -0.284496725 : f32
    %296 = vector.broadcast %cst_125 : f32 to vector<64x128xf32>
    %297 = arith.addf %295, %296 : vector<64x128xf32>
    %298 = arith.mulf %297, %287 : vector<64x128xf32>
    %cst_126 = arith.constant 0.254829586 : f32
    %299 = vector.broadcast %cst_126 : f32 to vector<64x128xf32>
    %300 = arith.addf %298, %299 : vector<64x128xf32>
    %301 = arith.mulf %300, %287 : vector<64x128xf32>
    %cst_127 = arith.constant 0.000000e+00 : f32
    %302 = vector.broadcast %cst_127 : f32 to vector<64x128xf32>
    %303 = arith.subf %302, %281 : vector<64x128xf32>
    %304 = arith.mulf %303, %281 : vector<64x128xf32>
    %305 = math.exp %304 : vector<64x128xf32>
    %306 = arith.mulf %301, %305 : vector<64x128xf32>
    %cst_128 = arith.constant 1.000000e+00 : f32
    %307 = vector.broadcast %cst_128 : f32 to vector<64x128xf32>
    %308 = arith.subf %307, %306 : vector<64x128xf32>
    %309 = arith.mulf %280, %308 : vector<64x128xf32>
    %cst_129 = arith.constant 1.000000e+00 : f32
    %310 = vector.broadcast %cst_129 : f32 to vector<64x128xf32>
    %311 = arith.addf %310, %309 : vector<64x128xf32>
    %312 = arith.mulf %273, %311 : vector<64x128xf32>
    %cst_130 = arith.constant dense<0.000000e+00> : vector<64x128xf32>
    %313 = tpu.matmul %2, %312, %cst_130 {dimension_numbers = #tpu.dot_dimension_numbers<[1], [0], [0], [1], [0, 0, 1, 1], [], []>} : vector<64x64xf32>, vector<64x128xf32>, vector<64x128xf32> -> vector<64x128xf32>
    %314 = vector.broadcast %3 : vector<64x1xf32> to vector<64x128xf32>
    %315 = arith.addf %313, %314 : vector<64x128xf32>
    %316 = arith.addf %315, %268 : vector<64x128xf32>
    %cst_131 = arith.constant 5.000000e-01 : f32
    %317 = vector.broadcast %cst_131 : f32 to vector<64x128xf32>
    %318 = arith.mulf %317, %316 : vector<64x128xf32>
    %cst_132 = arith.constant 1.41421354 : f32
    %319 = vector.broadcast %cst_132 : f32 to vector<64x128xf32>
    %320 = arith.divf %316, %319 : vector<64x128xf32>
    %cst_133 = arith.constant 0.000000e+00 : f32
    %321 = vector.broadcast %cst_133 : f32 to vector<64x128xf32>
    %322 = arith.cmpf oge, %320, %321 : vector<64x128xf32>
    %cst_134 = arith.constant 1.000000e+00 : f32
    %cst_135 = arith.constant -1.000000e+00 : f32
    %323 = vector.broadcast %cst_134 : f32 to vector<64x128xf32>
    %324 = vector.broadcast %cst_135 : f32 to vector<64x128xf32>
    %325 = arith.select %322, %323, %324 : vector<64x128xi1>, vector<64x128xf32>
    %326 = math.absf %320 : vector<64x128xf32>
    %cst_136 = arith.constant 0.327591091 : f32
    %327 = vector.broadcast %cst_136 : f32 to vector<64x128xf32>
    %328 = arith.mulf %327, %326 : vector<64x128xf32>
    %cst_137 = arith.constant 1.000000e+00 : f32
    %329 = vector.broadcast %cst_137 : f32 to vector<64x128xf32>
    %330 = arith.addf %329, %328 : vector<64x128xf32>
    %cst_138 = arith.constant 1.000000e+00 : f32
    %331 = vector.broadcast %cst_138 : f32 to vector<64x128xf32>
    %332 = arith.divf %331, %330 : vector<64x128xf32>
    %cst_139 = arith.constant 1.06140542 : f32
    %333 = vector.broadcast %cst_139 : f32 to vector<64x128xf32>
    %334 = arith.mulf %333, %332 : vector<64x128xf32>
    %cst_140 = arith.constant -1.45315206 : f32
    %335 = vector.broadcast %cst_140 : f32 to vector<64x128xf32>
    %336 = arith.addf %334, %335 : vector<64x128xf32>
    %337 = arith.mulf %336, %332 : vector<64x128xf32>
    %cst_141 = arith.constant 1.42141378 : f32
    %338 = vector.broadcast %cst_141 : f32 to vector<64x128xf32>
    %339 = arith.addf %337, %338 : vector<64x128xf32>
    %340 = arith.mulf %339, %332 : vector<64x128xf32>
    %cst_142 = arith.constant -0.284496725 : f32
    %341 = vector.broadcast %cst_142 : f32 to vector<64x128xf32>
    %342 = arith.addf %340, %341 : vector<64x128xf32>
    %343 = arith.mulf %342, %332 : vector<64x128xf32>
    %cst_143 = arith.constant 0.254829586 : f32
    %344 = vector.broadcast %cst_143 : f32 to vector<64x128xf32>
    %345 = arith.addf %343, %344 : vector<64x128xf32>
    %346 = arith.mulf %345, %332 : vector<64x128xf32>
    %cst_144 = arith.constant 0.000000e+00 : f32
    %347 = vector.broadcast %cst_144 : f32 to vector<64x128xf32>
    %348 = arith.subf %347, %326 : vector<64x128xf32>
    %349 = arith.mulf %348, %326 : vector<64x128xf32>
    %350 = math.exp %349 : vector<64x128xf32>
    %351 = arith.mulf %346, %350 : vector<64x128xf32>
    %cst_145 = arith.constant 1.000000e+00 : f32
    %352 = vector.broadcast %cst_145 : f32 to vector<64x128xf32>
    %353 = arith.subf %352, %351 : vector<64x128xf32>
    %354 = arith.mulf %325, %353 : vector<64x128xf32>
    %cst_146 = arith.constant 1.000000e+00 : f32
    %355 = vector.broadcast %cst_146 : f32 to vector<64x128xf32>
    %356 = arith.addf %355, %354 : vector<64x128xf32>
    %357 = arith.mulf %318, %356 : vector<64x128xf32>
    %cst_147 = arith.constant dense<0.000000e+00> : vector<384x128xf32>
    %358 = tpu.matmul %4, %357, %cst_147 {dimension_numbers = #tpu.dot_dimension_numbers<[1], [0], [0], [1], [0, 0, 1, 1], [], []>} : vector<384x64xf32>, vector<64x128xf32>, vector<384x128xf32> -> vector<384x128xf32>
    %359 = vector.extract_strided_slice %358 {offsets = [0, 0], sizes = [128, 128], strides = [1, 1]} : vector<384x128xf32> to vector<128x128xf32>
    %360 = vector.extract_strided_slice %358 {offsets = [128, 0], sizes = [128, 128], strides = [1, 1]} : vector<384x128xf32> to vector<128x128xf32>
    %361 = vector.extract_strided_slice %358 {offsets = [256, 0], sizes = [128, 128], strides = [1, 1]} : vector<384x128xf32> to vector<128x128xf32>
    %362 = tpu.transpose %360, [1, 0] : vector<128x128xf32> -> vector<128x128xf32>
    %363 = vector.extract_strided_slice %359 {offsets = [0, 0], sizes = [32, 128], strides = [1, 1]} : vector<128x128xf32> to vector<32x128xf32>
    %364 = vector.extract_strided_slice %361 {offsets = [0, 0], sizes = [32, 128], strides = [1, 1]} : vector<128x128xf32> to vector<32x128xf32>
    %365 = vector.extract_strided_slice %362 {offsets = [0, 0], sizes = [128, 32], strides = [1, 1]} : vector<128x128xf32> to vector<128x32xf32>
    %cst_148 = arith.constant dense<0.000000e+00> : vector<128x128xf32>
    %366 = tpu.matmul %365, %363, %cst_148 {dimension_numbers = #tpu.dot_dimension_numbers<[1], [0], [0], [1], [0, 0, 1, 1], [], []>} : vector<128x32xf32>, vector<32x128xf32>, vector<128x128xf32> -> vector<128x128xf32>
    %cst_149 = arith.constant 0.176776692 : f32
    %367 = vector.broadcast %cst_149 : f32 to vector<128x128xf32>
    %368 = arith.mulf %366, %367 : vector<128x128xf32>
    %cst_150 = arith.constant dense<0xFF800000> : vector<128xf32>
    %369 = vector.multi_reduction <maximumf>, %368, %cst_150 [0] : vector<128x128xf32> to vector<128xf32>
    %370 = vector.shape_cast %369 : vector<128xf32> to vector<1x128xf32>
    %371 = vector.broadcast %370 : vector<1x128xf32> to vector<128x128xf32>
    %372 = arith.subf %368, %371 : vector<128x128xf32>
    %373 = math.exp %372 : vector<128x128xf32>
    %cst_151 = arith.constant dense<0.000000e+00> : vector<128xf32>
    %374 = vector.multi_reduction <add>, %373, %cst_151 [0] : vector<128x128xf32> to vector<128xf32>
    %375 = vector.shape_cast %374 : vector<128xf32> to vector<1x128xf32>
    %cst_152 = arith.constant dense<0.000000e+00> : vector<32x128xf32>
    %376 = tpu.matmul %364, %373, %cst_152 {dimension_numbers = #tpu.dot_dimension_numbers<[1], [0], [0], [1], [0, 0, 1, 1], [], []>} : vector<32x128xf32>, vector<128x128xf32>, vector<32x128xf32> -> vector<32x128xf32>
    %377 = tpu.reciprocal %375 {approx = true} : vector<1x128xf32> -> vector<1x128xf32>
    %378 = vector.broadcast %377 : vector<1x128xf32> to vector<32x128xf32>
    %379 = arith.mulf %376, %378 : vector<32x128xf32>
    %380 = vector.extract_strided_slice %359 {offsets = [32, 0], sizes = [32, 128], strides = [1, 1]} : vector<128x128xf32> to vector<32x128xf32>
    %381 = vector.extract_strided_slice %361 {offsets = [32, 0], sizes = [32, 128], strides = [1, 1]} : vector<128x128xf32> to vector<32x128xf32>
    %382 = vector.extract_strided_slice %362 {offsets = [0, 32], sizes = [128, 32], strides = [1, 1]} : vector<128x128xf32> to vector<128x32xf32>
    %cst_153 = arith.constant dense<0.000000e+00> : vector<128x128xf32>
    %383 = tpu.matmul %382, %380, %cst_153 {dimension_numbers = #tpu.dot_dimension_numbers<[1], [0], [0], [1], [0, 0, 1, 1], [], []>} : vector<128x32xf32>, vector<32x128xf32>, vector<128x128xf32> -> vector<128x128xf32>
    %cst_154 = arith.constant 0.176776692 : f32
    %384 = vector.broadcast %cst_154 : f32 to vector<128x128xf32>
    %385 = arith.mulf %383, %384 : vector<128x128xf32>
    %cst_155 = arith.constant dense<0xFF800000> : vector<128xf32>
    %386 = vector.multi_reduction <maximumf>, %385, %cst_155 [0] : vector<128x128xf32> to vector<128xf32>
    %387 = vector.shape_cast %386 : vector<128xf32> to vector<1x128xf32>
    %388 = vector.broadcast %387 : vector<1x128xf32> to vector<128x128xf32>
    %389 = arith.subf %385, %388 : vector<128x128xf32>
    %390 = math.exp %389 : vector<128x128xf32>
    %cst_156 = arith.constant dense<0.000000e+00> : vector<128xf32>
    %391 = vector.multi_reduction <add>, %390, %cst_156 [0] : vector<128x128xf32> to vector<128xf32>
    %392 = vector.shape_cast %391 : vector<128xf32> to vector<1x128xf32>
    %cst_157 = arith.constant dense<0.000000e+00> : vector<32x128xf32>
    %393 = tpu.matmul %381, %390, %cst_157 {dimension_numbers = #tpu.dot_dimension_numbers<[1], [0], [0], [1], [0, 0, 1, 1], [], []>} : vector<32x128xf32>, vector<128x128xf32>, vector<32x128xf32> -> vector<32x128xf32>
    %394 = tpu.reciprocal %392 {approx = true} : vector<1x128xf32> -> vector<1x128xf32>
    %395 = vector.broadcast %394 : vector<1x128xf32> to vector<32x128xf32>
    %396 = arith.mulf %393, %395 : vector<32x128xf32>
    %397 = vector.extract_strided_slice %359 {offsets = [64, 0], sizes = [32, 128], strides = [1, 1]} : vector<128x128xf32> to vector<32x128xf32>
    %398 = vector.extract_strided_slice %361 {offsets = [64, 0], sizes = [32, 128], strides = [1, 1]} : vector<128x128xf32> to vector<32x128xf32>
    %399 = vector.extract_strided_slice %362 {offsets = [0, 64], sizes = [128, 32], strides = [1, 1]} : vector<128x128xf32> to vector<128x32xf32>
    %cst_158 = arith.constant dense<0.000000e+00> : vector<128x128xf32>
    %400 = tpu.matmul %399, %397, %cst_158 {dimension_numbers = #tpu.dot_dimension_numbers<[1], [0], [0], [1], [0, 0, 1, 1], [], []>} : vector<128x32xf32>, vector<32x128xf32>, vector<128x128xf32> -> vector<128x128xf32>
    %cst_159 = arith.constant 0.176776692 : f32
    %401 = vector.broadcast %cst_159 : f32 to vector<128x128xf32>
    %402 = arith.mulf %400, %401 : vector<128x128xf32>
    %cst_160 = arith.constant dense<0xFF800000> : vector<128xf32>
    %403 = vector.multi_reduction <maximumf>, %402, %cst_160 [0] : vector<128x128xf32> to vector<128xf32>
    %404 = vector.shape_cast %403 : vector<128xf32> to vector<1x128xf32>
    %405 = vector.broadcast %404 : vector<1x128xf32> to vector<128x128xf32>
    %406 = arith.subf %402, %405 : vector<128x128xf32>
    %407 = math.exp %406 : vector<128x128xf32>
    %cst_161 = arith.constant dense<0.000000e+00> : vector<128xf32>
    %408 = vector.multi_reduction <add>, %407, %cst_161 [0] : vector<128x128xf32> to vector<128xf32>
    %409 = vector.shape_cast %408 : vector<128xf32> to vector<1x128xf32>
    %cst_162 = arith.constant dense<0.000000e+00> : vector<32x128xf32>
    %410 = tpu.matmul %398, %407, %cst_162 {dimension_numbers = #tpu.dot_dimension_numbers<[1], [0], [0], [1], [0, 0, 1, 1], [], []>} : vector<32x128xf32>, vector<128x128xf32>, vector<32x128xf32> -> vector<32x128xf32>
    %411 = tpu.reciprocal %409 {approx = true} : vector<1x128xf32> -> vector<1x128xf32>
    %412 = vector.broadcast %411 : vector<1x128xf32> to vector<32x128xf32>
    %413 = arith.mulf %410, %412 : vector<32x128xf32>
    %414 = vector.extract_strided_slice %359 {offsets = [96, 0], sizes = [32, 128], strides = [1, 1]} : vector<128x128xf32> to vector<32x128xf32>
    %415 = vector.extract_strided_slice %361 {offsets = [96, 0], sizes = [32, 128], strides = [1, 1]} : vector<128x128xf32> to vector<32x128xf32>
    %416 = vector.extract_strided_slice %362 {offsets = [0, 96], sizes = [128, 32], strides = [1, 1]} : vector<128x128xf32> to vector<128x32xf32>
    %cst_163 = arith.constant dense<0.000000e+00> : vector<128x128xf32>
    %417 = tpu.matmul %416, %414, %cst_163 {dimension_numbers = #tpu.dot_dimension_numbers<[1], [0], [0], [1], [0, 0, 1, 1], [], []>} : vector<128x32xf32>, vector<32x128xf32>, vector<128x128xf32> -> vector<128x128xf32>
    %cst_164 = arith.constant 0.176776692 : f32
    %418 = vector.broadcast %cst_164 : f32 to vector<128x128xf32>
    %419 = arith.mulf %417, %418 : vector<128x128xf32>
    %cst_165 = arith.constant dense<0xFF800000> : vector<128xf32>
    %420 = vector.multi_reduction <maximumf>, %419, %cst_165 [0] : vector<128x128xf32> to vector<128xf32>
    %421 = vector.shape_cast %420 : vector<128xf32> to vector<1x128xf32>
    %422 = vector.broadcast %421 : vector<1x128xf32> to vector<128x128xf32>
    %423 = arith.subf %419, %422 : vector<128x128xf32>
    %424 = math.exp %423 : vector<128x128xf32>
    %cst_166 = arith.constant dense<0.000000e+00> : vector<128xf32>
    %425 = vector.multi_reduction <add>, %424, %cst_166 [0] : vector<128x128xf32> to vector<128xf32>
    %426 = vector.shape_cast %425 : vector<128xf32> to vector<1x128xf32>
    %cst_167 = arith.constant dense<0.000000e+00> : vector<32x128xf32>
    %427 = tpu.matmul %415, %424, %cst_167 {dimension_numbers = #tpu.dot_dimension_numbers<[1], [0], [0], [1], [0, 0, 1, 1], [], []>} : vector<32x128xf32>, vector<128x128xf32>, vector<32x128xf32> -> vector<32x128xf32>
    %428 = tpu.reciprocal %426 {approx = true} : vector<1x128xf32> -> vector<1x128xf32>
    %429 = vector.broadcast %428 : vector<1x128xf32> to vector<32x128xf32>
    %430 = arith.mulf %427, %429 : vector<32x128xf32>
    %431 = tpu.concatenate %379, %396, %413, %430 in 0 : vector<32x128xf32>, vector<32x128xf32>, vector<32x128xf32>, vector<32x128xf32> -> vector<128x128xf32>
    %cst_168 = arith.constant dense<0.000000e+00> : vector<64x128xf32>
    %432 = tpu.matmul %5, %431, %cst_168 {dimension_numbers = #tpu.dot_dimension_numbers<[1], [0], [0], [1], [0, 0, 1, 1], [], []>} : vector<64x128xf32>, vector<128x128xf32>, vector<64x128xf32> -> vector<64x128xf32>
    %433 = vector.broadcast %6 : vector<64x1xf32> to vector<64x128xf32>
    %434 = arith.addf %432, %433 : vector<64x128xf32>
    %435 = arith.addf %434, %357 : vector<64x128xf32>
    %cst_169 = arith.constant 5.000000e-01 : f32
    %436 = vector.broadcast %cst_169 : f32 to vector<64x128xf32>
    %437 = arith.mulf %436, %435 : vector<64x128xf32>
    %cst_170 = arith.constant 1.41421354 : f32
    %438 = vector.broadcast %cst_170 : f32 to vector<64x128xf32>
    %439 = arith.divf %435, %438 : vector<64x128xf32>
    %cst_171 = arith.constant 0.000000e+00 : f32
    %440 = vector.broadcast %cst_171 : f32 to vector<64x128xf32>
    %441 = arith.cmpf oge, %439, %440 : vector<64x128xf32>
    %cst_172 = arith.constant 1.000000e+00 : f32
    %cst_173 = arith.constant -1.000000e+00 : f32
    %442 = vector.broadcast %cst_172 : f32 to vector<64x128xf32>
    %443 = vector.broadcast %cst_173 : f32 to vector<64x128xf32>
    %444 = arith.select %441, %442, %443 : vector<64x128xi1>, vector<64x128xf32>
    %445 = math.absf %439 : vector<64x128xf32>
    %cst_174 = arith.constant 0.327591091 : f32
    %446 = vector.broadcast %cst_174 : f32 to vector<64x128xf32>
    %447 = arith.mulf %446, %445 : vector<64x128xf32>
    %cst_175 = arith.constant 1.000000e+00 : f32
    %448 = vector.broadcast %cst_175 : f32 to vector<64x128xf32>
    %449 = arith.addf %448, %447 : vector<64x128xf32>
    %cst_176 = arith.constant 1.000000e+00 : f32
    %450 = vector.broadcast %cst_176 : f32 to vector<64x128xf32>
    %451 = arith.divf %450, %449 : vector<64x128xf32>
    %cst_177 = arith.constant 1.06140542 : f32
    %452 = vector.broadcast %cst_177 : f32 to vector<64x128xf32>
    %453 = arith.mulf %452, %451 : vector<64x128xf32>
    %cst_178 = arith.constant -1.45315206 : f32
    %454 = vector.broadcast %cst_178 : f32 to vector<64x128xf32>
    %455 = arith.addf %453, %454 : vector<64x128xf32>
    %456 = arith.mulf %455, %451 : vector<64x128xf32>
    %cst_179 = arith.constant 1.42141378 : f32
    %457 = vector.broadcast %cst_179 : f32 to vector<64x128xf32>
    %458 = arith.addf %456, %457 : vector<64x128xf32>
    %459 = arith.mulf %458, %451 : vector<64x128xf32>
    %cst_180 = arith.constant -0.284496725 : f32
    %460 = vector.broadcast %cst_180 : f32 to vector<64x128xf32>
    %461 = arith.addf %459, %460 : vector<64x128xf32>
    %462 = arith.mulf %461, %451 : vector<64x128xf32>
    %cst_181 = arith.constant 0.254829586 : f32
    %463 = vector.broadcast %cst_181 : f32 to vector<64x128xf32>
    %464 = arith.addf %462, %463 : vector<64x128xf32>
    %465 = arith.mulf %464, %451 : vector<64x128xf32>
    %cst_182 = arith.constant 0.000000e+00 : f32
    %466 = vector.broadcast %cst_182 : f32 to vector<64x128xf32>
    %467 = arith.subf %466, %445 : vector<64x128xf32>
    %468 = arith.mulf %467, %445 : vector<64x128xf32>
    %469 = math.exp %468 : vector<64x128xf32>
    %470 = arith.mulf %465, %469 : vector<64x128xf32>
    %cst_183 = arith.constant 1.000000e+00 : f32
    %471 = vector.broadcast %cst_183 : f32 to vector<64x128xf32>
    %472 = arith.subf %471, %470 : vector<64x128xf32>
    %473 = arith.mulf %444, %472 : vector<64x128xf32>
    %cst_184 = arith.constant 1.000000e+00 : f32
    %474 = vector.broadcast %cst_184 : f32 to vector<64x128xf32>
    %475 = arith.addf %474, %473 : vector<64x128xf32>
    %476 = arith.mulf %437, %475 : vector<64x128xf32>
    %cst_185 = arith.constant dense<0.000000e+00> : vector<64x128xf32>
    %477 = tpu.matmul %7, %476, %cst_185 {dimension_numbers = #tpu.dot_dimension_numbers<[1], [0], [0], [1], [0, 0, 1, 1], [], []>} : vector<64x64xf32>, vector<64x128xf32>, vector<64x128xf32> -> vector<64x128xf32>
    %478 = vector.broadcast %8 : vector<64x1xf32> to vector<64x128xf32>
    %479 = arith.addf %477, %478 : vector<64x128xf32>
    %480 = arith.addf %476, %479 : vector<64x128xf32>
    %cst_186 = arith.constant 5.000000e-01 : f32
    %481 = vector.broadcast %cst_186 : f32 to vector<64x128xf32>
    %482 = arith.mulf %481, %480 : vector<64x128xf32>
    %cst_187 = arith.constant 1.41421354 : f32
    %483 = vector.broadcast %cst_187 : f32 to vector<64x128xf32>
    %484 = arith.divf %480, %483 : vector<64x128xf32>
    %cst_188 = arith.constant 0.000000e+00 : f32
    %485 = vector.broadcast %cst_188 : f32 to vector<64x128xf32>
    %486 = arith.cmpf oge, %484, %485 : vector<64x128xf32>
    %cst_189 = arith.constant 1.000000e+00 : f32
    %cst_190 = arith.constant -1.000000e+00 : f32
    %487 = vector.broadcast %cst_189 : f32 to vector<64x128xf32>
    %488 = vector.broadcast %cst_190 : f32 to vector<64x128xf32>
    %489 = arith.select %486, %487, %488 : vector<64x128xi1>, vector<64x128xf32>
    %490 = math.absf %484 : vector<64x128xf32>
    %cst_191 = arith.constant 0.327591091 : f32
    %491 = vector.broadcast %cst_191 : f32 to vector<64x128xf32>
    %492 = arith.mulf %491, %490 : vector<64x128xf32>
    %cst_192 = arith.constant 1.000000e+00 : f32
    %493 = vector.broadcast %cst_192 : f32 to vector<64x128xf32>
    %494 = arith.addf %493, %492 : vector<64x128xf32>
    %cst_193 = arith.constant 1.000000e+00 : f32
    %495 = vector.broadcast %cst_193 : f32 to vector<64x128xf32>
    %496 = arith.divf %495, %494 : vector<64x128xf32>
    %cst_194 = arith.constant 1.06140542 : f32
    %497 = vector.broadcast %cst_194 : f32 to vector<64x128xf32>
    %498 = arith.mulf %497, %496 : vector<64x128xf32>
    %cst_195 = arith.constant -1.45315206 : f32
    %499 = vector.broadcast %cst_195 : f32 to vector<64x128xf32>
    %500 = arith.addf %498, %499 : vector<64x128xf32>
    %501 = arith.mulf %500, %496 : vector<64x128xf32>
    %cst_196 = arith.constant 1.42141378 : f32
    %502 = vector.broadcast %cst_196 : f32 to vector<64x128xf32>
    %503 = arith.addf %501, %502 : vector<64x128xf32>
    %504 = arith.mulf %503, %496 : vector<64x128xf32>
    %cst_197 = arith.constant -0.284496725 : f32
    %505 = vector.broadcast %cst_197 : f32 to vector<64x128xf32>
    %506 = arith.addf %504, %505 : vector<64x128xf32>
    %507 = arith.mulf %506, %496 : vector<64x128xf32>
    %cst_198 = arith.constant 0.254829586 : f32
    %508 = vector.broadcast %cst_198 : f32 to vector<64x128xf32>
    %509 = arith.addf %507, %508 : vector<64x128xf32>
    %510 = arith.mulf %509, %496 : vector<64x128xf32>
    %cst_199 = arith.constant 0.000000e+00 : f32
    %511 = vector.broadcast %cst_199 : f32 to vector<64x128xf32>
    %512 = arith.subf %511, %490 : vector<64x128xf32>
    %513 = arith.mulf %512, %490 : vector<64x128xf32>
    %514 = math.exp %513 : vector<64x128xf32>
    %515 = arith.mulf %510, %514 : vector<64x128xf32>
    %cst_200 = arith.constant 1.000000e+00 : f32
    %516 = vector.broadcast %cst_200 : f32 to vector<64x128xf32>
    %517 = arith.subf %516, %515 : vector<64x128xf32>
    %518 = arith.mulf %489, %517 : vector<64x128xf32>
    %cst_201 = arith.constant 1.000000e+00 : f32
    %519 = vector.broadcast %cst_201 : f32 to vector<64x128xf32>
    %520 = arith.addf %519, %518 : vector<64x128xf32>
    %521 = arith.mulf %482, %520 : vector<64x128xf32>
    %c1_202 = arith.constant 1 : index
    %c0_203 = arith.constant 0 : index
    %c0_204 = arith.constant 0 : index
    %522 = vector.load %arg11[%c1_202, %c0_203, %c0_204] : memref<2x64x128xf32, #tpu.memory_space<vmem>>, vector<1x64x128xf32>
    %523 = vector.shape_cast %522 : vector<1x64x128xf32> to vector<64x128xf32>
    %524 = vector.shape_cast %521 : vector<64x128xf32> to vector<1x64x128xf32>
    tpu.vector_store %arg11[%c1_202, %c0_203, %c0_204], %524 {strides = array<i32>} : memref<2x64x128xf32, #tpu.memory_space<vmem>>, vector<1x64x128xf32>,
    return
  }
  func.func @transform_0(%arg0: i32) -> (i32, i32, i32) {
    %c0_i32 = arith.constant 0 : i32
    %c0_i32_0 = arith.constant 0 : i32
    %c0_i32_1 = arith.constant 0 : i32
    return %arg0, %c0_i32, %c0_i32_0 : i32, i32, i32
  }
  func.func @transform_1(%arg0: i32) -> (i32, i32) {
    %c0_i32 = arith.constant 0 : i32
    %c0_i32_0 = arith.constant 0 : i32
    %c0_i32_1 = arith.constant 0 : i32
    return %c0_i32, %c0_i32_0 : i32, i32
  }
  func.func @transform_2(%arg0: i32) -> (i32, i32) {
    %c0_i32 = arith.constant 0 : i32
    %c0_i32_0 = arith.constant 0 : i32
    %c0_i32_1 = arith.constant 0 : i32
    return %c0_i32, %c0_i32_0 : i32, i32
  }
  func.func @transform_3(%arg0: i32) -> (i32, i32) {
    %c0_i32 = arith.constant 0 : i32
    %c0_i32_0 = arith.constant 0 : i32
    %c0_i32_1 = arith.constant 0 : i32
    return %c0_i32, %c0_i32_0 : i32, i32
  }
  func.func @transform_4(%arg0: i32) -> (i32, i32) {
    %c0_i32 = arith.constant 0 : i32
    %c0_i32_0 = arith.constant 0 : i32
    %c0_i32_1 = arith.constant 0 : i32
    return %c0_i32, %c0_i32_0 : i32, i32
  }
  func.func @transform_5(%arg0: i32) -> (i32, i32) {
    %c0_i32 = arith.constant 0 : i32
    %c0_i32_0 = arith.constant 0 : i32
    %c0_i32_1 = arith.constant 0 : i32
    return %c0_i32, %c0_i32_0 : i32, i32
  }
  func.func @transform_6(%arg0: i32) -> (i32, i32) {
    %c0_i32 = arith.constant 0 : i32
    %c0_i32_0 = arith.constant 0 : i32
    %c0_i32_1 = arith.constant 0 : i32
    return %c0_i32, %c0_i32_0 : i32, i32
  }
  func.func @transform_7(%arg0: i32) -> (i32, i32) {
    %c0_i32 = arith.constant 0 : i32
    %c0_i32_0 = arith.constant 0 : i32
    %c0_i32_1 = arith.constant 0 : i32
    return %c0_i32, %c0_i32_0 : i32, i32
  }
  func.func @transform_8(%arg0: i32) -> (i32, i32) {
    %c0_i32 = arith.constant 0 : i32
    %c0_i32_0 = arith.constant 0 : i32
    %c0_i32_1 = arith.constant 0 : i32
    return %c0_i32, %c0_i32_0 : i32, i32
  }
  func.func @transform_9(%arg0: i32) -> (i32, i32) {
    %c0_i32 = arith.constant 0 : i32
    %c0_i32_0 = arith.constant 0 : i32
    %c0_i32_1 = arith.constant 0 : i32
    return %c0_i32, %c0_i32_0 : i32, i32
  }
  func.func @transform_10(%arg0: i32) -> (i32, i32, i32) {
    %c0_i32 = arith.constant 0 : i32
    %c0_i32_0 = arith.constant 0 : i32
    %c0_i32_1 = arith.constant 0 : i32
    return %arg0, %c0_i32, %c0_i32_0 : i32, i32, i32
  }
}

</mosaic_0001>

<llo_original>
// kernel: tpu_custom_call.1
$region0: #{tpu_custom_call.1}
  #allocation0 [shape = 'u32[]', space=smem, size = 0x4, offset = 0x4, fixed_abs, tag = 'smem constant byte address 0x4 - core index']
  #allocation1 [shape = 'u32[144,128]{1,0:T(1,128)}', space=vmem, size = 0x12000, scoped, tag = 'internal scratch']
  %s0 = inlined_call_operand.vmem [shape: f32[2,64,128], index: 0, kind: input, shape index: {}]
  %s1 = inlined_call_operand.vmem [shape: f32[64,64], index: 1, kind: input, shape index: {}]
  %s2 = inlined_call_operand.vmem [shape: f32[64,1], index: 2, kind: input, shape index: {}]
  %s3 = inlined_call_operand.vmem [shape: f32[64,64], index: 3, kind: input, shape index: {}]
  %s4 = inlined_call_operand.vmem [shape: f32[64,1], index: 4, kind: input, shape index: {}]
  %s5 = inlined_call_operand.vmem [shape: f32[384,64], index: 5, kind: input, shape index: {}]
  %s6 = inlined_call_operand.vmem [shape: f32[64,128], index: 6, kind: input, shape index: {}]
  %s7 = inlined_call_operand.vmem [shape: f32[64,1], index: 7, kind: input, shape index: {}]
  %s8 = inlined_call_operand.vmem [shape: f32[64,64], index: 8, kind: input, shape index: {}]
  %s9 = inlined_call_operand.vmem [shape: f32[64,1], index: 9, kind: input, shape index: {}]
  %s10 = inlined_call_operand.hbm [shape: f32[2,64,128], index: 10, kind: output, shape index: {}]
  %s11 = sld [smem:[#allocation0]]
  $region50: #{tpu_custom_call.1} parent=0
    _
  %s13 = ssub.s32 1, %s11
  %s14 = scalar_select 0, %s13, %s11
  $region1: #{tpu_custom_call.1} parent=0
    #allocation2 [shape = 'u8[65536]{0}', space=vmem, size = 0x10000, scoped, tag = 'output window, operand 0, single buffered']
    #allocation3 [shape = 's32[1]{0}', space=sflag, size = 0x4, scoped, tag = 'scoped memory for tpu_custom_call.1']
    %15 = vsyncpa [#allocation3], 0
    // Predicated region
    $region2: #{tpu_custom_call.1} parent=1 // pred_check
      _
    $region3: #{tpu_custom_call.1} parent=1 // pred_check_branch
      %17 = sbr.rel (0) target = $region5
    $region4: #{tpu_custom_call.1} parent=1 // pred_region
      _
    $region5: #{tpu_custom_call.1} parent=1 // pred_fallthru
      _
    // Predicated region
    $region6: #{tpu_custom_call.1} parent=1 // pred_check
      _
    $region7: #{tpu_custom_call.1} parent=1 // pred_check_branch
      %19 = sbr.rel (0) target = $region9
    $region8: #{tpu_custom_call.1} parent=1 // pred_region
      _
    $region9: #{tpu_custom_call.1} parent=1 // pred_fallthru
      _
    // Predicated region
    $region10: #{tpu_custom_call.1} parent=1 // pred_check
      _
    $region11: #{tpu_custom_call.1} parent=1 // pred_check_branch
      %21 = sbr.rel (0) target = $region13
    $region12: #{tpu_custom_call.1} parent=1 // pred_region
      _
    $region13: #{tpu_custom_call.1} parent=1 // pred_fallthru
      _
    // Predicated region
    $region14: #{tpu_custom_call.1} parent=1 // pred_check
      _
    $region15: #{tpu_custom_call.1} parent=1 // pred_check_branch
      %23 = sbr.rel (0) target = $region17
    $region16: #{tpu_custom_call.1} parent=1 // pred_region
      _
    $region17: #{tpu_custom_call.1} parent=1 // pred_fallthru
      _
    // Predicated region
    $region18: #{tpu_custom_call.1} parent=1 // pred_check
      _
    $region19: #{tpu_custom_call.1} parent=1 // pred_check_branch
      %25 = sbr.rel (0) target = $region21
    $region20: #{tpu_custom_call.1} parent=1 // pred_region
      _
    $region21: #{tpu_custom_call.1} parent=1 // pred_fallthru
      _
    // Predicated region
    $region22: #{tpu_custom_call.1} parent=1 // pred_check
      _
    $region23: #{tpu_custom_call.1} parent=1 // pred_check_branch
      %27 = sbr.rel (0) target = $region25
    $region24: #{tpu_custom_call.1} parent=1 // pred_region
      _
    $region25: #{tpu_custom_call.1} parent=1 // pred_fallthru
      _
    // Predicated region
    $region26: #{tpu_custom_call.1} parent=1 // pred_check
      _
    $region27: #{tpu_custom_call.1} parent=1 // pred_check_branch
      %29 = sbr.rel (0) target = $region29
    $region28: #{tpu_custom_call.1} parent=1 // pred_region
      _
    $region29: #{tpu_custom_call.1} parent=1 // pred_fallthru
      _
    // Predicated region
    $region30: #{tpu_custom_call.1} parent=1 // pred_check
      _
    $region31: #{tpu_custom_call.1} parent=1 // pred_check_branch
      %31 = sbr.rel (0) target = $region33
    $region32: #{tpu_custom_call.1} parent=1 // pred_region
      _
    $region33: #{tpu_custom_call.1} parent=1 // pred_fallthru
      _
    // Predicated region
    $region34: #{tpu_custom_call.1} parent=1 // pred_check
      _
    $region35: #{tpu_custom_call.1} parent=1 // pred_check_branch
      %33 = sbr.rel (0) target = $region37
    $region36: #{tpu_custom_call.1} parent=1 // pred_region
      _
    $region37: #{tpu_custom_call.1} parent=1 // pred_fallthru
      _
    // Predicated region
    $region38: #{tpu_custom_call.1} parent=1 // pred_check
      _
    $region39: #{tpu_custom_call.1} parent=1 // pred_check_branch
      %35 = sbr.rel (0) target = $region41
    $region40: #{tpu_custom_call.1} parent=1 // pred_region
      _
    $region41: #{tpu_custom_call.1} parent=1 // pred_fallthru
      _
    %v36 = vld [vmem:[%s1] sm:$0xff]
    %v37 = vld [vmem:[%s1 + $0x8] sm:$0xff]
    %v38 = vld [vmem:[%s1 + $0x10] sm:$0xff]
    %v39 = vld [vmem:[%s1 + $0x18] sm:$0xff]
    %v40 = vld [vmem:[%s1 + $0x20] sm:$0xff]
    %v41 = vld [vmem:[%s1 + $0x28] sm:$0xff]
    %v42 = vld [vmem:[%s1 + $0x30] sm:$0xff]
    %v43 = vld [vmem:[%s1 + $0x38] sm:$0xff]
    %v44 = vld [vmem:[%s2] sm:$0xff]
    %v45 = vld [vmem:[%s2 + $0x8] sm:$0xff]
    %v46 = vld [vmem:[%s2 + $0x10] sm:$0xff]
    %v47 = vld [vmem:[%s2 + $0x18] sm:$0xff]
    %v48 = vld [vmem:[%s2 + $0x20] sm:$0xff]
    %v49 = vld [vmem:[%s2 + $0x28] sm:$0xff]
    %v50 = vld [vmem:[%s2 + $0x30] sm:$0xff]
    %v51 = vld [vmem:[%s2 + $0x38] sm:$0xff]
    %v52 = vld [vmem:[%s3] sm:$0xff]
    %v53 = vld [vmem:[%s3 + $0x8] sm:$0xff]
    %v54 = vld [vmem:[%s3 + $0x10] sm:$0xff]
    %v55 = vld [vmem:[%s3 + $0x18] sm:$0xff]
    %v56 = vld [vmem:[%s3 + $0x20] sm:$0xff]
    %v57 = vld [vmem:[%s3 + $0x28] sm:$0xff]
    %v58 = vld [vmem:[%s3 + $0x30] sm:$0xff]
    %v59 = vld [vmem:[%s3 + $0x38] sm:$0xff]
    %v60 = vld [vmem:[%s4] sm:$0xff]
    %v61 = vld [vmem:[%s4 + $0x8] sm:$0xff]
    %v62 = vld [vmem:[%s4 + $0x10] sm:$0xff]
    %v63 = vld [vmem:[%s4 + $0x18] sm:$0xff]
    %v64 = vld [vmem:[%s4 + $0x20] sm:$0xff]
    %v65 = vld [vmem:[%s4 + $0x28] sm:$0xff]
    %v66 = vld [vmem:[%s4 + $0x30] sm:$0xff]
    %v67 = vld [vmem:[%s4 + $0x38] sm:$0xff]
    %v68 = vld [vmem:[%s5] sm:$0xff]
    %v69 = vld [vmem:[%s5 + $0x8] sm:$0xff]
    %v70 = vld [vmem:[%s5 + $0x10] sm:$0xff]
    %v71 = vld [vmem:[%s5 + $0x18] sm:$0xff]
    %v72 = vld [vmem:[%s5 + $0x20] sm:$0xff]
    %v73 = vld [vmem:[%s5 + $0x28] sm:$0xff]
    %v74 = vld [vmem:[%s5 + $0x30] sm:$0xff]
    %v75 = vld [vmem:[%s5 + $0x38] sm:$0xff]
    %v76 = vld [vmem:[%s5 + $0x40] sm:$0xff]
    %v77 = vld [vmem:[%s5 + $0x48] sm:$0xff]
    %v78 = vld [vmem:[%s5 + $0x50] sm:$0xff]
    %v79 = vld [vmem:[%s5 + $0x58] sm:$0xff]
    %v80 = vld [vmem:[%s5 + $0x60] sm:$0xff]
    %v81 = vld [vmem:[%s5 + $0x68] sm:$0xff]
    %v82 = vld [vmem:[%s5 + $0x70] sm:$0xff]
    %v83 = vld [vmem:[%s5 + $0x78] sm:$0xff]
    %v84 = vld [vmem:[%s5 + $0x80] sm:$0xff]
    %v85 = vld [vmem:[%s5 + $0x88] sm:$0xff]
    %v86 = vld [vmem:[%s5 + $0x90] sm:$0xff]
    %v87 = vld [vmem:[%s5 + $0x98] sm:$0xff]
    %v88 = vld [vmem:[%s5 + $0xa0] sm:$0xff]
    %v89 = vld [vmem:[%s5 + $0xa8] sm:$0xff]
    %v90 = vld [vmem:[%s5 + $0xb0] sm:$0xff]
    %v91 = vld [vmem:[%s5 + $0xb8] sm:$0xff]
    %v92 = vld [vmem:[%s5 + $0xc0] sm:$0xff]
    %v93 = vld [vmem:[%s5 + $0xc8] sm:$0xff]
    %v94 = vld [vmem:[%s5 + $0xd0] sm:$0xff]
    %v95 = vld [vmem:[%s5 + $0xd8] sm:$0xff]
    %v96 = vld [vmem:[%s5 + $0xe0] sm:$0xff]
    %v97 = vld [vmem:[%s5 + $0xe8] sm:$0xff]
    %v98 = vld [vmem:[%s5 + $0xf0] sm:$0xff]
    %v99 = vld [vmem:[%s5 + $0xf8] sm:$0xff]
    %v100 = vld [vmem:[%s5 + $0x100] sm:$0xff]
    %v101 = vld [vmem:[%s5 + $0x108] sm:$0xff]
    %v102 = vld [vmem:[%s5 + $0x110] sm:$0xff]
    %v103 = vld [vmem:[%s5 + $0x118] sm:$0xff]
    %v104 = vld [vmem:[%s5 + $0x120] sm:$0xff]
    %v105 = vld [vmem:[%s5 + $0x128] sm:$0xff]
    %v106 = vld [vmem:[%s5 + $0x130] sm:$0xff]
    %v107 = vld [vmem:[%s5 + $0x138] sm:$0xff]
    %v108 = vld [vmem:[%s5 + $0x140] sm:$0xff]
    %v109 = vld [vmem:[%s5 + $0x148] sm:$0xff]
    %v110 = vld [vmem:[%s5 + $0x150] sm:$0xff]
    %v111 = vld [vmem:[%s5 + $0x158] sm:$0xff]
    %v112 = vld [vmem:[%s5 + $0x160] sm:$0xff]
    %v113 = vld [vmem:[%s5 + $0x168] sm:$0xff]
    %v114 = vld [vmem:[%s5 + $0x170] sm:$0xff]
    %v115 = vld [vmem:[%s5 + $0x178] sm:$0xff]
    %v116 = vld [vmem:[%s6] sm:$0xff]
    %v117 = vld [vmem:[%s6 + $0x8] sm:$0xff]
    %v118 = vld [vmem:[%s6 + $0x10] sm:$0xff]
    %v119 = vld [vmem:[%s6 + $0x18] sm:$0xff]
    %v120 = vld [vmem:[%s6 + $0x20] sm:$0xff]
    %v121 = vld [vmem:[%s6 + $0x28] sm:$0xff]
    %v122 = vld [vmem:[%s6 + $0x30] sm:$0xff]
    %v123 = vld [vmem:[%s6 + $0x38] sm:$0xff]
    %v124 = vld [vmem:[%s7] sm:$0xff]
    %v125 = vld [vmem:[%s7 + $0x8] sm:$0xff]
    %v126 = vld [vmem:[%s7 + $0x10] sm:$0xff]
    %v127 = vld [vmem:[%s7 + $0x18] sm:$0xff]
    %v128 = vld [vmem:[%s7 + $0x20] sm:$0xff]
    %v129 = vld [vmem:[%s7 + $0x28] sm:$0xff]
    %v130 = vld [vmem:[%s7 + $0x30] sm:$0xff]
    %v131 = vld [vmem:[%s7 + $0x38] sm:$0xff]
    %v132 = vld [vmem:[%s8] sm:$0xff]
    %v133 = vld [vmem:[%s8 + $0x8] sm:$0xff]
    %v134 = vld [vmem:[%s8 + $0x10] sm:$0xff]
    %v135 = vld [vmem:[%s8 + $0x18] sm:$0xff]
    %v136 = vld [vmem:[%s8 + $0x20] sm:$0xff]
    %v137 = vld [vmem:[%s8 + $0x28] sm:$0xff]
    %v138 = vld [vmem:[%s8 + $0x30] sm:$0xff]
    %v139 = vld [vmem:[%s8 + $0x38] sm:$0xff]
    %v140 = vld [vmem:[%s9] sm:$0xff]
    %v141 = vld [vmem:[%s9 + $0x8] sm:$0xff]
    %v142 = vld [vmem:[%s9 + $0x10] sm:$0xff]
    %v143 = vld [vmem:[%s9 + $0x18] sm:$0xff]
    %v144 = vld [vmem:[%s9 + $0x20] sm:$0xff]
    %v145 = vld [vmem:[%s9 + $0x28] sm:$0xff]
    %v146 = vld [vmem:[%s9 + $0x30] sm:$0xff]
    %v147 = vld [vmem:[%s9 + $0x38] sm:$0xff]
    %v148 = vld [vmem:[%s0] sm:$0xff]
    %v149 = vld [vmem:[%s0 + $0x8] sm:$0xff]
    %v150 = vld [vmem:[%s0 + $0x10] sm:$0xff]
    %v151 = vld [vmem:[%s0 + $0x18] sm:$0xff]
    %v152 = vld [vmem:[%s0 + $0x20] sm:$0xff]
    %v153 = vld [vmem:[%s0 + $0x28] sm:$0xff]
    %v154 = vld [vmem:[%s0 + $0x30] sm:$0xff]
    %v155 = vld [vmem:[%s0 + $0x38] sm:$0xff]
    %157 = vset.pattern.permute.xlu0 0
    %158 = vperm.xlu0 %157, %v44
    %v159 = vpop.permute.xlu0 %158
    %162 = vset.pattern.permute.xlu0 0
    %163 = vperm.xlu0 %162, %v45
    %v164 = vpop.permute.xlu0 %163
    %167 = vset.pattern.permute.xlu0 0
    %168 = vperm.xlu0 %167, %v46
    %v169 = vpop.permute.xlu0 %168
    %172 = vset.pattern.permute.xlu0 0
    %173 = vperm.xlu0 %172, %v47
    %v174 = vpop.permute.xlu0 %173
    %177 = vset.pattern.permute.xlu0 0
    %178 = vperm.xlu0 %177, %v48
    %v179 = vpop.permute.xlu0 %178
    %182 = vset.pattern.permute.xlu0 0
    %183 = vperm.xlu0 %182, %v49
    %v184 = vpop.permute.xlu0 %183
    %187 = vset.pattern.permute.xlu0 0
    %188 = vperm.xlu0 %187, %v50
    %v189 = vpop.permute.xlu0 %188
    %192 = vset.pattern.permute.xlu0 0
    %193 = vperm.xlu0 %192, %v51
    %v194 = vpop.permute.xlu0 %193
    %vm196 = vcmask 523264
    %v198 = vsel %vm196, %v36, 0
    %v201 = vsel %vm196, %v37, 0
    %v204 = vsel %vm196, %v38, 0
    %v207 = vsel %vm196, %v39, 0
    %v210 = vsel %vm196, %v40, 0
    %v213 = vsel %vm196, %v41, 0
    %v216 = vsel %vm196, %v42, 0
    %v219 = vsel %vm196, %v43, 0
    %221 = vmatprep.subr.mxu0 0.0
    %222 = vmatpush1.msra.mxu0 %v148
    %223 = vmatprep.subr.mxu0 0.0
    %224 = vmatpush1.msra.mxu0 %v149
    %225 = vmatprep.subr.mxu0 0.0
    %226 = vmatpush1.msra.mxu0 %v150
    %227 = vmatprep.subr.mxu0 0.0
    %228 = vmatpush1.msra.mxu0 %v151
    %229 = vmatprep.subr.mxu0 0.0
    %230 = vmatpush1.msra.mxu0 %v152
    %231 = vmatprep.subr.mxu0 0.0
    %232 = vmatpush1.msra.mxu0 %v153
    %233 = vmatprep.subr.mxu0 0.0
    %234 = vmatpush1.msra.mxu0 %v154
    %235 = vmatprep.subr.mxu0 0.0
    %236 = vmatpush1.msra.mxu0 %v155
    %237 = vmatprep.subr.mxu0 0.0
    %238 = vmatpush1.msra.mxu0 0.0
    %239 = vmatprep.subr.mxu0 0.0
    %240 = vmatpush1.msra.mxu0 0.0
    %241 = vmatprep.subr.mxu0 0.0
    %242 = vmatpush1.msra.mxu0 0.0
    %243 = vmatprep.subr.mxu0 0.0
    %244 = vmatpush1.msra.mxu0 0.0
    %245 = vmatprep.subr.mxu0 0.0
    %246 = vmatpush1.msra.mxu0 0.0
    %247 = vmatprep.subr.mxu0 0.0
    %248 = vmatpush1.msra.mxu0 0.0
    %249 = vmatprep.subr.mxu0 0.0
    %250 = vmatpush1.msra.mxu0 0.0
    %251 = vmatprep.subr.mxu0 0.0
    %252 = vmatpush1.msra.mxu0 0.0
    %253 = vmatprep.subr.mxu0 0.0
    %254 = vmatpush1.msra.mxu0 0.0
    %255 = vmatprep.subr.mxu0 0.0
    %256 = vmatpush1.msra.mxu0 0.0
    %257 = vmatprep.subr.mxu0 0.0
    %258 = vmatpush1.msra.mxu0 0.0
    %259 = vmatprep.subr.mxu0 0.0
    %260 = vmatpush1.msra.mxu0 0.0
    %261 = vmatprep.subr.mxu0 0.0
    %262 = vmatpush1.msra.mxu0 0.0
    %263 = vmatprep.subr.mxu0 0.0
    %264 = vmatpush1.msra.mxu0 0.0
    %265 = vmatprep.subr.mxu0 0.0
    %266 = vmatpush1.msra.mxu0 0.0
    %267 = vmatprep.subr.mxu0 0.0
    %268 = vmatpush1.msra.mxu0 0.0
    %269 = vmatprep.subr.mxu0 0.0
    %270 = vmatpush1.msra.mxu0 0.0
    %271 = vmatprep.subr.mxu0 0.0
    %272 = vmatpush1.msra.mxu0 0.0
    %273 = vmatprep.subr.mxu0 0.0
    %274 = vmatpush1.msra.mxu0 0.0
    %275 = vmatprep.subr.mxu0 0.0
    %276 = vmatpush1.msra.mxu0 0.0
    %277 = vmatprep.subr.mxu0 0.0
    %278 = vmatpush1.msra.mxu0 0.0
    %279 = vmatprep.subr.mxu0 0.0
    %280 = vmatpush1.msra.mxu0 0.0
    %281 = vmatprep.subr.mxu0 0.0
    %282 = vmatpush1.msra.mxu0 0.0
    %283 = vmatprep.subr.mxu0 0.0
    %284 = vmatpush1.msra.mxu0 0.0
    %285 = vmatprep.mubr.f32.mxu0 0.0
    %286 = vmatmul.mubr.f32.gmra.mrb[0].mxu0 %v198
    %v287 = vpop.f32.mrb[0].mxu0
    %v288 = vadd.f32 %v159, %v287
    %v289 = vpop.f32.mrb[0].mxu0
    %290 = vmatprep.mubr.f32.mxu0 0.0
    %291 = vmatmul.mubr.f32.gmra.mrb[0].mxu0 %v201
    %v292 = vpop.f32.mrb[0].mxu0
    %v293 = vadd.f32 %v164, %v292
    %v294 = vpop.f32.mrb[0].mxu0
    %295 = vmatprep.mubr.f32.mxu0 0.0
    %296 = vmatmul.mubr.f32.gmra.mrb[0].mxu0 %v204
    %v297 = vpop.f32.mrb[0].mxu0
    %v298 = vadd.f32 %v169, %v297
    %v299 = vpop.f32.mrb[0].mxu0
    %300 = vmatprep.mubr.f32.mxu0 0.0
    %301 = vmatmul.mubr.f32.gmra.mrb[0].mxu0 %v207
    %v302 = vpop.f32.mrb[0].mxu0
    %v303 = vadd.f32 %v174, %v302
    %v304 = vpop.f32.mrb[0].mxu0
    %305 = vmatprep.mubr.f32.mxu0 0.0
    %306 = vmatmul.mubr.f32.gmra.mrb[0].mxu0 %v210
    %v307 = vpop.f32.mrb[0].mxu0
    %v308 = vadd.f32 %v179, %v307
    %v309 = vpop.f32.mrb[0].mxu0
    %310 = vmatprep.mubr.f32.mxu0 0.0
    %311 = vmatmul.mubr.f32.gmra.mrb[0].mxu0 %v213
    %v312 = vpop.f32.mrb[0].mxu0
    %v313 = vadd.f32 %v184, %v312
    %v314 = vpop.f32.mrb[0].mxu0
    %315 = vmatprep.mubr.f32.mxu0 0.0
    %316 = vmatmul.mubr.f32.gmra.mrb[0].mxu0 %v216
    %v317 = vpop.f32.mrb[0].mxu0
    %v318 = vadd.f32 %v189, %v317
    %v319 = vpop.f32.mrb[0].mxu0
    %320 = vmatprep.mubr.f32.mxu0 0.0
    %321 = vmatmul.mubr.f32.gmra.mrb[0].mxu0 %v219
    %v322 = vpop.f32.mrb[0].mxu0
    %v323 = vadd.f32 %v194, %v322
    %v324 = vpop.f32.mrb[0].mxu0
    %325 = vdwg.mxu0
    %v326 = vmul.f32 %v288, 0.5
    %v327 = vmul.f32 %v293, 0.5
    %v328 = vmul.f32 %v298, 0.5
    %v329 = vmul.f32 %v303, 0.5
    %v330 = vmul.f32 %v308, 0.5
    %v331 = vmul.f32 %v313, 0.5
    %v332 = vmul.f32 %v318, 0.5
    %v333 = vmul.f32 %v323, 0.5
    %v334 = vrcp.pop 1.4142135
    %v335 = vmul.f32 %v288, %v334
    %v336 = vmul.f32 %v293, %v334
    %v337 = vmul.f32 %v298, %v334
    %v338 = vmul.f32 %v303, %v334
    %v339 = vmul.f32 %v308, %v334
    %v340 = vmul.f32 %v313, %v334
    %v341 = vmul.f32 %v318, %v334
    %v342 = vmul.f32 %v323, %v334
    %vm343 = vcmp.ge.f32.partialorder %v335, 0.0
    %vm344 = vcmp.ge.f32.partialorder %v336, 0.0
    %vm345 = vcmp.ge.f32.partialorder %v337, 0.0
    %vm346 = vcmp.ge.f32.partialorder %v338, 0.0
    %vm347 = vcmp.ge.f32.partialorder %v339, 0.0
    %vm348 = vcmp.ge.f32.partialorder %v340, 0.0
    %vm349 = vcmp.ge.f32.partialorder %v341, 0.0
    %vm350 = vcmp.ge.f32.partialorder %v342, 0.0
    %v351 = vsel %vm343, 1.0, -1.0
    %v352 = vsel %vm344, 1.0, -1.0
    %v353 = vsel %vm345, 1.0, -1.0
    %v354 = vsel %vm346, 1.0, -1.0
    %v355 = vsel %vm347, 1.0, -1.0
    %v356 = vsel %vm348, 1.0, -1.0
    %v357 = vsel %vm349, 1.0, -1.0
    %v358 = vsel %vm350, 1.0, -1.0
    %v359 = vand.u32 2147483647, %v335
    %v360 = vand.u32 2147483647, %v336
    %v361 = vand.u32 2147483647, %v337
    %v362 = vand.u32 2147483647, %v338
    %v363 = vand.u32 2147483647, %v339
    %v364 = vand.u32 2147483647, %v340
    %v365 = vand.u32 2147483647, %v341
    %v366 = vand.u32 2147483647, %v342
    %v367 = vmul.f32 %v359, 0.3275911
    %v368 = vmul.f32 %v360, 0.3275911
    %v369 = vmul.f32 %v361, 0.3275911
    %v370 = vmul.f32 %v362, 0.3275911
    %v371 = vmul.f32 %v363, 0.3275911
    %v372 = vmul.f32 %v364, 0.3275911
    %v373 = vmul.f32 %v365, 0.3275911
    %v374 = vmul.f32 %v366, 0.3275911
    %v375 = vadd.f32 %v367, 1.0
    %v376 = vadd.f32 %v368, 1.0
    %v377 = vadd.f32 %v369, 1.0
    %v378 = vadd.f32 %v370, 1.0
    %v379 = vadd.f32 %v371, 1.0
    %v380 = vadd.f32 %v372, 1.0
    %v381 = vadd.f32 %v373, 1.0
    %v382 = vadd.f32 %v374, 1.0
    %v383 = vrcp.pop %v375
    %v384 = vmul.f32 1.0, %v383
    %v385 = vrcp.pop %v376
    %v386 = vmul.f32 1.0, %v385
    %v387 = vrcp.pop %v377
    %v388 = vmul.f32 1.0, %v387
    %v389 = vrcp.pop %v378
    %v390 = vmul.f32 1.0, %v389
    %v391 = vrcp.pop %v379
    %v392 = vmul.f32 1.0, %v391
    %v393 = vrcp.pop %v380
    %v394 = vmul.f32 1.0, %v393
    %v395 = vrcp.pop %v381
    %v396 = vmul.f32 1.0, %v395
    %v397 = vrcp.pop %v382
    %v398 = vmul.f32 1.0, %v397
    %v399 = vmul.f32 %v384, 1.0614054
    %v400 = vmul.f32 %v386, 1.0614054
    %v401 = vmul.f32 %v388, 1.0614054
    %v402 = vmul.f32 %v390, 1.0614054
    %v403 = vmul.f32 %v392, 1.0614054
    %v404 = vmul.f32 %v394, 1.0614054
    %v405 = vmul.f32 %v396, 1.0614054
    %v406 = vmul.f32 %v398, 1.0614054
    %v407 = vadd.f32 %v399, -1.4531521
    %v408 = vadd.f32 %v400, -1.4531521
    %v409 = vadd.f32 %v401, -1.4531521
    %v410 = vadd.f32 %v402, -1.4531521
    %v411 = vadd.f32 %v403, -1.4531521
    %v412 = vadd.f32 %v404, -1.4531521
    %v413 = vadd.f32 %v405, -1.4531521
    %v414 = vadd.f32 %v406, -1.4531521
    %v415 = vmul.f32 %v407, %v384
    %v416 = vmul.f32 %v408, %v386
    %v417 = vmul.f32 %v409, %v388
    %v418 = vmul.f32 %v410, %v390
    %v419 = vmul.f32 %v411, %v392
    %v420 = vmul.f32 %v412, %v394
    %v421 = vmul.f32 %v413, %v396
    %v422 = vmul.f32 %v414, %v398
    %v423 = vadd.f32 %v415, 1.4214138
    %v424 = vadd.f32 %v416, 1.4214138
    %v425 = vadd.f32 %v417, 1.4214138
    %v426 = vadd.f32 %v418, 1.4214138
    %v427 = vadd.f32 %v419, 1.4214138
    %v428 = vadd.f32 %v420, 1.4214138
    %v429 = vadd.f32 %v421, 1.4214138
    %v430 = vadd.f32 %v422, 1.4214138
    %v431 = vmul.f32 %v423, %v384
    %v432 = vmul.f32 %v424, %v386
    %v433 = vmul.f32 %v425, %v388
    %v434 = vmul.f32 %v426, %v390
    %v435 = vmul.f32 %v427, %v392
    %v436 = vmul.f32 %v428, %v394
    %v437 = vmul.f32 %v429, %v396
    %v438 = vmul.f32 %v430, %v398
    %v439 = vadd.f32 %v431, -0.28449672
    %v440 = vadd.f32 %v432, -0.28449672
    %v441 = vadd.f32 %v433, -0.28449672
    %v442 = vadd.f32 %v434, -0.28449672
    %v443 = vadd.f32 %v435, -0.28449672
    %v444 = vadd.f32 %v436, -0.28449672
    %v445 = vadd.f32 %v437, -0.28449672
    %v446 = vadd.f32 %v438, -0.28449672
    %v447 = vmul.f32 %v439, %v384
    %v448 = vmul.f32 %v440, %v386
    %v449 = vmul.f32 %v441, %v388
    %v450 = vmul.f32 %v442, %v390
    %v451 = vmul.f32 %v443, %v392
    %v452 = vmul.f32 %v444, %v394
    %v453 = vmul.f32 %v445, %v396
    %v454 = vmul.f32 %v446, %v398
    %v455 = vadd.f32 %v447, 0.2548296
    %v456 = vadd.f32 %v448, 0.2548296
    %v457 = vadd.f32 %v449, 0.2548296
    %v458 = vadd.f32 %v450, 0.2548296
    %v459 = vadd.f32 %v451, 0.2548296
    %v460 = vadd.f32 %v452, 0.2548296
    %v461 = vadd.f32 %v453, 0.2548296
    %v462 = vadd.f32 %v454, 0.2548296
    %v463 = vmul.f32 %v455, %v384
    %v464 = vmul.f32 %v456, %v386
    %v465 = vmul.f32 %v457, %v388
    %v466 = vmul.f32 %v458, %v390
    %v467 = vmul.f32 %v459, %v392
    %v468 = vmul.f32 %v460, %v394
    %v469 = vmul.f32 %v461, %v396
    %v470 = vmul.f32 %v462, %v398
    %v471 = vsub.f32 0.0, %v359
    %v472 = vsub.f32 0.0, %v360
    %v473 = vsub.f32 0.0, %v361
    %v474 = vsub.f32 0.0, %v362
    %v475 = vsub.f32 0.0, %v363
    %v476 = vsub.f32 0.0, %v364
    %v477 = vsub.f32 0.0, %v365
    %v478 = vsub.f32 0.0, %v366
    %v479 = vmul.f32 %v471, %v359
    %v480 = vmul.f32 %v472, %v360
    %v481 = vmul.f32 %v473, %v361
    %v482 = vmul.f32 %v474, %v362
    %v483 = vmul.f32 %v475, %v363
    %v484 = vmul.f32 %v476, %v364
    %v485 = vmul.f32 %v477, %v365
    %v486 = vmul.f32 %v478, %v366
    %v487 = vmul.f32 %v479, 1.442695
    %v488 = vpow.pop %v487
    %v489 = vmul.f32 %v480, 1.442695
    %v490 = vpow.pop %v489
    %v491 = vmul.f32 %v481, 1.442695
    %v492 = vpow.pop %v491
    %v493 = vmul.f32 %v482, 1.442695
    %v494 = vpow.pop %v493
    %v495 = vmul.f32 %v483, 1.442695
    %v496 = vpow.pop %v495
    %v497 = vmul.f32 %v484, 1.442695
    %v498 = vpow.pop %v497
    %v499 = vmul.f32 %v485, 1.442695
    %v500 = vpow.pop %v499
    %v501 = vmul.f32 %v486, 1.442695
    %v502 = vpow.pop %v501
    %v503 = vmul.f32 %v463, %v488
    %v504 = vmul.f32 %v464, %v490
    %v505 = vmul.f32 %v465, %v492
    %v506 = vmul.f32 %v466, %v494
    %v507 = vmul.f32 %v467, %v496
    %v508 = vmul.f32 %v468, %v498
    %v509 = vmul.f32 %v469, %v500
    %v510 = vmul.f32 %v470, %v502
    %v511 = vsub.f32 1.0, %v503
    %v512 = vsub.f32 1.0, %v504
    %v513 = vsub.f32 1.0, %v505
    %v514 = vsub.f32 1.0, %v506
    %v515 = vsub.f32 1.0, %v507
    %v516 = vsub.f32 1.0, %v508
    %v517 = vsub.f32 1.0, %v509
    %v518 = vsub.f32 1.0, %v510
    %v519 = vmul.f32 %v351, %v511
    %v520 = vmul.f32 %v352, %v512
    %v521 = vmul.f32 %v353, %v513
    %v522 = vmul.f32 %v354, %v514
    %v523 = vmul.f32 %v355, %v515
    %v524 = vmul.f32 %v356, %v516
    %v525 = vmul.f32 %v357, %v517
    %v526 = vmul.f32 %v358, %v518
    %v527 = vadd.f32 %v519, 1.0
    %v528 = vadd.f32 %v520, 1.0
    %v529 = vadd.f32 %v521, 1.0
    %v530 = vadd.f32 %v522, 1.0
    %v531 = vadd.f32 %v523, 1.0
    %v532 = vadd.f32 %v524, 1.0
    %v533 = vadd.f32 %v525, 1.0
    %v534 = vadd.f32 %v526, 1.0
    %v535 = vmul.f32 %v326, %v527
    %v536 = vmul.f32 %v327, %v528
    %v537 = vmul.f32 %v328, %v529
    %v538 = vmul.f32 %v329, %v530
    %v539 = vmul.f32 %v330, %v531
    %v540 = vmul.f32 %v331, %v532
    %v541 = vmul.f32 %v332, %v533
    %v542 = vmul.f32 %v333, %v534
    %544 = vset.pattern.permute.xlu0 0
    %545 = vperm.xlu0 %544, %v60
    %v546 = vpop.permute.xlu0 %545
    %549 = vset.pattern.permute.xlu0 0
    %550 = vperm.xlu0 %549, %v61
    %v551 = vpop.permute.xlu0 %550
    %554 = vset.pattern.permute.xlu0 0
    %555 = vperm.xlu0 %554, %v62
    %v556 = vpop.permute.xlu0 %555
    %559 = vset.pattern.permute.xlu0 0
    %560 = vperm.xlu0 %559, %v63
    %v561 = vpop.permute.xlu0 %560
    %564 = vset.pattern.permute.xlu0 0
    %565 = vperm.xlu0 %564, %v64
    %v566 = vpop.permute.xlu0 %565
    %569 = vset.pattern.permute.xlu0 0
    %570 = vperm.xlu0 %569, %v65
    %v571 = vpop.permute.xlu0 %570
    %574 = vset.pattern.permute.xlu0 0
    %575 = vperm.xlu0 %574, %v66
    %v576 = vpop.permute.xlu0 %575
    %579 = vset.pattern.permute.xlu0 0
    %580 = vperm.xlu0 %579, %v67
    %v581 = vpop.permute.xlu0 %580
    %v584 = vsel %vm196, %v52, 0
    %v587 = vsel %vm196, %v53, 0
    %v590 = vsel %vm196, %v54, 0
    %v593 = vsel %vm196, %v55, 0
    %v596 = vsel %vm196, %v56, 0
    %v599 = vsel %vm196, %v57, 0
    %v602 = vsel %vm196, %v58, 0
    %v605 = vsel %vm196, %v59, 0
    %607 = vmatprep.subr.mxu0 0.0
    %608 = vmatpush1.msra.mxu0 %v535
    %609 = vmatprep.subr.mxu0 0.0
    %610 = vmatpush1.msra.mxu0 %v536
    %611 = vmatprep.subr.mxu0 0.0
    %612 = vmatpush1.msra.mxu0 %v537
    %613 = vmatprep.subr.mxu0 0.0
    %614 = vmatpush1.msra.mxu0 %v538
    %615 = vmatprep.subr.mxu0 0.0
    %616 = vmatpush1.msra.mxu0 %v539
    %617 = vmatprep.subr.mxu0 0.0
    %618 = vmatpush1.msra.mxu0 %v540
    %619 = vmatprep.subr.mxu0 0.0
    %620 = vmatpush1.msra.mxu0 %v541
    %621 = vmatprep.subr.mxu0 0.0
    %622 = vmatpush1.msra.mxu0 %v542
    %623 = vmatprep.subr.mxu0 0.0
    %624 = vmatpush1.msra.mxu0 0.0
    %625 = vmatprep.subr.mxu0 0.0
    %626 = vmatpush1.msra.mxu0 0.0
    %627 = vmatprep.subr.mxu0 0.0
    %628 = vmatpush1.msra.mxu0 0.0
    %629 = vmatprep.subr.mxu0 0.0
    %630 = vmatpush1.msra.mxu0 0.0
    %631 = vmatprep.subr.mxu0 0.0
    %632 = vmatpush1.msra.mxu0 0.0
    %633 = vmatprep.subr.mxu0 0.0
    %634 = vmatpush1.msra.mxu0 0.0
    %635 = vmatprep.subr.mxu0 0.0
    %636 = vmatpush1.msra.mxu0 0.0
    %637 = vmatprep.subr.mxu0 0.0
    %638 = vmatpush1.msra.mxu0 0.0
    %639 = vmatprep.subr.mxu0 0.0
    %640 = vmatpush1.msra.mxu0 0.0
    %641 = vmatprep.subr.mxu0 0.0
    %642 = vmatpush1.msra.mxu0 0.0
    %643 = vmatprep.subr.mxu0 0.0
    %644 = vmatpush1.msra.mxu0 0.0
    %645 = vmatprep.subr.mxu0 0.0
    %646 = vmatpush1.msra.mxu0 0.0
    %647 = vmatprep.subr.mxu0 0.0
    %648 = vmatpush1.msra.mxu0 0.0
    %649 = vmatprep.subr.mxu0 0.0
    %650 = vmatpush1.msra.mxu0 0.0
    %651 = vmatprep.subr.mxu0 0.0
    %652 = vmatpush1.msra.mxu0 0.0
    %653 = vmatprep.subr.mxu0 0.0
    %654 = vmatpush1.msra.mxu0 0.0
    %655 = vmatprep.subr.mxu0 0.0
    %656 = vmatpush1.msra.mxu0 0.0
    %657 = vmatprep.subr.mxu0 0.0
    %658 = vmatpush1.msra.mxu0 0.0
    %659 = vmatprep.subr.mxu0 0.0
    %660 = vmatpush1.msra.mxu0 0.0
    %661 = vmatprep.subr.mxu0 0.0
    %662 = vmatpush1.msra.mxu0 0.0
    %663 = vmatprep.subr.mxu0 0.0
    %664 = vmatpush1.msra.mxu0 0.0
    %665 = vmatprep.subr.mxu0 0.0
    %666 = vmatpush1.msra.mxu0 0.0
    %667 = vmatprep.subr.mxu0 0.0
    %668 = vmatpush1.msra.mxu0 0.0
    %669 = vmatprep.subr.mxu0 0.0
    %670 = vmatpush1.msra.mxu0 0.0
    %671 = vmatprep.mubr.f32.mxu0 0.0
    %672 = vmatmul.mubr.f32.gmra.mrb[0].mxu0 %v584
    %v673 = vpop.f32.mrb[0].mxu0
    %v674 = vadd.f32 %v546, %v673
    %v675 = vpop.f32.mrb[0].mxu0
    %676 = vmatprep.mubr.f32.mxu0 0.0
    %677 = vmatmul.mubr.f32.gmra.mrb[0].mxu0 %v587
    %v678 = vpop.f32.mrb[0].mxu0
    %v679 = vadd.f32 %v551, %v678
    %v680 = vpop.f32.mrb[0].mxu0
    %681 = vmatprep.mubr.f32.mxu0 0.0
    %682 = vmatmul.mubr.f32.gmra.mrb[0].mxu0 %v590
    %v683 = vpop.f32.mrb[0].mxu0
    %v684 = vadd.f32 %v556, %v683
    %v685 = vpop.f32.mrb[0].mxu0
    %686 = vmatprep.mubr.f32.mxu0 0.0
    %687 = vmatmul.mubr.f32.gmra.mrb[0].mxu0 %v593
    %v688 = vpop.f32.mrb[0].mxu0
    %v689 = vadd.f32 %v561, %v688
    %v690 = vpop.f32.mrb[0].mxu0
    %691 = vmatprep.mubr.f32.mxu0 0.0
    %692 = vmatmul.mubr.f32.gmra.mrb[0].mxu0 %v596
    %v693 = vpop.f32.mrb[0].mxu0
    %v694 = vadd.f32 %v566, %v693
    %v695 = vpop.f32.mrb[0].mxu0
    %696 = vmatprep.mubr.f32.mxu0 0.0
    %697 = vmatmul.mubr.f32.gmra.mrb[0].mxu0 %v599
    %v698 = vpop.f32.mrb[0].mxu0
    %v699 = vadd.f32 %v571, %v698
    %v700 = vpop.f32.mrb[0].mxu0
    %701 = vmatprep.mubr.f32.mxu0 0.0
    %702 = vmatmul.mubr.f32.gmra.mrb[0].mxu0 %v602
    %v703 = vpop.f32.mrb[0].mxu0
    %v704 = vadd.f32 %v576, %v703
    %v705 = vpop.f32.mrb[0].mxu0
    %706 = vmatprep.mubr.f32.mxu0 0.0
    %707 = vmatmul.mubr.f32.gmra.mrb[0].mxu0 %v605
    %v708 = vpop.f32.mrb[0].mxu0
    %v709 = vadd.f32 %v581, %v708
    %v710 = vpop.f32.mrb[0].mxu0
    %711 = vdwg.mxu0
    %v712 = vadd.f32 %v674, %v148
    %v713 = vadd.f32 %v679, %v149
    %v714 = vadd.f32 %v684, %v150
    %v715 = vadd.f32 %v689, %v151
    %v716 = vadd.f32 %v694, %v152
    %v717 = vadd.f32 %v699, %v153
    %v718 = vadd.f32 %v704, %v154
    %v719 = vadd.f32 %v709, %v155
    %v720 = vmul.f32 %v712, 0.5
    %v721 = vmul.f32 %v713, 0.5
    %v722 = vmul.f32 %v714, 0.5
    %v723 = vmul.f32 %v715, 0.5
    %v724 = vmul.f32 %v716, 0.5
    %v725 = vmul.f32 %v717, 0.5
    %v726 = vmul.f32 %v718, 0.5
    %v727 = vmul.f32 %v719, 0.5
    %v728 = vmul.f32 %v712, %v334
    %v729 = vmul.f32 %v713, %v334
    %v730 = vmul.f32 %v714, %v334
    %v731 = vmul.f32 %v715, %v334
    %v732 = vmul.f32 %v716, %v334
    %v733 = vmul.f32 %v717, %v334
    %v734 = vmul.f32 %v718, %v334
    %v735 = vmul.f32 %v719, %v334
    %vm736 = vcmp.ge.f32.partialorder %v728, 0.0
    %vm737 = vcmp.ge.f32.partialorder %v729, 0.0
    %vm738 = vcmp.ge.f32.partialorder %v730, 0.0
    %vm739 = vcmp.ge.f32.partialorder %v731, 0.0
    %vm740 = vcmp.ge.f32.partialorder %v732, 0.0
    %vm741 = vcmp.ge.f32.partialorder %v733, 0.0
    %vm742 = vcmp.ge.f32.partialorder %v734, 0.0
    %vm743 = vcmp.ge.f32.partialorder %v735, 0.0
    %v744 = vsel %vm736, 1.0, -1.0
    %v745 = vsel %vm737, 1.0, -1.0
    %v746 = vsel %vm738, 1.0, -1.0
    %v747 = vsel %vm739, 1.0, -1.0
    %v748 = vsel %vm740, 1.0, -1.0
    %v749 = vsel %vm741, 1.0, -1.0
    %v750 = vsel %vm742, 1.0, -1.0
    %v751 = vsel %vm743, 1.0, -1.0
    %v752 = vand.u32 2147483647, %v728
    %v753 = vand.u32 2147483647, %v729
    %v754 = vand.u32 2147483647, %v730
    %v755 = vand.u32 2147483647, %v731
    %v756 = vand.u32 2147483647, %v732
    %v757 = vand.u32 2147483647, %v733
    %v758 = vand.u32 2147483647, %v734
    %v759 = vand.u32 2147483647, %v735
    %v760 = vmul.f32 %v752, 0.3275911
    %v761 = vmul.f32 %v753, 0.3275911
    %v762 = vmul.f32 %v754, 0.3275911
    %v763 = vmul.f32 %v755, 0.3275911
    %v764 = vmul.f32 %v756, 0.3275911
    %v765 = vmul.f32 %v757, 0.3275911
    %v766 = vmul.f32 %v758, 0.3275911
    %v767 = vmul.f32 %v759, 0.3275911
    %v768 = vadd.f32 %v760, 1.0
    %v769 = vadd.f32 %v761, 1.0
    %v770 = vadd.f32 %v762, 1.0
    %v771 = vadd.f32 %v763, 1.0
    %v772 = vadd.f32 %v764, 1.0
    %v773 = vadd.f32 %v765, 1.0
    %v774 = vadd.f32 %v766, 1.0
    %v775 = vadd.f32 %v767, 1.0
    %v776 = vrcp.pop %v768
    %v777 = vmul.f32 1.0, %v776
    %v778 = vrcp.pop %v769
    %v779 = vmul.f32 1.0, %v778
    %v780 = vrcp.pop %v770
    %v781 = vmul.f32 1.0, %v780
    %v782 = vrcp.pop %v771
    %v783 = vmul.f32 1.0, %v782
    %v784 = vrcp.pop %v772
    %v785 = vmul.f32 1.0, %v784
    %v786 = vrcp.pop %v773
    %v787 = vmul.f32 1.0, %v786
    %v788 = vrcp.pop %v774
    %v789 = vmul.f32 1.0, %v788
    %v790 = vrcp.pop %v775
    %v791 = vmul.f32 1.0, %v790
    %v792 = vmul.f32 %v777, 1.0614054
    %v793 = vmul.f32 %v779, 1.0614054
    %v794 = vmul.f32 %v781, 1.0614054
    %v795 = vmul.f32 %v783, 1.0614054
    %v796 = vmul.f32 %v785, 1.0614054
    %v797 = vmul.f32 %v787, 1.0614054
    %v798 = vmul.f32 %v789, 1.0614054
    %v799 = vmul.f32 %v791, 1.0614054
    %v800 = vadd.f32 %v792, -1.4531521
    %v801 = vadd.f32 %v793, -1.4531521
    %v802 = vadd.f32 %v794, -1.4531521
    %v803 = vadd.f32 %v795, -1.4531521
    %v804 = vadd.f32 %v796, -1.4531521
    %v805 = vadd.f32 %v797, -1.4531521
    %v806 = vadd.f32 %v798, -1.4531521
    %v807 = vadd.f32 %v799, -1.4531521
    %v808 = vmul.f32 %v800, %v777
    %v809 = vmul.f32 %v801, %v779
    %v810 = vmul.f32 %v802, %v781
    %v811 = vmul.f32 %v803, %v783
    %v812 = vmul.f32 %v804, %v785
    %v813 = vmul.f32 %v805, %v787
    %v814 = vmul.f32 %v806, %v789
    %v815 = vmul.f32 %v807, %v791
    %v816 = vadd.f32 %v808, 1.4214138
    %v817 = vadd.f32 %v809, 1.4214138
    %v818 = vadd.f32 %v810, 1.4214138
    %v819 = vadd.f32 %v811, 1.4214138
    %v820 = vadd.f32 %v812, 1.4214138
    %v821 = vadd.f32 %v813, 1.4214138
    %v822 = vadd.f32 %v814, 1.4214138
    %v823 = vadd.f32 %v815, 1.4214138
    %v824 = vmul.f32 %v816, %v777
    %v825 = vmul.f32 %v817, %v779
    %v826 = vmul.f32 %v818, %v781
    %v827 = vmul.f32 %v819, %v783
    %v828 = vmul.f32 %v820, %v785
    %v829 = vmul.f32 %v821, %v787
    %v830 = vmul.f32 %v822, %v789
    %v831 = vmul.f32 %v823, %v791
    %v832 = vadd.f32 %v824, -0.28449672
    %v833 = vadd.f32 %v825, -0.28449672
    %v834 = vadd.f32 %v826, -0.28449672
    %v835 = vadd.f32 %v827, -0.28449672
    %v836 = vadd.f32 %v828, -0.28449672
    %v837 = vadd.f32 %v829, -0.28449672
    %v838 = vadd.f32 %v830, -0.28449672
    %v839 = vadd.f32 %v831, -0.28449672
    %v840 = vmul.f32 %v832, %v777
    %v841 = vmul.f32 %v833, %v779
    %v842 = vmul.f32 %v834, %v781
    %v843 = vmul.f32 %v835, %v783
    %v844 = vmul.f32 %v836, %v785
    %v845 = vmul.f32 %v837, %v787
    %v846 = vmul.f32 %v838, %v789
    %v847 = vmul.f32 %v839, %v791
    %v848 = vadd.f32 %v840, 0.2548296
    %v849 = vadd.f32 %v841, 0.2548296
    %v850 = vadd.f32 %v842, 0.2548296
    %v851 = vadd.f32 %v843, 0.2548296
    %v852 = vadd.f32 %v844, 0.2548296
    %v853 = vadd.f32 %v845, 0.2548296
    %v854 = vadd.f32 %v846, 0.2548296
    %v855 = vadd.f32 %v847, 0.2548296
    %v856 = vmul.f32 %v848, %v777
    %v857 = vmul.f32 %v849, %v779
    %v858 = vmul.f32 %v850, %v781
    %v859 = vmul.f32 %v851, %v783
    %v860 = vmul.f32 %v852, %v785
    %v861 = vmul.f32 %v853, %v787
    %v862 = vmul.f32 %v854, %v789
    %v863 = vmul.f32 %v855, %v791
    %v864 = vsub.f32 0.0, %v752
    %v865 = vsub.f32 0.0, %v753
    %v866 = vsub.f32 0.0, %v754
    %v867 = vsub.f32 0.0, %v755
    %v868 = vsub.f32 0.0, %v756
    %v869 = vsub.f32 0.0, %v757
    %v870 = vsub.f32 0.0, %v758
    %v871 = vsub.f32 0.0, %v759
    %v872 = vmul.f32 %v864, %v752
    %v873 = vmul.f32 %v865, %v753
    %v874 = vmul.f32 %v866, %v754
    %v875 = vmul.f32 %v867, %v755
    %v876 = vmul.f32 %v868, %v756
    %v877 = vmul.f32 %v869, %v757
    %v878 = vmul.f32 %v870, %v758
    %v879 = vmul.f32 %v871, %v759
    %v880 = vmul.f32 %v872, 1.442695
    %v881 = vpow.pop %v880
    %v882 = vmul.f32 %v873, 1.442695
    %v883 = vpow.pop %v882
    %v884 = vmul.f32 %v874, 1.442695
    %v885 = vpow.pop %v884
    %v886 = vmul.f32 %v875, 1.442695
    %v887 = vpow.pop %v886
    %v888 = vmul.f32 %v876, 1.442695
    %v889 = vpow.pop %v888
    %v890 = vmul.f32 %v877, 1.442695
    %v891 = vpow.pop %v890
    %v892 = vmul.f32 %v878, 1.442695
    %v893 = vpow.pop %v892
    %v894 = vmul.f32 %v879, 1.442695
    %v895 = vpow.pop %v894
    %v896 = vmul.f32 %v856, %v881
    %v897 = vmul.f32 %v857, %v883
    %v898 = vmul.f32 %v858, %v885
    %v899 = vmul.f32 %v859, %v887
    %v900 = vmul.f32 %v860, %v889
    %v901 = vmul.f32 %v861, %v891
    %v902 = vmul.f32 %v862, %v893
    %v903 = vmul.f32 %v863, %v895
    %v904 = vsub.f32 1.0, %v896
    %v905 = vsub.f32 1.0, %v897
    %v906 = vsub.f32 1.0, %v898
    %v907 = vsub.f32 1.0, %v899
    %v908 = vsub.f32 1.0, %v900
    %v909 = vsub.f32 1.0, %v901
    %v910 = vsub.f32 1.0, %v902
    %v911 = vsub.f32 1.0, %v903
    %v912 = vmul.f32 %v744, %v904
    %v913 = vmul.f32 %v745, %v905
    %v914 = vmul.f32 %v746, %v906
    %v915 = vmul.f32 %v747, %v907
    %v916 = vmul.f32 %v748, %v908
    %v917 = vmul.f32 %v749, %v909
    %v918 = vmul.f32 %v750, %v910
    %v919 = vmul.f32 %v751, %v911
    %v920 = vadd.f32 %v912, 1.0
    %v921 = vadd.f32 %v913, 1.0
    %v922 = vadd.f32 %v914, 1.0
    %v923 = vadd.f32 %v915, 1.0
    %v924 = vadd.f32 %v916, 1.0
    %v925 = vadd.f32 %v917, 1.0
    %v926 = vadd.f32 %v918, 1.0
    %v927 = vadd.f32 %v919, 1.0
    %v928 = vmul.f32 %v720, %v920
    %v929 = vmul.f32 %v721, %v921
    %v930 = vmul.f32 %v722, %v922
    %v931 = vmul.f32 %v723, %v923
    %v932 = vmul.f32 %v724, %v924
    %v933 = vmul.f32 %v725, %v925
    %v934 = vmul.f32 %v726, %v926
    %v935 = vmul.f32 %v727, %v927
    %v937 = vsel %vm196, %v68, 0
    %v940 = vsel %vm196, %v69, 0
    %v943 = vsel %vm196, %v70, 0
    %v946 = vsel %vm196, %v71, 0
    %v949 = vsel %vm196, %v72, 0
    %v952 = vsel %vm196, %v73, 0
    %v955 = vsel %vm196, %v74, 0
    %v958 = vsel %vm196, %v75, 0
    %v961 = vsel %vm196, %v76, 0
    %v964 = vsel %vm196, %v77, 0
    %v967 = vsel %vm196, %v78, 0
    %v970 = vsel %vm196, %v79, 0
    %v973 = vsel %vm196, %v80, 0
    %v976 = vsel %vm196, %v81, 0
    %v979 = vsel %vm196, %v82, 0
    %v982 = vsel %vm196, %v83, 0
    %v985 = vsel %vm196, %v84, 0
    %v988 = vsel %vm196, %v85, 0
    %v991 = vsel %vm196, %v86, 0
    %v994 = vsel %vm196, %v87, 0
    %v997 = vsel %vm196, %v88, 0
    %v1000 = vsel %vm196, %v89, 0
    %v1003 = vsel %vm196, %v90, 0
    %v1006 = vsel %vm196, %v91, 0
    %v1009 = vsel %vm196, %v92, 0
    %v1012 = vsel %vm196, %v93, 0
    %v1015 = vsel %vm196, %v94, 0
    %v1018 = vsel %vm196, %v95, 0
    %v1021 = vsel %vm196, %v96, 0
    %v1024 = vsel %vm196, %v97, 0
    %v1027 = vsel %vm196, %v98, 0
    %v1030 = vsel %vm196, %v99, 0
    %v1033 = vsel %vm196, %v100, 0
    %v1036 = vsel %vm196, %v101, 0
    %v1039 = vsel %vm196, %v102, 0
    %v1042 = vsel %vm196, %v103, 0
    %v1045 = vsel %vm196, %v104, 0
    %v1048 = vsel %vm196, %v105, 0
    %v1051 = vsel %vm196, %v106, 0
    %v1054 = vsel %vm196, %v107, 0
    %v1057 = vsel %vm196, %v108, 0
    %v1060 = vsel %vm196, %v109, 0
    %v1063 = vsel %vm196, %v110, 0
    %v1066 = vsel %vm196, %v111, 0
    %v1069 = vsel %vm196, %v112, 0
    %v1072 = vsel %vm196, %v113, 0
    %v1075 = vsel %vm196, %v114, 0
    %v1078 = vsel %vm196, %v115, 0
    %1080 = vmatprep.subr.mxu0 0.0
    %1081 = vmatpush1.msra.mxu0 %v928
    %1082 = vmatprep.subr.mxu0 0.0
    %1083 = vmatpush1.msra.mxu0 %v929
    %1084 = vmatprep.subr.mxu0 0.0
    %1085 = vmatpush1.msra.mxu0 %v930
    %1086 = vmatprep.subr.mxu0 0.0
    %1087 = vmatpush1.msra.mxu0 %v931
    %1088 = vmatprep.subr.mxu0 0.0
    %1089 = vmatpush1.msra.mxu0 %v932
    %1090 = vmatprep.subr.mxu0 0.0
    %1091 = vmatpush1.msra.mxu0 %v933
    %1092 = vmatprep.subr.mxu0 0.0
    %1093 = vmatpush1.msra.mxu0 %v934
    %1094 = vmatprep.subr.mxu0 0.0
    %1095 = vmatpush1.msra.mxu0 %v935
    %1096 = vmatprep.subr.mxu0 0.0
    %1097 = vmatpush1.msra.mxu0 0.0
    %1098 = vmatprep.subr.mxu0 0.0
    %1099 = vmatpush1.msra.mxu0 0.0
    %1100 = vmatprep.subr.mxu0 0.0
    %1101 = vmatpush1.msra.mxu0 0.0
    %1102 = vmatprep.subr.mxu0 0.0
    %1103 = vmatpush1.msra.mxu0 0.0
    %1104 = vmatprep.subr.mxu0 0.0
    %1105 = vmatpush1.msra.mxu0 0.0
    %1106 = vmatprep.subr.mxu0 0.0
    %1107 = vmatpush1.msra.mxu0 0.0
    %1108 = vmatprep.subr.mxu0 0.0
    %1109 = vmatpush1.msra.mxu0 0.0
    %1110 = vmatprep.subr.mxu0 0.0
    %1111 = vmatpush1.msra.mxu0 0.0
    %1112 = vmatprep.subr.mxu0 0.0
    %1113 = vmatpush1.msra.mxu0 0.0
    %1114 = vmatprep.subr.mxu0 0.0
    %1115 = vmatpush1.msra.mxu0 0.0
    %1116 = vmatprep.subr.mxu0 0.0
    %1117 = vmatpush1.msra.mxu0 0.0
    %1118 = vmatprep.subr.mxu0 0.0
    %1119 = vmatpush1.msra.mxu0 0.0
    %1120 = vmatprep.subr.mxu0 0.0
    %1121 = vmatpush1.msra.mxu0 0.0
    %1122 = vmatprep.subr.mxu0 0.0
    %1123 = vmatpush1.msra.mxu0 0.0
    %1124 = vmatprep.subr.mxu0 0.0
    %1125 = vmatpush1.msra.mxu0 0.0
    %1126 = vmatprep.subr.mxu0 0.0
    %1127 = vmatpush1.msra.mxu0 0.0
    %1128 = vmatprep.subr.mxu0 0.0
    %1129 = vmatpush1.msra.mxu0 0.0
    %1130 = vmatprep.subr.mxu0 0.0
    %1131 = vmatpush1.msra.mxu0 0.0
    %1132 = vmatprep.subr.mxu0 0.0
    %1133 = vmatpush1.msra.mxu0 0.0
    %1134 = vmatprep.subr.mxu0 0.0
    %1135 = vmatpush1.msra.mxu0 0.0
    %1136 = vmatprep.subr.mxu0 0.0
    %1137 = vmatpush1.msra.mxu0 0.0
    %1138 = vmatprep.subr.mxu0 0.0
    %1139 = vmatpush1.msra.mxu0 0.0
    %1140 = vmatprep.subr.mxu0 0.0
    %1141 = vmatpush1.msra.mxu0 0.0
    %1142 = vmatprep.subr.mxu0 0.0
    %1143 = vmatpush1.msra.mxu0 0.0
    %1144 = vmatprep.mubr.f32.mxu0 0.0
    %1145 = vmatmul.mubr.f32.gmra.mrb[0].mxu0 %v937
    %v1146 = vpop.f32.mrb[0].mxu0
    %v1147 = vadd.f32 0.0, %v1146
    %v1148 = vpop.f32.mrb[0].mxu0
    %1149 = vmatprep.mubr.f32.mxu0 0.0
    %1150 = vmatmul.mubr.f32.gmra.mrb[0].mxu0 %v940
    %v1151 = vpop.f32.mrb[0].mxu0
    %v1152 = vadd.f32 0.0, %v1151
    %v1153 = vpop.f32.mrb[0].mxu0
    %1154 = vmatprep.mubr.f32.mxu0 0.0
    %1155 = vmatmul.mubr.f32.gmra.mrb[0].mxu0 %v943
    %v1156 = vpop.f32.mrb[0].mxu0
    %v1157 = vadd.f32 0.0, %v1156
    %v1158 = vpop.f32.mrb[0].mxu0
    %1159 = vmatprep.mubr.f32.mxu0 0.0
    %1160 = vmatmul.mubr.f32.gmra.mrb[0].mxu0 %v946
    %v1161 = vpop.f32.mrb[0].mxu0
    %v1162 = vadd.f32 0.0, %v1161
    %v1163 = vpop.f32.mrb[0].mxu0
    %1164 = vmatprep.mubr.f32.mxu0 0.0
    %1165 = vmatmul.mubr.f32.gmra.mrb[0].mxu0 %v949
    %v1166 = vpop.f32.mrb[0].mxu0
    %v1167 = vadd.f32 0.0, %v1166
    %v1168 = vpop.f32.mrb[0].mxu0
    %1169 = vmatprep.mubr.f32.mxu0 0.0
    %1170 = vmatmul.mubr.f32.gmra.mrb[0].mxu0 %v952
    %v1171 = vpop.f32.mrb[0].mxu0
    %v1172 = vadd.f32 0.0, %v1171
    %v1173 = vpop.f32.mrb[0].mxu0
    %1174 = vmatprep.mubr.f32.mxu0 0.0
    %1175 = vmatmul.mubr.f32.gmra.mrb[0].mxu0 %v955
    %v1176 = vpop.f32.mrb[0].mxu0
    %v1177 = vadd.f32 0.0, %v1176
    %v1178 = vpop.f32.mrb[0].mxu0
    %1179 = vmatprep.mubr.f32.mxu0 0.0
    %1180 = vmatmul.mubr.f32.gmra.mrb[0].mxu0 %v958
    %v1181 = vpop.f32.mrb[0].mxu0
    %v1182 = vadd.f32 0.0, %v1181
    %v1183 = vpop.f32.mrb[0].mxu0
    %1184 = vmatprep.mubr.f32.mxu0 0.0
    %1185 = vmatmul.mubr.f32.gmra.mrb[0].mxu0 %v961
    %v1186 = vpop.f32.mrb[0].mxu0
    %v1187 = vadd.f32 0.0, %v1186
    %v1188 = vpop.f32.mrb[0].mxu0
    %1189 = vmatprep.mubr.f32.mxu0 0.0
    %1190 = vmatmul.mubr.f32.gmra.mrb[0].mxu0 %v964
    %v1191 = vpop.f32.mrb[0].mxu0
    %v1192 = vadd.f32 0.0, %v1191
    %v1193 = vpop.f32.mrb[0].mxu0
    %1194 = vmatprep.mubr.f32.mxu0 0.0
    %1195 = vmatmul.mubr.f32.gmra.mrb[0].mxu0 %v967
    %v1196 = vpop.f32.mrb[0].mxu0
    %v1197 = vadd.f32 0.0, %v1196
    %v1198 = vpop.f32.mrb[0].mxu0
    %1199 = vmatprep.mubr.f32.mxu0 0.0
    %1200 = vmatmul.mubr.f32.gmra.mrb[0].mxu0 %v970
    %v1201 = vpop.f32.mrb[0].mxu0
    %v1202 = vadd.f32 0.0, %v1201
    %v1203 = vpop.f32.mrb[0].mxu0
    %1204 = vmatprep.mubr.f32.mxu0 0.0
    %1205 = vmatmul.mubr.f32.gmra.mrb[0].mxu0 %v973
    %v1206 = vpop.f32.mrb[0].mxu0
    %v1207 = vadd.f32 0.0, %v1206
    %v1208 = vpop.f32.mrb[0].mxu0
    %1209 = vmatprep.mubr.f32.mxu0 0.0
    %1210 = vmatmul.mubr.f32.gmra.mrb[0].mxu0 %v976
    %v1211 = vpop.f32.mrb[0].mxu0
    %v1212 = vadd.f32 0.0, %v1211
    %v1213 = vpop.f32.mrb[0].mxu0
    %1214 = vmatprep.mubr.f32.mxu0 0.0
    %1215 = vmatmul.mubr.f32.gmra.mrb[0].mxu0 %v979
    %v1216 = vpop.f32.mrb[0].mxu0
    %v1217 = vadd.f32 0.0, %v1216
    %v1218 = vpop.f32.mrb[0].mxu0
    %1219 = vmatprep.mubr.f32.mxu0 0.0
    %1220 = vmatmul.mubr.f32.gmra.mrb[0].mxu0 %v982
    %v1221 = vpop.f32.mrb[0].mxu0
    %v1222 = vadd.f32 0.0, %v1221
    %v1223 = vpop.f32.mrb[0].mxu0
    %1224 = vmatprep.mubr.f32.mxu0 0.0
    %1225 = vmatmul.mubr.f32.gmra.mrb[0].mxu0 %v985
    %v1226 = vpop.f32.mrb[0].mxu0
    %v1227 = vadd.f32 0.0, %v1226
    %v1228 = vpop.f32.mrb[0].mxu0
    %1229 = vmatprep.mubr.f32.mxu0 0.0
    %1230 = vmatmul.mubr.f32.gmra.mrb[0].mxu0 %v988
    %v1231 = vpop.f32.mrb[0].mxu0
    %v1232 = vadd.f32 0.0, %v1231
    %v1233 = vpop.f32.mrb[0].mxu0
    %1234 = vmatprep.mubr.f32.mxu0 0.0
    %1235 = vmatmul.mubr.f32.gmra.mrb[0].mxu0 %v991
    %v1236 = vpop.f32.mrb[0].mxu0
    %v1237 = vadd.f32 0.0, %v1236
    %v1238 = vpop.f32.mrb[0].mxu0
    %1239 = vmatprep.mubr.f32.mxu0 0.0
    %1240 = vmatmul.mubr.f32.gmra.mrb[0].mxu0 %v994
    %v1241 = vpop.f32.mrb[0].mxu0
    %v1242 = vadd.f32 0.0, %v1241
    %v1243 = vpop.f32.mrb[0].mxu0
    %1244 = vmatprep.mubr.f32.mxu0 0.0
    %1245 = vmatmul.mubr.f32.gmra.mrb[0].mxu0 %v997
    %v1246 = vpop.f32.mrb[0].mxu0
    %v1247 = vadd.f32 0.0, %v1246
    %v1248 = vpop.f32.mrb[0].mxu0
    %1249 = vmatprep.mubr.f32.mxu0 0.0
    %1250 = vmatmul.mubr.f32.gmra.mrb[0].mxu0 %v1000
    %v1251 = vpop.f32.mrb[0].mxu0
    %v1252 = vadd.f32 0.0, %v1251
    %v1253 = vpop.f32.mrb[0].mxu0
    %1254 = vmatprep.mubr.f32.mxu0 0.0
    %1255 = vmatmul.mubr.f32.gmra.mrb[0].mxu0 %v1003
    %v1256 = vpop.f32.mrb[0].mxu0
    %v1257 = vadd.f32 0.0, %v1256
    %v1258 = vpop.f32.mrb[0].mxu0
    %1259 = vmatprep.mubr.f32.mxu0 0.0
    %1260 = vmatmul.mubr.f32.gmra.mrb[0].mxu0 %v1006
    %v1261 = vpop.f32.mrb[0].mxu0
    %v1262 = vadd.f32 0.0, %v1261
    %v1263 = vpop.f32.mrb[0].mxu0
    %1264 = vmatprep.mubr.f32.mxu0 0.0
    %1265 = vmatmul.mubr.f32.gmra.mrb[0].mxu0 %v1009
    %v1266 = vpop.f32.mrb[0].mxu0
    %v1267 = vadd.f32 0.0, %v1266
    %v1268 = vpop.f32.mrb[0].mxu0
    %1269 = vmatprep.mubr.f32.mxu0 0.0
    %1270 = vmatmul.mubr.f32.gmra.mrb[0].mxu0 %v1012
    %v1271 = vpop.f32.mrb[0].mxu0
    %v1272 = vadd.f32 0.0, %v1271
    %v1273 = vpop.f32.mrb[0].mxu0
    %1274 = vmatprep.mubr.f32.mxu0 0.0
    %1275 = vmatmul.mubr.f32.gmra.mrb[0].mxu0 %v1015
    %v1276 = vpop.f32.mrb[0].mxu0
    %v1277 = vadd.f32 0.0, %v1276
    %v1278 = vpop.f32.mrb[0].mxu0
    %1279 = vmatprep.mubr.f32.mxu0 0.0
    %1280 = vmatmul.mubr.f32.gmra.mrb[0].mxu0 %v1018
    %v1281 = vpop.f32.mrb[0].mxu0
    %v1282 = vadd.f32 0.0, %v1281
    %v1283 = vpop.f32.mrb[0].mxu0
    %1284 = vmatprep.mubr.f32.mxu0 0.0
    %1285 = vmatmul.mubr.f32.gmra.mrb[0].mxu0 %v1021
    %v1286 = vpop.f32.mrb[0].mxu0
    %v1287 = vadd.f32 0.0, %v1286
    %v1288 = vpop.f32.mrb[0].mxu0
    %1289 = vmatprep.mubr.f32.mxu0 0.0
    %1290 = vmatmul.mubr.f32.gmra.mrb[0].mxu0 %v1024
    %v1291 = vpop.f32.mrb[0].mxu0
    %v1292 = vadd.f32 0.0, %v1291
    %v1293 = vpop.f32.mrb[0].mxu0
    %1294 = vmatprep.mubr.f32.mxu0 0.0
    %1295 = vmatmul.mubr.f32.gmra.mrb[0].mxu0 %v1027
    %v1296 = vpop.f32.mrb[0].mxu0
    %v1297 = vadd.f32 0.0, %v1296
    %v1298 = vpop.f32.mrb[0].mxu0
    %1299 = vmatprep.mubr.f32.mxu0 0.0
    %1300 = vmatmul.mubr.f32.gmra.mrb[0].mxu0 %v1030
    %v1301 = vpop.f32.mrb[0].mxu0
    %v1302 = vadd.f32 0.0, %v1301
    %v1303 = vpop.f32.mrb[0].mxu0
    %1304 = vmatprep.mubr.f32.mxu0 0.0
    %1305 = vmatmul.mubr.f32.gmra.mrb[0].mxu0 %v1033
    %v1306 = vpop.f32.mrb[0].mxu0
    %v1307 = vadd.f32 0.0, %v1306
    %v1308 = vpop.f32.mrb[0].mxu0
    %1309 = vmatprep.mubr.f32.mxu0 0.0
    %1310 = vmatmul.mubr.f32.gmra.mrb[0].mxu0 %v1036
    %v1311 = vpop.f32.mrb[0].mxu0
    %v1312 = vadd.f32 0.0, %v1311
    %v1313 = vpop.f32.mrb[0].mxu0
    %1314 = vmatprep.mubr.f32.mxu0 0.0
    %1315 = vmatmul.mubr.f32.gmra.mrb[0].mxu0 %v1039
    %v1316 = vpop.f32.mrb[0].mxu0
    %v1317 = vadd.f32 0.0, %v1316
    %v1318 = vpop.f32.mrb[0].mxu0
    %1319 = vmatprep.mubr.f32.mxu0 0.0
    %1320 = vmatmul.mubr.f32.gmra.mrb[0].mxu0 %v1042
    %v1321 = vpop.f32.mrb[0].mxu0
    %v1322 = vadd.f32 0.0, %v1321
    %v1323 = vpop.f32.mrb[0].mxu0
    %1324 = vmatprep.mubr.f32.mxu0 0.0
    %1325 = vmatmul.mubr.f32.gmra.mrb[0].mxu0 %v1045
    %v1326 = vpop.f32.mrb[0].mxu0
    %v1327 = vadd.f32 0.0, %v1326
    %v1328 = vpop.f32.mrb[0].mxu0
    %1329 = vmatprep.mubr.f32.mxu0 0.0
    %1330 = vmatmul.mubr.f32.gmra.mrb[0].mxu0 %v1048
    %v1331 = vpop.f32.mrb[0].mxu0
    %v1332 = vadd.f32 0.0, %v1331
    %v1333 = vpop.f32.mrb[0].mxu0
    %1334 = vmatprep.mubr.f32.mxu0 0.0
    %1335 = vmatmul.mubr.f32.gmra.mrb[0].mxu0 %v1051
    %v1336 = vpop.f32.mrb[0].mxu0
    %v1337 = vadd.f32 0.0, %v1336
    %v1338 = vpop.f32.mrb[0].mxu0
    %1339 = vmatprep.mubr.f32.mxu0 0.0
    %1340 = vmatmul.mubr.f32.gmra.mrb[0].mxu0 %v1054
    %v1341 = vpop.f32.mrb[0].mxu0
    %v1342 = vadd.f32 0.0, %v1341
    %v1343 = vpop.f32.mrb[0].mxu0
    %1344 = vmatprep.mubr.f32.mxu0 0.0
    %1345 = vmatmul.mubr.f32.gmra.mrb[0].mxu0 %v1057
    %v1346 = vpop.f32.mrb[0].mxu0
    %v1347 = vadd.f32 0.0, %v1346
    %v1348 = vpop.f32.mrb[0].mxu0
    %1349 = vmatprep.mubr.f32.mxu0 0.0
    %1350 = vmatmul.mubr.f32.gmra.mrb[0].mxu0 %v1060
    %v1351 = vpop.f32.mrb[0].mxu0
    %v1352 = vadd.f32 0.0, %v1351
    %v1353 = vpop.f32.mrb[0].mxu0
    %1354 = vmatprep.mubr.f32.mxu0 0.0
    %1355 = vmatmul.mubr.f32.gmra.mrb[0].mxu0 %v1063
    %v1356 = vpop.f32.mrb[0].mxu0
    %v1357 = vadd.f32 0.0, %v1356
    %v1358 = vpop.f32.mrb[0].mxu0
    %1359 = vmatprep.mubr.f32.mxu0 0.0
    %1360 = vmatmul.mubr.f32.gmra.mrb[0].mxu0 %v1066
    %v1361 = vpop.f32.mrb[0].mxu0
    %v1362 = vadd.f32 0.0, %v1361
    %v1363 = vpop.f32.mrb[0].mxu0
    %1364 = vmatprep.mubr.f32.mxu0 0.0
    %1365 = vmatmul.mubr.f32.gmra.mrb[0].mxu0 %v1069
    %v1366 = vpop.f32.mrb[0].mxu0
    %v1367 = vadd.f32 0.0, %v1366
    %v1368 = vpop.f32.mrb[0].mxu0
    %1369 = vmatprep.mubr.f32.mxu0 0.0
    %1370 = vmatmul.mubr.f32.gmra.mrb[0].mxu0 %v1072
    %v1371 = vpop.f32.mrb[0].mxu0
    %v1372 = vadd.f32 0.0, %v1371
    %v1373 = vpop.f32.mrb[0].mxu0
    %1374 = vmatprep.mubr.f32.mxu0 0.0
    %1375 = vmatmul.mubr.f32.gmra.mrb[0].mxu0 %v1075
    %v1376 = vpop.f32.mrb[0].mxu0
    %v1377 = vadd.f32 0.0, %v1376
    %v1378 = vpop.f32.mrb[0].mxu0
    %1379 = vmatprep.mubr.f32.mxu0 0.0
    %1380 = vmatmul.mubr.f32.gmra.mrb[0].mxu0 %v1078
    %v1381 = vpop.f32.mrb[0].mxu0
    %v1382 = vadd.f32 0.0, %v1381
    %v1383 = vpop.f32.mrb[0].mxu0
    %1384 = vdwg.mxu0
    %1385 = vxpose.xlu0.b32.start [1/16] %v1227, 128
    %1386 = vxpose.xlu0.b32.cont [2/16] %v1232, 128
    %1387 = vxpose.xlu0.b32.cont [3/16] %v1237, 128
    %1388 = vxpose.xlu0.b32.cont [4/16] %v1242, 128
    %1389 = vxpose.xlu0.b32.cont [5/16] %v1247, 128
    %1390 = vxpose.xlu0.b32.cont [6/16] %v1252, 128
    %1391 = vxpose.xlu0.b32.cont [7/16] %v1257, 128
    %1392 = vxpose.xlu0.b32.cont [8/16] %v1262, 128
    %1393 = vxpose.xlu0.b32.cont [9/16] %v1267, 128
    %1394 = vxpose.xlu0.b32.cont [10/16] %v1272, 128
    %1395 = vxpose.xlu0.b32.cont [11/16] %v1277, 128
    %1396 = vxpose.xlu0.b32.cont [12/16] %v1282, 128
    %1397 = vxpose.xlu0.b32.cont [13/16] %v1287, 128
    %1398 = vxpose.xlu0.b32.cont [14/16] %v1292, 128
    %1399 = vxpose.xlu0.b32.cont [15/16] %v1297, 128
    %1400 = vxpose.xlu0.b32.end [16/16] %v1302, 128
    %v1401 = vpop.trf.xlu0
    %v1402 = vpop.trf.xlu0
    %v1403 = vpop.trf.xlu0
    %v1404 = vpop.trf.xlu0
    %v1405 = vpop.trf.xlu0
    %v1406 = vpop.trf.xlu0
    %v1407 = vpop.trf.xlu0
    %v1408 = vpop.trf.xlu0
    %v1409 = vpop.trf.xlu0
    %v1410 = vpop.trf.xlu0
    %v1411 = vpop.trf.xlu0
    %v1412 = vpop.trf.xlu0
    %v1413 = vpop.trf.xlu0
    %v1414 = vpop.trf.xlu0
    %v1415 = vpop.trf.xlu0
    %v1416 = vpop.trf.xlu0
    %vm1417 = vcmask 261120
    %v1419 = vsel %vm1417, %v1401, 0
    %v1422 = vsel %vm1417, %v1402, 0
    %v1425 = vsel %vm1417, %v1403, 0
    %v1428 = vsel %vm1417, %v1404, 0
    %v1431 = vsel %vm1417, %v1405, 0
    %v1434 = vsel %vm1417, %v1406, 0
    %v1437 = vsel %vm1417, %v1407, 0
    %v1440 = vsel %vm1417, %v1408, 0
    %v1443 = vsel %vm1417, %v1409, 0
    %v1446 = vsel %vm1417, %v1410, 0
    %v1449 = vsel %vm1417, %v1411, 0
    %v1452 = vsel %vm1417, %v1412, 0
    %v1455 = vsel %vm1417, %v1413, 0
    %v1458 = vsel %vm1417, %v1414, 0
    %v1461 = vsel %vm1417, %v1415, 0
    %v1464 = vsel %vm1417, %v1416, 0
    %1466 = vmatprep.subr.mxu0 0.0
    %1467 = vmatpush1.msra.mxu0 %v1147
    %1468 = vmatprep.subr.mxu0 0.0
    %1469 = vmatpush1.msra.mxu0 %v1152
    %1470 = vmatprep.subr.mxu0 0.0
    %1471 = vmatpush1.msra.mxu0 %v1157
    %1472 = vmatprep.subr.mxu0 0.0
    %1473 = vmatpush1.msra.mxu0 %v1162
    %1474 = vmatprep.subr.mxu0 0.0
    %1475 = vmatpush1.msra.mxu0 0.0
    %1476 = vmatprep.subr.mxu0 0.0
    %1477 = vmatpush1.msra.mxu0 0.0
    %1478 = vmatprep.subr.mxu0 0.0
    %1479 = vmatpush1.msra.mxu0 0.0
    %1480 = vmatprep.subr.mxu0 0.0
    %1481 = vmatpush1.msra.mxu0 0.0
    %1482 = vmatprep.subr.mxu0 0.0
    %1483 = vmatpush1.msra.mxu0 0.0
    %1484 = vmatprep.subr.mxu0 0.0
    %1485 = vmatpush1.msra.mxu0 0.0
    %1486 = vmatprep.subr.mxu0 0.0
    %1487 = vmatpush1.msra.mxu0 0.0
    %1488 = vmatprep.subr.mxu0 0.0
    %1489 = vmatpush1.msra.mxu0 0.0
    %1490 = vmatprep.subr.mxu0 0.0
    %1491 = vmatpush1.msra.mxu0 0.0
    %1492 = vmatprep.subr.mxu0 0.0
    %1493 = vmatpush1.msra.mxu0 0.0
    %1494 = vmatprep.subr.mxu0 0.0
    %1495 = vmatpush1.msra.mxu0 0.0
    %1496 = vmatprep.subr.mxu0 0.0
    %1497 = vmatpush1.msra.mxu0 0.0
    %1498 = vmatprep.subr.mxu0 0.0
    %1499 = vmatpush1.msra.mxu0 0.0
    %1500 = vmatprep.subr.mxu0 0.0
    %1501 = vmatpush1.msra.mxu0 0.0
    %1502 = vmatprep.subr.mxu0 0.0
    %1503 = vmatpush1.msra.mxu0 0.0
    %1504 = vmatprep.subr.mxu0 0.0
    %1505 = vmatpush1.msra.mxu0 0.0
    %1506 = vmatprep.subr.mxu0 0.0
    %1507 = vmatpush1.msra.mxu0 0.0
    %1508 = vmatprep.subr.mxu0 0.0
    %1509 = vmatpush1.msra.mxu0 0.0
    %1510 = vmatprep.subr.mxu0 0.0
    %1511 = vmatpush1.msra.mxu0 0.0
    %1512 = vmatprep.subr.mxu0 0.0
    %1513 = vmatpush1.msra.mxu0 0.0
    %1514 = vmatprep.subr.mxu0 0.0
    %1515 = vmatpush1.msra.mxu0 0.0
    %1516 = vmatprep.subr.mxu0 0.0
    %1517 = vmatpush1.msra.mxu0 0.0
    %1518 = vmatprep.subr.mxu0 0.0
    %1519 = vmatpush1.msra.mxu0 0.0
    %1520 = vmatprep.subr.mxu0 0.0
    %1521 = vmatpush1.msra.mxu0 0.0
    %1522 = vmatprep.subr.mxu0 0.0
    %1523 = vmatpush1.msra.mxu0 0.0
    %1524 = vmatprep.subr.mxu0 0.0
    %1525 = vmatpush1.msra.mxu0 0.0
    %1526 = vmatprep.subr.mxu0 0.0
    %1527 = vmatpush1.msra.mxu0 0.0
    %1528 = vmatprep.subr.mxu0 0.0
    %1529 = vmatpush1.msra.mxu0 0.0
    %1530 = vmatprep.mubr.f32.mxu0 0.0
    %1531 = vmatmul.mubr.f32.gmra.mrb[0].mxu0 %v1419
    %v1532 = vpop.f32.mrb[0].mxu0
    %v1533 = vadd.f32 0.0, %v1532
    %v1534 = vpop.f32.mrb[0].mxu0
    %1535 = vmatprep.mubr.f32.mxu0 0.0
    %1536 = vmatmul.mubr.f32.gmra.mrb[0].mxu0 %v1422
    %v1537 = vpop.f32.mrb[0].mxu0
    %v1538 = vadd.f32 0.0, %v1537
    %v1539 = vpop.f32.mrb[0].mxu0
    %1540 = vmatprep.mubr.f32.mxu0 0.0
    %1541 = vmatmul.mubr.f32.gmra.mrb[0].mxu0 %v1425
    %v1542 = vpop.f32.mrb[0].mxu0
    %v1543 = vadd.f32 0.0, %v1542
    %v1544 = vpop.f32.mrb[0].mxu0
    %1545 = vmatprep.mubr.f32.mxu0 0.0
    %1546 = vmatmul.mubr.f32.gmra.mrb[0].mxu0 %v1428
    %v1547 = vpop.f32.mrb[0].mxu0
    %v1548 = vadd.f32 0.0, %v1547
    %v1549 = vpop.f32.mrb[0].mxu0
    %1550 = vmatprep.mubr.f32.mxu0 0.0
    %1551 = vmatmul.mubr.f32.gmra.mrb[0].mxu0 %v1431
    %v1552 = vpop.f32.mrb[0].mxu0
    %v1553 = vadd.f32 0.0, %v1552
    %v1554 = vpop.f32.mrb[0].mxu0
    %1555 = vmatprep.mubr.f32.mxu0 0.0
    %1556 = vmatmul.mubr.f32.gmra.mrb[0].mxu0 %v1434
    %v1557 = vpop.f32.mrb[0].mxu0
    %v1558 = vadd.f32 0.0, %v1557
    %v1559 = vpop.f32.mrb[0].mxu0
    %1560 = vmatprep.mubr.f32.mxu0 0.0
    %1561 = vmatmul.mubr.f32.gmra.mrb[0].mxu0 %v1437
    %v1562 = vpop.f32.mrb[0].mxu0
    %v1563 = vadd.f32 0.0, %v1562
    %v1564 = vpop.f32.mrb[0].mxu0
    %1565 = vmatprep.mubr.f32.mxu0 0.0
    %1566 = vmatmul.mubr.f32.gmra.mrb[0].mxu0 %v1440
    %v1567 = vpop.f32.mrb[0].mxu0
    %v1568 = vadd.f32 0.0, %v1567
    %v1569 = vpop.f32.mrb[0].mxu0
    %1570 = vmatprep.mubr.f32.mxu0 0.0
    %1571 = vmatmul.mubr.f32.gmra.mrb[0].mxu0 %v1443
    %v1572 = vpop.f32.mrb[0].mxu0
    %v1573 = vadd.f32 0.0, %v1572
    %v1574 = vpop.f32.mrb[0].mxu0
    %1575 = vmatprep.mubr.f32.mxu0 0.0
    %1576 = vmatmul.mubr.f32.gmra.mrb[0].mxu0 %v1446
    %v1577 = vpop.f32.mrb[0].mxu0
    %v1578 = vadd.f32 0.0, %v1577
    %v1579 = vpop.f32.mrb[0].mxu0
    %1580 = vmatprep.mubr.f32.mxu0 0.0
    %1581 = vmatmul.mubr.f32.gmra.mrb[0].mxu0 %v1449
    %v1582 = vpop.f32.mrb[0].mxu0
    %v1583 = vadd.f32 0.0, %v1582
    %v1584 = vpop.f32.mrb[0].mxu0
    %1585 = vmatprep.mubr.f32.mxu0 0.0
    %1586 = vmatmul.mubr.f32.gmra.mrb[0].mxu0 %v1452
    %v1587 = vpop.f32.mrb[0].mxu0
    %v1588 = vadd.f32 0.0, %v1587
    %v1589 = vpop.f32.mrb[0].mxu0
    %1590 = vmatprep.mubr.f32.mxu0 0.0
    %1591 = vmatmul.mubr.f32.gmra.mrb[0].mxu0 %v1455
    %v1592 = vpop.f32.mrb[0].mxu0
    %v1593 = vadd.f32 0.0, %v1592
    %v1594 = vpop.f32.mrb[0].mxu0
    %1595 = vmatprep.mubr.f32.mxu0 0.0
    %1596 = vmatmul.mubr.f32.gmra.mrb[0].mxu0 %v1458
    %v1597 = vpop.f32.mrb[0].mxu0
    %v1598 = vadd.f32 0.0, %v1597
    %v1599 = vpop.f32.mrb[0].mxu0
    %1600 = vmatprep.mubr.f32.mxu0 0.0
    %1601 = vmatmul.mubr.f32.gmra.mrb[0].mxu0 %v1461
    %v1602 = vpop.f32.mrb[0].mxu0
    %v1603 = vadd.f32 0.0, %v1602
    %v1604 = vpop.f32.mrb[0].mxu0
    %1605 = vmatprep.mubr.f32.mxu0 0.0
    %1606 = vmatmul.mubr.f32.gmra.mrb[0].mxu0 %v1464
    %v1607 = vpop.f32.mrb[0].mxu0
    %v1608 = vadd.f32 0.0, %v1607
    %v1609 = vpop.f32.mrb[0].mxu0
    %1610 = vdwg.mxu0
    %v1611 = vmul.f32 %v1533, 0.17677669
    %v1612 = vmul.f32 %v1538, 0.17677669
    %v1613 = vmul.f32 %v1543, 0.17677669
    %v1614 = vmul.f32 %v1548, 0.17677669
    %v1615 = vmul.f32 %v1553, 0.17677669
    %v1616 = vmul.f32 %v1558, 0.17677669
    %v1617 = vmul.f32 %v1563, 0.17677669
    %v1618 = vmul.f32 %v1568, 0.17677669
    %v1619 = vmul.f32 %v1573, 0.17677669
    %v1620 = vmul.f32 %v1578, 0.17677669
    %v1621 = vmul.f32 %v1583, 0.17677669
    %v1622 = vmul.f32 %v1588, 0.17677669
    %v1623 = vmul.f32 %v1593, 0.17677669
    %v1624 = vmul.f32 %v1598, 0.17677669
    %v1625 = vmul.f32 %v1603, 0.17677669
    %v1626 = vmul.f32 %v1608, 0.17677669
    %v1627 = vmax.f32 %v1611, %v1615
    %v1628 = vmax.f32 %v1612, %v1616
    %v1629 = vmax.f32 %v1613, %v1617
    %v1630 = vmax.f32 %v1614, %v1618
    %v1631 = vmax.f32 %v1627, %v1619
    %v1632 = vmax.f32 %v1628, %v1620
    %v1633 = vmax.f32 %v1629, %v1621
    %v1634 = vmax.f32 %v1630, %v1622
    %v1635 = vmax.f32 %v1631, %v1623
    %v1636 = vmax.f32 %v1632, %v1624
    %v1637 = vmax.f32 %v1633, %v1625
    %v1638 = vmax.f32 %v1634, %v1626
    %v1639 = vmax.f32 %v1635, %v1636
    %v1640 = vmax.f32 %v1637, %v1638
    %v1641 = vmax.f32 %v1639, %v1640
    %v1642 = vrot.slane %v1641, 4
    %v1643 = vmax.f32 %v1641, %v1642
    %v1644 = vrot.slane %v1643, 2
    %v1645 = vmax.f32 %v1643, %v1644
    %v1646 = vrot.slane %v1645, 1
    %v1647 = vmax.f32 %v1645, %v1646
    %v1648 = vsub.f32 %v1611, %v1647
    %v1649 = vsub.f32 %v1612, %v1647
    %v1650 = vsub.f32 %v1613, %v1647
    %v1651 = vsub.f32 %v1614, %v1647
    %v1652 = vsub.f32 %v1615, %v1647
    %v1653 = vsub.f32 %v1616, %v1647
    %v1654 = vsub.f32 %v1617, %v1647
    %v1655 = vsub.f32 %v1618, %v1647
    %v1656 = vsub.f32 %v1619, %v1647
    %v1657 = vsub.f32 %v1620, %v1647
    %v1658 = vsub.f32 %v1621, %v1647
    %v1659 = vsub.f32 %v1622, %v1647
    %v1660 = vsub.f32 %v1623, %v1647
    %v1661 = vsub.f32 %v1624, %v1647
    %v1662 = vsub.f32 %v1625, %v1647
    %v1663 = vsub.f32 %v1626, %v1647
    %v1664 = vmul.f32 %v1648, 1.442695
    %v1665 = vpow.pop %v1664
    %v1666 = vmul.f32 %v1649, 1.442695
    %v1667 = vpow.pop %v1666
    %v1668 = vmul.f32 %v1650, 1.442695
    %v1669 = vpow.pop %v1668
    %v1670 = vmul.f32 %v1651, 1.442695
    %v1671 = vpow.pop %v1670
    %v1672 = vmul.f32 %v1652, 1.442695
    %v1673 = vpow.pop %v1672
    %v1674 = vmul.f32 %v1653, 1.442695
    %v1675 = vpow.pop %v1674
    %v1676 = vmul.f32 %v1654, 1.442695
    %v1677 = vpow.pop %v1676
    %v1678 = vmul.f32 %v1655, 1.442695
    %v1679 = vpow.pop %v1678
    %v1680 = vmul.f32 %v1656, 1.442695
    %v1681 = vpow.pop %v1680
    %v1682 = vmul.f32 %v1657, 1.442695
    %v1683 = vpow.pop %v1682
    %v1684 = vmul.f32 %v1658, 1.442695
    %v1685 = vpow.pop %v1684
    %v1686 = vmul.f32 %v1659, 1.442695
    %v1687 = vpow.pop %v1686
    %v1688 = vmul.f32 %v1660, 1.442695
    %v1689 = vpow.pop %v1688
    %v1690 = vmul.f32 %v1661, 1.442695
    %v1691 = vpow.pop %v1690
    %v1692 = vmul.f32 %v1662, 1.442695
    %v1693 = vpow.pop %v1692
    %v1694 = vmul.f32 %v1663, 1.442695
    %v1695 = vpow.pop %v1694
    %v1696 = vadd.f32 %v1665, %v1667
    %v1697 = vadd.f32 %v1696, %v1669
    %v1698 = vadd.f32 %v1697, %v1671
    %v1699 = vadd.f32 %v1698, %v1673
    %v1700 = vadd.f32 %v1699, %v1675
    %v1701 = vadd.f32 %v1700, %v1677
    %v1702 = vadd.f32 %v1701, %v1679
    %v1703 = vadd.f32 %v1702, %v1681
    %v1704 = vadd.f32 %v1703, %v1683
    %v1705 = vadd.f32 %v1704, %v1685
    %v1706 = vadd.f32 %v1705, %v1687
    %v1707 = vadd.f32 %v1706, %v1689
    %v1708 = vadd.f32 %v1707, %v1691
    %v1709 = vadd.f32 %v1708, %v1693
    %v1710 = vadd.f32 %v1709, %v1695
    %v1711 = vrot.slane %v1710, 4
    %v1712 = vadd.f32 %v1710, %v1711
    %v1713 = vrot.slane %v1712, 2
    %v1714 = vadd.f32 %v1712, %v1713
    %v1715 = vrot.slane %v1714, 1
    %v1716 = vadd.f32 %v1714, %v1715
    %1717 = vmatprep.subr.mxu0 0.0
    %1718 = vmatpush1.msra.mxu0 %v1665
    %1719 = vmatprep.subr.mxu0 0.0
    %1720 = vmatpush1.msra.mxu0 %v1667
    %1721 = vmatprep.subr.mxu0 0.0
    %1722 = vmatpush1.msra.mxu0 %v1669
    %1723 = vmatprep.subr.mxu0 0.0
    %1724 = vmatpush1.msra.mxu0 %v1671
    %1725 = vmatprep.subr.mxu0 0.0
    %1726 = vmatpush1.msra.mxu0 %v1673
    %1727 = vmatprep.subr.mxu0 0.0
    %1728 = vmatpush1.msra.mxu0 %v1675
    %1729 = vmatprep.subr.mxu0 0.0
    %1730 = vmatpush1.msra.mxu0 %v1677
    %1731 = vmatprep.subr.mxu0 0.0
    %1732 = vmatpush1.msra.mxu0 %v1679
    %1733 = vmatprep.subr.mxu0 0.0
    %1734 = vmatpush1.msra.mxu0 %v1681
    %1735 = vmatprep.subr.mxu0 0.0
    %1736 = vmatpush1.msra.mxu0 %v1683
    %1737 = vmatprep.subr.mxu0 0.0
    %1738 = vmatpush1.msra.mxu0 %v1685
    %1739 = vmatprep.subr.mxu0 0.0
    %1740 = vmatpush1.msra.mxu0 %v1687
    %1741 = vmatprep.subr.mxu0 0.0
    %1742 = vmatpush1.msra.mxu0 %v1689
    %1743 = vmatprep.subr.mxu0 0.0
    %1744 = vmatpush1.msra.mxu0 %v1691
    %1745 = vmatprep.subr.mxu0 0.0
    %1746 = vmatpush1.msra.mxu0 %v1693
    %1747 = vmatprep.subr.mxu0 0.0
    %1748 = vmatpush1.msra.mxu0 %v1695
    %1749 = vmatprep.subr.mxu0 0.0
    %1750 = vmatpush1.msra.mxu0 0.0
    %1751 = vmatprep.subr.mxu0 0.0
    %1752 = vmatpush1.msra.mxu0 0.0
    %1753 = vmatprep.subr.mxu0 0.0
    %1754 = vmatpush1.msra.mxu0 0.0
    %1755 = vmatprep.subr.mxu0 0.0
    %1756 = vmatpush1.msra.mxu0 0.0
    %1757 = vmatprep.subr.mxu0 0.0
    %1758 = vmatpush1.msra.mxu0 0.0
    %1759 = vmatprep.subr.mxu0 0.0
    %1760 = vmatpush1.msra.mxu0 0.0
    %1761 = vmatprep.subr.mxu0 0.0
    %1762 = vmatpush1.msra.mxu0 0.0
    %1763 = vmatprep.subr.mxu0 0.0
    %1764 = vmatpush1.msra.mxu0 0.0
    %1765 = vmatprep.subr.mxu0 0.0
    %1766 = vmatpush1.msra.mxu0 0.0
    %1767 = vmatprep.subr.mxu0 0.0
    %1768 = vmatpush1.msra.mxu0 0.0
    %1769 = vmatprep.subr.mxu0 0.0
    %1770 = vmatpush1.msra.mxu0 0.0
    %1771 = vmatprep.subr.mxu0 0.0
    %1772 = vmatpush1.msra.mxu0 0.0
    %1773 = vmatprep.subr.mxu0 0.0
    %1774 = vmatpush1.msra.mxu0 0.0
    %1775 = vmatprep.subr.mxu0 0.0
    %1776 = vmatpush1.msra.mxu0 0.0
    %1777 = vmatprep.subr.mxu0 0.0
    %1778 = vmatpush1.msra.mxu0 0.0
    %1779 = vmatprep.subr.mxu0 0.0
    %1780 = vmatpush1.msra.mxu0 0.0
    %1781 = vmatprep.mubr.f32.mxu0 0.0
    %1782 = vmatmul.mubr.f32.gmra.mrb[0].mxu0 %v1307
    %v1783 = vpop.f32.mrb[0].mxu0
    %v1784 = vadd.f32 0.0, %v1783
    %v1785 = vpop.f32.mrb[0].mxu0
    %1786 = vmatprep.mubr.f32.mxu0 0.0
    %1787 = vmatmul.mubr.f32.gmra.mrb[0].mxu0 %v1312
    %v1788 = vpop.f32.mrb[0].mxu0
    %v1789 = vadd.f32 0.0, %v1788
    %v1790 = vpop.f32.mrb[0].mxu0
    %1791 = vmatprep.mubr.f32.mxu0 0.0
    %1792 = vmatmul.mubr.f32.gmra.mrb[0].mxu0 %v1317
    %v1793 = vpop.f32.mrb[0].mxu0
    %v1794 = vadd.f32 0.0, %v1793
    %v1795 = vpop.f32.mrb[0].mxu0
    %1796 = vmatprep.mubr.f32.mxu0 0.0
    %1797 = vmatmul.mubr.f32.gmra.mrb[0].mxu0 %v1322
    %v1798 = vpop.f32.mrb[0].mxu0
    %v1799 = vadd.f32 0.0, %v1798
    %v1800 = vpop.f32.mrb[0].mxu0
    %1801 = vdwg.mxu0
    %v1802 = vrcp.pop %v1716
    %v1803 = vmul.f32 %v1784, %v1802
    %v1804 = vmul.f32 %v1789, %v1802
    %v1805 = vmul.f32 %v1794, %v1802
    %v1806 = vmul.f32 %v1799, %v1802
    %1807 = vrot.lane.b32.xlu0 %v1401, 96
    %v1808 = vpop.permute.xlu0 %1807
    %1809 = vrot.lane.b32.xlu0 %v1402, 96
    %v1810 = vpop.permute.xlu0 %1809
    %1811 = vrot.lane.b32.xlu0 %v1403, 96
    %v1812 = vpop.permute.xlu0 %1811
    %1813 = vrot.lane.b32.xlu0 %v1404, 96
    %v1814 = vpop.permute.xlu0 %1813
    %1815 = vrot.lane.b32.xlu0 %v1405, 96
    %v1816 = vpop.permute.xlu0 %1815
    %1817 = vrot.lane.b32.xlu0 %v1406, 96
    %v1818 = vpop.permute.xlu0 %1817
    %1819 = vrot.lane.b32.xlu0 %v1407, 96
    %v1820 = vpop.permute.xlu0 %1819
    %1821 = vrot.lane.b32.xlu0 %v1408, 96
    %v1822 = vpop.permute.xlu0 %1821
    %1823 = vrot.lane.b32.xlu0 %v1409, 96
    %v1824 = vpop.permute.xlu0 %1823
    %1825 = vrot.lane.b32.xlu0 %v1410, 96
    %v1826 = vpop.permute.xlu0 %1825
    %1827 = vrot.lane.b32.xlu0 %v1411, 96
    %v1828 = vpop.permute.xlu0 %1827
    %1829 = vrot.lane.b32.xlu0 %v1412, 96
    %v1830 = vpop.permute.xlu0 %1829
    %1831 = vrot.lane.b32.xlu0 %v1413, 96
    %v1832 = vpop.permute.xlu0 %1831
    %1833 = vrot.lane.b32.xlu0 %v1414, 96
    %v1834 = vpop.permute.xlu0 %1833
    %1835 = vrot.lane.b32.xlu0 %v1415, 96
    %v1836 = vpop.permute.xlu0 %1835
    %1837 = vrot.lane.b32.xlu0 %v1416, 96
    %v1838 = vpop.permute.xlu0 %1837
    %v1839 = vsel %vm1417, %v1808, 0
    %v1841 = vsel %vm1417, %v1810, 0
    %v1843 = vsel %vm1417, %v1812, 0
    %v1845 = vsel %vm1417, %v1814, 0
    %v1847 = vsel %vm1417, %v1816, 0
    %v1849 = vsel %vm1417, %v1818, 0
    %v1851 = vsel %vm1417, %v1820, 0
    %v1853 = vsel %vm1417, %v1822, 0
    %v1855 = vsel %vm1417, %v1824, 0
    %v1857 = vsel %vm1417, %v1826, 0
    %v1859 = vsel %vm1417, %v1828, 0
    %v1861 = vsel %vm1417, %v1830, 0
    %v1863 = vsel %vm1417, %v1832, 0
    %v1865 = vsel %vm1417, %v1834, 0
    %v1867 = vsel %vm1417, %v1836, 0
    %v1869 = vsel %vm1417, %v1838, 0
    %1871 = vmatprep.subr.mxu0 0.0
    %1872 = vmatpush1.msra.mxu0 %v1167
    %1873 = vmatprep.subr.mxu0 0.0
    %1874 = vmatpush1.msra.mxu0 %v1172
    %1875 = vmatprep.subr.mxu0 0.0
    %1876 = vmatpush1.msra.mxu0 %v1177
    %1877 = vmatprep.subr.mxu0 0.0
    %1878 = vmatpush1.msra.mxu0 %v1182
    %1879 = vmatprep.subr.mxu0 0.0
    %1880 = vmatpush1.msra.mxu0 0.0
    %1881 = vmatprep.subr.mxu0 0.0
    %1882 = vmatpush1.msra.mxu0 0.0
    %1883 = vmatprep.subr.mxu0 0.0
    %1884 = vmatpush1.msra.mxu0 0.0
    %1885 = vmatprep.subr.mxu0 0.0
    %1886 = vmatpush1.msra.mxu0 0.0
    %1887 = vmatprep.subr.mxu0 0.0
    %1888 = vmatpush1.msra.mxu0 0.0
    %1889 = vmatprep.subr.mxu0 0.0
    %1890 = vmatpush1.msra.mxu0 0.0
    %1891 = vmatprep.subr.mxu0 0.0
    %1892 = vmatpush1.msra.mxu0 0.0
    %1893 = vmatprep.subr.mxu0 0.0
    %1894 = vmatpush1.msra.mxu0 0.0
    %1895 = vmatprep.subr.mxu0 0.0
    %1896 = vmatpush1.msra.mxu0 0.0
    %1897 = vmatprep.subr.mxu0 0.0
    %1898 = vmatpush1.msra.mxu0 0.0
    %1899 = vmatprep.subr.mxu0 0.0
    %1900 = vmatpush1.msra.mxu0 0.0
    %1901 = vmatprep.subr.mxu0 0.0
    %1902 = vmatpush1.msra.mxu0 0.0
    %1903 = vmatprep.subr.mxu0 0.0
    %1904 = vmatpush1.msra.mxu0 0.0
    %1905 = vmatprep.subr.mxu0 0.0
    %1906 = vmatpush1.msra.mxu0 0.0
    %1907 = vmatprep.subr.mxu0 0.0
    %1908 = vmatpush1.msra.mxu0 0.0
    %1909 = vmatprep.subr.mxu0 0.0
    %1910 = vmatpush1.msra.mxu0 0.0
    %1911 = vmatprep.subr.mxu0 0.0
    %1912 = vmatpush1.msra.mxu0 0.0
    %1913 = vmatprep.subr.mxu0 0.0
    %1914 = vmatpush1.msra.mxu0 0.0
    %1915 = vmatprep.subr.mxu0 0.0
    %1916 = vmatpush1.msra.mxu0 0.0
    %1917 = vmatprep.subr.mxu0 0.0
    %1918 = vmatpush1.msra.mxu0 0.0
    %1919 = vmatprep.subr.mxu0 0.0
    %1920 = vmatpush1.msra.mxu0 0.0
    %1921 = vmatprep.subr.mxu0 0.0
    %1922 = vmatpush1.msra.mxu0 0.0
    %1923 = vmatprep.subr.mxu0 0.0
    %1924 = vmatpush1.msra.mxu0 0.0
    %1925 = vmatprep.subr.mxu0 0.0
    %1926 = vmatpush1.msra.mxu0 0.0
    %1927 = vmatprep.subr.mxu0 0.0
    %1928 = vmatpush1.msra.mxu0 0.0
    %1929 = vmatprep.subr.mxu0 0.0
    %1930 = vmatpush1.msra.mxu0 0.0
    %1931 = vmatprep.subr.mxu0 0.0
    %1932 = vmatpush1.msra.mxu0 0.0
    %1933 = vmatprep.subr.mxu0 0.0
    %1934 = vmatpush1.msra.mxu0 0.0
    %1935 = vmatprep.mubr.f32.mxu0 0.0
    %1936 = vmatmul.mubr.f32.gmra.mrb[0].mxu0 %v1839
    %v1937 = vpop.f32.mrb[0].mxu0
    %v1938 = vadd.f32 0.0, %v1937
    %v1939 = vpop.f32.mrb[0].mxu0
    %1940 = vmatprep.mubr.f32.mxu0 0.0
    %1941 = vmatmul.mubr.f32.gmra.mrb[0].mxu0 %v1841
    %v1942 = vpop.f32.mrb[0].mxu0
    %v1943 = vadd.f32 0.0, %v1942
    %v1944 = vpop.f32.mrb[0].mxu0
    %1945 = vmatprep.mubr.f32.mxu0 0.0
    %1946 = vmatmul.mubr.f32.gmra.mrb[0].mxu0 %v1843
    %v1947 = vpop.f32.mrb[0].mxu0
    %v1948 = vadd.f32 0.0, %v1947
    %v1949 = vpop.f32.mrb[0].mxu0
    %1950 = vmatprep.mubr.f32.mxu0 0.0
    %1951 = vmatmul.mubr.f32.gmra.mrb[0].mxu0 %v1845
    %v1952 = vpop.f32.mrb[0].mxu0
    %v1953 = vadd.f32 0.0, %v1952
    %v1954 = vpop.f32.mrb[0].mxu0
    %1955 = vmatprep.mubr.f32.mxu0 0.0
    %1956 = vmatmul.mubr.f32.gmra.mrb[0].mxu0 %v1847
    %v1957 = vpop.f32.mrb[0].mxu0
    %v1958 = vadd.f32 0.0, %v1957
    %v1959 = vpop.f32.mrb[0].mxu0
    %1960 = vmatprep.mubr.f32.mxu0 0.0
    %1961 = vmatmul.mubr.f32.gmra.mrb[0].mxu0 %v1849
    %v1962 = vpop.f32.mrb[0].mxu0
    %v1963 = vadd.f32 0.0, %v1962
    %v1964 = vpop.f32.mrb[0].mxu0
    %1965 = vmatprep.mubr.f32.mxu0 0.0
    %1966 = vmatmul.mubr.f32.gmra.mrb[0].mxu0 %v1851
    %v1967 = vpop.f32.mrb[0].mxu0
    %v1968 = vadd.f32 0.0, %v1967
    %v1969 = vpop.f32.mrb[0].mxu0
    %1970 = vmatprep.mubr.f32.mxu0 0.0
    %1971 = vmatmul.mubr.f32.gmra.mrb[0].mxu0 %v1853
    %v1972 = vpop.f32.mrb[0].mxu0
    %v1973 = vadd.f32 0.0, %v1972
    %v1974 = vpop.f32.mrb[0].mxu0
    %1975 = vmatprep.mubr.f32.mxu0 0.0
    %1976 = vmatmul.mubr.f32.gmra.mrb[0].mxu0 %v1855
    %v1977 = vpop.f32.mrb[0].mxu0
    %v1978 = vadd.f32 0.0, %v1977
    %v1979 = vpop.f32.mrb[0].mxu0
    %1980 = vmatprep.mubr.f32.mxu0 0.0
    %1981 = vmatmul.mubr.f32.gmra.mrb[0].mxu0 %v1857
    %v1982 = vpop.f32.mrb[0].mxu0
    %v1983 = vadd.f32 0.0, %v1982
    %v1984 = vpop.f32.mrb[0].mxu0
    %1985 = vmatprep.mubr.f32.mxu0 0.0
    %1986 = vmatmul.mubr.f32.gmra.mrb[0].mxu0 %v1859
    %v1987 = vpop.f32.mrb[0].mxu0
    %v1988 = vadd.f32 0.0, %v1987
    %v1989 = vpop.f32.mrb[0].mxu0
    %1990 = vmatprep.mubr.f32.mxu0 0.0
    %1991 = vmatmul.mubr.f32.gmra.mrb[0].mxu0 %v1861
    %v1992 = vpop.f32.mrb[0].mxu0
    %v1993 = vadd.f32 0.0, %v1992
    %v1994 = vpop.f32.mrb[0].mxu0
    %1995 = vmatprep.mubr.f32.mxu0 0.0
    %1996 = vmatmul.mubr.f32.gmra.mrb[0].mxu0 %v1863
    %v1997 = vpop.f32.mrb[0].mxu0
    %v1998 = vadd.f32 0.0, %v1997
    %v1999 = vpop.f32.mrb[0].mxu0
    %2000 = vmatprep.mubr.f32.mxu0 0.0
    %2001 = vmatmul.mubr.f32.gmra.mrb[0].mxu0 %v1865
    %v2002 = vpop.f32.mrb[0].mxu0
    %v2003 = vadd.f32 0.0, %v2002
    %v2004 = vpop.f32.mrb[0].mxu0
    %2005 = vmatprep.mubr.f32.mxu0 0.0
    %2006 = vmatmul.mubr.f32.gmra.mrb[0].mxu0 %v1867
    %v2007 = vpop.f32.mrb[0].mxu0
    %v2008 = vadd.f32 0.0, %v2007
    %v2009 = vpop.f32.mrb[0].mxu0
    %2010 = vmatprep.mubr.f32.mxu0 0.0
    %2011 = vmatmul.mubr.f32.gmra.mrb[0].mxu0 %v1869
    %v2012 = vpop.f32.mrb[0].mxu0
    %v2013 = vadd.f32 0.0, %v2012
    %v2014 = vpop.f32.mrb[0].mxu0
    %2015 = vdwg.mxu0
    %v2016 = vmul.f32 %v1938, 0.17677669
    %v2017 = vmul.f32 %v1943, 0.17677669
    %v2018 = vmul.f32 %v1948, 0.17677669
    %v2019 = vmul.f32 %v1953, 0.17677669
    %v2020 = vmul.f32 %v1958, 0.17677669
    %v2021 = vmul.f32 %v1963, 0.17677669
    %v2022 = vmul.f32 %v1968, 0.17677669
    %v2023 = vmul.f32 %v1973, 0.17677669
    %v2024 = vmul.f32 %v1978, 0.17677669
    %v2025 = vmul.f32 %v1983, 0.17677669
    %v2026 = vmul.f32 %v1988, 0.17677669
    %v2027 = vmul.f32 %v1993, 0.17677669
    %v2028 = vmul.f32 %v1998, 0.17677669
    %v2029 = vmul.f32 %v2003, 0.17677669
    %v2030 = vmul.f32 %v2008, 0.17677669
    %v2031 = vmul.f32 %v2013, 0.17677669
    %v2032 = vmax.f32 %v2016, %v2020
    %v2033 = vmax.f32 %v2017, %v2021
    %v2034 = vmax.f32 %v2018, %v2022
    %v2035 = vmax.f32 %v2019, %v2023
    %v2036 = vmax.f32 %v2032, %v2024
    %v2037 = vmax.f32 %v2033, %v2025
    %v2038 = vmax.f32 %v2034, %v2026
    %v2039 = vmax.f32 %v2035, %v2027
    %v2040 = vmax.f32 %v2036, %v2028
    %v2041 = vmax.f32 %v2037, %v2029
    %v2042 = vmax.f32 %v2038, %v2030
    %v2043 = vmax.f32 %v2039, %v2031
    %v2044 = vmax.f32 %v2040, %v2041
    %v2045 = vmax.f32 %v2042, %v2043
    %v2046 = vmax.f32 %v2044, %v2045
    %v2047 = vrot.slane %v2046, 4
    %v2048 = vmax.f32 %v2046, %v2047
    %v2049 = vrot.slane %v2048, 2
    %v2050 = vmax.f32 %v2048, %v2049
    %v2051 = vrot.slane %v2050, 1
    %v2052 = vmax.f32 %v2050, %v2051
    %v2053 = vsub.f32 %v2016, %v2052
    %v2054 = vsub.f32 %v2017, %v2052
    %v2055 = vsub.f32 %v2018, %v2052
    %v2056 = vsub.f32 %v2019, %v2052
    %v2057 = vsub.f32 %v2020, %v2052
    %v2058 = vsub.f32 %v2021, %v2052
    %v2059 = vsub.f32 %v2022, %v2052
    %v2060 = vsub.f32 %v2023, %v2052
    %v2061 = vsub.f32 %v2024, %v2052
    %v2062 = vsub.f32 %v2025, %v2052
    %v2063 = vsub.f32 %v2026, %v2052
    %v2064 = vsub.f32 %v2027, %v2052
    %v2065 = vsub.f32 %v2028, %v2052
    %v2066 = vsub.f32 %v2029, %v2052
    %v2067 = vsub.f32 %v2030, %v2052
    %v2068 = vsub.f32 %v2031, %v2052
    %v2069 = vmul.f32 %v2053, 1.442695
    %v2070 = vpow.pop %v2069
    %v2071 = vmul.f32 %v2054, 1.442695
    %v2072 = vpow.pop %v2071
    %v2073 = vmul.f32 %v2055, 1.442695
    %v2074 = vpow.pop %v2073
    %v2075 = vmul.f32 %v2056, 1.442695
    %v2076 = vpow.pop %v2075
    %v2077 = vmul.f32 %v2057, 1.442695
    %v2078 = vpow.pop %v2077
    %v2079 = vmul.f32 %v2058, 1.442695
    %v2080 = vpow.pop %v2079
    %v2081 = vmul.f32 %v2059, 1.442695
    %v2082 = vpow.pop %v2081
    %v2083 = vmul.f32 %v2060, 1.442695
    %v2084 = vpow.pop %v2083
    %v2085 = vmul.f32 %v2061, 1.442695
    %v2086 = vpow.pop %v2085
    %v2087 = vmul.f32 %v2062, 1.442695
    %v2088 = vpow.pop %v2087
    %v2089 = vmul.f32 %v2063, 1.442695
    %v2090 = vpow.pop %v2089
    %v2091 = vmul.f32 %v2064, 1.442695
    %v2092 = vpow.pop %v2091
    %v2093 = vmul.f32 %v2065, 1.442695
    %v2094 = vpow.pop %v2093
    %v2095 = vmul.f32 %v2066, 1.442695
    %v2096 = vpow.pop %v2095
    %v2097 = vmul.f32 %v2067, 1.442695
    %v2098 = vpow.pop %v2097
    %v2099 = vmul.f32 %v2068, 1.442695
    %v2100 = vpow.pop %v2099
    %v2101 = vadd.f32 %v2070, %v2072
    %v2102 = vadd.f32 %v2101, %v2074
    %v2103 = vadd.f32 %v2102, %v2076
    %v2104 = vadd.f32 %v2103, %v2078
    %v2105 = vadd.f32 %v2104, %v2080
    %v2106 = vadd.f32 %v2105, %v2082
    %v2107 = vadd.f32 %v2106, %v2084
    %v2108 = vadd.f32 %v2107, %v2086
    %v2109 = vadd.f32 %v2108, %v2088
    %v2110 = vadd.f32 %v2109, %v2090
    %v2111 = vadd.f32 %v2110, %v2092
    %v2112 = vadd.f32 %v2111, %v2094
    %v2113 = vadd.f32 %v2112, %v2096
    %v2114 = vadd.f32 %v2113, %v2098
    %v2115 = vadd.f32 %v2114, %v2100
    %v2116 = vrot.slane %v2115, 4
    %v2117 = vadd.f32 %v2115, %v2116
    %v2118 = vrot.slane %v2117, 2
    %v2119 = vadd.f32 %v2117, %v2118
    %v2120 = vrot.slane %v2119, 1
    %v2121 = vadd.f32 %v2119, %v2120
    %2122 = vmatprep.subr.mxu0 0.0
    %2123 = vmatpush1.msra.mxu0 %v2070
    %2124 = vmatprep.subr.mxu0 0.0
    %2125 = vmatpush1.msra.mxu0 %v2072
    %2126 = vmatprep.subr.mxu0 0.0
    %2127 = vmatpush1.msra.mxu0 %v2074
    %2128 = vmatprep.subr.mxu0 0.0
    %2129 = vmatpush1.msra.mxu0 %v2076
    %2130 = vmatprep.subr.mxu0 0.0
    %2131 = vmatpush1.msra.mxu0 %v2078
    %2132 = vmatprep.subr.mxu0 0.0
    %2133 = vmatpush1.msra.mxu0 %v2080
    %2134 = vmatprep.subr.mxu0 0.0
    %2135 = vmatpush1.msra.mxu0 %v2082
    %2136 = vmatprep.subr.mxu0 0.0
    %2137 = vmatpush1.msra.mxu0 %v2084
    %2138 = vmatprep.subr.mxu0 0.0
    %2139 = vmatpush1.msra.mxu0 %v2086
    %2140 = vmatprep.subr.mxu0 0.0
    %2141 = vmatpush1.msra.mxu0 %v2088
    %2142 = vmatprep.subr.mxu0 0.0
    %2143 = vmatpush1.msra.mxu0 %v2090
    %2144 = vmatprep.subr.mxu0 0.0
    %2145 = vmatpush1.msra.mxu0 %v2092
    %2146 = vmatprep.subr.mxu0 0.0
    %2147 = vmatpush1.msra.mxu0 %v2094
    %2148 = vmatprep.subr.mxu0 0.0
    %2149 = vmatpush1.msra.mxu0 %v2096
    %2150 = vmatprep.subr.mxu0 0.0
    %2151 = vmatpush1.msra.mxu0 %v2098
    %2152 = vmatprep.subr.mxu0 0.0
    %2153 = vmatpush1.msra.mxu0 %v2100
    %2154 = vmatprep.subr.mxu0 0.0
    %2155 = vmatpush1.msra.mxu0 0.0
    %2156 = vmatprep.subr.mxu0 0.0
    %2157 = vmatpush1.msra.mxu0 0.0
    %2158 = vmatprep.subr.mxu0 0.0
    %2159 = vmatpush1.msra.mxu0 0.0
    %2160 = vmatprep.subr.mxu0 0.0
    %2161 = vmatpush1.msra.mxu0 0.0
    %2162 = vmatprep.subr.mxu0 0.0
    %2163 = vmatpush1.msra.mxu0 0.0
    %2164 = vmatprep.subr.mxu0 0.0
    %2165 = vmatpush1.msra.mxu0 0.0
    %2166 = vmatprep.subr.mxu0 0.0
    %2167 = vmatpush1.msra.mxu0 0.0
    %2168 = vmatprep.subr.mxu0 0.0
    %2169 = vmatpush1.msra.mxu0 0.0
    %2170 = vmatprep.subr.mxu0 0.0
    %2171 = vmatpush1.msra.mxu0 0.0
    %2172 = vmatprep.subr.mxu0 0.0
    %2173 = vmatpush1.msra.mxu0 0.0
    %2174 = vmatprep.subr.mxu0 0.0
    %2175 = vmatpush1.msra.mxu0 0.0
    %2176 = vmatprep.subr.mxu0 0.0
    %2177 = vmatpush1.msra.mxu0 0.0
    %2178 = vmatprep.subr.mxu0 0.0
    %2179 = vmatpush1.msra.mxu0 0.0
    %2180 = vmatprep.subr.mxu0 0.0
    %2181 = vmatpush1.msra.mxu0 0.0
    %2182 = vmatprep.subr.mxu0 0.0
    %2183 = vmatpush1.msra.mxu0 0.0
    %2184 = vmatprep.subr.mxu0 0.0
    %2185 = vmatpush1.msra.mxu0 0.0
    %2186 = vmatprep.mubr.f32.mxu0 0.0
    %2187 = vmatmul.mubr.f32.gmra.mrb[0].mxu0 %v1327
    %v2188 = vpop.f32.mrb[0].mxu0
    %v2189 = vadd.f32 0.0, %v2188
    %v2190 = vpop.f32.mrb[0].mxu0
    %2191 = vmatprep.mubr.f32.mxu0 0.0
    %2192 = vmatmul.mubr.f32.gmra.mrb[0].mxu0 %v1332
    %v2193 = vpop.f32.mrb[0].mxu0
    %v2194 = vadd.f32 0.0, %v2193
    %v2195 = vpop.f32.mrb[0].mxu0
    %2196 = vmatprep.mubr.f32.mxu0 0.0
    %2197 = vmatmul.mubr.f32.gmra.mrb[0].mxu0 %v1337
    %v2198 = vpop.f32.mrb[0].mxu0
    %v2199 = vadd.f32 0.0, %v2198
    %v2200 = vpop.f32.mrb[0].mxu0
    %2201 = vmatprep.mubr.f32.mxu0 0.0
    %2202 = vmatmul.mubr.f32.gmra.mrb[0].mxu0 %v1342
    %v2203 = vpop.f32.mrb[0].mxu0
    %v2204 = vadd.f32 0.0, %v2203
    %v2205 = vpop.f32.mrb[0].mxu0
    %2206 = vdwg.mxu0
    %v2207 = vrcp.pop %v2121
    %v2208 = vmul.f32 %v2189, %v2207
    %v2209 = vmul.f32 %v2194, %v2207
    %v2210 = vmul.f32 %v2199, %v2207
    %v2211 = vmul.f32 %v2204, %v2207
    %2212 = vrot.lane.b32.xlu0 %v1401, 64
    %v2213 = vpop.permute.xlu0 %2212
    %2214 = vrot.lane.b32.xlu0 %v1402, 64
    %v2215 = vpop.permute.xlu0 %2214
    %2216 = vrot.lane.b32.xlu0 %v1403, 64
    %v2217 = vpop.permute.xlu0 %2216
    %2218 = vrot.lane.b32.xlu0 %v1404, 64
    %v2219 = vpop.permute.xlu0 %2218
    %2220 = vrot.lane.b32.xlu0 %v1405, 64
    %v2221 = vpop.permute.xlu0 %2220
    %2222 = vrot.lane.b32.xlu0 %v1406, 64
    %v2223 = vpop.permute.xlu0 %2222
    %2224 = vrot.lane.b32.xlu0 %v1407, 64
    %v2225 = vpop.permute.xlu0 %2224
    %2226 = vrot.lane.b32.xlu0 %v1408, 64
    %v2227 = vpop.permute.xlu0 %2226
    %2228 = vrot.lane.b32.xlu0 %v1409, 64
    %v2229 = vpop.permute.xlu0 %2228
    %2230 = vrot.lane.b32.xlu0 %v1410, 64
    %v2231 = vpop.permute.xlu0 %2230
    %2232 = vrot.lane.b32.xlu0 %v1411, 64
    %v2233 = vpop.permute.xlu0 %2232
    %2234 = vrot.lane.b32.xlu0 %v1412, 64
    %v2235 = vpop.permute.xlu0 %2234
    %2236 = vrot.lane.b32.xlu0 %v1413, 64
    %v2237 = vpop.permute.xlu0 %2236
    %2238 = vrot.lane.b32.xlu0 %v1414, 64
    %v2239 = vpop.permute.xlu0 %2238
    %2240 = vrot.lane.b32.xlu0 %v1415, 64
    %v2241 = vpop.permute.xlu0 %2240
    %2242 = vrot.lane.b32.xlu0 %v1416, 64
    %v2243 = vpop.permute.xlu0 %2242
    %v2244 = vsel %vm1417, %v2213, 0
    %v2246 = vsel %vm1417, %v2215, 0
    %v2248 = vsel %vm1417, %v2217, 0
    %v2250 = vsel %vm1417, %v2219, 0
    %v2252 = vsel %vm1417, %v2221, 0
    %v2254 = vsel %vm1417, %v2223, 0
    %v2256 = vsel %vm1417, %v2225, 0
    %v2258 = vsel %vm1417, %v2227, 0
    %v2260 = vsel %vm1417, %v2229, 0
    %v2262 = vsel %vm1417, %v2231, 0
    %v2264 = vsel %vm1417, %v2233, 0
    %v2266 = vsel %vm1417, %v2235, 0
    %v2268 = vsel %vm1417, %v2237, 0
    %v2270 = vsel %vm1417, %v2239, 0
    %v2272 = vsel %vm1417, %v2241, 0
    %v2274 = vsel %vm1417, %v2243, 0
    %2276 = vmatprep.subr.mxu0 0.0
    %2277 = vmatpush1.msra.mxu0 %v1187
    %2278 = vmatprep.subr.mxu0 0.0
    %2279 = vmatpush1.msra.mxu0 %v1192
    %2280 = vmatprep.subr.mxu0 0.0
    %2281 = vmatpush1.msra.mxu0 %v1197
    %2282 = vmatprep.subr.mxu0 0.0
    %2283 = vmatpush1.msra.mxu0 %v1202
    %2284 = vmatprep.subr.mxu0 0.0
    %2285 = vmatpush1.msra.mxu0 0.0
    %2286 = vmatprep.subr.mxu0 0.0
    %2287 = vmatpush1.msra.mxu0 0.0
    %2288 = vmatprep.subr.mxu0 0.0
    %2289 = vmatpush1.msra.mxu0 0.0
    %2290 = vmatprep.subr.mxu0 0.0
    %2291 = vmatpush1.msra.mxu0 0.0
    %2292 = vmatprep.subr.mxu0 0.0
    %2293 = vmatpush1.msra.mxu0 0.0
    %2294 = vmatprep.subr.mxu0 0.0
    %2295 = vmatpush1.msra.mxu0 0.0
    %2296 = vmatprep.subr.mxu0 0.0
    %2297 = vmatpush1.msra.mxu0 0.0
    %2298 = vmatprep.subr.mxu0 0.0
    %2299 = vmatpush1.msra.mxu0 0.0
    %2300 = vmatprep.subr.mxu0 0.0
    %2301 = vmatpush1.msra.mxu0 0.0
    %2302 = vmatprep.subr.mxu0 0.0
    %2303 = vmatpush1.msra.mxu0 0.0
    %2304 = vmatprep.subr.mxu0 0.0
    %2305 = vmatpush1.msra.mxu0 0.0
    %2306 = vmatprep.subr.mxu0 0.0
    %2307 = vmatpush1.msra.mxu0 0.0
    %2308 = vmatprep.subr.mxu0 0.0
    %2309 = vmatpush1.msra.mxu0 0.0
    %2310 = vmatprep.subr.mxu0 0.0
    %2311 = vmatpush1.msra.mxu0 0.0
    %2312 = vmatprep.subr.mxu0 0.0
    %2313 = vmatpush1.msra.mxu0 0.0
    %2314 = vmatprep.subr.mxu0 0.0
    %2315 = vmatpush1.msra.mxu0 0.0
    %2316 = vmatprep.subr.mxu0 0.0
    %2317 = vmatpush1.msra.mxu0 0.0
    %2318 = vmatprep.subr.mxu0 0.0
    %2319 = vmatpush1.msra.mxu0 0.0
    %2320 = vmatprep.subr.mxu0 0.0
    %2321 = vmatpush1.msra.mxu0 0.0
    %2322 = vmatprep.subr.mxu0 0.0
    %2323 = vmatpush1.msra.mxu0 0.0
    %2324 = vmatprep.subr.mxu0 0.0
    %2325 = vmatpush1.msra.mxu0 0.0
    %2326 = vmatprep.subr.mxu0 0.0
    %2327 = vmatpush1.msra.mxu0 0.0
    %2328 = vmatprep.subr.mxu0 0.0
    %2329 = vmatpush1.msra.mxu0 0.0
    %2330 = vmatprep.subr.mxu0 0.0
    %2331 = vmatpush1.msra.mxu0 0.0
    %2332 = vmatprep.subr.mxu0 0.0
    %2333 = vmatpush1.msra.mxu0 0.0
    %2334 = vmatprep.subr.mxu0 0.0
    %2335 = vmatpush1.msra.mxu0 0.0
    %2336 = vmatprep.subr.mxu0 0.0
    %2337 = vmatpush1.msra.mxu0 0.0
    %2338 = vmatprep.subr.mxu0 0.0
    %2339 = vmatpush1.msra.mxu0 0.0
    %2340 = vmatprep.mubr.f32.mxu0 0.0
    %2341 = vmatmul.mubr.f32.gmra.mrb[0].mxu0 %v2244
    %v2342 = vpop.f32.mrb[0].mxu0
    %v2343 = vadd.f32 0.0, %v2342
    %v2344 = vpop.f32.mrb[0].mxu0
    %2345 = vmatprep.mubr.f32.mxu0 0.0
    %2346 = vmatmul.mubr.f32.gmra.mrb[0].mxu0 %v2246
    %v2347 = vpop.f32.mrb[0].mxu0
    %v2348 = vadd.f32 0.0, %v2347
    %v2349 = vpop.f32.mrb[0].mxu0
    %2350 = vmatprep.mubr.f32.mxu0 0.0
    %2351 = vmatmul.mubr.f32.gmra.mrb[0].mxu0 %v2248
    %v2352 = vpop.f32.mrb[0].mxu0
    %v2353 = vadd.f32 0.0, %v2352
    %v2354 = vpop.f32.mrb[0].mxu0
    %2355 = vmatprep.mubr.f32.mxu0 0.0
    %2356 = vmatmul.mubr.f32.gmra.mrb[0].mxu0 %v2250
    %v2357 = vpop.f32.mrb[0].mxu0
    %v2358 = vadd.f32 0.0, %v2357
    %v2359 = vpop.f32.mrb[0].mxu0
    %2360 = vmatprep.mubr.f32.mxu0 0.0
    %2361 = vmatmul.mubr.f32.gmra.mrb[0].mxu0 %v2252
    %v2362 = vpop.f32.mrb[0].mxu0
    %v2363 = vadd.f32 0.0, %v2362
    %v2364 = vpop.f32.mrb[0].mxu0
    %2365 = vmatprep.mubr.f32.mxu0 0.0
    %2366 = vmatmul.mubr.f32.gmra.mrb[0].mxu0 %v2254
    %v2367 = vpop.f32.mrb[0].mxu0
    %v2368 = vadd.f32 0.0, %v2367
    %v2369 = vpop.f32.mrb[0].mxu0
    %2370 = vmatprep.mubr.f32.mxu0 0.0
    %2371 = vmatmul.mubr.f32.gmra.mrb[0].mxu0 %v2256
    %v2372 = vpop.f32.mrb[0].mxu0
    %v2373 = vadd.f32 0.0, %v2372
    %v2374 = vpop.f32.mrb[0].mxu0
    %2375 = vmatprep.mubr.f32.mxu0 0.0
    %2376 = vmatmul.mubr.f32.gmra.mrb[0].mxu0 %v2258
    %v2377 = vpop.f32.mrb[0].mxu0
    %v2378 = vadd.f32 0.0, %v2377
    %v2379 = vpop.f32.mrb[0].mxu0
    %2380 = vmatprep.mubr.f32.mxu0 0.0
    %2381 = vmatmul.mubr.f32.gmra.mrb[0].mxu0 %v2260
    %v2382 = vpop.f32.mrb[0].mxu0
    %v2383 = vadd.f32 0.0, %v2382
    %v2384 = vpop.f32.mrb[0].mxu0
    %2385 = vmatprep.mubr.f32.mxu0 0.0
    %2386 = vmatmul.mubr.f32.gmra.mrb[0].mxu0 %v2262
    %v2387 = vpop.f32.mrb[0].mxu0
    %v2388 = vadd.f32 0.0, %v2387
    %v2389 = vpop.f32.mrb[0].mxu0
    %2390 = vmatprep.mubr.f32.mxu0 0.0
    %2391 = vmatmul.mubr.f32.gmra.mrb[0].mxu0 %v2264
    %v2392 = vpop.f32.mrb[0].mxu0
    %v2393 = vadd.f32 0.0, %v2392
    %v2394 = vpop.f32.mrb[0].mxu0
    %2395 = vmatprep.mubr.f32.mxu0 0.0
    %2396 = vmatmul.mubr.f32.gmra.mrb[0].mxu0 %v2266
    %v2397 = vpop.f32.mrb[0].mxu0
    %v2398 = vadd.f32 0.0, %v2397
    %v2399 = vpop.f32.mrb[0].mxu0
    %2400 = vmatprep.mubr.f32.mxu0 0.0
    %2401 = vmatmul.mubr.f32.gmra.mrb[0].mxu0 %v2268
    %v2402 = vpop.f32.mrb[0].mxu0
    %v2403 = vadd.f32 0.0, %v2402
    %v2404 = vpop.f32.mrb[0].mxu0
    %2405 = vmatprep.mubr.f32.mxu0 0.0
    %2406 = vmatmul.mubr.f32.gmra.mrb[0].mxu0 %v2270
    %v2407 = vpop.f32.mrb[0].mxu0
    %v2408 = vadd.f32 0.0, %v2407
    %v2409 = vpop.f32.mrb[0].mxu0
    %2410 = vmatprep.mubr.f32.mxu0 0.0
    %2411 = vmatmul.mubr.f32.gmra.mrb[0].mxu0 %v2272
    %v2412 = vpop.f32.mrb[0].mxu0
    %v2413 = vadd.f32 0.0, %v2412
    %v2414 = vpop.f32.mrb[0].mxu0
    %2415 = vmatprep.mubr.f32.mxu0 0.0
    %2416 = vmatmul.mubr.f32.gmra.mrb[0].mxu0 %v2274
    %v2417 = vpop.f32.mrb[0].mxu0
    %v2418 = vadd.f32 0.0, %v2417
    %v2419 = vpop.f32.mrb[0].mxu0
    %2420 = vdwg.mxu0
    %v2421 = vmul.f32 %v2343, 0.17677669
    %v2422 = vmul.f32 %v2348, 0.17677669
    %v2423 = vmul.f32 %v2353, 0.17677669
    %v2424 = vmul.f32 %v2358, 0.17677669
    %v2425 = vmul.f32 %v2363, 0.17677669
    %v2426 = vmul.f32 %v2368, 0.17677669
    %v2427 = vmul.f32 %v2373, 0.17677669
    %v2428 = vmul.f32 %v2378, 0.17677669
    %v2429 = vmul.f32 %v2383, 0.17677669
    %v2430 = vmul.f32 %v2388, 0.17677669
    %v2431 = vmul.f32 %v2393, 0.17677669
    %v2432 = vmul.f32 %v2398, 0.17677669
    %v2433 = vmul.f32 %v2403, 0.17677669
    %v2434 = vmul.f32 %v2408, 0.17677669
    %v2435 = vmul.f32 %v2413, 0.17677669
    %v2436 = vmul.f32 %v2418, 0.17677669
    %v2437 = vmax.f32 %v2421, %v2425
    %v2438 = vmax.f32 %v2422, %v2426
    %v2439 = vmax.f32 %v2423, %v2427
    %v2440 = vmax.f32 %v2424, %v2428
    %v2441 = vmax.f32 %v2437, %v2429
    %v2442 = vmax.f32 %v2438, %v2430
    %v2443 = vmax.f32 %v2439, %v2431
    %v2444 = vmax.f32 %v2440, %v2432
    %v2445 = vmax.f32 %v2441, %v2433
    %v2446 = vmax.f32 %v2442, %v2434
    %v2447 = vmax.f32 %v2443, %v2435
    %v2448 = vmax.f32 %v2444, %v2436
    %v2449 = vmax.f32 %v2445, %v2446
    %v2450 = vmax.f32 %v2447, %v2448
    %v2451 = vmax.f32 %v2449, %v2450
    %v2452 = vrot.slane %v2451, 4
    %v2453 = vmax.f32 %v2451, %v2452
    %v2454 = vrot.slane %v2453, 2
    %v2455 = vmax.f32 %v2453, %v2454
    %v2456 = vrot.slane %v2455, 1
    %v2457 = vmax.f32 %v2455, %v2456
    %v2458 = vsub.f32 %v2421, %v2457
    %v2459 = vsub.f32 %v2422, %v2457
    %v2460 = vsub.f32 %v2423, %v2457
    %v2461 = vsub.f32 %v2424, %v2457
    %v2462 = vsub.f32 %v2425, %v2457
    %v2463 = vsub.f32 %v2426, %v2457
    %v2464 = vsub.f32 %v2427, %v2457
    %v2465 = vsub.f32 %v2428, %v2457
    %v2466 = vsub.f32 %v2429, %v2457
    %v2467 = vsub.f32 %v2430, %v2457
    %v2468 = vsub.f32 %v2431, %v2457
    %v2469 = vsub.f32 %v2432, %v2457
    %v2470 = vsub.f32 %v2433, %v2457
    %v2471 = vsub.f32 %v2434, %v2457
    %v2472 = vsub.f32 %v2435, %v2457
    %v2473 = vsub.f32 %v2436, %v2457
    %v2474 = vmul.f32 %v2458, 1.442695
    %v2475 = vpow.pop %v2474
    %v2476 = vmul.f32 %v2459, 1.442695
    %v2477 = vpow.pop %v2476
    %v2478 = vmul.f32 %v2460, 1.442695
    %v2479 = vpow.pop %v2478
    %v2480 = vmul.f32 %v2461, 1.442695
    %v2481 = vpow.pop %v2480
    %v2482 = vmul.f32 %v2462, 1.442695
    %v2483 = vpow.pop %v2482
    %v2484 = vmul.f32 %v2463, 1.442695
    %v2485 = vpow.pop %v2484
    %v2486 = vmul.f32 %v2464, 1.442695
    %v2487 = vpow.pop %v2486
    %v2488 = vmul.f32 %v2465, 1.442695
    %v2489 = vpow.pop %v2488
    %v2490 = vmul.f32 %v2466, 1.442695
    %v2491 = vpow.pop %v2490
    %v2492 = vmul.f32 %v2467, 1.442695
    %v2493 = vpow.pop %v2492
    %v2494 = vmul.f32 %v2468, 1.442695
    %v2495 = vpow.pop %v2494
    %v2496 = vmul.f32 %v2469, 1.442695
    %v2497 = vpow.pop %v2496
    %v2498 = vmul.f32 %v2470, 1.442695
    %v2499 = vpow.pop %v2498
    %v2500 = vmul.f32 %v2471, 1.442695
    %v2501 = vpow.pop %v2500
    %v2502 = vmul.f32 %v2472, 1.442695
    %v2503 = vpow.pop %v2502
    %v2504 = vmul.f32 %v2473, 1.442695
    %v2505 = vpow.pop %v2504
    %v2506 = vadd.f32 %v2475, %v2477
    %v2507 = vadd.f32 %v2506, %v2479
    %v2508 = vadd.f32 %v2507, %v2481
    %v2509 = vadd.f32 %v2508, %v2483
    %v2510 = vadd.f32 %v2509, %v2485
    %v2511 = vadd.f32 %v2510, %v2487
    %v2512 = vadd.f32 %v2511, %v2489
    %v2513 = vadd.f32 %v2512, %v2491
    %v2514 = vadd.f32 %v2513, %v2493
    %v2515 = vadd.f32 %v2514, %v2495
    %v2516 = vadd.f32 %v2515, %v2497
    %v2517 = vadd.f32 %v2516, %v2499
    %v2518 = vadd.f32 %v2517, %v2501
    %v2519 = vadd.f32 %v2518, %v2503
    %v2520 = vadd.f32 %v2519, %v2505
    %v2521 = vrot.slane %v2520, 4
    %v2522 = vadd.f32 %v2520, %v2521
    %v2523 = vrot.slane %v2522, 2
    %v2524 = vadd.f32 %v2522, %v2523
    %v2525 = vrot.slane %v2524, 1
    %v2526 = vadd.f32 %v2524, %v2525
    %2527 = vmatprep.subr.mxu0 0.0
    %2528 = vmatpush1.msra.mxu0 %v2475
    %2529 = vmatprep.subr.mxu0 0.0
    %2530 = vmatpush1.msra.mxu0 %v2477
    %2531 = vmatprep.subr.mxu0 0.0
    %2532 = vmatpush1.msra.mxu0 %v2479
    %2533 = vmatprep.subr.mxu0 0.0
    %2534 = vmatpush1.msra.mxu0 %v2481
    %2535 = vmatprep.subr.mxu0 0.0
    %2536 = vmatpush1.msra.mxu0 %v2483
    %2537 = vmatprep.subr.mxu0 0.0
    %2538 = vmatpush1.msra.mxu0 %v2485
    %2539 = vmatprep.subr.mxu0 0.0
    %2540 = vmatpush1.msra.mxu0 %v2487
    %2541 = vmatprep.subr.mxu0 0.0
    %2542 = vmatpush1.msra.mxu0 %v2489
    %2543 = vmatprep.subr.mxu0 0.0
    %2544 = vmatpush1.msra.mxu0 %v2491
    %2545 = vmatprep.subr.mxu0 0.0
    %2546 = vmatpush1.msra.mxu0 %v2493
    %2547 = vmatprep.subr.mxu0 0.0
    %2548 = vmatpush1.msra.mxu0 %v2495
    %2549 = vmatprep.subr.mxu0 0.0
    %2550 = vmatpush1.msra.mxu0 %v2497
    %2551 = vmatprep.subr.mxu0 0.0
    %2552 = vmatpush1.msra.mxu0 %v2499
    %2553 = vmatprep.subr.mxu0 0.0
    %2554 = vmatpush1.msra.mxu0 %v2501
    %2555 = vmatprep.subr.mxu0 0.0
    %2556 = vmatpush1.msra.mxu0 %v2503
    %2557 = vmatprep.subr.mxu0 0.0
    %2558 = vmatpush1.msra.mxu0 %v2505
    %2559 = vmatprep.subr.mxu0 0.0
    %2560 = vmatpush1.msra.mxu0 0.0
    %2561 = vmatprep.subr.mxu0 0.0
    %2562 = vmatpush1.msra.mxu0 0.0
    %2563 = vmatprep.subr.mxu0 0.0
    %2564 = vmatpush1.msra.mxu0 0.0
    %2565 = vmatprep.subr.mxu0 0.0
    %2566 = vmatpush1.msra.mxu0 0.0
    %2567 = vmatprep.subr.mxu0 0.0
    %2568 = vmatpush1.msra.mxu0 0.0
    %2569 = vmatprep.subr.mxu0 0.0
    %2570 = vmatpush1.msra.mxu0 0.0
    %2571 = vmatprep.subr.mxu0 0.0
    %2572 = vmatpush1.msra.mxu0 0.0
    %2573 = vmatprep.subr.mxu0 0.0
    %2574 = vmatpush1.msra.mxu0 0.0
    %2575 = vmatprep.subr.mxu0 0.0
    %2576 = vmatpush1.msra.mxu0 0.0
    %2577 = vmatprep.subr.mxu0 0.0
    %2578 = vmatpush1.msra.mxu0 0.0
    %2579 = vmatprep.subr.mxu0 0.0
    %2580 = vmatpush1.msra.mxu0 0.0
    %2581 = vmatprep.subr.mxu0 0.0
    %2582 = vmatpush1.msra.mxu0 0.0
    %2583 = vmatprep.subr.mxu0 0.0
    %2584 = vmatpush1.msra.mxu0 0.0
    %2585 = vmatprep.subr.mxu0 0.0
    %2586 = vmatpush1.msra.mxu0 0.0
    %2587 = vmatprep.subr.mxu0 0.0
    %2588 = vmatpush1.msra.mxu0 0.0
    %2589 = vmatprep.subr.mxu0 0.0
    %2590 = vmatpush1.msra.mxu0 0.0
    %2591 = vmatprep.mubr.f32.mxu0 0.0
    %2592 = vmatmul.mubr.f32.gmra.mrb[0].mxu0 %v1347
    %v2593 = vpop.f32.mrb[0].mxu0
    %v2594 = vadd.f32 0.0, %v2593
    %v2595 = vpop.f32.mrb[0].mxu0
    %2596 = vmatprep.mubr.f32.mxu0 0.0
    %2597 = vmatmul.mubr.f32.gmra.mrb[0].mxu0 %v1352
    %v2598 = vpop.f32.mrb[0].mxu0
    %v2599 = vadd.f32 0.0, %v2598
    %v2600 = vpop.f32.mrb[0].mxu0
    %2601 = vmatprep.mubr.f32.mxu0 0.0
    %2602 = vmatmul.mubr.f32.gmra.mrb[0].mxu0 %v1357
    %v2603 = vpop.f32.mrb[0].mxu0
    %v2604 = vadd.f32 0.0, %v2603
    %v2605 = vpop.f32.mrb[0].mxu0
    %2606 = vmatprep.mubr.f32.mxu0 0.0
    %2607 = vmatmul.mubr.f32.gmra.mrb[0].mxu0 %v1362
    %v2608 = vpop.f32.mrb[0].mxu0
    %v2609 = vadd.f32 0.0, %v2608
    %v2610 = vpop.f32.mrb[0].mxu0
    %2611 = vdwg.mxu0
    %v2612 = vrcp.pop %v2526
    %v2613 = vmul.f32 %v2594, %v2612
    %v2614 = vmul.f32 %v2599, %v2612
    %v2615 = vmul.f32 %v2604, %v2612
    %v2616 = vmul.f32 %v2609, %v2612
    %2617 = vrot.lane.b32.xlu0 %v1401, 32
    %v2618 = vpop.permute.xlu0 %2617
    %2619 = vrot.lane.b32.xlu0 %v1402, 32
    %v2620 = vpop.permute.xlu0 %2619
    %2621 = vrot.lane.b32.xlu0 %v1403, 32
    %v2622 = vpop.permute.xlu0 %2621
    %2623 = vrot.lane.b32.xlu0 %v1404, 32
    %v2624 = vpop.permute.xlu0 %2623
    %2625 = vrot.lane.b32.xlu0 %v1405, 32
    %v2626 = vpop.permute.xlu0 %2625
    %2627 = vrot.lane.b32.xlu0 %v1406, 32
    %v2628 = vpop.permute.xlu0 %2627
    %2629 = vrot.lane.b32.xlu0 %v1407, 32
    %v2630 = vpop.permute.xlu0 %2629
    %2631 = vrot.lane.b32.xlu0 %v1408, 32
    %v2632 = vpop.permute.xlu0 %2631
    %2633 = vrot.lane.b32.xlu0 %v1409, 32
    %v2634 = vpop.permute.xlu0 %2633
    %2635 = vrot.lane.b32.xlu0 %v1410, 32
    %v2636 = vpop.permute.xlu0 %2635
    %2637 = vrot.lane.b32.xlu0 %v1411, 32
    %v2638 = vpop.permute.xlu0 %2637
    %2639 = vrot.lane.b32.xlu0 %v1412, 32
    %v2640 = vpop.permute.xlu0 %2639
    %2641 = vrot.lane.b32.xlu0 %v1413, 32
    %v2642 = vpop.permute.xlu0 %2641
    %2643 = vrot.lane.b32.xlu0 %v1414, 32
    %v2644 = vpop.permute.xlu0 %2643
    %2645 = vrot.lane.b32.xlu0 %v1415, 32
    %v2646 = vpop.permute.xlu0 %2645
    %2647 = vrot.lane.b32.xlu0 %v1416, 32
    %v2648 = vpop.permute.xlu0 %2647
    %v2649 = vsel %vm1417, %v2618, 0
    %v2651 = vsel %vm1417, %v2620, 0
    %v2653 = vsel %vm1417, %v2622, 0
    %v2655 = vsel %vm1417, %v2624, 0
    %v2657 = vsel %vm1417, %v2626, 0
    %v2659 = vsel %vm1417, %v2628, 0
    %v2661 = vsel %vm1417, %v2630, 0
    %v2663 = vsel %vm1417, %v2632, 0
    %v2665 = vsel %vm1417, %v2634, 0
    %v2667 = vsel %vm1417, %v2636, 0
    %v2669 = vsel %vm1417, %v2638, 0
    %v2671 = vsel %vm1417, %v2640, 0
    %v2673 = vsel %vm1417, %v2642, 0
    %v2675 = vsel %vm1417, %v2644, 0
    %v2677 = vsel %vm1417, %v2646, 0
    %v2679 = vsel %vm1417, %v2648, 0
    %2681 = vmatprep.subr.mxu0 0.0
    %2682 = vmatpush1.msra.mxu0 %v1207
    %2683 = vmatprep.subr.mxu0 0.0
    %2684 = vmatpush1.msra.mxu0 %v1212
    %2685 = vmatprep.subr.mxu0 0.0
    %2686 = vmatpush1.msra.mxu0 %v1217
    %2687 = vmatprep.subr.mxu0 0.0
    %2688 = vmatpush1.msra.mxu0 %v1222
    %2689 = vmatprep.subr.mxu0 0.0
    %2690 = vmatpush1.msra.mxu0 0.0
    %2691 = vmatprep.subr.mxu0 0.0
    %2692 = vmatpush1.msra.mxu0 0.0
    %2693 = vmatprep.subr.mxu0 0.0
    %2694 = vmatpush1.msra.mxu0 0.0
    %2695 = vmatprep.subr.mxu0 0.0
    %2696 = vmatpush1.msra.mxu0 0.0
    %2697 = vmatprep.subr.mxu0 0.0
    %2698 = vmatpush1.msra.mxu0 0.0
    %2699 = vmatprep.subr.mxu0 0.0
    %2700 = vmatpush1.msra.mxu0 0.0
    %2701 = vmatprep.subr.mxu0 0.0
    %2702 = vmatpush1.msra.mxu0 0.0
    %2703 = vmatprep.subr.mxu0 0.0
    %2704 = vmatpush1.msra.mxu0 0.0
    %2705 = vmatprep.subr.mxu0 0.0
    %2706 = vmatpush1.msra.mxu0 0.0
    %2707 = vmatprep.subr.mxu0 0.0
    %2708 = vmatpush1.msra.mxu0 0.0
    %2709 = vmatprep.subr.mxu0 0.0
    %2710 = vmatpush1.msra.mxu0 0.0
    %2711 = vmatprep.subr.mxu0 0.0
    %2712 = vmatpush1.msra.mxu0 0.0
    %2713 = vmatprep.subr.mxu0 0.0
    %2714 = vmatpush1.msra.mxu0 0.0
    %2715 = vmatprep.subr.mxu0 0.0
    %2716 = vmatpush1.msra.mxu0 0.0
    %2717 = vmatprep.subr.mxu0 0.0
    %2718 = vmatpush1.msra.mxu0 0.0
    %2719 = vmatprep.subr.mxu0 0.0
    %2720 = vmatpush1.msra.mxu0 0.0
    %2721 = vmatprep.subr.mxu0 0.0
    %2722 = vmatpush1.msra.mxu0 0.0
    %2723 = vmatprep.subr.mxu0 0.0
    %2724 = vmatpush1.msra.mxu0 0.0
    %2725 = vmatprep.subr.mxu0 0.0
    %2726 = vmatpush1.msra.mxu0 0.0
    %2727 = vmatprep.subr.mxu0 0.0
    %2728 = vmatpush1.msra.mxu0 0.0
    %2729 = vmatprep.subr.mxu0 0.0
    %2730 = vmatpush1.msra.mxu0 0.0
    %2731 = vmatprep.subr.mxu0 0.0
    %2732 = vmatpush1.msra.mxu0 0.0
    %2733 = vmatprep.subr.mxu0 0.0
    %2734 = vmatpush1.msra.mxu0 0.0
    %2735 = vmatprep.subr.mxu0 0.0
    %2736 = vmatpush1.msra.mxu0 0.0
    %2737 = vmatprep.subr.mxu0 0.0
    %2738 = vmatpush1.msra.mxu0 0.0
    %2739 = vmatprep.subr.mxu0 0.0
    %2740 = vmatpush1.msra.mxu0 0.0
    %2741 = vmatprep.subr.mxu0 0.0
    %2742 = vmatpush1.msra.mxu0 0.0
    %2743 = vmatprep.subr.mxu0 0.0
    %2744 = vmatpush1.msra.mxu0 0.0
    %2745 = vmatprep.mubr.f32.mxu0 0.0
    %2746 = vmatmul.mubr.f32.gmra.mrb[0].mxu0 %v2649
    %v2747 = vpop.f32.mrb[0].mxu0
    %v2748 = vadd.f32 0.0, %v2747
    %v2749 = vpop.f32.mrb[0].mxu0
    %2750 = vmatprep.mubr.f32.mxu0 0.0
    %2751 = vmatmul.mubr.f32.gmra.mrb[0].mxu0 %v2651
    %v2752 = vpop.f32.mrb[0].mxu0
    %v2753 = vadd.f32 0.0, %v2752
    %v2754 = vpop.f32.mrb[0].mxu0
    %2755 = vmatprep.mubr.f32.mxu0 0.0
    %2756 = vmatmul.mubr.f32.gmra.mrb[0].mxu0 %v2653
    %v2757 = vpop.f32.mrb[0].mxu0
    %v2758 = vadd.f32 0.0, %v2757
    %v2759 = vpop.f32.mrb[0].mxu0
    %2760 = vmatprep.mubr.f32.mxu0 0.0
    %2761 = vmatmul.mubr.f32.gmra.mrb[0].mxu0 %v2655
    %v2762 = vpop.f32.mrb[0].mxu0
    %v2763 = vadd.f32 0.0, %v2762
    %v2764 = vpop.f32.mrb[0].mxu0
    %2765 = vmatprep.mubr.f32.mxu0 0.0
    %2766 = vmatmul.mubr.f32.gmra.mrb[0].mxu0 %v2657
    %v2767 = vpop.f32.mrb[0].mxu0
    %v2768 = vadd.f32 0.0, %v2767
    %v2769 = vpop.f32.mrb[0].mxu0
    %2770 = vmatprep.mubr.f32.mxu0 0.0
    %2771 = vmatmul.mubr.f32.gmra.mrb[0].mxu0 %v2659
    %v2772 = vpop.f32.mrb[0].mxu0
    %v2773 = vadd.f32 0.0, %v2772
    %v2774 = vpop.f32.mrb[0].mxu0
    %2775 = vmatprep.mubr.f32.mxu0 0.0
    %2776 = vmatmul.mubr.f32.gmra.mrb[0].mxu0 %v2661
    %v2777 = vpop.f32.mrb[0].mxu0
    %v2778 = vadd.f32 0.0, %v2777
    %v2779 = vpop.f32.mrb[0].mxu0
    %2780 = vmatprep.mubr.f32.mxu0 0.0
    %2781 = vmatmul.mubr.f32.gmra.mrb[0].mxu0 %v2663
    %v2782 = vpop.f32.mrb[0].mxu0
    %v2783 = vadd.f32 0.0, %v2782
    %v2784 = vpop.f32.mrb[0].mxu0
    %2785 = vmatprep.mubr.f32.mxu0 0.0
    %2786 = vmatmul.mubr.f32.gmra.mrb[0].mxu0 %v2665
    %v2787 = vpop.f32.mrb[0].mxu0
    %v2788 = vadd.f32 0.0, %v2787
    %v2789 = vpop.f32.mrb[0].mxu0
    %2790 = vmatprep.mubr.f32.mxu0 0.0
    %2791 = vmatmul.mubr.f32.gmra.mrb[0].mxu0 %v2667
    %v2792 = vpop.f32.mrb[0].mxu0
    %v2793 = vadd.f32 0.0, %v2792
    %v2794 = vpop.f32.mrb[0].mxu0
    %2795 = vmatprep.mubr.f32.mxu0 0.0
    %2796 = vmatmul.mubr.f32.gmra.mrb[0].mxu0 %v2669
    %v2797 = vpop.f32.mrb[0].mxu0
    %v2798 = vadd.f32 0.0, %v2797
    %v2799 = vpop.f32.mrb[0].mxu0
    %2800 = vmatprep.mubr.f32.mxu0 0.0
    %2801 = vmatmul.mubr.f32.gmra.mrb[0].mxu0 %v2671
    %v2802 = vpop.f32.mrb[0].mxu0
    %v2803 = vadd.f32 0.0, %v2802
    %v2804 = vpop.f32.mrb[0].mxu0
    %2805 = vmatprep.mubr.f32.mxu0 0.0
    %2806 = vmatmul.mubr.f32.gmra.mrb[0].mxu0 %v2673
    %v2807 = vpop.f32.mrb[0].mxu0
    %v2808 = vadd.f32 0.0, %v2807
    %v2809 = vpop.f32.mrb[0].mxu0
    %2810 = vmatprep.mubr.f32.mxu0 0.0
    %2811 = vmatmul.mubr.f32.gmra.mrb[0].mxu0 %v2675
    %v2812 = vpop.f32.mrb[0].mxu0
    %v2813 = vadd.f32 0.0, %v2812
    %v2814 = vpop.f32.mrb[0].mxu0
    %2815 = vmatprep.mubr.f32.mxu0 0.0
    %2816 = vmatmul.mubr.f32.gmra.mrb[0].mxu0 %v2677
    %v2817 = vpop.f32.mrb[0].mxu0
    %v2818 = vadd.f32 0.0, %v2817
    %v2819 = vpop.f32.mrb[0].mxu0
    %2820 = vmatprep.mubr.f32.mxu0 0.0
    %2821 = vmatmul.mubr.f32.gmra.mrb[0].mxu0 %v2679
    %v2822 = vpop.f32.mrb[0].mxu0
    %v2823 = vadd.f32 0.0, %v2822
    %v2824 = vpop.f32.mrb[0].mxu0
    %2825 = vdwg.mxu0
    %v2826 = vmul.f32 %v2748, 0.17677669
    %v2827 = vmul.f32 %v2753, 0.17677669
    %v2828 = vmul.f32 %v2758, 0.17677669
    %v2829 = vmul.f32 %v2763, 0.17677669
    %v2830 = vmul.f32 %v2768, 0.17677669
    %v2831 = vmul.f32 %v2773, 0.17677669
    %v2832 = vmul.f32 %v2778, 0.17677669
    %v2833 = vmul.f32 %v2783, 0.17677669
    %v2834 = vmul.f32 %v2788, 0.17677669
    %v2835 = vmul.f32 %v2793, 0.17677669
    %v2836 = vmul.f32 %v2798, 0.17677669
    %v2837 = vmul.f32 %v2803, 0.17677669
    %v2838 = vmul.f32 %v2808, 0.17677669
    %v2839 = vmul.f32 %v2813, 0.17677669
    %v2840 = vmul.f32 %v2818, 0.17677669
    %v2841 = vmul.f32 %v2823, 0.17677669
    %v2842 = vmax.f32 %v2826, %v2830
    %v2843 = vmax.f32 %v2827, %v2831
    %v2844 = vmax.f32 %v2828, %v2832
    %v2845 = vmax.f32 %v2829, %v2833
    %v2846 = vmax.f32 %v2842, %v2834
    %v2847 = vmax.f32 %v2843, %v2835
    %v2848 = vmax.f32 %v2844, %v2836
    %v2849 = vmax.f32 %v2845, %v2837
    %v2850 = vmax.f32 %v2846, %v2838
    %v2851 = vmax.f32 %v2847, %v2839
    %v2852 = vmax.f32 %v2848, %v2840
    %v2853 = vmax.f32 %v2849, %v2841
    %v2854 = vmax.f32 %v2850, %v2851
    %v2855 = vmax.f32 %v2852, %v2853
    %v2856 = vmax.f32 %v2854, %v2855
    %v2857 = vrot.slane %v2856, 4
    %v2858 = vmax.f32 %v2856, %v2857
    %v2859 = vrot.slane %v2858, 2
    %v2860 = vmax.f32 %v2858, %v2859
    %v2861 = vrot.slane %v2860, 1
    %v2862 = vmax.f32 %v2860, %v2861
    %v2863 = vsub.f32 %v2826, %v2862
    %v2864 = vsub.f32 %v2827, %v2862
    %v2865 = vsub.f32 %v2828, %v2862
    %v2866 = vsub.f32 %v2829, %v2862
    %v2867 = vsub.f32 %v2830, %v2862
    %v2868 = vsub.f32 %v2831, %v2862
    %v2869 = vsub.f32 %v2832, %v2862
    %v2870 = vsub.f32 %v2833, %v2862
    %v2871 = vsub.f32 %v2834, %v2862
    %v2872 = vsub.f32 %v2835, %v2862
    %v2873 = vsub.f32 %v2836, %v2862
    %v2874 = vsub.f32 %v2837, %v2862
    %v2875 = vsub.f32 %v2838, %v2862
    %v2876 = vsub.f32 %v2839, %v2862
    %v2877 = vsub.f32 %v2840, %v2862
    %v2878 = vsub.f32 %v2841, %v2862
    %v2879 = vmul.f32 %v2863, 1.442695
    %v2880 = vpow.pop %v2879
    %v2881 = vmul.f32 %v2864, 1.442695
    %v2882 = vpow.pop %v2881
    %v2883 = vmul.f32 %v2865, 1.442695
    %v2884 = vpow.pop %v2883
    %v2885 = vmul.f32 %v2866, 1.442695
    %v2886 = vpow.pop %v2885
    %v2887 = vmul.f32 %v2867, 1.442695
    %v2888 = vpow.pop %v2887
    %v2889 = vmul.f32 %v2868, 1.442695
    %v2890 = vpow.pop %v2889
    %v2891 = vmul.f32 %v2869, 1.442695
    %v2892 = vpow.pop %v2891
    %v2893 = vmul.f32 %v2870, 1.442695
    %v2894 = vpow.pop %v2893
    %v2895 = vmul.f32 %v2871, 1.442695
    %v2896 = vpow.pop %v2895
    %v2897 = vmul.f32 %v2872, 1.442695
    %v2898 = vpow.pop %v2897
    %v2899 = vmul.f32 %v2873, 1.442695
    %v2900 = vpow.pop %v2899
    %v2901 = vmul.f32 %v2874, 1.442695
    %v2902 = vpow.pop %v2901
    %v2903 = vmul.f32 %v2875, 1.442695
    %v2904 = vpow.pop %v2903
    %v2905 = vmul.f32 %v2876, 1.442695
    %v2906 = vpow.pop %v2905
    %v2907 = vmul.f32 %v2877, 1.442695
    %v2908 = vpow.pop %v2907
    %v2909 = vmul.f32 %v2878, 1.442695
    %v2910 = vpow.pop %v2909
    %v2911 = vadd.f32 %v2880, %v2882
    %v2912 = vadd.f32 %v2911, %v2884
    %v2913 = vadd.f32 %v2912, %v2886
    %v2914 = vadd.f32 %v2913, %v2888
    %v2915 = vadd.f32 %v2914, %v2890
    %v2916 = vadd.f32 %v2915, %v2892
    %v2917 = vadd.f32 %v2916, %v2894
    %v2918 = vadd.f32 %v2917, %v2896
    %v2919 = vadd.f32 %v2918, %v2898
    %v2920 = vadd.f32 %v2919, %v2900
    %v2921 = vadd.f32 %v2920, %v2902
    %v2922 = vadd.f32 %v2921, %v2904
    %v2923 = vadd.f32 %v2922, %v2906
    %v2924 = vadd.f32 %v2923, %v2908
    %v2925 = vadd.f32 %v2924, %v2910
    %v2926 = vrot.slane %v2925, 4
    %v2927 = vadd.f32 %v2925, %v2926
    %v2928 = vrot.slane %v2927, 2
    %v2929 = vadd.f32 %v2927, %v2928
    %v2930 = vrot.slane %v2929, 1
    %v2931 = vadd.f32 %v2929, %v2930
    %2932 = vmatprep.subr.mxu0 0.0
    %2933 = vmatpush1.msra.mxu0 %v2880
    %2934 = vmatprep.subr.mxu0 0.0
    %2935 = vmatpush1.msra.mxu0 %v2882
    %2936 = vmatprep.subr.mxu0 0.0
    %2937 = vmatpush1.msra.mxu0 %v2884
    %2938 = vmatprep.subr.mxu0 0.0
    %2939 = vmatpush1.msra.mxu0 %v2886
    %2940 = vmatprep.subr.mxu0 0.0
    %2941 = vmatpush1.msra.mxu0 %v2888
    %2942 = vmatprep.subr.mxu0 0.0
    %2943 = vmatpush1.msra.mxu0 %v2890
    %2944 = vmatprep.subr.mxu0 0.0
    %2945 = vmatpush1.msra.mxu0 %v2892
    %2946 = vmatprep.subr.mxu0 0.0
    %2947 = vmatpush1.msra.mxu0 %v2894
    %2948 = vmatprep.subr.mxu0 0.0
    %2949 = vmatpush1.msra.mxu0 %v2896
    %2950 = vmatprep.subr.mxu0 0.0
    %2951 = vmatpush1.msra.mxu0 %v2898
    %2952 = vmatprep.subr.mxu0 0.0
    %2953 = vmatpush1.msra.mxu0 %v2900
    %2954 = vmatprep.subr.mxu0 0.0
    %2955 = vmatpush1.msra.mxu0 %v2902
    %2956 = vmatprep.subr.mxu0 0.0
    %2957 = vmatpush1.msra.mxu0 %v2904
    %2958 = vmatprep.subr.mxu0 0.0
    %2959 = vmatpush1.msra.mxu0 %v2906
    %2960 = vmatprep.subr.mxu0 0.0
    %2961 = vmatpush1.msra.mxu0 %v2908
    %2962 = vmatprep.subr.mxu0 0.0
    %2963 = vmatpush1.msra.mxu0 %v2910
    %2964 = vmatprep.subr.mxu0 0.0
    %2965 = vmatpush1.msra.mxu0 0.0
    %2966 = vmatprep.subr.mxu0 0.0
    %2967 = vmatpush1.msra.mxu0 0.0
    %2968 = vmatprep.subr.mxu0 0.0
    %2969 = vmatpush1.msra.mxu0 0.0
    %2970 = vmatprep.subr.mxu0 0.0
    %2971 = vmatpush1.msra.mxu0 0.0
    %2972 = vmatprep.subr.mxu0 0.0
    %2973 = vmatpush1.msra.mxu0 0.0
    %2974 = vmatprep.subr.mxu0 0.0
    %2975 = vmatpush1.msra.mxu0 0.0
    %2976 = vmatprep.subr.mxu0 0.0
    %2977 = vmatpush1.msra.mxu0 0.0
    %2978 = vmatprep.subr.mxu0 0.0
    %2979 = vmatpush1.msra.mxu0 0.0
    %2980 = vmatprep.subr.mxu0 0.0
    %2981 = vmatpush1.msra.mxu0 0.0
    %2982 = vmatprep.subr.mxu0 0.0
    %2983 = vmatpush1.msra.mxu0 0.0
    %2984 = vmatprep.subr.mxu0 0.0
    %2985 = vmatpush1.msra.mxu0 0.0
    %2986 = vmatprep.subr.mxu0 0.0
    %2987 = vmatpush1.msra.mxu0 0.0
    %2988 = vmatprep.subr.mxu0 0.0
    %2989 = vmatpush1.msra.mxu0 0.0
    %2990 = vmatprep.subr.mxu0 0.0
    %2991 = vmatpush1.msra.mxu0 0.0
    %2992 = vmatprep.subr.mxu0 0.0
    %2993 = vmatpush1.msra.mxu0 0.0
    %2994 = vmatprep.subr.mxu0 0.0
    %2995 = vmatpush1.msra.mxu0 0.0
    %2996 = vmatprep.mubr.f32.mxu0 0.0
    %2997 = vmatmul.mubr.f32.gmra.mrb[0].mxu0 %v1367
    %v2998 = vpop.f32.mrb[0].mxu0
    %v2999 = vadd.f32 0.0, %v2998
    %v3000 = vpop.f32.mrb[0].mxu0
    %3001 = vmatprep.mubr.f32.mxu0 0.0
    %3002 = vmatmul.mubr.f32.gmra.mrb[0].mxu0 %v1372
    %v3003 = vpop.f32.mrb[0].mxu0
    %v3004 = vadd.f32 0.0, %v3003
    %v3005 = vpop.f32.mrb[0].mxu0
    %3006 = vmatprep.mubr.f32.mxu0 0.0
    %3007 = vmatmul.mubr.f32.gmra.mrb[0].mxu0 %v1377
    %v3008 = vpop.f32.mrb[0].mxu0
    %v3009 = vadd.f32 0.0, %v3008
    %v3010 = vpop.f32.mrb[0].mxu0
    %3011 = vmatprep.mubr.f32.mxu0 0.0
    %3012 = vmatmul.mubr.f32.gmra.mrb[0].mxu0 %v1382
    %v3013 = vpop.f32.mrb[0].mxu0
    %v3014 = vadd.f32 0.0, %v3013
    %v3015 = vpop.f32.mrb[0].mxu0
    %3016 = vdwg.mxu0
    %v3017 = vrcp.pop %v2931
    %v3018 = vmul.f32 %v2999, %v3017
    %v3019 = vmul.f32 %v3004, %v3017
    %v3020 = vmul.f32 %v3009, %v3017
    %v3021 = vmul.f32 %v3014, %v3017
    %3023 = vset.pattern.permute.xlu0 0
    %3024 = vperm.xlu0 %3023, %v124
    %v3025 = vpop.permute.xlu0 %3024
    %3028 = vset.pattern.permute.xlu0 0
    %3029 = vperm.xlu0 %3028, %v125
    %v3030 = vpop.permute.xlu0 %3029
    %3033 = vset.pattern.permute.xlu0 0
    %3034 = vperm.xlu0 %3033, %v126
    %v3035 = vpop.permute.xlu0 %3034
    %3038 = vset.pattern.permute.xlu0 0
    %3039 = vperm.xlu0 %3038, %v127
    %v3040 = vpop.permute.xlu0 %3039
    %3043 = vset.pattern.permute.xlu0 0
    %3044 = vperm.xlu0 %3043, %v128
    %v3045 = vpop.permute.xlu0 %3044
    %3048 = vset.pattern.permute.xlu0 0
    %3049 = vperm.xlu0 %3048, %v129
    %v3050 = vpop.permute.xlu0 %3049
    %3053 = vset.pattern.permute.xlu0 0
    %3054 = vperm.xlu0 %3053, %v130
    %v3055 = vpop.permute.xlu0 %3054
    %3058 = vset.pattern.permute.xlu0 0
    %3059 = vperm.xlu0 %3058, %v131
    %v3060 = vpop.permute.xlu0 %3059
    %3062 = vmatprep.subr.mxu0 0.0
    %3063 = vmatpush1.msra.mxu0 %v1803
    %3064 = vmatprep.subr.mxu0 0.0
    %3065 = vmatpush1.msra.mxu0 %v1804
    %3066 = vmatprep.subr.mxu0 0.0
    %3067 = vmatpush1.msra.mxu0 %v1805
    %3068 = vmatprep.subr.mxu0 0.0
    %3069 = vmatpush1.msra.mxu0 %v1806
    %3070 = vmatprep.subr.mxu0 0.0
    %3071 = vmatpush1.msra.mxu0 %v2208
    %3072 = vmatprep.subr.mxu0 0.0
    %3073 = vmatpush1.msra.mxu0 %v2209
    %3074 = vmatprep.subr.mxu0 0.0
    %3075 = vmatpush1.msra.mxu0 %v2210
    %3076 = vmatprep.subr.mxu0 0.0
    %3077 = vmatpush1.msra.mxu0 %v2211
    %3078 = vmatprep.subr.mxu0 0.0
    %3079 = vmatpush1.msra.mxu0 %v2613
    %3080 = vmatprep.subr.mxu0 0.0
    %3081 = vmatpush1.msra.mxu0 %v2614
    %3082 = vmatprep.subr.mxu0 0.0
    %3083 = vmatpush1.msra.mxu0 %v2615
    %3084 = vmatprep.subr.mxu0 0.0
    %3085 = vmatpush1.msra.mxu0 %v2616
    %3086 = vmatprep.subr.mxu0 0.0
    %3087 = vmatpush1.msra.mxu0 %v3018
    %3088 = vmatprep.subr.mxu0 0.0
    %3089 = vmatpush1.msra.mxu0 %v3019
    %3090 = vmatprep.subr.mxu0 0.0
    %3091 = vmatpush1.msra.mxu0 %v3020
    %3092 = vmatprep.subr.mxu0 0.0
    %3093 = vmatpush1.msra.mxu0 %v3021
    %3094 = vmatprep.subr.mxu0 0.0
    %3095 = vmatpush1.msra.mxu0 0.0
    %3096 = vmatprep.subr.mxu0 0.0
    %3097 = vmatpush1.msra.mxu0 0.0
    %3098 = vmatprep.subr.mxu0 0.0
    %3099 = vmatpush1.msra.mxu0 0.0
    %3100 = vmatprep.subr.mxu0 0.0
    %3101 = vmatpush1.msra.mxu0 0.0
    %3102 = vmatprep.subr.mxu0 0.0
    %3103 = vmatpush1.msra.mxu0 0.0
    %3104 = vmatprep.subr.mxu0 0.0
    %3105 = vmatpush1.msra.mxu0 0.0
    %3106 = vmatprep.subr.mxu0 0.0
    %3107 = vmatpush1.msra.mxu0 0.0
    %3108 = vmatprep.subr.mxu0 0.0
    %3109 = vmatpush1.msra.mxu0 0.0
    %3110 = vmatprep.subr.mxu0 0.0
    %3111 = vmatpush1.msra.mxu0 0.0
    %3112 = vmatprep.subr.mxu0 0.0
    %3113 = vmatpush1.msra.mxu0 0.0
    %3114 = vmatprep.subr.mxu0 0.0
    %3115 = vmatpush1.msra.mxu0 0.0
    %3116 = vmatprep.subr.mxu0 0.0
    %3117 = vmatpush1.msra.mxu0 0.0
    %3118 = vmatprep.subr.mxu0 0.0
    %3119 = vmatpush1.msra.mxu0 0.0
    %3120 = vmatprep.subr.mxu0 0.0
    %3121 = vmatpush1.msra.mxu0 0.0
    %3122 = vmatprep.subr.mxu0 0.0
    %3123 = vmatpush1.msra.mxu0 0.0
    %3124 = vmatprep.subr.mxu0 0.0
    %3125 = vmatpush1.msra.mxu0 0.0
    %3126 = vmatprep.mubr.f32.mxu0 0.0
    %3127 = vmatmul.mubr.f32.gmra.mrb[0].mxu0 %v116
    %v3128 = vpop.f32.mrb[0].mxu0
    %v3129 = vadd.f32 %v3025, %v3128
    %v3130 = vpop.f32.mrb[0].mxu0
    %3131 = vmatprep.mubr.f32.mxu0 0.0
    %3132 = vmatmul.mubr.f32.gmra.mrb[0].mxu0 %v117
    %v3133 = vpop.f32.mrb[0].mxu0
    %v3134 = vadd.f32 %v3030, %v3133
    %v3135 = vpop.f32.mrb[0].mxu0
    %3136 = vmatprep.mubr.f32.mxu0 0.0
    %3137 = vmatmul.mubr.f32.gmra.mrb[0].mxu0 %v118
    %v3138 = vpop.f32.mrb[0].mxu0
    %v3139 = vadd.f32 %v3035, %v3138
    %v3140 = vpop.f32.mrb[0].mxu0
    %3141 = vmatprep.mubr.f32.mxu0 0.0
    %3142 = vmatmul.mubr.f32.gmra.mrb[0].mxu0 %v119
    %v3143 = vpop.f32.mrb[0].mxu0
    %v3144 = vadd.f32 %v3040, %v3143
    %v3145 = vpop.f32.mrb[0].mxu0
    %3146 = vmatprep.mubr.f32.mxu0 0.0
    %3147 = vmatmul.mubr.f32.gmra.mrb[0].mxu0 %v120
    %v3148 = vpop.f32.mrb[0].mxu0
    %v3149 = vadd.f32 %v3045, %v3148
    %v3150 = vpop.f32.mrb[0].mxu0
    %3151 = vmatprep.mubr.f32.mxu0 0.0
    %3152 = vmatmul.mubr.f32.gmra.mrb[0].mxu0 %v121
    %v3153 = vpop.f32.mrb[0].mxu0
    %v3154 = vadd.f32 %v3050, %v3153
    %v3155 = vpop.f32.mrb[0].mxu0
    %3156 = vmatprep.mubr.f32.mxu0 0.0
    %3157 = vmatmul.mubr.f32.gmra.mrb[0].mxu0 %v122
    %v3158 = vpop.f32.mrb[0].mxu0
    %v3159 = vadd.f32 %v3055, %v3158
    %v3160 = vpop.f32.mrb[0].mxu0
    %3161 = vmatprep.mubr.f32.mxu0 0.0
    %3162 = vmatmul.mubr.f32.gmra.mrb[0].mxu0 %v123
    %v3163 = vpop.f32.mrb[0].mxu0
    %v3164 = vadd.f32 %v3060, %v3163
    %v3165 = vpop.f32.mrb[0].mxu0
    %3166 = vdwg.mxu0
    %v3167 = vadd.f32 %v3129, %v928
    %v3168 = vadd.f32 %v3134, %v929
    %v3169 = vadd.f32 %v3139, %v930
    %v3170 = vadd.f32 %v3144, %v931
    %v3171 = vadd.f32 %v3149, %v932
    %v3172 = vadd.f32 %v3154, %v933
    %v3173 = vadd.f32 %v3159, %v934
    %v3174 = vadd.f32 %v3164, %v935
    %v3175 = vmul.f32 %v3167, 0.5
    %v3176 = vmul.f32 %v3168, 0.5
    %v3177 = vmul.f32 %v3169, 0.5
    %v3178 = vmul.f32 %v3170, 0.5
    %v3179 = vmul.f32 %v3171, 0.5
    %v3180 = vmul.f32 %v3172, 0.5
    %v3181 = vmul.f32 %v3173, 0.5
    %v3182 = vmul.f32 %v3174, 0.5
    %v3183 = vmul.f32 %v3167, %v334
    %v3184 = vmul.f32 %v3168, %v334
    %v3185 = vmul.f32 %v3169, %v334
    %v3186 = vmul.f32 %v3170, %v334
    %v3187 = vmul.f32 %v3171, %v334
    %v3188 = vmul.f32 %v3172, %v334
    %v3189 = vmul.f32 %v3173, %v334
    %v3190 = vmul.f32 %v3174, %v334
    %vm3191 = vcmp.ge.f32.partialorder %v3183, 0.0
    %vm3192 = vcmp.ge.f32.partialorder %v3184, 0.0
    %vm3193 = vcmp.ge.f32.partialorder %v3185, 0.0
    %vm3194 = vcmp.ge.f32.partialorder %v3186, 0.0
    %vm3195 = vcmp.ge.f32.partialorder %v3187, 0.0
    %vm3196 = vcmp.ge.f32.partialorder %v3188, 0.0
    %vm3197 = vcmp.ge.f32.partialorder %v3189, 0.0
    %vm3198 = vcmp.ge.f32.partialorder %v3190, 0.0
    %v3199 = vsel %vm3191, 1.0, -1.0
    %v3200 = vsel %vm3192, 1.0, -1.0
    %v3201 = vsel %vm3193, 1.0, -1.0
    %v3202 = vsel %vm3194, 1.0, -1.0
    %v3203 = vsel %vm3195, 1.0, -1.0
    %v3204 = vsel %vm3196, 1.0, -1.0
    %v3205 = vsel %vm3197, 1.0, -1.0
    %v3206 = vsel %vm3198, 1.0, -1.0
    %v3207 = vand.u32 2147483647, %v3183
    %v3208 = vand.u32 2147483647, %v3184
    %v3209 = vand.u32 2147483647, %v3185
    %v3210 = vand.u32 2147483647, %v3186
    %v3211 = vand.u32 2147483647, %v3187
    %v3212 = vand.u32 2147483647, %v3188
    %v3213 = vand.u32 2147483647, %v3189
    %v3214 = vand.u32 2147483647, %v3190
    %v3215 = vmul.f32 %v3207, 0.3275911
    %v3216 = vmul.f32 %v3208, 0.3275911
    %v3217 = vmul.f32 %v3209, 0.3275911
    %v3218 = vmul.f32 %v3210, 0.3275911
    %v3219 = vmul.f32 %v3211, 0.3275911
    %v3220 = vmul.f32 %v3212, 0.3275911
    %v3221 = vmul.f32 %v3213, 0.3275911
    %v3222 = vmul.f32 %v3214, 0.3275911
    %v3223 = vadd.f32 %v3215, 1.0
    %v3224 = vadd.f32 %v3216, 1.0
    %v3225 = vadd.f32 %v3217, 1.0
    %v3226 = vadd.f32 %v3218, 1.0
    %v3227 = vadd.f32 %v3219, 1.0
    %v3228 = vadd.f32 %v3220, 1.0
    %v3229 = vadd.f32 %v3221, 1.0
    %v3230 = vadd.f32 %v3222, 1.0
    %v3231 = vrcp.pop %v3223
    %v3232 = vmul.f32 1.0, %v3231
    %v3233 = vrcp.pop %v3224
    %v3234 = vmul.f32 1.0, %v3233
    %v3235 = vrcp.pop %v3225
    %v3236 = vmul.f32 1.0, %v3235
    %v3237 = vrcp.pop %v3226
    %v3238 = vmul.f32 1.0, %v3237
    %v3239 = vrcp.pop %v3227
    %v3240 = vmul.f32 1.0, %v3239
    %v3241 = vrcp.pop %v3228
    %v3242 = vmul.f32 1.0, %v3241
    %v3243 = vrcp.pop %v3229
    %v3244 = vmul.f32 1.0, %v3243
    %v3245 = vrcp.pop %v3230
    %v3246 = vmul.f32 1.0, %v3245
    %v3247 = vmul.f32 %v3232, 1.0614054
    %v3248 = vmul.f32 %v3234, 1.0614054
    %v3249 = vmul.f32 %v3236, 1.0614054
    %v3250 = vmul.f32 %v3238, 1.0614054
    %v3251 = vmul.f32 %v3240, 1.0614054
    %v3252 = vmul.f32 %v3242, 1.0614054
    %v3253 = vmul.f32 %v3244, 1.0614054
    %v3254 = vmul.f32 %v3246, 1.0614054
    %v3255 = vadd.f32 %v3247, -1.4531521
    %v3256 = vadd.f32 %v3248, -1.4531521
    %v3257 = vadd.f32 %v3249, -1.4531521
    %v3258 = vadd.f32 %v3250, -1.4531521
    %v3259 = vadd.f32 %v3251, -1.4531521
    %v3260 = vadd.f32 %v3252, -1.4531521
    %v3261 = vadd.f32 %v3253, -1.4531521
    %v3262 = vadd.f32 %v3254, -1.4531521
    %v3263 = vmul.f32 %v3255, %v3232
    %v3264 = vmul.f32 %v3256, %v3234
    %v3265 = vmul.f32 %v3257, %v3236
    %v3266 = vmul.f32 %v3258, %v3238
    %v3267 = vmul.f32 %v3259, %v3240
    %v3268 = vmul.f32 %v3260, %v3242
    %v3269 = vmul.f32 %v3261, %v3244
    %v3270 = vmul.f32 %v3262, %v3246
    %v3271 = vadd.f32 %v3263, 1.4214138
    %v3272 = vadd.f32 %v3264, 1.4214138
    %v3273 = vadd.f32 %v3265, 1.4214138
    %v3274 = vadd.f32 %v3266, 1.4214138
    %v3275 = vadd.f32 %v3267, 1.4214138
    %v3276 = vadd.f32 %v3268, 1.4214138
    %v3277 = vadd.f32 %v3269, 1.4214138
    %v3278 = vadd.f32 %v3270, 1.4214138
    %v3279 = vmul.f32 %v3271, %v3232
    %v3280 = vmul.f32 %v3272, %v3234
    %v3281 = vmul.f32 %v3273, %v3236
    %v3282 = vmul.f32 %v3274, %v3238
    %v3283 = vmul.f32 %v3275, %v3240
    %v3284 = vmul.f32 %v3276, %v3242
    %v3285 = vmul.f32 %v3277, %v3244
    %v3286 = vmul.f32 %v3278, %v3246
    %v3287 = vadd.f32 %v3279, -0.28449672
    %v3288 = vadd.f32 %v3280, -0.28449672
    %v3289 = vadd.f32 %v3281, -0.28449672
    %v3290 = vadd.f32 %v3282, -0.28449672
    %v3291 = vadd.f32 %v3283, -0.28449672
    %v3292 = vadd.f32 %v3284, -0.28449672
    %v3293 = vadd.f32 %v3285, -0.28449672
    %v3294 = vadd.f32 %v3286, -0.28449672
    %v3295 = vmul.f32 %v3287, %v3232
    %v3296 = vmul.f32 %v3288, %v3234
    %v3297 = vmul.f32 %v3289, %v3236
    %v3298 = vmul.f32 %v3290, %v3238
    %v3299 = vmul.f32 %v3291, %v3240
    %v3300 = vmul.f32 %v3292, %v3242
    %v3301 = vmul.f32 %v3293, %v3244
    %v3302 = vmul.f32 %v3294, %v3246
    %v3303 = vadd.f32 %v3295, 0.2548296
    %v3304 = vadd.f32 %v3296, 0.2548296
    %v3305 = vadd.f32 %v3297, 0.2548296
    %v3306 = vadd.f32 %v3298, 0.2548296
    %v3307 = vadd.f32 %v3299, 0.2548296
    %v3308 = vadd.f32 %v3300, 0.2548296
    %v3309 = vadd.f32 %v3301, 0.2548296
    %v3310 = vadd.f32 %v3302, 0.2548296
    %v3311 = vmul.f32 %v3303, %v3232
    %v3312 = vmul.f32 %v3304, %v3234
    %v3313 = vmul.f32 %v3305, %v3236
    %v3314 = vmul.f32 %v3306, %v3238
    %v3315 = vmul.f32 %v3307, %v3240
    %v3316 = vmul.f32 %v3308, %v3242
    %v3317 = vmul.f32 %v3309, %v3244
    %v3318 = vmul.f32 %v3310, %v3246
    %v3319 = vsub.f32 0.0, %v3207
    %v3320 = vsub.f32 0.0, %v3208
    %v3321 = vsub.f32 0.0, %v3209
    %v3322 = vsub.f32 0.0, %v3210
    %v3323 = vsub.f32 0.0, %v3211
    %v3324 = vsub.f32 0.0, %v3212
    %v3325 = vsub.f32 0.0, %v3213
    %v3326 = vsub.f32 0.0, %v3214
    %v3327 = vmul.f32 %v3319, %v3207
    %v3328 = vmul.f32 %v3320, %v3208
    %v3329 = vmul.f32 %v3321, %v3209
    %v3330 = vmul.f32 %v3322, %v3210
    %v3331 = vmul.f32 %v3323, %v3211
    %v3332 = vmul.f32 %v3324, %v3212
    %v3333 = vmul.f32 %v3325, %v3213
    %v3334 = vmul.f32 %v3326, %v3214
    %v3335 = vmul.f32 %v3327, 1.442695
    %v3336 = vpow.pop %v3335
    %v3337 = vmul.f32 %v3328, 1.442695
    %v3338 = vpow.pop %v3337
    %v3339 = vmul.f32 %v3329, 1.442695
    %v3340 = vpow.pop %v3339
    %v3341 = vmul.f32 %v3330, 1.442695
    %v3342 = vpow.pop %v3341
    %v3343 = vmul.f32 %v3331, 1.442695
    %v3344 = vpow.pop %v3343
    %v3345 = vmul.f32 %v3332, 1.442695
    %v3346 = vpow.pop %v3345
    %v3347 = vmul.f32 %v3333, 1.442695
    %v3348 = vpow.pop %v3347
    %v3349 = vmul.f32 %v3334, 1.442695
    %v3350 = vpow.pop %v3349
    %v3351 = vmul.f32 %v3311, %v3336
    %v3352 = vmul.f32 %v3312, %v3338
    %v3353 = vmul.f32 %v3313, %v3340
    %v3354 = vmul.f32 %v3314, %v3342
    %v3355 = vmul.f32 %v3315, %v3344
    %v3356 = vmul.f32 %v3316, %v3346
    %v3357 = vmul.f32 %v3317, %v3348
    %v3358 = vmul.f32 %v3318, %v3350
    %v3359 = vsub.f32 1.0, %v3351
    %v3360 = vsub.f32 1.0, %v3352
    %v3361 = vsub.f32 1.0, %v3353
    %v3362 = vsub.f32 1.0, %v3354
    %v3363 = vsub.f32 1.0, %v3355
    %v3364 = vsub.f32 1.0, %v3356
    %v3365 = vsub.f32 1.0, %v3357
    %v3366 = vsub.f32 1.0, %v3358
    %v3367 = vmul.f32 %v3199, %v3359
    %v3368 = vmul.f32 %v3200, %v3360
    %v3369 = vmul.f32 %v3201, %v3361
    %v3370 = vmul.f32 %v3202, %v3362
    %v3371 = vmul.f32 %v3203, %v3363
    %v3372 = vmul.f32 %v3204, %v3364
    %v3373 = vmul.f32 %v3205, %v3365
    %v3374 = vmul.f32 %v3206, %v3366
    %v3375 = vadd.f32 %v3367, 1.0
    %v3376 = vadd.f32 %v3368, 1.0
    %v3377 = vadd.f32 %v3369, 1.0
    %v3378 = vadd.f32 %v3370, 1.0
    %v3379 = vadd.f32 %v3371, 1.0
    %v3380 = vadd.f32 %v3372, 1.0
    %v3381 = vadd.f32 %v3373, 1.0
    %v3382 = vadd.f32 %v3374, 1.0
    %v3383 = vmul.f32 %v3175, %v3375
    %v3384 = vmul.f32 %v3176, %v3376
    %v3385 = vmul.f32 %v3177, %v3377
    %v3386 = vmul.f32 %v3178, %v3378
    %v3387 = vmul.f32 %v3179, %v3379
    %v3388 = vmul.f32 %v3180, %v3380
    %v3389 = vmul.f32 %v3181, %v3381
    %v3390 = vmul.f32 %v3182, %v3382
    %3392 = vset.pattern.permute.xlu0 0
    %3393 = vperm.xlu0 %3392, %v140
    %v3394 = vpop.permute.xlu0 %3393
    %3397 = vset.pattern.permute.xlu0 0
    %3398 = vperm.xlu0 %3397, %v141
    %v3399 = vpop.permute.xlu0 %3398
    %3402 = vset.pattern.permute.xlu0 0
    %3403 = vperm.xlu0 %3402, %v142
    %v3404 = vpop.permute.xlu0 %3403
    %3407 = vset.pattern.permute.xlu0 0
    %3408 = vperm.xlu0 %3407, %v143
    %v3409 = vpop.permute.xlu0 %3408
    %3412 = vset.pattern.permute.xlu0 0
    %3413 = vperm.xlu0 %3412, %v144
    %v3414 = vpop.permute.xlu0 %3413
    %3417 = vset.pattern.permute.xlu0 0
    %3418 = vperm.xlu0 %3417, %v145
    %v3419 = vpop.permute.xlu0 %3418
    %3422 = vset.pattern.permute.xlu0 0
    %3423 = vperm.xlu0 %3422, %v146
    %v3424 = vpop.permute.xlu0 %3423
    %3427 = vset.pattern.permute.xlu0 0
    %3428 = vperm.xlu0 %3427, %v147
    %v3429 = vpop.permute.xlu0 %3428
    %v3432 = vsel %vm196, %v132, 0
    %v3435 = vsel %vm196, %v133, 0
    %v3438 = vsel %vm196, %v134, 0
    %v3441 = vsel %vm196, %v135, 0
    %v3444 = vsel %vm196, %v136, 0
    %v3447 = vsel %vm196, %v137, 0
    %v3450 = vsel %vm196, %v138, 0
    %v3453 = vsel %vm196, %v139, 0
    %3455 = vmatprep.subr.mxu0 0.0
    %3456 = vmatpush1.msra.mxu0 %v3383
    %3457 = vmatprep.subr.mxu0 0.0
    %3458 = vmatpush1.msra.mxu0 %v3384
    %3459 = vmatprep.subr.mxu0 0.0
    %3460 = vmatpush1.msra.mxu0 %v3385
    %3461 = vmatprep.subr.mxu0 0.0
    %3462 = vmatpush1.msra.mxu0 %v3386
    %3463 = vmatprep.subr.mxu0 0.0
    %3464 = vmatpush1.msra.mxu0 %v3387
    %3465 = vmatprep.subr.mxu0 0.0
    %3466 = vmatpush1.msra.mxu0 %v3388
    %3467 = vmatprep.subr.mxu0 0.0
    %3468 = vmatpush1.msra.mxu0 %v3389
    %3469 = vmatprep.subr.mxu0 0.0
    %3470 = vmatpush1.msra.mxu0 %v3390
    %3471 = vmatprep.subr.mxu0 0.0
    %3472 = vmatpush1.msra.mxu0 0.0
    %3473 = vmatprep.subr.mxu0 0.0
    %3474 = vmatpush1.msra.mxu0 0.0
    %3475 = vmatprep.subr.mxu0 0.0
    %3476 = vmatpush1.msra.mxu0 0.0
    %3477 = vmatprep.subr.mxu0 0.0
    %3478 = vmatpush1.msra.mxu0 0.0
    %3479 = vmatprep.subr.mxu0 0.0
    %3480 = vmatpush1.msra.mxu0 0.0
    %3481 = vmatprep.subr.mxu0 0.0
    %3482 = vmatpush1.msra.mxu0 0.0
    %3483 = vmatprep.subr.mxu0 0.0
    %3484 = vmatpush1.msra.mxu0 0.0
    %3485 = vmatprep.subr.mxu0 0.0
    %3486 = vmatpush1.msra.mxu0 0.0
    %3487 = vmatprep.subr.mxu0 0.0
    %3488 = vmatpush1.msra.mxu0 0.0
    %3489 = vmatprep.subr.mxu0 0.0
    %3490 = vmatpush1.msra.mxu0 0.0
    %3491 = vmatprep.subr.mxu0 0.0
    %3492 = vmatpush1.msra.mxu0 0.0
    %3493 = vmatprep.subr.mxu0 0.0
    %3494 = vmatpush1.msra.mxu0 0.0
    %3495 = vmatprep.subr.mxu0 0.0
    %3496 = vmatpush1.msra.mxu0 0.0
    %3497 = vmatprep.subr.mxu0 0.0
    %3498 = vmatpush1.msra.mxu0 0.0
    %3499 = vmatprep.subr.mxu0 0.0
    %3500 = vmatpush1.msra.mxu0 0.0
    %3501 = vmatprep.subr.mxu0 0.0
    %3502 = vmatpush1.msra.mxu0 0.0
    %3503 = vmatprep.subr.mxu0 0.0
    %3504 = vmatpush1.msra.mxu0 0.0
    %3505 = vmatprep.subr.mxu0 0.0
    %3506 = vmatpush1.msra.mxu0 0.0
    %3507 = vmatprep.subr.mxu0 0.0
    %3508 = vmatpush1.msra.mxu0 0.0
    %3509 = vmatprep.subr.mxu0 0.0
    %3510 = vmatpush1.msra.mxu0 0.0
    %3511 = vmatprep.subr.mxu0 0.0
    %3512 = vmatpush1.msra.mxu0 0.0
    %3513 = vmatprep.subr.mxu0 0.0
    %3514 = vmatpush1.msra.mxu0 0.0
    %3515 = vmatprep.subr.mxu0 0.0
    %3516 = vmatpush1.msra.mxu0 0.0
    %3517 = vmatprep.subr.mxu0 0.0
    %3518 = vmatpush1.msra.mxu0 0.0
    %3519 = vmatprep.mubr.f32.mxu0 0.0
    %3520 = vmatmul.mubr.f32.gmra.mrb[0].mxu0 %v3432
    %v3521 = vpop.f32.mrb[0].mxu0
    %v3522 = vadd.f32 %v3394, %v3521
    %v3523 = vpop.f32.mrb[0].mxu0
    %3524 = vmatprep.mubr.f32.mxu0 0.0
    %3525 = vmatmul.mubr.f32.gmra.mrb[0].mxu0 %v3435
    %v3526 = vpop.f32.mrb[0].mxu0
    %v3527 = vadd.f32 %v3399, %v3526
    %v3528 = vpop.f32.mrb[0].mxu0
    %3529 = vmatprep.mubr.f32.mxu0 0.0
    %3530 = vmatmul.mubr.f32.gmra.mrb[0].mxu0 %v3438
    %v3531 = vpop.f32.mrb[0].mxu0
    %v3532 = vadd.f32 %v3404, %v3531
    %v3533 = vpop.f32.mrb[0].mxu0
    %3534 = vmatprep.mubr.f32.mxu0 0.0
    %3535 = vmatmul.mubr.f32.gmra.mrb[0].mxu0 %v3441
    %v3536 = vpop.f32.mrb[0].mxu0
    %v3537 = vadd.f32 %v3409, %v3536
    %v3538 = vpop.f32.mrb[0].mxu0
    %3539 = vmatprep.mubr.f32.mxu0 0.0
    %3540 = vmatmul.mubr.f32.gmra.mrb[0].mxu0 %v3444
    %v3541 = vpop.f32.mrb[0].mxu0
    %v3542 = vadd.f32 %v3414, %v3541
    %v3543 = vpop.f32.mrb[0].mxu0
    %3544 = vmatprep.mubr.f32.mxu0 0.0
    %3545 = vmatmul.mubr.f32.gmra.mrb[0].mxu0 %v3447
    %v3546 = vpop.f32.mrb[0].mxu0
    %v3547 = vadd.f32 %v3419, %v3546
    %v3548 = vpop.f32.mrb[0].mxu0
    %3549 = vmatprep.mubr.f32.mxu0 0.0
    %3550 = vmatmul.mubr.f32.gmra.mrb[0].mxu0 %v3450
    %v3551 = vpop.f32.mrb[0].mxu0
    %v3552 = vadd.f32 %v3424, %v3551
    %v3553 = vpop.f32.mrb[0].mxu0
    %3554 = vmatprep.mubr.f32.mxu0 0.0
    %3555 = vmatmul.mubr.f32.gmra.mrb[0].mxu0 %v3453
    %v3556 = vpop.f32.mrb[0].mxu0
    %v3557 = vadd.f32 %v3429, %v3556
    %v3558 = vpop.f32.mrb[0].mxu0
    %3559 = vdwg.mxu0
    %v3560 = vadd.f32 %v3383, %v3522
    %v3561 = vadd.f32 %v3384, %v3527
    %v3562 = vadd.f32 %v3385, %v3532
    %v3563 = vadd.f32 %v3386, %v3537
    %v3564 = vadd.f32 %v3387, %v3542
    %v3565 = vadd.f32 %v3388, %v3547
    %v3566 = vadd.f32 %v3389, %v3552
    %v3567 = vadd.f32 %v3390, %v3557
    %v3568 = vmul.f32 %v3560, 0.5
    %v3569 = vmul.f32 %v3561, 0.5
    %v3570 = vmul.f32 %v3562, 0.5
    %v3571 = vmul.f32 %v3563, 0.5
    %v3572 = vmul.f32 %v3564, 0.5
    %v3573 = vmul.f32 %v3565, 0.5
    %v3574 = vmul.f32 %v3566, 0.5
    %v3575 = vmul.f32 %v3567, 0.5
    %v3576 = vmul.f32 %v3560, %v334
    %v3577 = vmul.f32 %v3561, %v334
    %v3578 = vmul.f32 %v3562, %v334
    %v3579 = vmul.f32 %v3563, %v334
    %v3580 = vmul.f32 %v3564, %v334
    %v3581 = vmul.f32 %v3565, %v334
    %v3582 = vmul.f32 %v3566, %v334
    %v3583 = vmul.f32 %v3567, %v334
    %vm3584 = vcmp.ge.f32.partialorder %v3576, 0.0
    %vm3585 = vcmp.ge.f32.partialorder %v3577, 0.0
    %vm3586 = vcmp.ge.f32.partialorder %v3578, 0.0
    %vm3587 = vcmp.ge.f32.partialorder %v3579, 0.0
    %vm3588 = vcmp.ge.f32.partialorder %v3580, 0.0
    %vm3589 = vcmp.ge.f32.partialorder %v3581, 0.0
    %vm3590 = vcmp.ge.f32.partialorder %v3582, 0.0
    %vm3591 = vcmp.ge.f32.partialorder %v3583, 0.0
    %v3592 = vsel %vm3584, 1.0, -1.0
    %v3593 = vsel %vm3585, 1.0, -1.0
    %v3594 = vsel %vm3586, 1.0, -1.0
    %v3595 = vsel %vm3587, 1.0, -1.0
    %v3596 = vsel %vm3588, 1.0, -1.0
    %v3597 = vsel %vm3589, 1.0, -1.0
    %v3598 = vsel %vm3590, 1.0, -1.0
    %v3599 = vsel %vm3591, 1.0, -1.0
    %v3600 = vand.u32 2147483647, %v3576
    %v3601 = vand.u32 2147483647, %v3577
    %v3602 = vand.u32 2147483647, %v3578
    %v3603 = vand.u32 2147483647, %v3579
    %v3604 = vand.u32 2147483647, %v3580
    %v3605 = vand.u32 2147483647, %v3581
    %v3606 = vand.u32 2147483647, %v3582
    %v3607 = vand.u32 2147483647, %v3583
    %v3608 = vmul.f32 %v3600, 0.3275911
    %v3609 = vmul.f32 %v3601, 0.3275911
    %v3610 = vmul.f32 %v3602, 0.3275911
    %v3611 = vmul.f32 %v3603, 0.3275911
    %v3612 = vmul.f32 %v3604, 0.3275911
    %v3613 = vmul.f32 %v3605, 0.3275911
    %v3614 = vmul.f32 %v3606, 0.3275911
    %v3615 = vmul.f32 %v3607, 0.3275911
    %v3616 = vadd.f32 %v3608, 1.0
    %v3617 = vadd.f32 %v3609, 1.0
    %v3618 = vadd.f32 %v3610, 1.0
    %v3619 = vadd.f32 %v3611, 1.0
    %v3620 = vadd.f32 %v3612, 1.0
    %v3621 = vadd.f32 %v3613, 1.0
    %v3622 = vadd.f32 %v3614, 1.0
    %v3623 = vadd.f32 %v3615, 1.0
    %v3624 = vrcp.pop %v3616
    %v3625 = vmul.f32 1.0, %v3624
    %v3626 = vrcp.pop %v3617
    %v3627 = vmul.f32 1.0, %v3626
    %v3628 = vrcp.pop %v3618
    %v3629 = vmul.f32 1.0, %v3628
    %v3630 = vrcp.pop %v3619
    %v3631 = vmul.f32 1.0, %v3630
    %v3632 = vrcp.pop %v3620
    %v3633 = vmul.f32 1.0, %v3632
    %v3634 = vrcp.pop %v3621
    %v3635 = vmul.f32 1.0, %v3634
    %v3636 = vrcp.pop %v3622
    %v3637 = vmul.f32 1.0, %v3636
    %v3638 = vrcp.pop %v3623
    %v3639 = vmul.f32 1.0, %v3638
    %v3640 = vmul.f32 %v3625, 1.0614054
    %v3641 = vmul.f32 %v3627, 1.0614054
    %v3642 = vmul.f32 %v3629, 1.0614054
    %v3643 = vmul.f32 %v3631, 1.0614054
    %v3644 = vmul.f32 %v3633, 1.0614054
    %v3645 = vmul.f32 %v3635, 1.0614054
    %v3646 = vmul.f32 %v3637, 1.0614054
    %v3647 = vmul.f32 %v3639, 1.0614054
    %v3648 = vadd.f32 %v3640, -1.4531521
    %v3649 = vadd.f32 %v3641, -1.4531521
    %v3650 = vadd.f32 %v3642, -1.4531521
    %v3651 = vadd.f32 %v3643, -1.4531521
    %v3652 = vadd.f32 %v3644, -1.4531521
    %v3653 = vadd.f32 %v3645, -1.4531521
    %v3654 = vadd.f32 %v3646, -1.4531521
    %v3655 = vadd.f32 %v3647, -1.4531521
    %v3656 = vmul.f32 %v3648, %v3625
    %v3657 = vmul.f32 %v3649, %v3627
    %v3658 = vmul.f32 %v3650, %v3629
    %v3659 = vmul.f32 %v3651, %v3631
    %v3660 = vmul.f32 %v3652, %v3633
    %v3661 = vmul.f32 %v3653, %v3635
    %v3662 = vmul.f32 %v3654, %v3637
    %v3663 = vmul.f32 %v3655, %v3639
    %v3664 = vadd.f32 %v3656, 1.4214138
    %v3665 = vadd.f32 %v3657, 1.4214138
    %v3666 = vadd.f32 %v3658, 1.4214138
    %v3667 = vadd.f32 %v3659, 1.4214138
    %v3668 = vadd.f32 %v3660, 1.4214138
    %v3669 = vadd.f32 %v3661, 1.4214138
    %v3670 = vadd.f32 %v3662, 1.4214138
    %v3671 = vadd.f32 %v3663, 1.4214138
    %v3672 = vmul.f32 %v3664, %v3625
    %v3673 = vmul.f32 %v3665, %v3627
    %v3674 = vmul.f32 %v3666, %v3629
    %v3675 = vmul.f32 %v3667, %v3631
    %v3676 = vmul.f32 %v3668, %v3633
    %v3677 = vmul.f32 %v3669, %v3635
    %v3678 = vmul.f32 %v3670, %v3637
    %v3679 = vmul.f32 %v3671, %v3639
    %v3680 = vadd.f32 %v3672, -0.28449672
    %v3681 = vadd.f32 %v3673, -0.28449672
    %v3682 = vadd.f32 %v3674, -0.28449672
    %v3683 = vadd.f32 %v3675, -0.28449672
    %v3684 = vadd.f32 %v3676, -0.28449672
    %v3685 = vadd.f32 %v3677, -0.28449672
    %v3686 = vadd.f32 %v3678, -0.28449672
    %v3687 = vadd.f32 %v3679, -0.28449672
    %v3688 = vmul.f32 %v3680, %v3625
    %v3689 = vmul.f32 %v3681, %v3627
    %v3690 = vmul.f32 %v3682, %v3629
    %v3691 = vmul.f32 %v3683, %v3631
    %v3692 = vmul.f32 %v3684, %v3633
    %v3693 = vmul.f32 %v3685, %v3635
    %v3694 = vmul.f32 %v3686, %v3637
    %v3695 = vmul.f32 %v3687, %v3639
    %v3696 = vadd.f32 %v3688, 0.2548296
    %v3697 = vadd.f32 %v3689, 0.2548296
    %v3698 = vadd.f32 %v3690, 0.2548296
    %v3699 = vadd.f32 %v3691, 0.2548296
    %v3700 = vadd.f32 %v3692, 0.2548296
    %v3701 = vadd.f32 %v3693, 0.2548296
    %v3702 = vadd.f32 %v3694, 0.2548296
    %v3703 = vadd.f32 %v3695, 0.2548296
    %v3704 = vmul.f32 %v3696, %v3625
    %v3705 = vmul.f32 %v3697, %v3627
    %v3706 = vmul.f32 %v3698, %v3629
    %v3707 = vmul.f32 %v3699, %v3631
    %v3708 = vmul.f32 %v3700, %v3633
    %v3709 = vmul.f32 %v3701, %v3635
    %v3710 = vmul.f32 %v3702, %v3637
    %v3711 = vmul.f32 %v3703, %v3639
    %v3712 = vsub.f32 0.0, %v3600
    %v3713 = vsub.f32 0.0, %v3601
    %v3714 = vsub.f32 0.0, %v3602
    %v3715 = vsub.f32 0.0, %v3603
    %v3716 = vsub.f32 0.0, %v3604
    %v3717 = vsub.f32 0.0, %v3605
    %v3718 = vsub.f32 0.0, %v3606
    %v3719 = vsub.f32 0.0, %v3607
    %v3720 = vmul.f32 %v3712, %v3600
    %v3721 = vmul.f32 %v3713, %v3601
    %v3722 = vmul.f32 %v3714, %v3602
    %v3723 = vmul.f32 %v3715, %v3603
    %v3724 = vmul.f32 %v3716, %v3604
    %v3725 = vmul.f32 %v3717, %v3605
    %v3726 = vmul.f32 %v3718, %v3606
    %v3727 = vmul.f32 %v3719, %v3607
    %v3728 = vmul.f32 %v3720, 1.442695
    %v3729 = vpow.pop %v3728
    %v3730 = vmul.f32 %v3721, 1.442695
    %v3731 = vpow.pop %v3730
    %v3732 = vmul.f32 %v3722, 1.442695
    %v3733 = vpow.pop %v3732
    %v3734 = vmul.f32 %v3723, 1.442695
    %v3735 = vpow.pop %v3734
    %v3736 = vmul.f32 %v3724, 1.442695
    %v3737 = vpow.pop %v3736
    %v3738 = vmul.f32 %v3725, 1.442695
    %v3739 = vpow.pop %v3738
    %v3740 = vmul.f32 %v3726, 1.442695
    %v3741 = vpow.pop %v3740
    %v3742 = vmul.f32 %v3727, 1.442695
    %v3743 = vpow.pop %v3742
    %v3744 = vmul.f32 %v3704, %v3729
    %v3745 = vmul.f32 %v3705, %v3731
    %v3746 = vmul.f32 %v3706, %v3733
    %v3747 = vmul.f32 %v3707, %v3735
    %v3748 = vmul.f32 %v3708, %v3737
    %v3749 = vmul.f32 %v3709, %v3739
    %v3750 = vmul.f32 %v3710, %v3741
    %v3751 = vmul.f32 %v3711, %v3743
    %v3752 = vsub.f32 1.0, %v3744
    %v3753 = vsub.f32 1.0, %v3745
    %v3754 = vsub.f32 1.0, %v3746
    %v3755 = vsub.f32 1.0, %v3747
    %v3756 = vsub.f32 1.0, %v3748
    %v3757 = vsub.f32 1.0, %v3749
    %v3758 = vsub.f32 1.0, %v3750
    %v3759 = vsub.f32 1.0, %v3751
    %v3760 = vmul.f32 %v3592, %v3752
    %v3761 = vmul.f32 %v3593, %v3753
    %v3762 = vmul.f32 %v3594, %v3754
    %v3763 = vmul.f32 %v3595, %v3755
    %v3764 = vmul.f32 %v3596, %v3756
    %v3765 = vmul.f32 %v3597, %v3757
    %v3766 = vmul.f32 %v3598, %v3758
    %v3767 = vmul.f32 %v3599, %v3759
    %v3768 = vadd.f32 %v3760, 1.0
    %v3769 = vadd.f32 %v3761, 1.0
    %v3770 = vadd.f32 %v3762, 1.0
    %v3771 = vadd.f32 %v3763, 1.0
    %v3772 = vadd.f32 %v3764, 1.0
    %v3773 = vadd.f32 %v3765, 1.0
    %v3774 = vadd.f32 %v3766, 1.0
    %v3775 = vadd.f32 %v3767, 1.0
    %v3776 = vmul.f32 %v3568, %v3768
    %v3777 = vmul.f32 %v3569, %v3769
    %v3778 = vmul.f32 %v3570, %v3770
    %v3779 = vmul.f32 %v3571, %v3771
    %v3780 = vmul.f32 %v3572, %v3772
    %v3781 = vmul.f32 %v3573, %v3773
    %v3782 = vmul.f32 %v3574, %v3774
    %v3783 = vmul.f32 %v3575, %v3775
    %3784 = vst [vmem:[#allocation2] sm:$0xff] %v3776
    %3785 = vst [vmem:[#allocation2 + $0x8] sm:$0xff] %v3777
    %3786 = vst [vmem:[#allocation2 + $0x10] sm:$0xff] %v3778
    %3787 = vst [vmem:[#allocation2 + $0x18] sm:$0xff] %v3779
    %3788 = vst [vmem:[#allocation2 + $0x20] sm:$0xff] %v3780
    %3789 = vst [vmem:[#allocation2 + $0x28] sm:$0xff] %v3781
    %3790 = vst [vmem:[#allocation2 + $0x30] sm:$0xff] %v3782
    %3791 = vst [vmem:[#allocation2 + $0x38] sm:$0xff] %v3783
    %s3792 = scalar_lea.vmem %s0, 64
    %v3793 = vld [vmem:[%s3792] sm:$0xff]
    %v3794 = vld [vmem:[%s3792 + $0x8] sm:$0xff]
    %v3795 = vld [vmem:[%s3792 + $0x10] sm:$0xff]
    %v3796 = vld [vmem:[%s3792 + $0x18] sm:$0xff]
    %v3797 = vld [vmem:[%s3792 + $0x20] sm:$0xff]
    %v3798 = vld [vmem:[%s3792 + $0x28] sm:$0xff]
    %v3799 = vld [vmem:[%s3792 + $0x30] sm:$0xff]
    %v3800 = vld [vmem:[%s3792 + $0x38] sm:$0xff]
    %3801 = vmatprep.subr.mxu0 0.0
    %3802 = vmatpush1.msra.mxu0 %v3793
    %3803 = vmatprep.subr.mxu0 0.0
    %3804 = vmatpush1.msra.mxu0 %v3794
    %3805 = vmatprep.subr.mxu0 0.0
    %3806 = vmatpush1.msra.mxu0 %v3795
    %3807 = vmatprep.subr.mxu0 0.0
    %3808 = vmatpush1.msra.mxu0 %v3796
    %3809 = vmatprep.subr.mxu0 0.0
    %3810 = vmatpush1.msra.mxu0 %v3797
    %3811 = vmatprep.subr.mxu0 0.0
    %3812 = vmatpush1.msra.mxu0 %v3798
    %3813 = vmatprep.subr.mxu0 0.0
    %3814 = vmatpush1.msra.mxu0 %v3799
    %3815 = vmatprep.subr.mxu0 0.0
    %3816 = vmatpush1.msra.mxu0 %v3800
    %3817 = vmatprep.subr.mxu0 0.0
    %3818 = vmatpush1.msra.mxu0 0.0
    %3819 = vmatprep.subr.mxu0 0.0
    %3820 = vmatpush1.msra.mxu0 0.0
    %3821 = vmatprep.subr.mxu0 0.0
    %3822 = vmatpush1.msra.mxu0 0.0
    %3823 = vmatprep.subr.mxu0 0.0
    %3824 = vmatpush1.msra.mxu0 0.0
    %3825 = vmatprep.subr.mxu0 0.0
    %3826 = vmatpush1.msra.mxu0 0.0
    %3827 = vmatprep.subr.mxu0 0.0
    %3828 = vmatpush1.msra.mxu0 0.0
    %3829 = vmatprep.subr.mxu0 0.0
    %3830 = vmatpush1.msra.mxu0 0.0
    %3831 = vmatprep.subr.mxu0 0.0
    %3832 = vmatpush1.msra.mxu0 0.0
    %3833 = vmatprep.subr.mxu0 0.0
    %3834 = vmatpush1.msra.mxu0 0.0
    %3835 = vmatprep.subr.mxu0 0.0
    %3836 = vmatpush1.msra.mxu0 0.0
    %3837 = vmatprep.subr.mxu0 0.0
    %3838 = vmatpush1.msra.mxu0 0.0
    %3839 = vmatprep.subr.mxu0 0.0
    %3840 = vmatpush1.msra.mxu0 0.0
    %3841 = vmatprep.subr.mxu0 0.0
    %3842 = vmatpush1.msra.mxu0 0.0
    %3843 = vmatprep.subr.mxu0 0.0
    %3844 = vmatpush1.msra.mxu0 0.0
    %3845 = vmatprep.subr.mxu0 0.0
    %3846 = vmatpush1.msra.mxu0 0.0
    %3847 = vmatprep.subr.mxu0 0.0
    %3848 = vmatpush1.msra.mxu0 0.0
    %3849 = vmatprep.subr.mxu0 0.0
    %3850 = vmatpush1.msra.mxu0 0.0
    %3851 = vmatprep.subr.mxu0 0.0
    %3852 = vmatpush1.msra.mxu0 0.0
    %3853 = vmatprep.subr.mxu0 0.0
    %3854 = vmatpush1.msra.mxu0 0.0
    %3855 = vmatprep.subr.mxu0 0.0
    %3856 = vmatpush1.msra.mxu0 0.0
    %3857 = vmatprep.subr.mxu0 0.0
    %3858 = vmatpush1.msra.mxu0 0.0
    %3859 = vmatprep.subr.mxu0 0.0
    %3860 = vmatpush1.msra.mxu0 0.0
    %3861 = vmatprep.subr.mxu0 0.0
    %3862 = vmatpush1.msra.mxu0 0.0
    %3863 = vmatprep.subr.mxu0 0.0
    %3864 = vmatpush1.msra.mxu0 0.0
    %3865 = vmatprep.mubr.f32.mxu0 0.0
    %3866 = vmatmul.mubr.f32.gmra.mrb[0].mxu0 %v198
    %v3867 = vpop.f32.mrb[0].mxu0
    %v3868 = vadd.f32 %v159, %v3867
    %v3869 = vpop.f32.mrb[0].mxu0
    %3870 = vmatprep.mubr.f32.mxu0 0.0
    %3871 = vmatmul.mubr.f32.gmra.mrb[0].mxu0 %v201
    %v3872 = vpop.f32.mrb[0].mxu0
    %v3873 = vadd.f32 %v164, %v3872
    %v3874 = vpop.f32.mrb[0].mxu0
    %3875 = vmatprep.mubr.f32.mxu0 0.0
    %3876 = vmatmul.mubr.f32.gmra.mrb[0].mxu0 %v204
    %v3877 = vpop.f32.mrb[0].mxu0
    %v3878 = vadd.f32 %v169, %v3877
    %v3879 = vpop.f32.mrb[0].mxu0
    %3880 = vmatprep.mubr.f32.mxu0 0.0
    %3881 = vmatmul.mubr.f32.gmra.mrb[0].mxu0 %v207
    %v3882 = vpop.f32.mrb[0].mxu0
    %v3883 = vadd.f32 %v174, %v3882
    %v3884 = vpop.f32.mrb[0].mxu0
    %3885 = vmatprep.mubr.f32.mxu0 0.0
    %3886 = vmatmul.mubr.f32.gmra.mrb[0].mxu0 %v210
    %v3887 = vpop.f32.mrb[0].mxu0
    %v3888 = vadd.f32 %v179, %v3887
    %v3889 = vpop.f32.mrb[0].mxu0
    %3890 = vmatprep.mubr.f32.mxu0 0.0
    %3891 = vmatmul.mubr.f32.gmra.mrb[0].mxu0 %v213
    %v3892 = vpop.f32.mrb[0].mxu0
    %v3893 = vadd.f32 %v184, %v3892
    %v3894 = vpop.f32.mrb[0].mxu0
    %3895 = vmatprep.mubr.f32.mxu0 0.0
    %3896 = vmatmul.mubr.f32.gmra.mrb[0].mxu0 %v216
    %v3897 = vpop.f32.mrb[0].mxu0
    %v3898 = vadd.f32 %v189, %v3897
    %v3899 = vpop.f32.mrb[0].mxu0
    %3900 = vmatprep.mubr.f32.mxu0 0.0
    %3901 = vmatmul.mubr.f32.gmra.mrb[0].mxu0 %v219
    %v3902 = vpop.f32.mrb[0].mxu0
    %v3903 = vadd.f32 %v194, %v3902
    %v3904 = vpop.f32.mrb[0].mxu0
    %3905 = vdwg.mxu0
    %v3906 = vmul.f32 %v3868, 0.5
    %v3907 = vmul.f32 %v3873, 0.5
    %v3908 = vmul.f32 %v3878, 0.5
    %v3909 = vmul.f32 %v3883, 0.5
    %v3910 = vmul.f32 %v3888, 0.5
    %v3911 = vmul.f32 %v3893, 0.5
    %v3912 = vmul.f32 %v3898, 0.5
    %v3913 = vmul.f32 %v3903, 0.5
    %v3914 = vmul.f32 %v3868, %v334
    %v3915 = vmul.f32 %v3873, %v334
    %v3916 = vmul.f32 %v3878, %v334
    %v3917 = vmul.f32 %v3883, %v334
    %v3918 = vmul.f32 %v3888, %v334
    %v3919 = vmul.f32 %v3893, %v334
    %v3920 = vmul.f32 %v3898, %v334
    %v3921 = vmul.f32 %v3903, %v334
    %vm3922 = vcmp.ge.f32.partialorder %v3914, 0.0
    %vm3923 = vcmp.ge.f32.partialorder %v3915, 0.0
    %vm3924 = vcmp.ge.f32.partialorder %v3916, 0.0
    %vm3925 = vcmp.ge.f32.partialorder %v3917, 0.0
    %vm3926 = vcmp.ge.f32.partialorder %v3918, 0.0
    %vm3927 = vcmp.ge.f32.partialorder %v3919, 0.0
    %vm3928 = vcmp.ge.f32.partialorder %v3920, 0.0
    %vm3929 = vcmp.ge.f32.partialorder %v3921, 0.0
    %v3930 = vsel %vm3922, 1.0, -1.0
    %v3931 = vsel %vm3923, 1.0, -1.0
    %v3932 = vsel %vm3924, 1.0, -1.0
    %v3933 = vsel %vm3925, 1.0, -1.0
    %v3934 = vsel %vm3926, 1.0, -1.0
    %v3935 = vsel %vm3927, 1.0, -1.0
    %v3936 = vsel %vm3928, 1.0, -1.0
    %v3937 = vsel %vm3929, 1.0, -1.0
    %v3938 = vand.u32 2147483647, %v3914
    %v3939 = vand.u32 2147483647, %v3915
    %v3940 = vand.u32 2147483647, %v3916
    %v3941 = vand.u32 2147483647, %v3917
    %v3942 = vand.u32 2147483647, %v3918
    %v3943 = vand.u32 2147483647, %v3919
    %v3944 = vand.u32 2147483647, %v3920
    %v3945 = vand.u32 2147483647, %v3921
    %v3946 = vmul.f32 %v3938, 0.3275911
    %v3947 = vmul.f32 %v3939, 0.3275911
    %v3948 = vmul.f32 %v3940, 0.3275911
    %v3949 = vmul.f32 %v3941, 0.3275911
    %v3950 = vmul.f32 %v3942, 0.3275911
    %v3951 = vmul.f32 %v3943, 0.3275911
    %v3952 = vmul.f32 %v3944, 0.3275911
    %v3953 = vmul.f32 %v3945, 0.3275911
    %v3954 = vadd.f32 %v3946, 1.0
    %v3955 = vadd.f32 %v3947, 1.0
    %v3956 = vadd.f32 %v3948, 1.0
    %v3957 = vadd.f32 %v3949, 1.0
    %v3958 = vadd.f32 %v3950, 1.0
    %v3959 = vadd.f32 %v3951, 1.0
    %v3960 = vadd.f32 %v3952, 1.0
    %v3961 = vadd.f32 %v3953, 1.0
    %v3962 = vrcp.pop %v3954
    %v3963 = vmul.f32 1.0, %v3962
    %v3964 = vrcp.pop %v3955
    %v3965 = vmul.f32 1.0, %v3964
    %v3966 = vrcp.pop %v3956
    %v3967 = vmul.f32 1.0, %v3966
    %v3968 = vrcp.pop %v3957
    %v3969 = vmul.f32 1.0, %v3968
    %v3970 = vrcp.pop %v3958
    %v3971 = vmul.f32 1.0, %v3970
    %v3972 = vrcp.pop %v3959
    %v3973 = vmul.f32 1.0, %v3972
    %v3974 = vrcp.pop %v3960
    %v3975 = vmul.f32 1.0, %v3974
    %v3976 = vrcp.pop %v3961
    %v3977 = vmul.f32 1.0, %v3976
    %v3978 = vmul.f32 %v3963, 1.0614054
    %v3979 = vmul.f32 %v3965, 1.0614054
    %v3980 = vmul.f32 %v3967, 1.0614054
    %v3981 = vmul.f32 %v3969, 1.0614054
    %v3982 = vmul.f32 %v3971, 1.0614054
    %v3983 = vmul.f32 %v3973, 1.0614054
    %v3984 = vmul.f32 %v3975, 1.0614054
    %v3985 = vmul.f32 %v3977, 1.0614054
    %v3986 = vadd.f32 %v3978, -1.4531521
    %v3987 = vadd.f32 %v3979, -1.4531521
    %v3988 = vadd.f32 %v3980, -1.4531521
    %v3989 = vadd.f32 %v3981, -1.4531521
    %v3990 = vadd.f32 %v3982, -1.4531521
    %v3991 = vadd.f32 %v3983, -1.4531521
    %v3992 = vadd.f32 %v3984, -1.4531521
    %v3993 = vadd.f32 %v3985, -1.4531521
    %v3994 = vmul.f32 %v3986, %v3963
    %v3995 = vmul.f32 %v3987, %v3965
    %v3996 = vmul.f32 %v3988, %v3967
    %v3997 = vmul.f32 %v3989, %v3969
    %v3998 = vmul.f32 %v3990, %v3971
    %v3999 = vmul.f32 %v3991, %v3973
    %v4000 = vmul.f32 %v3992, %v3975
    %v4001 = vmul.f32 %v3993, %v3977
    %v4002 = vadd.f32 %v3994, 1.4214138
    %v4003 = vadd.f32 %v3995, 1.4214138
    %v4004 = vadd.f32 %v3996, 1.4214138
    %v4005 = vadd.f32 %v3997, 1.4214138
    %v4006 = vadd.f32 %v3998, 1.4214138
    %v4007 = vadd.f32 %v3999, 1.4214138
    %v4008 = vadd.f32 %v4000, 1.4214138
    %v4009 = vadd.f32 %v4001, 1.4214138
    %v4010 = vmul.f32 %v4002, %v3963
    %v4011 = vmul.f32 %v4003, %v3965
    %v4012 = vmul.f32 %v4004, %v3967
    %v4013 = vmul.f32 %v4005, %v3969
    %v4014 = vmul.f32 %v4006, %v3971
    %v4015 = vmul.f32 %v4007, %v3973
    %v4016 = vmul.f32 %v4008, %v3975
    %v4017 = vmul.f32 %v4009, %v3977
    %v4018 = vadd.f32 %v4010, -0.28449672
    %v4019 = vadd.f32 %v4011, -0.28449672
    %v4020 = vadd.f32 %v4012, -0.28449672
    %v4021 = vadd.f32 %v4013, -0.28449672
    %v4022 = vadd.f32 %v4014, -0.28449672
    %v4023 = vadd.f32 %v4015, -0.28449672
    %v4024 = vadd.f32 %v4016, -0.28449672
    %v4025 = vadd.f32 %v4017, -0.28449672
    %v4026 = vmul.f32 %v4018, %v3963
    %v4027 = vmul.f32 %v4019, %v3965
    %v4028 = vmul.f32 %v4020, %v3967
    %v4029 = vmul.f32 %v4021, %v3969
    %v4030 = vmul.f32 %v4022, %v3971
    %v4031 = vmul.f32 %v4023, %v3973
    %v4032 = vmul.f32 %v4024, %v3975
    %v4033 = vmul.f32 %v4025, %v3977
    %v4034 = vadd.f32 %v4026, 0.2548296
    %v4035 = vadd.f32 %v4027, 0.2548296
    %v4036 = vadd.f32 %v4028, 0.2548296
    %v4037 = vadd.f32 %v4029, 0.2548296
    %v4038 = vadd.f32 %v4030, 0.2548296
    %v4039 = vadd.f32 %v4031, 0.2548296
    %v4040 = vadd.f32 %v4032, 0.2548296
    %v4041 = vadd.f32 %v4033, 0.2548296
    %v4042 = vmul.f32 %v4034, %v3963
    %v4043 = vmul.f32 %v4035, %v3965
    %v4044 = vmul.f32 %v4036, %v3967
    %v4045 = vmul.f32 %v4037, %v3969
    %v4046 = vmul.f32 %v4038, %v3971
    %v4047 = vmul.f32 %v4039, %v3973
    %v4048 = vmul.f32 %v4040, %v3975
    %v4049 = vmul.f32 %v4041, %v3977
    %v4050 = vsub.f32 0.0, %v3938
    %v4051 = vsub.f32 0.0, %v3939
    %v4052 = vsub.f32 0.0, %v3940
    %v4053 = vsub.f32 0.0, %v3941
    %v4054 = vsub.f32 0.0, %v3942
    %v4055 = vsub.f32 0.0, %v3943
    %v4056 = vsub.f32 0.0, %v3944
    %v4057 = vsub.f32 0.0, %v3945
    %v4058 = vmul.f32 %v4050, %v3938
    %v4059 = vmul.f32 %v4051, %v3939
    %v4060 = vmul.f32 %v4052, %v3940
    %v4061 = vmul.f32 %v4053, %v3941
    %v4062 = vmul.f32 %v4054, %v3942
    %v4063 = vmul.f32 %v4055, %v3943
    %v4064 = vmul.f32 %v4056, %v3944
    %v4065 = vmul.f32 %v4057, %v3945
    %v4066 = vmul.f32 %v4058, 1.442695
    %v4067 = vpow.pop %v4066
    %v4068 = vmul.f32 %v4059, 1.442695
    %v4069 = vpow.pop %v4068
    %v4070 = vmul.f32 %v4060, 1.442695
    %v4071 = vpow.pop %v4070
    %v4072 = vmul.f32 %v4061, 1.442695
    %v4073 = vpow.pop %v4072
    %v4074 = vmul.f32 %v4062, 1.442695
    %v4075 = vpow.pop %v4074
    %v4076 = vmul.f32 %v4063, 1.442695
    %v4077 = vpow.pop %v4076
    %v4078 = vmul.f32 %v4064, 1.442695
    %v4079 = vpow.pop %v4078
    %v4080 = vmul.f32 %v4065, 1.442695
    %v4081 = vpow.pop %v4080
    %v4082 = vmul.f32 %v4042, %v4067
    %v4083 = vmul.f32 %v4043, %v4069
    %v4084 = vmul.f32 %v4044, %v4071
    %v4085 = vmul.f32 %v4045, %v4073
    %v4086 = vmul.f32 %v4046, %v4075
    %v4087 = vmul.f32 %v4047, %v4077
    %v4088 = vmul.f32 %v4048, %v4079
    %v4089 = vmul.f32 %v4049, %v4081
    %v4090 = vsub.f32 1.0, %v4082
    %v4091 = vsub.f32 1.0, %v4083
    %v4092 = vsub.f32 1.0, %v4084
    %v4093 = vsub.f32 1.0, %v4085
    %v4094 = vsub.f32 1.0, %v4086
    %v4095 = vsub.f32 1.0, %v4087
    %v4096 = vsub.f32 1.0, %v4088
    %v4097 = vsub.f32 1.0, %v4089
    %v4098 = vmul.f32 %v3930, %v4090
    %v4099 = vmul.f32 %v3931, %v4091
    %v4100 = vmul.f32 %v3932, %v4092
    %v4101 = vmul.f32 %v3933, %v4093
    %v4102 = vmul.f32 %v3934, %v4094
    %v4103 = vmul.f32 %v3935, %v4095
    %v4104 = vmul.f32 %v3936, %v4096
    %v4105 = vmul.f32 %v3937, %v4097
    %v4106 = vadd.f32 %v4098, 1.0
    %v4107 = vadd.f32 %v4099, 1.0
    %v4108 = vadd.f32 %v4100, 1.0
    %v4109 = vadd.f32 %v4101, 1.0
    %v4110 = vadd.f32 %v4102, 1.0
    %v4111 = vadd.f32 %v4103, 1.0
    %v4112 = vadd.f32 %v4104, 1.0
    %v4113 = vadd.f32 %v4105, 1.0
    %v4114 = vmul.f32 %v3906, %v4106
    %v4115 = vmul.f32 %v3907, %v4107
    %v4116 = vmul.f32 %v3908, %v4108
    %v4117 = vmul.f32 %v3909, %v4109
    %v4118 = vmul.f32 %v3910, %v4110
    %v4119 = vmul.f32 %v3911, %v4111
    %v4120 = vmul.f32 %v3912, %v4112
    %v4121 = vmul.f32 %v3913, %v4113
    %4122 = vmatprep.subr.mxu0 0.0
    %4123 = vmatpush1.msra.mxu0 %v4114
    %4124 = vmatprep.subr.mxu0 0.0
    %4125 = vmatpush1.msra.mxu0 %v4115
    %4126 = vmatprep.subr.mxu0 0.0
    %4127 = vmatpush1.msra.mxu0 %v4116
    %4128 = vmatprep.subr.mxu0 0.0
    %4129 = vmatpush1.msra.mxu0 %v4117
    %4130 = vmatprep.subr.mxu0 0.0
    %4131 = vmatpush1.msra.mxu0 %v4118
    %4132 = vmatprep.subr.mxu0 0.0
    %4133 = vmatpush1.msra.mxu0 %v4119
    %4134 = vmatprep.subr.mxu0 0.0
    %4135 = vmatpush1.msra.mxu0 %v4120
    %4136 = vmatprep.subr.mxu0 0.0
    %4137 = vmatpush1.msra.mxu0 %v4121
    %4138 = vmatprep.subr.mxu0 0.0
    %4139 = vmatpush1.msra.mxu0 0.0
    %4140 = vmatprep.subr.mxu0 0.0
    %4141 = vmatpush1.msra.mxu0 0.0
    %4142 = vmatprep.subr.mxu0 0.0
    %4143 = vmatpush1.msra.mxu0 0.0
    %4144 = vmatprep.subr.mxu0 0.0
    %4145 = vmatpush1.msra.mxu0 0.0
    %4146 = vmatprep.subr.mxu0 0.0
    %4147 = vmatpush1.msra.mxu0 0.0
    %4148 = vmatprep.subr.mxu0 0.0
    %4149 = vmatpush1.msra.mxu0 0.0
    %4150 = vmatprep.subr.mxu0 0.0
    %4151 = vmatpush1.msra.mxu0 0.0
    %4152 = vmatprep.subr.mxu0 0.0
    %4153 = vmatpush1.msra.mxu0 0.0
    %4154 = vmatprep.subr.mxu0 0.0
    %4155 = vmatpush1.msra.mxu0 0.0
    %4156 = vmatprep.subr.mxu0 0.0
    %4157 = vmatpush1.msra.mxu0 0.0
    %4158 = vmatprep.subr.mxu0 0.0
    %4159 = vmatpush1.msra.mxu0 0.0
    %4160 = vmatprep.subr.mxu0 0.0
    %4161 = vmatpush1.msra.mxu0 0.0
    %4162 = vmatprep.subr.mxu0 0.0
    %4163 = vmatpush1.msra.mxu0 0.0
    %4164 = vmatprep.subr.mxu0 0.0
    %4165 = vmatpush1.msra.mxu0 0.0
    %4166 = vmatprep.subr.mxu0 0.0
    %4167 = vmatpush1.msra.mxu0 0.0
    %4168 = vmatprep.subr.mxu0 0.0
    %4169 = vmatpush1.msra.mxu0 0.0
    %4170 = vmatprep.subr.mxu0 0.0
    %4171 = vmatpush1.msra.mxu0 0.0
    %4172 = vmatprep.subr.mxu0 0.0
    %4173 = vmatpush1.msra.mxu0 0.0
    %4174 = vmatprep.subr.mxu0 0.0
    %4175 = vmatpush1.msra.mxu0 0.0
    %4176 = vmatprep.subr.mxu0 0.0
    %4177 = vmatpush1.msra.mxu0 0.0
    %4178 = vmatprep.subr.mxu0 0.0
    %4179 = vmatpush1.msra.mxu0 0.0
    %4180 = vmatprep.subr.mxu0 0.0
    %4181 = vmatpush1.msra.mxu0 0.0
    %4182 = vmatprep.subr.mxu0 0.0
    %4183 = vmatpush1.msra.mxu0 0.0
    %4184 = vmatprep.subr.mxu0 0.0
    %4185 = vmatpush1.msra.mxu0 0.0
    %4186 = vmatprep.mubr.f32.mxu0 0.0
    %4187 = vmatmul.mubr.f32.gmra.mrb[0].mxu0 %v584
    %v4188 = vpop.f32.mrb[0].mxu0
    %v4189 = vadd.f32 %v546, %v4188
    %v4190 = vpop.f32.mrb[0].mxu0
    %4191 = vmatprep.mubr.f32.mxu0 0.0
    %4192 = vmatmul.mubr.f32.gmra.mrb[0].mxu0 %v587
    %v4193 = vpop.f32.mrb[0].mxu0
    %v4194 = vadd.f32 %v551, %v4193
    %v4195 = vpop.f32.mrb[0].mxu0
    %4196 = vmatprep.mubr.f32.mxu0 0.0
    %4197 = vmatmul.mubr.f32.gmra.mrb[0].mxu0 %v590
    %v4198 = vpop.f32.mrb[0].mxu0
    %v4199 = vadd.f32 %v556, %v4198
    %v4200 = vpop.f32.mrb[0].mxu0
    %4201 = vmatprep.mubr.f32.mxu0 0.0
    %4202 = vmatmul.mubr.f32.gmra.mrb[0].mxu0 %v593
    %v4203 = vpop.f32.mrb[0].mxu0
    %v4204 = vadd.f32 %v561, %v4203
    %v4205 = vpop.f32.mrb[0].mxu0
    %4206 = vmatprep.mubr.f32.mxu0 0.0
    %4207 = vmatmul.mubr.f32.gmra.mrb[0].mxu0 %v596
    %v4208 = vpop.f32.mrb[0].mxu0
    %v4209 = vadd.f32 %v566, %v4208
    %v4210 = vpop.f32.mrb[0].mxu0
    %4211 = vmatprep.mubr.f32.mxu0 0.0
    %4212 = vmatmul.mubr.f32.gmra.mrb[0].mxu0 %v599
    %v4213 = vpop.f32.mrb[0].mxu0
    %v4214 = vadd.f32 %v571, %v4213
    %v4215 = vpop.f32.mrb[0].mxu0
    %4216 = vmatprep.mubr.f32.mxu0 0.0
    %4217 = vmatmul.mubr.f32.gmra.mrb[0].mxu0 %v602
    %v4218 = vpop.f32.mrb[0].mxu0
    %v4219 = vadd.f32 %v576, %v4218
    %v4220 = vpop.f32.mrb[0].mxu0
    %4221 = vmatprep.mubr.f32.mxu0 0.0
    %4222 = vmatmul.mubr.f32.gmra.mrb[0].mxu0 %v605
    %v4223 = vpop.f32.mrb[0].mxu0
    %v4224 = vadd.f32 %v581, %v4223
    %v4225 = vpop.f32.mrb[0].mxu0
    %4226 = vdwg.mxu0
    %v4227 = vadd.f32 %v4189, %v3793
    %v4228 = vadd.f32 %v4194, %v3794
    %v4229 = vadd.f32 %v4199, %v3795
    %v4230 = vadd.f32 %v4204, %v3796
    %v4231 = vadd.f32 %v4209, %v3797
    %v4232 = vadd.f32 %v4214, %v3798
    %v4233 = vadd.f32 %v4219, %v3799
    %v4234 = vadd.f32 %v4224, %v3800
    %v4235 = vmul.f32 %v4227, 0.5
    %v4236 = vmul.f32 %v4228, 0.5
    %v4237 = vmul.f32 %v4229, 0.5
    %v4238 = vmul.f32 %v4230, 0.5
    %v4239 = vmul.f32 %v4231, 0.5
    %v4240 = vmul.f32 %v4232, 0.5
    %v4241 = vmul.f32 %v4233, 0.5
    %v4242 = vmul.f32 %v4234, 0.5
    %v4243 = vmul.f32 %v4227, %v334
    %v4244 = vmul.f32 %v4228, %v334
    %v4245 = vmul.f32 %v4229, %v334
    %v4246 = vmul.f32 %v4230, %v334
    %v4247 = vmul.f32 %v4231, %v334
    %v4248 = vmul.f32 %v4232, %v334
    %v4249 = vmul.f32 %v4233, %v334
    %v4250 = vmul.f32 %v4234, %v334
    %vm4251 = vcmp.ge.f32.partialorder %v4243, 0.0
    %vm4252 = vcmp.ge.f32.partialorder %v4244, 0.0
    %vm4253 = vcmp.ge.f32.partialorder %v4245, 0.0
    %vm4254 = vcmp.ge.f32.partialorder %v4246, 0.0
    %vm4255 = vcmp.ge.f32.partialorder %v4247, 0.0
    %vm4256 = vcmp.ge.f32.partialorder %v4248, 0.0
    %vm4257 = vcmp.ge.f32.partialorder %v4249, 0.0
    %vm4258 = vcmp.ge.f32.partialorder %v4250, 0.0
    %v4259 = vsel %vm4251, 1.0, -1.0
    %v4260 = vsel %vm4252, 1.0, -1.0
    %v4261 = vsel %vm4253, 1.0, -1.0
    %v4262 = vsel %vm4254, 1.0, -1.0
    %v4263 = vsel %vm4255, 1.0, -1.0
    %v4264 = vsel %vm4256, 1.0, -1.0
    %v4265 = vsel %vm4257, 1.0, -1.0
    %v4266 = vsel %vm4258, 1.0, -1.0
    %v4267 = vand.u32 2147483647, %v4243
    %v4268 = vand.u32 2147483647, %v4244
    %v4269 = vand.u32 2147483647, %v4245
    %v4270 = vand.u32 2147483647, %v4246
    %v4271 = vand.u32 2147483647, %v4247
    %v4272 = vand.u32 2147483647, %v4248
    %v4273 = vand.u32 2147483647, %v4249
    %v4274 = vand.u32 2147483647, %v4250
    %v4275 = vmul.f32 %v4267, 0.3275911
    %v4276 = vmul.f32 %v4268, 0.3275911
    %v4277 = vmul.f32 %v4269, 0.3275911
    %v4278 = vmul.f32 %v4270, 0.3275911
    %v4279 = vmul.f32 %v4271, 0.3275911
    %v4280 = vmul.f32 %v4272, 0.3275911
    %v4281 = vmul.f32 %v4273, 0.3275911
    %v4282 = vmul.f32 %v4274, 0.3275911
    %v4283 = vadd.f32 %v4275, 1.0
    %v4284 = vadd.f32 %v4276, 1.0
    %v4285 = vadd.f32 %v4277, 1.0
    %v4286 = vadd.f32 %v4278, 1.0
    %v4287 = vadd.f32 %v4279, 1.0
    %v4288 = vadd.f32 %v4280, 1.0
    %v4289 = vadd.f32 %v4281, 1.0
    %v4290 = vadd.f32 %v4282, 1.0
    %v4291 = vrcp.pop %v4283
    %v4292 = vmul.f32 1.0, %v4291
    %v4293 = vrcp.pop %v4284
    %v4294 = vmul.f32 1.0, %v4293
    %v4295 = vrcp.pop %v4285
    %v4296 = vmul.f32 1.0, %v4295
    %v4297 = vrcp.pop %v4286
    %v4298 = vmul.f32 1.0, %v4297
    %v4299 = vrcp.pop %v4287
    %v4300 = vmul.f32 1.0, %v4299
    %v4301 = vrcp.pop %v4288
    %v4302 = vmul.f32 1.0, %v4301
    %v4303 = vrcp.pop %v4289
    %v4304 = vmul.f32 1.0, %v4303
    %v4305 = vrcp.pop %v4290
    %v4306 = vmul.f32 1.0, %v4305
    %v4307 = vmul.f32 %v4292, 1.0614054
    %v4308 = vmul.f32 %v4294, 1.0614054
    %v4309 = vmul.f32 %v4296, 1.0614054
    %v4310 = vmul.f32 %v4298, 1.0614054
    %v4311 = vmul.f32 %v4300, 1.0614054
    %v4312 = vmul.f32 %v4302, 1.0614054
    %v4313 = vmul.f32 %v4304, 1.0614054
    %v4314 = vmul.f32 %v4306, 1.0614054
    %v4315 = vadd.f32 %v4307, -1.4531521
    %v4316 = vadd.f32 %v4308, -1.4531521
    %v4317 = vadd.f32 %v4309, -1.4531521
    %v4318 = vadd.f32 %v4310, -1.4531521
    %v4319 = vadd.f32 %v4311, -1.4531521
    %v4320 = vadd.f32 %v4312, -1.4531521
    %v4321 = vadd.f32 %v4313, -1.4531521
    %v4322 = vadd.f32 %v4314, -1.4531521
    %v4323 = vmul.f32 %v4315, %v4292
    %v4324 = vmul.f32 %v4316, %v4294
    %v4325 = vmul.f32 %v4317, %v4296
    %v4326 = vmul.f32 %v4318, %v4298
    %v4327 = vmul.f32 %v4319, %v4300
    %v4328 = vmul.f32 %v4320, %v4302
    %v4329 = vmul.f32 %v4321, %v4304
    %v4330 = vmul.f32 %v4322, %v4306
    %v4331 = vadd.f32 %v4323, 1.4214138
    %v4332 = vadd.f32 %v4324, 1.4214138
    %v4333 = vadd.f32 %v4325, 1.4214138
    %v4334 = vadd.f32 %v4326, 1.4214138
    %v4335 = vadd.f32 %v4327, 1.4214138
    %v4336 = vadd.f32 %v4328, 1.4214138
    %v4337 = vadd.f32 %v4329, 1.4214138
    %v4338 = vadd.f32 %v4330, 1.4214138
    %v4339 = vmul.f32 %v4331, %v4292
    %v4340 = vmul.f32 %v4332, %v4294
    %v4341 = vmul.f32 %v4333, %v4296
    %v4342 = vmul.f32 %v4334, %v4298
    %v4343 = vmul.f32 %v4335, %v4300
    %v4344 = vmul.f32 %v4336, %v4302
    %v4345 = vmul.f32 %v4337, %v4304
    %v4346 = vmul.f32 %v4338, %v4306
    %v4347 = vadd.f32 %v4339, -0.28449672
    %v4348 = vadd.f32 %v4340, -0.28449672
    %v4349 = vadd.f32 %v4341, -0.28449672
    %v4350 = vadd.f32 %v4342, -0.28449672
    %v4351 = vadd.f32 %v4343, -0.28449672
    %v4352 = vadd.f32 %v4344, -0.28449672
    %v4353 = vadd.f32 %v4345, -0.28449672
    %v4354 = vadd.f32 %v4346, -0.28449672
    %v4355 = vmul.f32 %v4347, %v4292
    %v4356 = vmul.f32 %v4348, %v4294
    %v4357 = vmul.f32 %v4349, %v4296
    %v4358 = vmul.f32 %v4350, %v4298
    %v4359 = vmul.f32 %v4351, %v4300
    %v4360 = vmul.f32 %v4352, %v4302
    %v4361 = vmul.f32 %v4353, %v4304
    %v4362 = vmul.f32 %v4354, %v4306
    %v4363 = vadd.f32 %v4355, 0.2548296
    %v4364 = vadd.f32 %v4356, 0.2548296
    %v4365 = vadd.f32 %v4357, 0.2548296
    %v4366 = vadd.f32 %v4358, 0.2548296
    %v4367 = vadd.f32 %v4359, 0.2548296
    %v4368 = vadd.f32 %v4360, 0.2548296
    %v4369 = vadd.f32 %v4361, 0.2548296
    %v4370 = vadd.f32 %v4362, 0.2548296
    %v4371 = vmul.f32 %v4363, %v4292
    %v4372 = vmul.f32 %v4364, %v4294
    %v4373 = vmul.f32 %v4365, %v4296
    %v4374 = vmul.f32 %v4366, %v4298
    %v4375 = vmul.f32 %v4367, %v4300
    %v4376 = vmul.f32 %v4368, %v4302
    %v4377 = vmul.f32 %v4369, %v4304
    %v4378 = vmul.f32 %v4370, %v4306
    %v4379 = vsub.f32 0.0, %v4267
    %v4380 = vsub.f32 0.0, %v4268
    %v4381 = vsub.f32 0.0, %v4269
    %v4382 = vsub.f32 0.0, %v4270
    %v4383 = vsub.f32 0.0, %v4271
    %v4384 = vsub.f32 0.0, %v4272
    %v4385 = vsub.f32 0.0, %v4273
    %v4386 = vsub.f32 0.0, %v4274
    %v4387 = vmul.f32 %v4379, %v4267
    %v4388 = vmul.f32 %v4380, %v4268
    %v4389 = vmul.f32 %v4381, %v4269
    %v4390 = vmul.f32 %v4382, %v4270
    %v4391 = vmul.f32 %v4383, %v4271
    %v4392 = vmul.f32 %v4384, %v4272
    %v4393 = vmul.f32 %v4385, %v4273
    %v4394 = vmul.f32 %v4386, %v4274
    %v4395 = vmul.f32 %v4387, 1.442695
    %v4396 = vpow.pop %v4395
    %v4397 = vmul.f32 %v4388, 1.442695
    %v4398 = vpow.pop %v4397
    %v4399 = vmul.f32 %v4389, 1.442695
    %v4400 = vpow.pop %v4399
    %v4401 = vmul.f32 %v4390, 1.442695
    %v4402 = vpow.pop %v4401
    %v4403 = vmul.f32 %v4391, 1.442695
    %v4404 = vpow.pop %v4403
    %v4405 = vmul.f32 %v4392, 1.442695
    %v4406 = vpow.pop %v4405
    %v4407 = vmul.f32 %v4393, 1.442695
    %v4408 = vpow.pop %v4407
    %v4409 = vmul.f32 %v4394, 1.442695
    %v4410 = vpow.pop %v4409
    %v4411 = vmul.f32 %v4371, %v4396
    %v4412 = vmul.f32 %v4372, %v4398
    %v4413 = vmul.f32 %v4373, %v4400
    %v4414 = vmul.f32 %v4374, %v4402
    %v4415 = vmul.f32 %v4375, %v4404
    %v4416 = vmul.f32 %v4376, %v4406
    %v4417 = vmul.f32 %v4377, %v4408
    %v4418 = vmul.f32 %v4378, %v4410
    %v4419 = vsub.f32 1.0, %v4411
    %v4420 = vsub.f32 1.0, %v4412
    %v4421 = vsub.f32 1.0, %v4413
    %v4422 = vsub.f32 1.0, %v4414
    %v4423 = vsub.f32 1.0, %v4415
    %v4424 = vsub.f32 1.0, %v4416
    %v4425 = vsub.f32 1.0, %v4417
    %v4426 = vsub.f32 1.0, %v4418
    %v4427 = vmul.f32 %v4259, %v4419
    %v4428 = vmul.f32 %v4260, %v4420
    %v4429 = vmul.f32 %v4261, %v4421
    %v4430 = vmul.f32 %v4262, %v4422
    %v4431 = vmul.f32 %v4263, %v4423
    %v4432 = vmul.f32 %v4264, %v4424
    %v4433 = vmul.f32 %v4265, %v4425
    %v4434 = vmul.f32 %v4266, %v4426
    %v4435 = vadd.f32 %v4427, 1.0
    %v4436 = vadd.f32 %v4428, 1.0
    %v4437 = vadd.f32 %v4429, 1.0
    %v4438 = vadd.f32 %v4430, 1.0
    %v4439 = vadd.f32 %v4431, 1.0
    %v4440 = vadd.f32 %v4432, 1.0
    %v4441 = vadd.f32 %v4433, 1.0
    %v4442 = vadd.f32 %v4434, 1.0
    %v4443 = vmul.f32 %v4235, %v4435
    %v4444 = vmul.f32 %v4236, %v4436
    %v4445 = vmul.f32 %v4237, %v4437
    %v4446 = vmul.f32 %v4238, %v4438
    %v4447 = vmul.f32 %v4239, %v4439
    %v4448 = vmul.f32 %v4240, %v4440
    %v4449 = vmul.f32 %v4241, %v4441
    %v4450 = vmul.f32 %v4242, %v4442
    %4451 = vmatprep.subr.mxu0 0.0
    %4452 = vmatpush1.msra.mxu0 %v4443
    %4453 = vmatprep.subr.mxu0 0.0
    %4454 = vmatpush1.msra.mxu0 %v4444
    %4455 = vmatprep.subr.mxu0 0.0
    %4456 = vmatpush1.msra.mxu0 %v4445
    %4457 = vmatprep.subr.mxu0 0.0
    %4458 = vmatpush1.msra.mxu0 %v4446
    %4459 = vmatprep.subr.mxu0 0.0
    %4460 = vmatpush1.msra.mxu0 %v4447
    %4461 = vmatprep.subr.mxu0 0.0
    %4462 = vmatpush1.msra.mxu0 %v4448
    %4463 = vmatprep.subr.mxu0 0.0
    %4464 = vmatpush1.msra.mxu0 %v4449
    %4465 = vmatprep.subr.mxu0 0.0
    %4466 = vmatpush1.msra.mxu0 %v4450
    %4467 = vmatprep.subr.mxu0 0.0
    %4468 = vmatpush1.msra.mxu0 0.0
    %4469 = vmatprep.subr.mxu0 0.0
    %4470 = vmatpush1.msra.mxu0 0.0
    %4471 = vmatprep.subr.mxu0 0.0
    %4472 = vmatpush1.msra.mxu0 0.0
    %4473 = vmatprep.subr.mxu0 0.0
    %4474 = vmatpush1.msra.mxu0 0.0
    %4475 = vmatprep.subr.mxu0 0.0
    %4476 = vmatpush1.msra.mxu0 0.0
    %4477 = vmatprep.subr.mxu0 0.0
    %4478 = vmatpush1.msra.mxu0 0.0
    %4479 = vmatprep.subr.mxu0 0.0
    %4480 = vmatpush1.msra.mxu0 0.0
    %4481 = vmatprep.subr.mxu0 0.0
    %4482 = vmatpush1.msra.mxu0 0.0
    %4483 = vmatprep.subr.mxu0 0.0
    %4484 = vmatpush1.msra.mxu0 0.0
    %4485 = vmatprep.subr.mxu0 0.0
    %4486 = vmatpush1.msra.mxu0 0.0
    %4487 = vmatprep.subr.mxu0 0.0
    %4488 = vmatpush1.msra.mxu0 0.0
    %4489 = vmatprep.subr.mxu0 0.0
    %4490 = vmatpush1.msra.mxu0 0.0
    %4491 = vmatprep.subr.mxu0 0.0
    %4492 = vmatpush1.msra.mxu0 0.0
    %4493 = vmatprep.subr.mxu0 0.0
    %4494 = vmatpush1.msra.mxu0 0.0
    %4495 = vmatprep.subr.mxu0 0.0
    %4496 = vmatpush1.msra.mxu0 0.0
    %4497 = vmatprep.subr.mxu0 0.0
    %4498 = vmatpush1.msra.mxu0 0.0
    %4499 = vmatprep.subr.mxu0 0.0
    %4500 = vmatpush1.msra.mxu0 0.0
    %4501 = vmatprep.subr.mxu0 0.0
    %4502 = vmatpush1.msra.mxu0 0.0
    %4503 = vmatprep.subr.mxu0 0.0
    %4504 = vmatpush1.msra.mxu0 0.0
    %4505 = vmatprep.subr.mxu0 0.0
    %4506 = vmatpush1.msra.mxu0 0.0
    %4507 = vmatprep.subr.mxu0 0.0
    %4508 = vmatpush1.msra.mxu0 0.0
    %4509 = vmatprep.subr.mxu0 0.0
    %4510 = vmatpush1.msra.mxu0 0.0
    %4511 = vmatprep.subr.mxu0 0.0
    %4512 = vmatpush1.msra.mxu0 0.0
    %4513 = vmatprep.subr.mxu0 0.0
    %4514 = vmatpush1.msra.mxu0 0.0
    %4515 = vmatprep.mubr.f32.mxu0 0.0
    %4516 = vmatmul.mubr.f32.gmra.mrb[0].mxu0 %v937
    %v4517 = vpop.f32.mrb[0].mxu0
    %v4518 = vadd.f32 0.0, %v4517
    %v4519 = vpop.f32.mrb[0].mxu0
    %4520 = vmatprep.mubr.f32.mxu0 0.0
    %4521 = vmatmul.mubr.f32.gmra.mrb[0].mxu0 %v940
    %v4522 = vpop.f32.mrb[0].mxu0
    %v4523 = vadd.f32 0.0, %v4522
    %v4524 = vpop.f32.mrb[0].mxu0
    %4525 = vmatprep.mubr.f32.mxu0 0.0
    %4526 = vmatmul.mubr.f32.gmra.mrb[0].mxu0 %v943
    %v4527 = vpop.f32.mrb[0].mxu0
    %v4528 = vadd.f32 0.0, %v4527
    %v4529 = vpop.f32.mrb[0].mxu0
    %4530 = vmatprep.mubr.f32.mxu0 0.0
    %4531 = vmatmul.mubr.f32.gmra.mrb[0].mxu0 %v946
    %v4532 = vpop.f32.mrb[0].mxu0
    %v4533 = vadd.f32 0.0, %v4532
    %v4534 = vpop.f32.mrb[0].mxu0
    %4535 = vmatprep.mubr.f32.mxu0 0.0
    %4536 = vmatmul.mubr.f32.gmra.mrb[0].mxu0 %v949
    %v4537 = vpop.f32.mrb[0].mxu0
    %v4538 = vadd.f32 0.0, %v4537
    %v4539 = vpop.f32.mrb[0].mxu0
    %4540 = vmatprep.mubr.f32.mxu0 0.0
    %4541 = vmatmul.mubr.f32.gmra.mrb[0].mxu0 %v952
    %v4542 = vpop.f32.mrb[0].mxu0
    %v4543 = vadd.f32 0.0, %v4542
    %v4544 = vpop.f32.mrb[0].mxu0
    %4545 = vmatprep.mubr.f32.mxu0 0.0
    %4546 = vmatmul.mubr.f32.gmra.mrb[0].mxu0 %v955
    %v4547 = vpop.f32.mrb[0].mxu0
    %v4548 = vadd.f32 0.0, %v4547
    %v4549 = vpop.f32.mrb[0].mxu0
    %4550 = vmatprep.mubr.f32.mxu0 0.0
    %4551 = vmatmul.mubr.f32.gmra.mrb[0].mxu0 %v958
    %v4552 = vpop.f32.mrb[0].mxu0
    %v4553 = vadd.f32 0.0, %v4552
    %v4554 = vpop.f32.mrb[0].mxu0
    %4555 = vmatprep.mubr.f32.mxu0 0.0
    %4556 = vmatmul.mubr.f32.gmra.mrb[0].mxu0 %v961
    %v4557 = vpop.f32.mrb[0].mxu0
    %v4558 = vadd.f32 0.0, %v4557
    %v4559 = vpop.f32.mrb[0].mxu0
    %4560 = vmatprep.mubr.f32.mxu0 0.0
    %4561 = vmatmul.mubr.f32.gmra.mrb[0].mxu0 %v964
    %v4562 = vpop.f32.mrb[0].mxu0
    %v4563 = vadd.f32 0.0, %v4562
    %v4564 = vpop.f32.mrb[0].mxu0
    %4565 = vmatprep.mubr.f32.mxu0 0.0
    %4566 = vmatmul.mubr.f32.gmra.mrb[0].mxu0 %v967
    %v4567 = vpop.f32.mrb[0].mxu0
    %v4568 = vadd.f32 0.0, %v4567
    %v4569 = vpop.f32.mrb[0].mxu0
    %4570 = vmatprep.mubr.f32.mxu0 0.0
    %4571 = vmatmul.mubr.f32.gmra.mrb[0].mxu0 %v970
    %v4572 = vpop.f32.mrb[0].mxu0
    %v4573 = vadd.f32 0.0, %v4572
    %v4574 = vpop.f32.mrb[0].mxu0
    %4575 = vmatprep.mubr.f32.mxu0 0.0
    %4576 = vmatmul.mubr.f32.gmra.mrb[0].mxu0 %v973
    %v4577 = vpop.f32.mrb[0].mxu0
    %v4578 = vadd.f32 0.0, %v4577
    %v4579 = vpop.f32.mrb[0].mxu0
    %4580 = vmatprep.mubr.f32.mxu0 0.0
    %4581 = vmatmul.mubr.f32.gmra.mrb[0].mxu0 %v976
    %v4582 = vpop.f32.mrb[0].mxu0
    %v4583 = vadd.f32 0.0, %v4582
    %v4584 = vpop.f32.mrb[0].mxu0
    %4585 = vmatprep.mubr.f32.mxu0 0.0
    %4586 = vmatmul.mubr.f32.gmra.mrb[0].mxu0 %v979
    %v4587 = vpop.f32.mrb[0].mxu0
    %v4588 = vadd.f32 0.0, %v4587
    %v4589 = vpop.f32.mrb[0].mxu0
    %4590 = vmatprep.mubr.f32.mxu0 0.0
    %4591 = vmatmul.mubr.f32.gmra.mrb[0].mxu0 %v982
    %v4592 = vpop.f32.mrb[0].mxu0
    %v4593 = vadd.f32 0.0, %v4592
    %v4594 = vpop.f32.mrb[0].mxu0
    %4595 = vmatprep.mubr.f32.mxu0 0.0
    %4596 = vmatmul.mubr.f32.gmra.mrb[0].mxu0 %v985
    %v4597 = vpop.f32.mrb[0].mxu0
    %v4598 = vadd.f32 0.0, %v4597
    %v4599 = vpop.f32.mrb[0].mxu0
    %4600 = vmatprep.mubr.f32.mxu0 0.0
    %4601 = vmatmul.mubr.f32.gmra.mrb[0].mxu0 %v988
    %v4602 = vpop.f32.mrb[0].mxu0
    %v4603 = vadd.f32 0.0, %v4602
    %v4604 = vpop.f32.mrb[0].mxu0
    %4605 = vmatprep.mubr.f32.mxu0 0.0
    %4606 = vmatmul.mubr.f32.gmra.mrb[0].mxu0 %v991
    %v4607 = vpop.f32.mrb[0].mxu0
    %v4608 = vadd.f32 0.0, %v4607
    %v4609 = vpop.f32.mrb[0].mxu0
    %4610 = vmatprep.mubr.f32.mxu0 0.0
    %4611 = vmatmul.mubr.f32.gmra.mrb[0].mxu0 %v994
    %v4612 = vpop.f32.mrb[0].mxu0
    %v4613 = vadd.f32 0.0, %v4612
    %v4614 = vpop.f32.mrb[0].mxu0
    %4615 = vmatprep.mubr.f32.mxu0 0.0
    %4616 = vmatmul.mubr.f32.gmra.mrb[0].mxu0 %v997
    %v4617 = vpop.f32.mrb[0].mxu0
    %v4618 = vadd.f32 0.0, %v4617
    %v4619 = vpop.f32.mrb[0].mxu0
    %4620 = vmatprep.mubr.f32.mxu0 0.0
    %4621 = vmatmul.mubr.f32.gmra.mrb[0].mxu0 %v1000
    %v4622 = vpop.f32.mrb[0].mxu0
    %v4623 = vadd.f32 0.0, %v4622
    %v4624 = vpop.f32.mrb[0].mxu0
    %4625 = vmatprep.mubr.f32.mxu0 0.0
    %4626 = vmatmul.mubr.f32.gmra.mrb[0].mxu0 %v1003
    %v4627 = vpop.f32.mrb[0].mxu0
    %v4628 = vadd.f32 0.0, %v4627
    %v4629 = vpop.f32.mrb[0].mxu0
    %4630 = vmatprep.mubr.f32.mxu0 0.0
    %4631 = vmatmul.mubr.f32.gmra.mrb[0].mxu0 %v1006
    %v4632 = vpop.f32.mrb[0].mxu0
    %v4633 = vadd.f32 0.0, %v4632
    %v4634 = vpop.f32.mrb[0].mxu0
    %4635 = vmatprep.mubr.f32.mxu0 0.0
    %4636 = vmatmul.mubr.f32.gmra.mrb[0].mxu0 %v1009
    %v4637 = vpop.f32.mrb[0].mxu0
    %v4638 = vadd.f32 0.0, %v4637
    %v4639 = vpop.f32.mrb[0].mxu0
    %4640 = vmatprep.mubr.f32.mxu0 0.0
    %4641 = vmatmul.mubr.f32.gmra.mrb[0].mxu0 %v1012
    %v4642 = vpop.f32.mrb[0].mxu0
    %v4643 = vadd.f32 0.0, %v4642
    %v4644 = vpop.f32.mrb[0].mxu0
    %4645 = vmatprep.mubr.f32.mxu0 0.0
    %4646 = vmatmul.mubr.f32.gmra.mrb[0].mxu0 %v1015
    %v4647 = vpop.f32.mrb[0].mxu0
    %v4648 = vadd.f32 0.0, %v4647
    %v4649 = vpop.f32.mrb[0].mxu0
    %4650 = vmatprep.mubr.f32.mxu0 0.0
    %4651 = vmatmul.mubr.f32.gmra.mrb[0].mxu0 %v1018
    %v4652 = vpop.f32.mrb[0].mxu0
    %v4653 = vadd.f32 0.0, %v4652
    %v4654 = vpop.f32.mrb[0].mxu0
    %4655 = vmatprep.mubr.f32.mxu0 0.0
    %4656 = vmatmul.mubr.f32.gmra.mrb[0].mxu0 %v1021
    %v4657 = vpop.f32.mrb[0].mxu0
    %v4658 = vadd.f32 0.0, %v4657
    %v4659 = vpop.f32.mrb[0].mxu0
    %4660 = vmatprep.mubr.f32.mxu0 0.0
    %4661 = vmatmul.mubr.f32.gmra.mrb[0].mxu0 %v1024
    %v4662 = vpop.f32.mrb[0].mxu0
    %v4663 = vadd.f32 0.0, %v4662
    %v4664 = vpop.f32.mrb[0].mxu0
    %4665 = vmatprep.mubr.f32.mxu0 0.0
    %4666 = vmatmul.mubr.f32.gmra.mrb[0].mxu0 %v1027
    %v4667 = vpop.f32.mrb[0].mxu0
    %v4668 = vadd.f32 0.0, %v4667
    %v4669 = vpop.f32.mrb[0].mxu0
    %4670 = vmatprep.mubr.f32.mxu0 0.0
    %4671 = vmatmul.mubr.f32.gmra.mrb[0].mxu0 %v1030
    %v4672 = vpop.f32.mrb[0].mxu0
    %v4673 = vadd.f32 0.0, %v4672
    %v4674 = vpop.f32.mrb[0].mxu0
    %4675 = vmatprep.mubr.f32.mxu0 0.0
    %4676 = vmatmul.mubr.f32.gmra.mrb[0].mxu0 %v1033
    %v4677 = vpop.f32.mrb[0].mxu0
    %v4678 = vadd.f32 0.0, %v4677
    %v4679 = vpop.f32.mrb[0].mxu0
    %4680 = vmatprep.mubr.f32.mxu0 0.0
    %4681 = vmatmul.mubr.f32.gmra.mrb[0].mxu0 %v1036
    %v4682 = vpop.f32.mrb[0].mxu0
    %v4683 = vadd.f32 0.0, %v4682
    %v4684 = vpop.f32.mrb[0].mxu0
    %4685 = vmatprep.mubr.f32.mxu0 0.0
    %4686 = vmatmul.mubr.f32.gmra.mrb[0].mxu0 %v1039
    %v4687 = vpop.f32.mrb[0].mxu0
    %v4688 = vadd.f32 0.0, %v4687
    %v4689 = vpop.f32.mrb[0].mxu0
    %4690 = vmatprep.mubr.f32.mxu0 0.0
    %4691 = vmatmul.mubr.f32.gmra.mrb[0].mxu0 %v1042
    %v4692 = vpop.f32.mrb[0].mxu0
    %v4693 = vadd.f32 0.0, %v4692
    %v4694 = vpop.f32.mrb[0].mxu0
    %4695 = vmatprep.mubr.f32.mxu0 0.0
    %4696 = vmatmul.mubr.f32.gmra.mrb[0].mxu0 %v1045
    %v4697 = vpop.f32.mrb[0].mxu0
    %v4698 = vadd.f32 0.0, %v4697
    %v4699 = vpop.f32.mrb[0].mxu0
    %4700 = vmatprep.mubr.f32.mxu0 0.0
    %4701 = vmatmul.mubr.f32.gmra.mrb[0].mxu0 %v1048
    %v4702 = vpop.f32.mrb[0].mxu0
    %v4703 = vadd.f32 0.0, %v4702
    %v4704 = vpop.f32.mrb[0].mxu0
    %4705 = vmatprep.mubr.f32.mxu0 0.0
    %4706 = vmatmul.mubr.f32.gmra.mrb[0].mxu0 %v1051
    %v4707 = vpop.f32.mrb[0].mxu0
    %v4708 = vadd.f32 0.0, %v4707
    %v4709 = vpop.f32.mrb[0].mxu0
    %4710 = vmatprep.mubr.f32.mxu0 0.0
    %4711 = vmatmul.mubr.f32.gmra.mrb[0].mxu0 %v1054
    %v4712 = vpop.f32.mrb[0].mxu0
    %v4713 = vadd.f32 0.0, %v4712
    %v4714 = vpop.f32.mrb[0].mxu0
    %4715 = vmatprep.mubr.f32.mxu0 0.0
    %4716 = vmatmul.mubr.f32.gmra.mrb[0].mxu0 %v1057
    %v4717 = vpop.f32.mrb[0].mxu0
    %v4718 = vadd.f32 0.0, %v4717
    %v4719 = vpop.f32.mrb[0].mxu0
    %4720 = vmatprep.mubr.f32.mxu0 0.0
    %4721 = vmatmul.mubr.f32.gmra.mrb[0].mxu0 %v1060
    %v4722 = vpop.f32.mrb[0].mxu0
    %v4723 = vadd.f32 0.0, %v4722
    %v4724 = vpop.f32.mrb[0].mxu0
    %4725 = vmatprep.mubr.f32.mxu0 0.0
    %4726 = vmatmul.mubr.f32.gmra.mrb[0].mxu0 %v1063
    %v4727 = vpop.f32.mrb[0].mxu0
    %v4728 = vadd.f32 0.0, %v4727
    %v4729 = vpop.f32.mrb[0].mxu0
    %4730 = vmatprep.mubr.f32.mxu0 0.0
    %4731 = vmatmul.mubr.f32.gmra.mrb[0].mxu0 %v1066
    %v4732 = vpop.f32.mrb[0].mxu0
    %v4733 = vadd.f32 0.0, %v4732
    %v4734 = vpop.f32.mrb[0].mxu0
    %4735 = vmatprep.mubr.f32.mxu0 0.0
    %4736 = vmatmul.mubr.f32.gmra.mrb[0].mxu0 %v1069
    %v4737 = vpop.f32.mrb[0].mxu0
    %v4738 = vadd.f32 0.0, %v4737
    %v4739 = vpop.f32.mrb[0].mxu0
    %4740 = vmatprep.mubr.f32.mxu0 0.0
    %4741 = vmatmul.mubr.f32.gmra.mrb[0].mxu0 %v1072
    %v4742 = vpop.f32.mrb[0].mxu0
    %v4743 = vadd.f32 0.0, %v4742
    %v4744 = vpop.f32.mrb[0].mxu0
    %4745 = vmatprep.mubr.f32.mxu0 0.0
    %4746 = vmatmul.mubr.f32.gmra.mrb[0].mxu0 %v1075
    %v4747 = vpop.f32.mrb[0].mxu0
    %v4748 = vadd.f32 0.0, %v4747
    %v4749 = vpop.f32.mrb[0].mxu0
    %4750 = vmatprep.mubr.f32.mxu0 0.0
    %4751 = vmatmul.mubr.f32.gmra.mrb[0].mxu0 %v1078
    %v4752 = vpop.f32.mrb[0].mxu0
    %v4753 = vadd.f32 0.0, %v4752
    %v4754 = vpop.f32.mrb[0].mxu0
    %4755 = vdwg.mxu0
    %4756 = vxpose.xlu0.b32.start [1/16] %v4598, 128
    %4757 = vxpose.xlu0.b32.cont [2/16] %v4603, 128
    %4758 = vxpose.xlu0.b32.cont [3/16] %v4608, 128
    %4759 = vxpose.xlu0.b32.cont [4/16] %v4613, 128
    %4760 = vxpose.xlu0.b32.cont [5/16] %v4618, 128
    %4761 = vxpose.xlu0.b32.cont [6/16] %v4623, 128
    %4762 = vxpose.xlu0.b32.cont [7/16] %v4628, 128
    %4763 = vxpose.xlu0.b32.cont [8/16] %v4633, 128
    %4764 = vxpose.xlu0.b32.cont [9/16] %v4638, 128
    %4765 = vxpose.xlu0.b32.cont [10/16] %v4643, 128
    %4766 = vxpose.xlu0.b32.cont [11/16] %v4648, 128
    %4767 = vxpose.xlu0.b32.cont [12/16] %v4653, 128
    %4768 = vxpose.xlu0.b32.cont [13/16] %v4658, 128
    %4769 = vxpose.xlu0.b32.cont [14/16] %v4663, 128
    %4770 = vxpose.xlu0.b32.cont [15/16] %v4668, 128
    %4771 = vxpose.xlu0.b32.end [16/16] %v4673, 128
    %v4772 = vpop.trf.xlu0
    %v4773 = vpop.trf.xlu0
    %v4774 = vpop.trf.xlu0
    %v4775 = vpop.trf.xlu0
    %v4776 = vpop.trf.xlu0
    %v4777 = vpop.trf.xlu0
    %v4778 = vpop.trf.xlu0
    %v4779 = vpop.trf.xlu0
    %v4780 = vpop.trf.xlu0
    %v4781 = vpop.trf.xlu0
    %v4782 = vpop.trf.xlu0
    %v4783 = vpop.trf.xlu0
    %v4784 = vpop.trf.xlu0
    %v4785 = vpop.trf.xlu0
    %v4786 = vpop.trf.xlu0
    %v4787 = vpop.trf.xlu0
    %v4789 = vsel %vm1417, %v4772, 0
    %v4792 = vsel %vm1417, %v4773, 0
    %v4795 = vsel %vm1417, %v4774, 0
    %v4798 = vsel %vm1417, %v4775, 0
    %v4801 = vsel %vm1417, %v4776, 0
    %v4804 = vsel %vm1417, %v4777, 0
    %v4807 = vsel %vm1417, %v4778, 0
    %v4810 = vsel %vm1417, %v4779, 0
    %v4813 = vsel %vm1417, %v4780, 0
    %v4816 = vsel %vm1417, %v4781, 0
    %v4819 = vsel %vm1417, %v4782, 0
    %v4822 = vsel %vm1417, %v4783, 0
    %v4825 = vsel %vm1417, %v4784, 0
    %v4828 = vsel %vm1417, %v4785, 0
    %v4831 = vsel %vm1417, %v4786, 0
    %v4834 = vsel %vm1417, %v4787, 0
    %4836 = vmatprep.subr.mxu0 0.0
    %4837 = vmatpush1.msra.mxu0 %v4518
    %4838 = vmatprep.subr.mxu0 0.0
    %4839 = vmatpush1.msra.mxu0 %v4523
    %4840 = vmatprep.subr.mxu0 0.0
    %4841 = vmatpush1.msra.mxu0 %v4528
    %4842 = vmatprep.subr.mxu0 0.0
    %4843 = vmatpush1.msra.mxu0 %v4533
    %4844 = vmatprep.subr.mxu0 0.0
    %4845 = vmatpush1.msra.mxu0 0.0
    %4846 = vmatprep.subr.mxu0 0.0
    %4847 = vmatpush1.msra.mxu0 0.0
    %4848 = vmatprep.subr.mxu0 0.0
    %4849 = vmatpush1.msra.mxu0 0.0
    %4850 = vmatprep.subr.mxu0 0.0
    %4851 = vmatpush1.msra.mxu0 0.0
    %4852 = vmatprep.subr.mxu0 0.0
    %4853 = vmatpush1.msra.mxu0 0.0
    %4854 = vmatprep.subr.mxu0 0.0
    %4855 = vmatpush1.msra.mxu0 0.0
    %4856 = vmatprep.subr.mxu0 0.0
    %4857 = vmatpush1.msra.mxu0 0.0
    %4858 = vmatprep.subr.mxu0 0.0
    %4859 = vmatpush1.msra.mxu0 0.0
    %4860 = vmatprep.subr.mxu0 0.0
    %4861 = vmatpush1.msra.mxu0 0.0
    %4862 = vmatprep.subr.mxu0 0.0
    %4863 = vmatpush1.msra.mxu0 0.0
    %4864 = vmatprep.subr.mxu0 0.0
    %4865 = vmatpush1.msra.mxu0 0.0
    %4866 = vmatprep.subr.mxu0 0.0
    %4867 = vmatpush1.msra.mxu0 0.0
    %4868 = vmatprep.subr.mxu0 0.0
    %4869 = vmatpush1.msra.mxu0 0.0
    %4870 = vmatprep.subr.mxu0 0.0
    %4871 = vmatpush1.msra.mxu0 0.0
    %4872 = vmatprep.subr.mxu0 0.0
    %4873 = vmatpush1.msra.mxu0 0.0
    %4874 = vmatprep.subr.mxu0 0.0
    %4875 = vmatpush1.msra.mxu0 0.0
    %4876 = vmatprep.subr.mxu0 0.0
    %4877 = vmatpush1.msra.mxu0 0.0
    %4878 = vmatprep.subr.mxu0 0.0
    %4879 = vmatpush1.msra.mxu0 0.0
    %4880 = vmatprep.subr.mxu0 0.0
    %4881 = vmatpush1.msra.mxu0 0.0
    %4882 = vmatprep.subr.mxu0 0.0
    %4883 = vmatpush1.msra.mxu0 0.0
    %4884 = vmatprep.subr.mxu0 0.0
    %4885 = vmatpush1.msra.mxu0 0.0
    %4886 = vmatprep.subr.mxu0 0.0
    %4887 = vmatpush1.msra.mxu0 0.0
    %4888 = vmatprep.subr.mxu0 0.0
    %4889 = vmatpush1.msra.mxu0 0.0
    %4890 = vmatprep.subr.mxu0 0.0
    %4891 = vmatpush1.msra.mxu0 0.0
    %4892 = vmatprep.subr.mxu0 0.0
    %4893 = vmatpush1.msra.mxu0 0.0
    %4894 = vmatprep.subr.mxu0 0.0
    %4895 = vmatpush1.msra.mxu0 0.0
    %4896 = vmatprep.subr.mxu0 0.0
    %4897 = vmatpush1.msra.mxu0 0.0
    %4898 = vmatprep.subr.mxu0 0.0
    %4899 = vmatpush1.msra.mxu0 0.0
    %4900 = vmatprep.mubr.f32.mxu0 0.0
    %4901 = vmatmul.mubr.f32.gmra.mrb[0].mxu0 %v4789
    %v4902 = vpop.f32.mrb[0].mxu0
    %v4903 = vadd.f32 0.0, %v4902
    %v4904 = vpop.f32.mrb[0].mxu0
    %4905 = vmatprep.mubr.f32.mxu0 0.0
    %4906 = vmatmul.mubr.f32.gmra.mrb[0].mxu0 %v4792
    %v4907 = vpop.f32.mrb[0].mxu0
    %v4908 = vadd.f32 0.0, %v4907
    %v4909 = vpop.f32.mrb[0].mxu0
    %4910 = vmatprep.mubr.f32.mxu0 0.0
    %4911 = vmatmul.mubr.f32.gmra.mrb[0].mxu0 %v4795
    %v4912 = vpop.f32.mrb[0].mxu0
    %v4913 = vadd.f32 0.0, %v4912
    %v4914 = vpop.f32.mrb[0].mxu0
    %4915 = vmatprep.mubr.f32.mxu0 0.0
    %4916 = vmatmul.mubr.f32.gmra.mrb[0].mxu0 %v4798
    %v4917 = vpop.f32.mrb[0].mxu0
    %v4918 = vadd.f32 0.0, %v4917
    %v4919 = vpop.f32.mrb[0].mxu0
    %4920 = vmatprep.mubr.f32.mxu0 0.0
    %4921 = vmatmul.mubr.f32.gmra.mrb[0].mxu0 %v4801
    %v4922 = vpop.f32.mrb[0].mxu0
    %v4923 = vadd.f32 0.0, %v4922
    %v4924 = vpop.f32.mrb[0].mxu0
    %4925 = vmatprep.mubr.f32.mxu0 0.0
    %4926 = vmatmul.mubr.f32.gmra.mrb[0].mxu0 %v4804
    %v4927 = vpop.f32.mrb[0].mxu0
    %v4928 = vadd.f32 0.0, %v4927
    %v4929 = vpop.f32.mrb[0].mxu0
    %4930 = vmatprep.mubr.f32.mxu0 0.0
    %4931 = vmatmul.mubr.f32.gmra.mrb[0].mxu0 %v4807
    %v4932 = vpop.f32.mrb[0].mxu0
    %v4933 = vadd.f32 0.0, %v4932
    %v4934 = vpop.f32.mrb[0].mxu0
    %4935 = vmatprep.mubr.f32.mxu0 0.0
    %4936 = vmatmul.mubr.f32.gmra.mrb[0].mxu0 %v4810
    %v4937 = vpop.f32.mrb[0].mxu0
    %v4938 = vadd.f32 0.0, %v4937
    %v4939 = vpop.f32.mrb[0].mxu0
    %4940 = vmatprep.mubr.f32.mxu0 0.0
    %4941 = vmatmul.mubr.f32.gmra.mrb[0].mxu0 %v4813
    %v4942 = vpop.f32.mrb[0].mxu0
    %v4943 = vadd.f32 0.0, %v4942
    %v4944 = vpop.f32.mrb[0].mxu0
    %4945 = vmatprep.mubr.f32.mxu0 0.0
    %4946 = vmatmul.mubr.f32.gmra.mrb[0].mxu0 %v4816
    %v4947 = vpop.f32.mrb[0].mxu0
    %v4948 = vadd.f32 0.0, %v4947
    %v4949 = vpop.f32.mrb[0].mxu0
    %4950 = vmatprep.mubr.f32.mxu0 0.0
    %4951 = vmatmul.mubr.f32.gmra.mrb[0].mxu0 %v4819
    %v4952 = vpop.f32.mrb[0].mxu0
    %v4953 = vadd.f32 0.0, %v4952
    %v4954 = vpop.f32.mrb[0].mxu0
    %4955 = vmatprep.mubr.f32.mxu0 0.0
    %4956 = vmatmul.mubr.f32.gmra.mrb[0].mxu0 %v4822
    %v4957 = vpop.f32.mrb[0].mxu0
    %v4958 = vadd.f32 0.0, %v4957
    %v4959 = vpop.f32.mrb[0].mxu0
    %4960 = vmatprep.mubr.f32.mxu0 0.0
    %4961 = vmatmul.mubr.f32.gmra.mrb[0].mxu0 %v4825
    %v4962 = vpop.f32.mrb[0].mxu0
    %v4963 = vadd.f32 0.0, %v4962
    %v4964 = vpop.f32.mrb[0].mxu0
    %4965 = vmatprep.mubr.f32.mxu0 0.0
    %4966 = vmatmul.mubr.f32.gmra.mrb[0].mxu0 %v4828
    %v4967 = vpop.f32.mrb[0].mxu0
    %v4968 = vadd.f32 0.0, %v4967
    %v4969 = vpop.f32.mrb[0].mxu0
    %4970 = vmatprep.mubr.f32.mxu0 0.0
    %4971 = vmatmul.mubr.f32.gmra.mrb[0].mxu0 %v4831
    %v4972 = vpop.f32.mrb[0].mxu0
    %v4973 = vadd.f32 0.0, %v4972
    %v4974 = vpop.f32.mrb[0].mxu0
    %4975 = vmatprep.mubr.f32.mxu0 0.0
    %4976 = vmatmul.mubr.f32.gmra.mrb[0].mxu0 %v4834
    %v4977 = vpop.f32.mrb[0].mxu0
    %v4978 = vadd.f32 0.0, %v4977
    %v4979 = vpop.f32.mrb[0].mxu0
    %4980 = vdwg.mxu0
    %v4981 = vmul.f32 %v4903, 0.17677669
    %v4982 = vmul.f32 %v4908, 0.17677669
    %v4983 = vmul.f32 %v4913, 0.17677669
    %v4984 = vmul.f32 %v4918, 0.17677669
    %v4985 = vmul.f32 %v4923, 0.17677669
    %v4986 = vmul.f32 %v4928, 0.17677669
    %v4987 = vmul.f32 %v4933, 0.17677669
    %v4988 = vmul.f32 %v4938, 0.17677669
    %v4989 = vmul.f32 %v4943, 0.17677669
    %v4990 = vmul.f32 %v4948, 0.17677669
    %v4991 = vmul.f32 %v4953, 0.17677669
    %v4992 = vmul.f32 %v4958, 0.17677669
    %v4993 = vmul.f32 %v4963, 0.17677669
    %v4994 = vmul.f32 %v4968, 0.17677669
    %v4995 = vmul.f32 %v4973, 0.17677669
    %v4996 = vmul.f32 %v4978, 0.17677669
    %v4997 = vmax.f32 %v4981, %v4985
    %v4998 = vmax.f32 %v4982, %v4986
    %v4999 = vmax.f32 %v4983, %v4987
    %v5000 = vmax.f32 %v4984, %v4988
    %v5001 = vmax.f32 %v4997, %v4989
    %v5002 = vmax.f32 %v4998, %v4990
    %v5003 = vmax.f32 %v4999, %v4991
    %v5004 = vmax.f32 %v5000, %v4992
    %v5005 = vmax.f32 %v5001, %v4993
    %v5006 = vmax.f32 %v5002, %v4994
    %v5007 = vmax.f32 %v5003, %v4995
    %v5008 = vmax.f32 %v5004, %v4996
    %v5009 = vmax.f32 %v5005, %v5006
    %v5010 = vmax.f32 %v5007, %v5008
    %v5011 = vmax.f32 %v5009, %v5010
    %v5012 = vrot.slane %v5011, 4
    %v5013 = vmax.f32 %v5011, %v5012
    %v5014 = vrot.slane %v5013, 2
    %v5015 = vmax.f32 %v5013, %v5014
    %v5016 = vrot.slane %v5015, 1
    %v5017 = vmax.f32 %v5015, %v5016
    %v5018 = vsub.f32 %v4981, %v5017
    %v5019 = vsub.f32 %v4982, %v5017
    %v5020 = vsub.f32 %v4983, %v5017
    %v5021 = vsub.f32 %v4984, %v5017
    %v5022 = vsub.f32 %v4985, %v5017
    %v5023 = vsub.f32 %v4986, %v5017
    %v5024 = vsub.f32 %v4987, %v5017
    %v5025 = vsub.f32 %v4988, %v5017
    %v5026 = vsub.f32 %v4989, %v5017
    %v5027 = vsub.f32 %v4990, %v5017
    %v5028 = vsub.f32 %v4991, %v5017
    %v5029 = vsub.f32 %v4992, %v5017
    %v5030 = vsub.f32 %v4993, %v5017
    %v5031 = vsub.f32 %v4994, %v5017
    %v5032 = vsub.f32 %v4995, %v5017
    %v5033 = vsub.f32 %v4996, %v5017
    %v5034 = vmul.f32 %v5018, 1.442695
    %v5035 = vpow.pop %v5034
    %v5036 = vmul.f32 %v5019, 1.442695
    %v5037 = vpow.pop %v5036
    %v5038 = vmul.f32 %v5020, 1.442695
    %v5039 = vpow.pop %v5038
    %v5040 = vmul.f32 %v5021, 1.442695
    %v5041 = vpow.pop %v5040
    %v5042 = vmul.f32 %v5022, 1.442695
    %v5043 = vpow.pop %v5042
    %v5044 = vmul.f32 %v5023, 1.442695
    %v5045 = vpow.pop %v5044
    %v5046 = vmul.f32 %v5024, 1.442695
    %v5047 = vpow.pop %v5046
    %v5048 = vmul.f32 %v5025, 1.442695
    %v5049 = vpow.pop %v5048
    %v5050 = vmul.f32 %v5026, 1.442695
    %v5051 = vpow.pop %v5050
    %v5052 = vmul.f32 %v5027, 1.442695
    %v5053 = vpow.pop %v5052
    %v5054 = vmul.f32 %v5028, 1.442695
    %v5055 = vpow.pop %v5054
    %v5056 = vmul.f32 %v5029, 1.442695
    %v5057 = vpow.pop %v5056
    %v5058 = vmul.f32 %v5030, 1.442695
    %v5059 = vpow.pop %v5058
    %v5060 = vmul.f32 %v5031, 1.442695
    %v5061 = vpow.pop %v5060
    %v5062 = vmul.f32 %v5032, 1.442695
    %v5063 = vpow.pop %v5062
    %v5064 = vmul.f32 %v5033, 1.442695
    %v5065 = vpow.pop %v5064
    %v5066 = vadd.f32 %v5035, %v5037
    %v5067 = vadd.f32 %v5066, %v5039
    %v5068 = vadd.f32 %v5067, %v5041
    %v5069 = vadd.f32 %v5068, %v5043
    %v5070 = vadd.f32 %v5069, %v5045
    %v5071 = vadd.f32 %v5070, %v5047
    %v5072 = vadd.f32 %v5071, %v5049
    %v5073 = vadd.f32 %v5072, %v5051
    %v5074 = vadd.f32 %v5073, %v5053
    %v5075 = vadd.f32 %v5074, %v5055
    %v5076 = vadd.f32 %v5075, %v5057
    %v5077 = vadd.f32 %v5076, %v5059
    %v5078 = vadd.f32 %v5077, %v5061
    %v5079 = vadd.f32 %v5078, %v5063
    %v5080 = vadd.f32 %v5079, %v5065
    %v5081 = vrot.slane %v5080, 4
    %v5082 = vadd.f32 %v5080, %v5081
    %v5083 = vrot.slane %v5082, 2
    %v5084 = vadd.f32 %v5082, %v5083
    %v5085 = vrot.slane %v5084, 1
    %v5086 = vadd.f32 %v5084, %v5085
    %5087 = vmatprep.subr.mxu0 0.0
    %5088 = vmatpush1.msra.mxu0 %v5035
    %5089 = vmatprep.subr.mxu0 0.0
    %5090 = vmatpush1.msra.mxu0 %v5037
    %5091 = vmatprep.subr.mxu0 0.0
    %5092 = vmatpush1.msra.mxu0 %v5039
    %5093 = vmatprep.subr.mxu0 0.0
    %5094 = vmatpush1.msra.mxu0 %v5041
    %5095 = vmatprep.subr.mxu0 0.0
    %5096 = vmatpush1.msra.mxu0 %v5043
    %5097 = vmatprep.subr.mxu0 0.0
    %5098 = vmatpush1.msra.mxu0 %v5045
    %5099 = vmatprep.subr.mxu0 0.0
    %5100 = vmatpush1.msra.mxu0 %v5047
    %5101 = vmatprep.subr.mxu0 0.0
    %5102 = vmatpush1.msra.mxu0 %v5049
    %5103 = vmatprep.subr.mxu0 0.0
    %5104 = vmatpush1.msra.mxu0 %v5051
    %5105 = vmatprep.subr.mxu0 0.0
    %5106 = vmatpush1.msra.mxu0 %v5053
    %5107 = vmatprep.subr.mxu0 0.0
    %5108 = vmatpush1.msra.mxu0 %v5055
    %5109 = vmatprep.subr.mxu0 0.0
    %5110 = vmatpush1.msra.mxu0 %v5057
    %5111 = vmatprep.subr.mxu0 0.0
    %5112 = vmatpush1.msra.mxu0 %v5059
    %5113 = vmatprep.subr.mxu0 0.0
    %5114 = vmatpush1.msra.mxu0 %v5061
    %5115 = vmatprep.subr.mxu0 0.0
    %5116 = vmatpush1.msra.mxu0 %v5063
    %5117 = vmatprep.subr.mxu0 0.0
    %5118 = vmatpush1.msra.mxu0 %v5065
    %5119 = vmatprep.subr.mxu0 0.0
    %5120 = vmatpush1.msra.mxu0 0.0
    %5121 = vmatprep.subr.mxu0 0.0
    %5122 = vmatpush1.msra.mxu0 0.0
    %5123 = vmatprep.subr.mxu0 0.0
    %5124 = vmatpush1.msra.mxu0 0.0
    %5125 = vmatprep.subr.mxu0 0.0
    %5126 = vmatpush1.msra.mxu0 0.0
    %5127 = vmatprep.subr.mxu0 0.0
    %5128 = vmatpush1.msra.mxu0 0.0
    %5129 = vmatprep.subr.mxu0 0.0
    %5130 = vmatpush1.msra.mxu0 0.0
    %5131 = vmatprep.subr.mxu0 0.0
    %5132 = vmatpush1.msra.mxu0 0.0
    %5133 = vmatprep.subr.mxu0 0.0
    %5134 = vmatpush1.msra.mxu0 0.0
    %5135 = vmatprep.subr.mxu0 0.0
    %5136 = vmatpush1.msra.mxu0 0.0
    %5137 = vmatprep.subr.mxu0 0.0
    %5138 = vmatpush1.msra.mxu0 0.0
    %5139 = vmatprep.subr.mxu0 0.0
    %5140 = vmatpush1.msra.mxu0 0.0
    %5141 = vmatprep.subr.mxu0 0.0
    %5142 = vmatpush1.msra.mxu0 0.0
    %5143 = vmatprep.subr.mxu0 0.0
    %5144 = vmatpush1.msra.mxu0 0.0
    %5145 = vmatprep.subr.mxu0 0.0
    %5146 = vmatpush1.msra.mxu0 0.0
    %5147 = vmatprep.subr.mxu0 0.0
    %5148 = vmatpush1.msra.mxu0 0.0
    %5149 = vmatprep.subr.mxu0 0.0
    %5150 = vmatpush1.msra.mxu0 0.0
    %5151 = vmatprep.mubr.f32.mxu0 0.0
    %5152 = vmatmul.mubr.f32.gmra.mrb[0].mxu0 %v4678
    %v5153 = vpop.f32.mrb[0].mxu0
    %v5154 = vadd.f32 0.0, %v5153
    %v5155 = vpop.f32.mrb[0].mxu0
    %5156 = vmatprep.mubr.f32.mxu0 0.0
    %5157 = vmatmul.mubr.f32.gmra.mrb[0].mxu0 %v4683
    %v5158 = vpop.f32.mrb[0].mxu0
    %v5159 = vadd.f32 0.0, %v5158
    %v5160 = vpop.f32.mrb[0].mxu0
    %5161 = vmatprep.mubr.f32.mxu0 0.0
    %5162 = vmatmul.mubr.f32.gmra.mrb[0].mxu0 %v4688
    %v5163 = vpop.f32.mrb[0].mxu0
    %v5164 = vadd.f32 0.0, %v5163
    %v5165 = vpop.f32.mrb[0].mxu0
    %5166 = vmatprep.mubr.f32.mxu0 0.0
    %5167 = vmatmul.mubr.f32.gmra.mrb[0].mxu0 %v4693
    %v5168 = vpop.f32.mrb[0].mxu0
    %v5169 = vadd.f32 0.0, %v5168
    %v5170 = vpop.f32.mrb[0].mxu0
    %5171 = vdwg.mxu0
    %v5172 = vrcp.pop %v5086
    %v5173 = vmul.f32 %v5154, %v5172
    %v5174 = vmul.f32 %v5159, %v5172
    %v5175 = vmul.f32 %v5164, %v5172
    %v5176 = vmul.f32 %v5169, %v5172
    %5177 = vrot.lane.b32.xlu0 %v4772, 96
    %v5178 = vpop.permute.xlu0 %5177
    %5179 = vrot.lane.b32.xlu0 %v4773, 96
    %v5180 = vpop.permute.xlu0 %5179
    %5181 = vrot.lane.b32.xlu0 %v4774, 96
    %v5182 = vpop.permute.xlu0 %5181
    %5183 = vrot.lane.b32.xlu0 %v4775, 96
    %v5184 = vpop.permute.xlu0 %5183
    %5185 = vrot.lane.b32.xlu0 %v4776, 96
    %v5186 = vpop.permute.xlu0 %5185
    %5187 = vrot.lane.b32.xlu0 %v4777, 96
    %v5188 = vpop.permute.xlu0 %5187
    %5189 = vrot.lane.b32.xlu0 %v4778, 96
    %v5190 = vpop.permute.xlu0 %5189
    %5191 = vrot.lane.b32.xlu0 %v4779, 96
    %v5192 = vpop.permute.xlu0 %5191
    %5193 = vrot.lane.b32.xlu0 %v4780, 96
    %v5194 = vpop.permute.xlu0 %5193
    %5195 = vrot.lane.b32.xlu0 %v4781, 96
    %v5196 = vpop.permute.xlu0 %5195
    %5197 = vrot.lane.b32.xlu0 %v4782, 96
    %v5198 = vpop.permute.xlu0 %5197
    %5199 = vrot.lane.b32.xlu0 %v4783, 96
    %v5200 = vpop.permute.xlu0 %5199
    %5201 = vrot.lane.b32.xlu0 %v4784, 96
    %v5202 = vpop.permute.xlu0 %5201
    %5203 = vrot.lane.b32.xlu0 %v4785, 96
    %v5204 = vpop.permute.xlu0 %5203
    %5205 = vrot.lane.b32.xlu0 %v4786, 96
    %v5206 = vpop.permute.xlu0 %5205
    %5207 = vrot.lane.b32.xlu0 %v4787, 96
    %v5208 = vpop.permute.xlu0 %5207
    %v5209 = vsel %vm1417, %v5178, 0
    %v5211 = vsel %vm1417, %v5180, 0
    %v5213 = vsel %vm1417, %v5182, 0
    %v5215 = vsel %vm1417, %v5184, 0
    %v5217 = vsel %vm1417, %v5186, 0
    %v5219 = vsel %vm1417, %v5188, 0
    %v5221 = vsel %vm1417, %v5190, 0
    %v5223 = vsel %vm1417, %v5192, 0
    %v5225 = vsel %vm1417, %v5194, 0
    %v5227 = vsel %vm1417, %v5196, 0
    %v5229 = vsel %vm1417, %v5198, 0
    %v5231 = vsel %vm1417, %v5200, 0
    %v5233 = vsel %vm1417, %v5202, 0
    %v5235 = vsel %vm1417, %v5204, 0
    %v5237 = vsel %vm1417, %v5206, 0
    %v5239 = vsel %vm1417, %v5208, 0
    %5241 = vmatprep.subr.mxu0 0.0
    %5242 = vmatpush1.msra.mxu0 %v4538
    %5243 = vmatprep.subr.mxu0 0.0
    %5244 = vmatpush1.msra.mxu0 %v4543
    %5245 = vmatprep.subr.mxu0 0.0
    %5246 = vmatpush1.msra.mxu0 %v4548
    %5247 = vmatprep.subr.mxu0 0.0
    %5248 = vmatpush1.msra.mxu0 %v4553
    %5249 = vmatprep.subr.mxu0 0.0
    %5250 = vmatpush1.msra.mxu0 0.0
    %5251 = vmatprep.subr.mxu0 0.0
    %5252 = vmatpush1.msra.mxu0 0.0
    %5253 = vmatprep.subr.mxu0 0.0
    %5254 = vmatpush1.msra.mxu0 0.0
    %5255 = vmatprep.subr.mxu0 0.0
    %5256 = vmatpush1.msra.mxu0 0.0
    %5257 = vmatprep.subr.mxu0 0.0
    %5258 = vmatpush1.msra.mxu0 0.0
    %5259 = vmatprep.subr.mxu0 0.0
    %5260 = vmatpush1.msra.mxu0 0.0
    %5261 = vmatprep.subr.mxu0 0.0
    %5262 = vmatpush1.msra.mxu0 0.0
    %5263 = vmatprep.subr.mxu0 0.0
    %5264 = vmatpush1.msra.mxu0 0.0
    %5265 = vmatprep.subr.mxu0 0.0
    %5266 = vmatpush1.msra.mxu0 0.0
    %5267 = vmatprep.subr.mxu0 0.0
    %5268 = vmatpush1.msra.mxu0 0.0
    %5269 = vmatprep.subr.mxu0 0.0
    %5270 = vmatpush1.msra.mxu0 0.0
    %5271 = vmatprep.subr.mxu0 0.0
    %5272 = vmatpush1.msra.mxu0 0.0
    %5273 = vmatprep.subr.mxu0 0.0
    %5274 = vmatpush1.msra.mxu0 0.0
    %5275 = vmatprep.subr.mxu0 0.0
    %5276 = vmatpush1.msra.mxu0 0.0
    %5277 = vmatprep.subr.mxu0 0.0
    %5278 = vmatpush1.msra.mxu0 0.0
    %5279 = vmatprep.subr.mxu0 0.0
    %5280 = vmatpush1.msra.mxu0 0.0
    %5281 = vmatprep.subr.mxu0 0.0
    %5282 = vmatpush1.msra.mxu0 0.0
    %5283 = vmatprep.subr.mxu0 0.0
    %5284 = vmatpush1.msra.mxu0 0.0
    %5285 = vmatprep.subr.mxu0 0.0
    %5286 = vmatpush1.msra.mxu0 0.0
    %5287 = vmatprep.subr.mxu0 0.0
    %5288 = vmatpush1.msra.mxu0 0.0
    %5289 = vmatprep.subr.mxu0 0.0
    %5290 = vmatpush1.msra.mxu0 0.0
    %5291 = vmatprep.subr.mxu0 0.0
    %5292 = vmatpush1.msra.mxu0 0.0
    %5293 = vmatprep.subr.mxu0 0.0
    %5294 = vmatpush1.msra.mxu0 0.0
    %5295 = vmatprep.subr.mxu0 0.0
    %5296 = vmatpush1.msra.mxu0 0.0
    %5297 = vmatprep.subr.mxu0 0.0
    %5298 = vmatpush1.msra.mxu0 0.0
    %5299 = vmatprep.subr.mxu0 0.0
    %5300 = vmatpush1.msra.mxu0 0.0
    %5301 = vmatprep.subr.mxu0 0.0
    %5302 = vmatpush1.msra.mxu0 0.0
    %5303 = vmatprep.subr.mxu0 0.0
    %5304 = vmatpush1.msra.mxu0 0.0
    %5305 = vmatprep.mubr.f32.mxu0 0.0
    %5306 = vmatmul.mubr.f32.gmra.mrb[0].mxu0 %v5209
    %v5307 = vpop.f32.mrb[0].mxu0
    %v5308 = vadd.f32 0.0, %v5307
    %v5309 = vpop.f32.mrb[0].mxu0
    %5310 = vmatprep.mubr.f32.mxu0 0.0
    %5311 = vmatmul.mubr.f32.gmra.mrb[0].mxu0 %v5211
    %v5312 = vpop.f32.mrb[0].mxu0
    %v5313 = vadd.f32 0.0, %v5312
    %v5314 = vpop.f32.mrb[0].mxu0
    %5315 = vmatprep.mubr.f32.mxu0 0.0
    %5316 = vmatmul.mubr.f32.gmra.mrb[0].mxu0 %v5213
    %v5317 = vpop.f32.mrb[0].mxu0
    %v5318 = vadd.f32 0.0, %v5317
    %v5319 = vpop.f32.mrb[0].mxu0
    %5320 = vmatprep.mubr.f32.mxu0 0.0
    %5321 = vmatmul.mubr.f32.gmra.mrb[0].mxu0 %v5215
    %v5322 = vpop.f32.mrb[0].mxu0
    %v5323 = vadd.f32 0.0, %v5322
    %v5324 = vpop.f32.mrb[0].mxu0
    %5325 = vmatprep.mubr.f32.mxu0 0.0
    %5326 = vmatmul.mubr.f32.gmra.mrb[0].mxu0 %v5217
    %v5327 = vpop.f32.mrb[0].mxu0
    %v5328 = vadd.f32 0.0, %v5327
    %v5329 = vpop.f32.mrb[0].mxu0
    %5330 = vmatprep.mubr.f32.mxu0 0.0
    %5331 = vmatmul.mubr.f32.gmra.mrb[0].mxu0 %v5219
    %v5332 = vpop.f32.mrb[0].mxu0
    %v5333 = vadd.f32 0.0, %v5332
    %v5334 = vpop.f32.mrb[0].mxu0
    %5335 = vmatprep.mubr.f32.mxu0 0.0
    %5336 = vmatmul.mubr.f32.gmra.mrb[0].mxu0 %v5221
    %v5337 = vpop.f32.mrb[0].mxu0
    %v5338 = vadd.f32 0.0, %v5337
    %v5339 = vpop.f32.mrb[0].mxu0
    %5340 = vmatprep.mubr.f32.mxu0 0.0
    %5341 = vmatmul.mubr.f32.gmra.mrb[0].mxu0 %v5223
    %v5342 = vpop.f32.mrb[0].mxu0
    %v5343 = vadd.f32 0.0, %v5342
    %v5344 = vpop.f32.mrb[0].mxu0
    %5345 = vmatprep.mubr.f32.mxu0 0.0
    %5346 = vmatmul.mubr.f32.gmra.mrb[0].mxu0 %v5225
    %v5347 = vpop.f32.mrb[0].mxu0
    %v5348 = vadd.f32 0.0, %v5347
    %v5349 = vpop.f32.mrb[0].mxu0
    %5350 = vmatprep.mubr.f32.mxu0 0.0
    %5351 = vmatmul.mubr.f32.gmra.mrb[0].mxu0 %v5227
    %v5352 = vpop.f32.mrb[0].mxu0
    %v5353 = vadd.f32 0.0, %v5352
    %v5354 = vpop.f32.mrb[0].mxu0
    %5355 = vmatprep.mubr.f32.mxu0 0.0
    %5356 = vmatmul.mubr.f32.gmra.mrb[0].mxu0 %v5229
    %v5357 = vpop.f32.mrb[0].mxu0
    %v5358 = vadd.f32 0.0, %v5357
    %v5359 = vpop.f32.mrb[0].mxu0
    %5360 = vmatprep.mubr.f32.mxu0 0.0
    %5361 = vmatmul.mubr.f32.gmra.mrb[0].mxu0 %v5231
    %v5362 = vpop.f32.mrb[0].mxu0
    %v5363 = vadd.f32 0.0, %v5362
    %v5364 = vpop.f32.mrb[0].mxu0
    %5365 = vmatprep.mubr.f32.mxu0 0.0
    %5366 = vmatmul.mubr.f32.gmra.mrb[0].mxu0 %v5233
    %v5367 = vpop.f32.mrb[0].mxu0
    %v5368 = vadd.f32 0.0, %v5367
    %v5369 = vpop.f32.mrb[0].mxu0
    %5370 = vmatprep.mubr.f32.mxu0 0.0
    %5371 = vmatmul.mubr.f32.gmra.mrb[0].mxu0 %v5235
    %v5372 = vpop.f32.mrb[0].mxu0
    %v5373 = vadd.f32 0.0, %v5372
    %v5374 = vpop.f32.mrb[0].mxu0
    %5375 = vmatprep.mubr.f32.mxu0 0.0
    %5376 = vmatmul.mubr.f32.gmra.mrb[0].mxu0 %v5237
    %v5377 = vpop.f32.mrb[0].mxu0
    %v5378 = vadd.f32 0.0, %v5377
    %v5379 = vpop.f32.mrb[0].mxu0
    %5380 = vmatprep.mubr.f32.mxu0 0.0
    %5381 = vmatmul.mubr.f32.gmra.mrb[0].mxu0 %v5239
    %v5382 = vpop.f32.mrb[0].mxu0
    %v5383 = vadd.f32 0.0, %v5382
    %v5384 = vpop.f32.mrb[0].mxu0
    %5385 = vdwg.mxu0
    %v5386 = vmul.f32 %v5308, 0.17677669
    %v5387 = vmul.f32 %v5313, 0.17677669
    %v5388 = vmul.f32 %v5318, 0.17677669
    %v5389 = vmul.f32 %v5323, 0.17677669
    %v5390 = vmul.f32 %v5328, 0.17677669
    %v5391 = vmul.f32 %v5333, 0.17677669
    %v5392 = vmul.f32 %v5338, 0.17677669
    %v5393 = vmul.f32 %v5343, 0.17677669
    %v5394 = vmul.f32 %v5348, 0.17677669
    %v5395 = vmul.f32 %v5353, 0.17677669
    %v5396 = vmul.f32 %v5358, 0.17677669
    %v5397 = vmul.f32 %v5363, 0.17677669
    %v5398 = vmul.f32 %v5368, 0.17677669
    %v5399 = vmul.f32 %v5373, 0.17677669
    %v5400 = vmul.f32 %v5378, 0.17677669
    %v5401 = vmul.f32 %v5383, 0.17677669
    %v5402 = vmax.f32 %v5386, %v5390
    %v5403 = vmax.f32 %v5387, %v5391
    %v5404 = vmax.f32 %v5388, %v5392
    %v5405 = vmax.f32 %v5389, %v5393
    %v5406 = vmax.f32 %v5402, %v5394
    %v5407 = vmax.f32 %v5403, %v5395
    %v5408 = vmax.f32 %v5404, %v5396
    %v5409 = vmax.f32 %v5405, %v5397
    %v5410 = vmax.f32 %v5406, %v5398
    %v5411 = vmax.f32 %v5407, %v5399
    %v5412 = vmax.f32 %v5408, %v5400
    %v5413 = vmax.f32 %v5409, %v5401
    %v5414 = vmax.f32 %v5410, %v5411
    %v5415 = vmax.f32 %v5412, %v5413
    %v5416 = vmax.f32 %v5414, %v5415
    %v5417 = vrot.slane %v5416, 4
    %v5418 = vmax.f32 %v5416, %v5417
    %v5419 = vrot.slane %v5418, 2
    %v5420 = vmax.f32 %v5418, %v5419
    %v5421 = vrot.slane %v5420, 1
    %v5422 = vmax.f32 %v5420, %v5421
    %v5423 = vsub.f32 %v5386, %v5422
    %v5424 = vsub.f32 %v5387, %v5422
    %v5425 = vsub.f32 %v5388, %v5422
    %v5426 = vsub.f32 %v5389, %v5422
    %v5427 = vsub.f32 %v5390, %v5422
    %v5428 = vsub.f32 %v5391, %v5422
    %v5429 = vsub.f32 %v5392, %v5422
    %v5430 = vsub.f32 %v5393, %v5422
    %v5431 = vsub.f32 %v5394, %v5422
    %v5432 = vsub.f32 %v5395, %v5422
    %v5433 = vsub.f32 %v5396, %v5422
    %v5434 = vsub.f32 %v5397, %v5422
    %v5435 = vsub.f32 %v5398, %v5422
    %v5436 = vsub.f32 %v5399, %v5422
    %v5437 = vsub.f32 %v5400, %v5422
    %v5438 = vsub.f32 %v5401, %v5422
    %v5439 = vmul.f32 %v5423, 1.442695
    %v5440 = vpow.pop %v5439
    %v5441 = vmul.f32 %v5424, 1.442695
    %v5442 = vpow.pop %v5441
    %v5443 = vmul.f32 %v5425, 1.442695
    %v5444 = vpow.pop %v5443
    %v5445 = vmul.f32 %v5426, 1.442695
    %v5446 = vpow.pop %v5445
    %v5447 = vmul.f32 %v5427, 1.442695
    %v5448 = vpow.pop %v5447
    %v5449 = vmul.f32 %v5428, 1.442695
    %v5450 = vpow.pop %v5449
    %v5451 = vmul.f32 %v5429, 1.442695
    %v5452 = vpow.pop %v5451
    %v5453 = vmul.f32 %v5430, 1.442695
    %v5454 = vpow.pop %v5453
    %v5455 = vmul.f32 %v5431, 1.442695
    %v5456 = vpow.pop %v5455
    %v5457 = vmul.f32 %v5432, 1.442695
    %v5458 = vpow.pop %v5457
    %v5459 = vmul.f32 %v5433, 1.442695
    %v5460 = vpow.pop %v5459
    %v5461 = vmul.f32 %v5434, 1.442695
    %v5462 = vpow.pop %v5461
    %v5463 = vmul.f32 %v5435, 1.442695
    %v5464 = vpow.pop %v5463
    %v5465 = vmul.f32 %v5436, 1.442695
    %v5466 = vpow.pop %v5465
    %v5467 = vmul.f32 %v5437, 1.442695
    %v5468 = vpow.pop %v5467
    %v5469 = vmul.f32 %v5438, 1.442695
    %v5470 = vpow.pop %v5469
    %v5471 = vadd.f32 %v5440, %v5442
    %v5472 = vadd.f32 %v5471, %v5444
    %v5473 = vadd.f32 %v5472, %v5446
    %v5474 = vadd.f32 %v5473, %v5448
    %v5475 = vadd.f32 %v5474, %v5450
    %v5476 = vadd.f32 %v5475, %v5452
    %v5477 = vadd.f32 %v5476, %v5454
    %v5478 = vadd.f32 %v5477, %v5456
    %v5479 = vadd.f32 %v5478, %v5458
    %v5480 = vadd.f32 %v5479, %v5460
    %v5481 = vadd.f32 %v5480, %v5462
    %v5482 = vadd.f32 %v5481, %v5464
    %v5483 = vadd.f32 %v5482, %v5466
    %v5484 = vadd.f32 %v5483, %v5468
    %v5485 = vadd.f32 %v5484, %v5470
    %v5486 = vrot.slane %v5485, 4
    %v5487 = vadd.f32 %v5485, %v5486
    %v5488 = vrot.slane %v5487, 2
    %v5489 = vadd.f32 %v5487, %v5488
    %v5490 = vrot.slane %v5489, 1
    %v5491 = vadd.f32 %v5489, %v5490
    %5492 = vmatprep.subr.mxu0 0.0
    %5493 = vmatpush1.msra.mxu0 %v5440
    %5494 = vmatprep.subr.mxu0 0.0
    %5495 = vmatpush1.msra.mxu0 %v5442
    %5496 = vmatprep.subr.mxu0 0.0
    %5497 = vmatpush1.msra.mxu0 %v5444
    %5498 = vmatprep.subr.mxu0 0.0
    %5499 = vmatpush1.msra.mxu0 %v5446
    %5500 = vmatprep.subr.mxu0 0.0
    %5501 = vmatpush1.msra.mxu0 %v5448
    %5502 = vmatprep.subr.mxu0 0.0
    %5503 = vmatpush1.msra.mxu0 %v5450
    %5504 = vmatprep.subr.mxu0 0.0
    %5505 = vmatpush1.msra.mxu0 %v5452
    %5506 = vmatprep.subr.mxu0 0.0
    %5507 = vmatpush1.msra.mxu0 %v5454
    %5508 = vmatprep.subr.mxu0 0.0
    %5509 = vmatpush1.msra.mxu0 %v5456
    %5510 = vmatprep.subr.mxu0 0.0
    %5511 = vmatpush1.msra.mxu0 %v5458
    %5512 = vmatprep.subr.mxu0 0.0
    %5513 = vmatpush1.msra.mxu0 %v5460
    %5514 = vmatprep.subr.mxu0 0.0
    %5515 = vmatpush1.msra.mxu0 %v5462
    %5516 = vmatprep.subr.mxu0 0.0
    %5517 = vmatpush1.msra.mxu0 %v5464
    %5518 = vmatprep.subr.mxu0 0.0
    %5519 = vmatpush1.msra.mxu0 %v5466
    %5520 = vmatprep.subr.mxu0 0.0
    %5521 = vmatpush1.msra.mxu0 %v5468
    %5522 = vmatprep.subr.mxu0 0.0
    %5523 = vmatpush1.msra.mxu0 %v5470
    %5524 = vmatprep.subr.mxu0 0.0
    %5525 = vmatpush1.msra.mxu0 0.0
    %5526 = vmatprep.subr.mxu0 0.0
    %5527 = vmatpush1.msra.mxu0 0.0
    %5528 = vmatprep.subr.mxu0 0.0
    %5529 = vmatpush1.msra.mxu0 0.0
    %5530 = vmatprep.subr.mxu0 0.0
    %5531 = vmatpush1.msra.mxu0 0.0
    %5532 = vmatprep.subr.mxu0 0.0
    %5533 = vmatpush1.msra.mxu0 0.0
    %5534 = vmatprep.subr.mxu0 0.0
    %5535 = vmatpush1.msra.mxu0 0.0
    %5536 = vmatprep.subr.mxu0 0.0
    %5537 = vmatpush1.msra.mxu0 0.0
    %5538 = vmatprep.subr.mxu0 0.0
    %5539 = vmatpush1.msra.mxu0 0.0
    %5540 = vmatprep.subr.mxu0 0.0
    %5541 = vmatpush1.msra.mxu0 0.0
    %5542 = vmatprep.subr.mxu0 0.0
    %5543 = vmatpush1.msra.mxu0 0.0
    %5544 = vmatprep.subr.mxu0 0.0
    %5545 = vmatpush1.msra.mxu0 0.0
    %5546 = vmatprep.subr.mxu0 0.0
    %5547 = vmatpush1.msra.mxu0 0.0
    %5548 = vmatprep.subr.mxu0 0.0
    %5549 = vmatpush1.msra.mxu0 0.0
    %5550 = vmatprep.subr.mxu0 0.0
    %5551 = vmatpush1.msra.mxu0 0.0
    %5552 = vmatprep.subr.mxu0 0.0
    %5553 = vmatpush1.msra.mxu0 0.0
    %5554 = vmatprep.subr.mxu0 0.0
    %5555 = vmatpush1.msra.mxu0 0.0
    %5556 = vmatprep.mubr.f32.mxu0 0.0
    %5557 = vmatmul.mubr.f32.gmra.mrb[0].mxu0 %v4698
    %v5558 = vpop.f32.mrb[0].mxu0
    %v5559 = vadd.f32 0.0, %v5558
    %v5560 = vpop.f32.mrb[0].mxu0
    %5561 = vmatprep.mubr.f32.mxu0 0.0
    %5562 = vmatmul.mubr.f32.gmra.mrb[0].mxu0 %v4703
    %v5563 = vpop.f32.mrb[0].mxu0
    %v5564 = vadd.f32 0.0, %v5563
    %v5565 = vpop.f32.mrb[0].mxu0
    %5566 = vmatprep.mubr.f32.mxu0 0.0
    %5567 = vmatmul.mubr.f32.gmra.mrb[0].mxu0 %v4708
    %v5568 = vpop.f32.mrb[0].mxu0
    %v5569 = vadd.f32 0.0, %v5568
    %v5570 = vpop.f32.mrb[0].mxu0
    %5571 = vmatprep.mubr.f32.mxu0 0.0
    %5572 = vmatmul.mubr.f32.gmra.mrb[0].mxu0 %v4713
    %v5573 = vpop.f32.mrb[0].mxu0
    %v5574 = vadd.f32 0.0, %v5573
    %v5575 = vpop.f32.mrb[0].mxu0
    %5576 = vdwg.mxu0
    %v5577 = vrcp.pop %v5491
    %v5578 = vmul.f32 %v5559, %v5577
    %v5579 = vmul.f32 %v5564, %v5577
    %v5580 = vmul.f32 %v5569, %v5577
    %v5581 = vmul.f32 %v5574, %v5577
    %5582 = vrot.lane.b32.xlu0 %v4772, 64
    %v5583 = vpop.permute.xlu0 %5582
    %5584 = vrot.lane.b32.xlu0 %v4773, 64
    %v5585 = vpop.permute.xlu0 %5584
    %5586 = vrot.lane.b32.xlu0 %v4774, 64
    %v5587 = vpop.permute.xlu0 %5586
    %5588 = vrot.lane.b32.xlu0 %v4775, 64
    %v5589 = vpop.permute.xlu0 %5588
    %5590 = vrot.lane.b32.xlu0 %v4776, 64
    %v5591 = vpop.permute.xlu0 %5590
    %5592 = vrot.lane.b32.xlu0 %v4777, 64
    %v5593 = vpop.permute.xlu0 %5592
    %5594 = vrot.lane.b32.xlu0 %v4778, 64
    %v5595 = vpop.permute.xlu0 %5594
    %5596 = vrot.lane.b32.xlu0 %v4779, 64
    %v5597 = vpop.permute.xlu0 %5596
    %5598 = vrot.lane.b32.xlu0 %v4780, 64
    %v5599 = vpop.permute.xlu0 %5598
    %5600 = vrot.lane.b32.xlu0 %v4781, 64
    %v5601 = vpop.permute.xlu0 %5600
    %5602 = vrot.lane.b32.xlu0 %v4782, 64
    %v5603 = vpop.permute.xlu0 %5602
    %5604 = vrot.lane.b32.xlu0 %v4783, 64
    %v5605 = vpop.permute.xlu0 %5604
    %5606 = vrot.lane.b32.xlu0 %v4784, 64
    %v5607 = vpop.permute.xlu0 %5606
    %5608 = vrot.lane.b32.xlu0 %v4785, 64
    %v5609 = vpop.permute.xlu0 %5608
    %5610 = vrot.lane.b32.xlu0 %v4786, 64
    %v5611 = vpop.permute.xlu0 %5610
    %5612 = vrot.lane.b32.xlu0 %v4787, 64
    %v5613 = vpop.permute.xlu0 %5612
    %v5614 = vsel %vm1417, %v5583, 0
    %v5616 = vsel %vm1417, %v5585, 0
    %v5618 = vsel %vm1417, %v5587, 0
    %v5620 = vsel %vm1417, %v5589, 0
    %v5622 = vsel %vm1417, %v5591, 0
    %v5624 = vsel %vm1417, %v5593, 0
    %v5626 = vsel %vm1417, %v5595, 0
    %v5628 = vsel %vm1417, %v5597, 0
    %v5630 = vsel %vm1417, %v5599, 0
    %v5632 = vsel %vm1417, %v5601, 0
    %v5634 = vsel %vm1417, %v5603, 0
    %v5636 = vsel %vm1417, %v5605, 0
    %v5638 = vsel %vm1417, %v5607, 0
    %v5640 = vsel %vm1417, %v5609, 0
    %v5642 = vsel %vm1417, %v5611, 0
    %v5644 = vsel %vm1417, %v5613, 0
    %5646 = vmatprep.subr.mxu0 0.0
    %5647 = vmatpush1.msra.mxu0 %v4558
    %5648 = vmatprep.subr.mxu0 0.0
    %5649 = vmatpush1.msra.mxu0 %v4563
    %5650 = vmatprep.subr.mxu0 0.0
    %5651 = vmatpush1.msra.mxu0 %v4568
    %5652 = vmatprep.subr.mxu0 0.0
    %5653 = vmatpush1.msra.mxu0 %v4573
    %5654 = vmatprep.subr.mxu0 0.0
    %5655 = vmatpush1.msra.mxu0 0.0
    %5656 = vmatprep.subr.mxu0 0.0
    %5657 = vmatpush1.msra.mxu0 0.0
    %5658 = vmatprep.subr.mxu0 0.0
    %5659 = vmatpush1.msra.mxu0 0.0
    %5660 = vmatprep.subr.mxu0 0.0
    %5661 = vmatpush1.msra.mxu0 0.0
    %5662 = vmatprep.subr.mxu0 0.0
    %5663 = vmatpush1.msra.mxu0 0.0
    %5664 = vmatprep.subr.mxu0 0.0
    %5665 = vmatpush1.msra.mxu0 0.0
    %5666 = vmatprep.subr.mxu0 0.0
    %5667 = vmatpush1.msra.mxu0 0.0
    %5668 = vmatprep.subr.mxu0 0.0
    %5669 = vmatpush1.msra.mxu0 0.0
    %5670 = vmatprep.subr.mxu0 0.0
    %5671 = vmatpush1.msra.mxu0 0.0
    %5672 = vmatprep.subr.mxu0 0.0
    %5673 = vmatpush1.msra.mxu0 0.0
    %5674 = vmatprep.subr.mxu0 0.0
    %5675 = vmatpush1.msra.mxu0 0.0
    %5676 = vmatprep.subr.mxu0 0.0
    %5677 = vmatpush1.msra.mxu0 0.0
    %5678 = vmatprep.subr.mxu0 0.0
    %5679 = vmatpush1.msra.mxu0 0.0
    %5680 = vmatprep.subr.mxu0 0.0
    %5681 = vmatpush1.msra.mxu0 0.0
    %5682 = vmatprep.subr.mxu0 0.0
    %5683 = vmatpush1.msra.mxu0 0.0
    %5684 = vmatprep.subr.mxu0 0.0
    %5685 = vmatpush1.msra.mxu0 0.0
    %5686 = vmatprep.subr.mxu0 0.0
    %5687 = vmatpush1.msra.mxu0 0.0
    %5688 = vmatprep.subr.mxu0 0.0
    %5689 = vmatpush1.msra.mxu0 0.0
    %5690 = vmatprep.subr.mxu0 0.0
    %5691 = vmatpush1.msra.mxu0 0.0
    %5692 = vmatprep.subr.mxu0 0.0
    %5693 = vmatpush1.msra.mxu0 0.0
    %5694 = vmatprep.subr.mxu0 0.0
    %5695 = vmatpush1.msra.mxu0 0.0
    %5696 = vmatprep.subr.mxu0 0.0
    %5697 = vmatpush1.msra.mxu0 0.0
    %5698 = vmatprep.subr.mxu0 0.0
    %5699 = vmatpush1.msra.mxu0 0.0
    %5700 = vmatprep.subr.mxu0 0.0
    %5701 = vmatpush1.msra.mxu0 0.0
    %5702 = vmatprep.subr.mxu0 0.0
    %5703 = vmatpush1.msra.mxu0 0.0
    %5704 = vmatprep.subr.mxu0 0.0
    %5705 = vmatpush1.msra.mxu0 0.0
    %5706 = vmatprep.subr.mxu0 0.0
    %5707 = vmatpush1.msra.mxu0 0.0
    %5708 = vmatprep.subr.mxu0 0.0
    %5709 = vmatpush1.msra.mxu0 0.0
    %5710 = vmatprep.mubr.f32.mxu0 0.0
    %5711 = vmatmul.mubr.f32.gmra.mrb[0].mxu0 %v5614
    %v5712 = vpop.f32.mrb[0].mxu0
    %v5713 = vadd.f32 0.0, %v5712
    %v5714 = vpop.f32.mrb[0].mxu0
    %5715 = vmatprep.mubr.f32.mxu0 0.0
    %5716 = vmatmul.mubr.f32.gmra.mrb[0].mxu0 %v5616
    %v5717 = vpop.f32.mrb[0].mxu0
    %v5718 = vadd.f32 0.0, %v5717
    %v5719 = vpop.f32.mrb[0].mxu0
    %5720 = vmatprep.mubr.f32.mxu0 0.0
    %5721 = vmatmul.mubr.f32.gmra.mrb[0].mxu0 %v5618
    %v5722 = vpop.f32.mrb[0].mxu0
    %v5723 = vadd.f32 0.0, %v5722
    %v5724 = vpop.f32.mrb[0].mxu0
    %5725 = vmatprep.mubr.f32.mxu0 0.0
    %5726 = vmatmul.mubr.f32.gmra.mrb[0].mxu0 %v5620
    %v5727 = vpop.f32.mrb[0].mxu0
    %v5728 = vadd.f32 0.0, %v5727
    %v5729 = vpop.f32.mrb[0].mxu0
    %5730 = vmatprep.mubr.f32.mxu0 0.0
    %5731 = vmatmul.mubr.f32.gmra.mrb[0].mxu0 %v5622
    %v5732 = vpop.f32.mrb[0].mxu0
    %v5733 = vadd.f32 0.0, %v5732
    %v5734 = vpop.f32.mrb[0].mxu0
    %5735 = vmatprep.mubr.f32.mxu0 0.0
    %5736 = vmatmul.mubr.f32.gmra.mrb[0].mxu0 %v5624
    %v5737 = vpop.f32.mrb[0].mxu0
    %v5738 = vadd.f32 0.0, %v5737
    %v5739 = vpop.f32.mrb[0].mxu0
    %5740 = vmatprep.mubr.f32.mxu0 0.0
    %5741 = vmatmul.mubr.f32.gmra.mrb[0].mxu0 %v5626
    %v5742 = vpop.f32.mrb[0].mxu0
    %v5743 = vadd.f32 0.0, %v5742
    %v5744 = vpop.f32.mrb[0].mxu0
    %5745 = vmatprep.mubr.f32.mxu0 0.0
    %5746 = vmatmul.mubr.f32.gmra.mrb[0].mxu0 %v5628
    %v5747 = vpop.f32.mrb[0].mxu0
    %v5748 = vadd.f32 0.0, %v5747
    %v5749 = vpop.f32.mrb[0].mxu0
    %5750 = vmatprep.mubr.f32.mxu0 0.0
    %5751 = vmatmul.mubr.f32.gmra.mrb[0].mxu0 %v5630
    %v5752 = vpop.f32.mrb[0].mxu0
    %v5753 = vadd.f32 0.0, %v5752
    %v5754 = vpop.f32.mrb[0].mxu0
    %5755 = vmatprep.mubr.f32.mxu0 0.0
    %5756 = vmatmul.mubr.f32.gmra.mrb[0].mxu0 %v5632
    %v5757 = vpop.f32.mrb[0].mxu0
    %v5758 = vadd.f32 0.0, %v5757
    %v5759 = vpop.f32.mrb[0].mxu0
    %5760 = vmatprep.mubr.f32.mxu0 0.0
    %5761 = vmatmul.mubr.f32.gmra.mrb[0].mxu0 %v5634
    %v5762 = vpop.f32.mrb[0].mxu0
    %v5763 = vadd.f32 0.0, %v5762
    %v5764 = vpop.f32.mrb[0].mxu0
    %5765 = vmatprep.mubr.f32.mxu0 0.0
    %5766 = vmatmul.mubr.f32.gmra.mrb[0].mxu0 %v5636
    %v5767 = vpop.f32.mrb[0].mxu0
    %v5768 = vadd.f32 0.0, %v5767
    %v5769 = vpop.f32.mrb[0].mxu0
    %5770 = vmatprep.mubr.f32.mxu0 0.0
    %5771 = vmatmul.mubr.f32.gmra.mrb[0].mxu0 %v5638
    %v5772 = vpop.f32.mrb[0].mxu0
    %v5773 = vadd.f32 0.0, %v5772
    %v5774 = vpop.f32.mrb[0].mxu0
    %5775 = vmatprep.mubr.f32.mxu0 0.0
    %5776 = vmatmul.mubr.f32.gmra.mrb[0].mxu0 %v5640
    %v5777 = vpop.f32.mrb[0].mxu0
    %v5778 = vadd.f32 0.0, %v5777
    %v5779 = vpop.f32.mrb[0].mxu0
    %5780 = vmatprep.mubr.f32.mxu0 0.0
    %5781 = vmatmul.mubr.f32.gmra.mrb[0].mxu0 %v5642
    %v5782 = vpop.f32.mrb[0].mxu0
    %v5783 = vadd.f32 0.0, %v5782
    %v5784 = vpop.f32.mrb[0].mxu0
    %5785 = vmatprep.mubr.f32.mxu0 0.0
    %5786 = vmatmul.mubr.f32.gmra.mrb[0].mxu0 %v5644
    %v5787 = vpop.f32.mrb[0].mxu0
    %v5788 = vadd.f32 0.0, %v5787
    %v5789 = vpop.f32.mrb[0].mxu0
    %5790 = vdwg.mxu0
    %v5791 = vmul.f32 %v5713, 0.17677669
    %v5792 = vmul.f32 %v5718, 0.17677669
    %v5793 = vmul.f32 %v5723, 0.17677669
    %v5794 = vmul.f32 %v5728, 0.17677669
    %v5795 = vmul.f32 %v5733, 0.17677669
    %v5796 = vmul.f32 %v5738, 0.17677669
    %v5797 = vmul.f32 %v5743, 0.17677669
    %v5798 = vmul.f32 %v5748, 0.17677669
    %v5799 = vmul.f32 %v5753, 0.17677669
    %v5800 = vmul.f32 %v5758, 0.17677669
    %v5801 = vmul.f32 %v5763, 0.17677669
    %v5802 = vmul.f32 %v5768, 0.17677669
    %v5803 = vmul.f32 %v5773, 0.17677669
    %v5804 = vmul.f32 %v5778, 0.17677669
    %v5805 = vmul.f32 %v5783, 0.17677669
    %v5806 = vmul.f32 %v5788, 0.17677669
    %v5807 = vmax.f32 %v5791, %v5795
    %v5808 = vmax.f32 %v5792, %v5796
    %v5809 = vmax.f32 %v5793, %v5797
    %v5810 = vmax.f32 %v5794, %v5798
    %v5811 = vmax.f32 %v5807, %v5799
    %v5812 = vmax.f32 %v5808, %v5800
    %v5813 = vmax.f32 %v5809, %v5801
    %v5814 = vmax.f32 %v5810, %v5802
    %v5815 = vmax.f32 %v5811, %v5803
    %v5816 = vmax.f32 %v5812, %v5804
    %v5817 = vmax.f32 %v5813, %v5805
    %v5818 = vmax.f32 %v5814, %v5806
    %v5819 = vmax.f32 %v5815, %v5816
    %v5820 = vmax.f32 %v5817, %v5818
    %v5821 = vmax.f32 %v5819, %v5820
    %v5822 = vrot.slane %v5821, 4
    %v5823 = vmax.f32 %v5821, %v5822
    %v5824 = vrot.slane %v5823, 2
    %v5825 = vmax.f32 %v5823, %v5824
    %v5826 = vrot.slane %v5825, 1
    %v5827 = vmax.f32 %v5825, %v5826
    %v5828 = vsub.f32 %v5791, %v5827
    %v5829 = vsub.f32 %v5792, %v5827
    %v5830 = vsub.f32 %v5793, %v5827
    %v5831 = vsub.f32 %v5794, %v5827
    %v5832 = vsub.f32 %v5795, %v5827
    %v5833 = vsub.f32 %v5796, %v5827
    %v5834 = vsub.f32 %v5797, %v5827
    %v5835 = vsub.f32 %v5798, %v5827
    %v5836 = vsub.f32 %v5799, %v5827
    %v5837 = vsub.f32 %v5800, %v5827
    %v5838 = vsub.f32 %v5801, %v5827
    %v5839 = vsub.f32 %v5802, %v5827
    %v5840 = vsub.f32 %v5803, %v5827
    %v5841 = vsub.f32 %v5804, %v5827
    %v5842 = vsub.f32 %v5805, %v5827
    %v5843 = vsub.f32 %v5806, %v5827
    %v5844 = vmul.f32 %v5828, 1.442695
    %v5845 = vpow.pop %v5844
    %v5846 = vmul.f32 %v5829, 1.442695
    %v5847 = vpow.pop %v5846
    %v5848 = vmul.f32 %v5830, 1.442695
    %v5849 = vpow.pop %v5848
    %v5850 = vmul.f32 %v5831, 1.442695
    %v5851 = vpow.pop %v5850
    %v5852 = vmul.f32 %v5832, 1.442695
    %v5853 = vpow.pop %v5852
    %v5854 = vmul.f32 %v5833, 1.442695
    %v5855 = vpow.pop %v5854
    %v5856 = vmul.f32 %v5834, 1.442695
    %v5857 = vpow.pop %v5856
    %v5858 = vmul.f32 %v5835, 1.442695
    %v5859 = vpow.pop %v5858
    %v5860 = vmul.f32 %v5836, 1.442695
    %v5861 = vpow.pop %v5860
    %v5862 = vmul.f32 %v5837, 1.442695
    %v5863 = vpow.pop %v5862
    %v5864 = vmul.f32 %v5838, 1.442695
    %v5865 = vpow.pop %v5864
    %v5866 = vmul.f32 %v5839, 1.442695
    %v5867 = vpow.pop %v5866
    %v5868 = vmul.f32 %v5840, 1.442695
    %v5869 = vpow.pop %v5868
    %v5870 = vmul.f32 %v5841, 1.442695
    %v5871 = vpow.pop %v5870
    %v5872 = vmul.f32 %v5842, 1.442695
    %v5873 = vpow.pop %v5872
    %v5874 = vmul.f32 %v5843, 1.442695
    %v5875 = vpow.pop %v5874
    %v5876 = vadd.f32 %v5845, %v5847
    %v5877 = vadd.f32 %v5876, %v5849
    %v5878 = vadd.f32 %v5877, %v5851
    %v5879 = vadd.f32 %v5878, %v5853
    %v5880 = vadd.f32 %v5879, %v5855
    %v5881 = vadd.f32 %v5880, %v5857
    %v5882 = vadd.f32 %v5881, %v5859
    %v5883 = vadd.f32 %v5882, %v5861
    %v5884 = vadd.f32 %v5883, %v5863
    %v5885 = vadd.f32 %v5884, %v5865
    %v5886 = vadd.f32 %v5885, %v5867
    %v5887 = vadd.f32 %v5886, %v5869
    %v5888 = vadd.f32 %v5887, %v5871
    %v5889 = vadd.f32 %v5888, %v5873
    %v5890 = vadd.f32 %v5889, %v5875
    %v5891 = vrot.slane %v5890, 4
    %v5892 = vadd.f32 %v5890, %v5891
    %v5893 = vrot.slane %v5892, 2
    %v5894 = vadd.f32 %v5892, %v5893
    %v5895 = vrot.slane %v5894, 1
    %v5896 = vadd.f32 %v5894, %v5895
    %5897 = vmatprep.subr.mxu0 0.0
    %5898 = vmatpush1.msra.mxu0 %v5845
    %5899 = vmatprep.subr.mxu0 0.0
    %5900 = vmatpush1.msra.mxu0 %v5847
    %5901 = vmatprep.subr.mxu0 0.0
    %5902 = vmatpush1.msra.mxu0 %v5849
    %5903 = vmatprep.subr.mxu0 0.0
    %5904 = vmatpush1.msra.mxu0 %v5851
    %5905 = vmatprep.subr.mxu0 0.0
    %5906 = vmatpush1.msra.mxu0 %v5853
    %5907 = vmatprep.subr.mxu0 0.0
    %5908 = vmatpush1.msra.mxu0 %v5855
    %5909 = vmatprep.subr.mxu0 0.0
    %5910 = vmatpush1.msra.mxu0 %v5857
    %5911 = vmatprep.subr.mxu0 0.0
    %5912 = vmatpush1.msra.mxu0 %v5859
    %5913 = vmatprep.subr.mxu0 0.0
    %5914 = vmatpush1.msra.mxu0 %v5861
    %5915 = vmatprep.subr.mxu0 0.0
    %5916 = vmatpush1.msra.mxu0 %v5863
    %5917 = vmatprep.subr.mxu0 0.0
    %5918 = vmatpush1.msra.mxu0 %v5865
    %5919 = vmatprep.subr.mxu0 0.0
    %5920 = vmatpush1.msra.mxu0 %v5867
    %5921 = vmatprep.subr.mxu0 0.0
    %5922 = vmatpush1.msra.mxu0 %v5869
    %5923 = vmatprep.subr.mxu0 0.0
    %5924 = vmatpush1.msra.mxu0 %v5871
    %5925 = vmatprep.subr.mxu0 0.0
    %5926 = vmatpush1.msra.mxu0 %v5873
    %5927 = vmatprep.subr.mxu0 0.0
    %5928 = vmatpush1.msra.mxu0 %v5875
    %5929 = vmatprep.subr.mxu0 0.0
    %5930 = vmatpush1.msra.mxu0 0.0
    %5931 = vmatprep.subr.mxu0 0.0
    %5932 = vmatpush1.msra.mxu0 0.0
    %5933 = vmatprep.subr.mxu0 0.0
    %5934 = vmatpush1.msra.mxu0 0.0
    %5935 = vmatprep.subr.mxu0 0.0
    %5936 = vmatpush1.msra.mxu0 0.0
    %5937 = vmatprep.subr.mxu0 0.0
    %5938 = vmatpush1.msra.mxu0 0.0
    %5939 = vmatprep.subr.mxu0 0.0
    %5940 = vmatpush1.msra.mxu0 0.0
    %5941 = vmatprep.subr.mxu0 0.0
    %5942 = vmatpush1.msra.mxu0 0.0
    %5943 = vmatprep.subr.mxu0 0.0
    %5944 = vmatpush1.msra.mxu0 0.0
    %5945 = vmatprep.subr.mxu0 0.0
    %5946 = vmatpush1.msra.mxu0 0.0
    %5947 = vmatprep.subr.mxu0 0.0
    %5948 = vmatpush1.msra.mxu0 0.0
    %5949 = vmatprep.subr.mxu0 0.0
    %5950 = vmatpush1.msra.mxu0 0.0
    %5951 = vmatprep.subr.mxu0 0.0
    %5952 = vmatpush1.msra.mxu0 0.0
    %5953 = vmatprep.subr.mxu0 0.0
    %5954 = vmatpush1.msra.mxu0 0.0
    %5955 = vmatprep.subr.mxu0 0.0
    %5956 = vmatpush1.msra.mxu0 0.0
    %5957 = vmatprep.subr.mxu0 0.0
    %5958 = vmatpush1.msra.mxu0 0.0
    %5959 = vmatprep.subr.mxu0 0.0
    %5960 = vmatpush1.msra.mxu0 0.0
    %5961 = vmatprep.mubr.f32.mxu0 0.0
    %5962 = vmatmul.mubr.f32.gmra.mrb[0].mxu0 %v4718
    %v5963 = vpop.f32.mrb[0].mxu0
    %v5964 = vadd.f32 0.0, %v5963
    %v5965 = vpop.f32.mrb[0].mxu0
    %5966 = vmatprep.mubr.f32.mxu0 0.0
    %5967 = vmatmul.mubr.f32.gmra.mrb[0].mxu0 %v4723
    %v5968 = vpop.f32.mrb[0].mxu0
    %v5969 = vadd.f32 0.0, %v5968
    %v5970 = vpop.f32.mrb[0].mxu0
    %5971 = vmatprep.mubr.f32.mxu0 0.0
    %5972 = vmatmul.mubr.f32.gmra.mrb[0].mxu0 %v4728
    %v5973 = vpop.f32.mrb[0].mxu0
    %v5974 = vadd.f32 0.0, %v5973
    %v5975 = vpop.f32.mrb[0].mxu0
    %5976 = vmatprep.mubr.f32.mxu0 0.0
    %5977 = vmatmul.mubr.f32.gmra.mrb[0].mxu0 %v4733
    %v5978 = vpop.f32.mrb[0].mxu0
    %v5979 = vadd.f32 0.0, %v5978
    %v5980 = vpop.f32.mrb[0].mxu0
    %5981 = vdwg.mxu0
    %v5982 = vrcp.pop %v5896
    %v5983 = vmul.f32 %v5964, %v5982
    %v5984 = vmul.f32 %v5969, %v5982
    %v5985 = vmul.f32 %v5974, %v5982
    %v5986 = vmul.f32 %v5979, %v5982
    %5987 = vrot.lane.b32.xlu0 %v4772, 32
    %v5988 = vpop.permute.xlu0 %5987
    %5989 = vrot.lane.b32.xlu0 %v4773, 32
    %v5990 = vpop.permute.xlu0 %5989
    %5991 = vrot.lane.b32.xlu0 %v4774, 32
    %v5992 = vpop.permute.xlu0 %5991
    %5993 = vrot.lane.b32.xlu0 %v4775, 32
    %v5994 = vpop.permute.xlu0 %5993
    %5995 = vrot.lane.b32.xlu0 %v4776, 32
    %v5996 = vpop.permute.xlu0 %5995
    %5997 = vrot.lane.b32.xlu0 %v4777, 32
    %v5998 = vpop.permute.xlu0 %5997
    %5999 = vrot.lane.b32.xlu0 %v4778, 32
    %v6000 = vpop.permute.xlu0 %5999
    %6001 = vrot.lane.b32.xlu0 %v4779, 32
    %v6002 = vpop.permute.xlu0 %6001
    %6003 = vrot.lane.b32.xlu0 %v4780, 32
    %v6004 = vpop.permute.xlu0 %6003
    %6005 = vrot.lane.b32.xlu0 %v4781, 32
    %v6006 = vpop.permute.xlu0 %6005
    %6007 = vrot.lane.b32.xlu0 %v4782, 32
    %v6008 = vpop.permute.xlu0 %6007
    %6009 = vrot.lane.b32.xlu0 %v4783, 32
    %v6010 = vpop.permute.xlu0 %6009
    %6011 = vrot.lane.b32.xlu0 %v4784, 32
    %v6012 = vpop.permute.xlu0 %6011
    %6013 = vrot.lane.b32.xlu0 %v4785, 32
    %v6014 = vpop.permute.xlu0 %6013
    %6015 = vrot.lane.b32.xlu0 %v4786, 32
    %v6016 = vpop.permute.xlu0 %6015
    %6017 = vrot.lane.b32.xlu0 %v4787, 32
    %v6018 = vpop.permute.xlu0 %6017
    %v6019 = vsel %vm1417, %v5988, 0
    %v6021 = vsel %vm1417, %v5990, 0
    %v6023 = vsel %vm1417, %v5992, 0
    %v6025 = vsel %vm1417, %v5994, 0
    %v6027 = vsel %vm1417, %v5996, 0
    %v6029 = vsel %vm1417, %v5998, 0
    %v6031 = vsel %vm1417, %v6000, 0
    %v6033 = vsel %vm1417, %v6002, 0
    %v6035 = vsel %vm1417, %v6004, 0
    %v6037 = vsel %vm1417, %v6006, 0
    %v6039 = vsel %vm1417, %v6008, 0
    %v6041 = vsel %vm1417, %v6010, 0
    %v6043 = vsel %vm1417, %v6012, 0
    %v6045 = vsel %vm1417, %v6014, 0
    %v6047 = vsel %vm1417, %v6016, 0
    %v6049 = vsel %vm1417, %v6018, 0
    %6051 = vmatprep.subr.mxu0 0.0
    %6052 = vmatpush1.msra.mxu0 %v4578
    %6053 = vmatprep.subr.mxu0 0.0
    %6054 = vmatpush1.msra.mxu0 %v4583
    %6055 = vmatprep.subr.mxu0 0.0
    %6056 = vmatpush1.msra.mxu0 %v4588
    %6057 = vmatprep.subr.mxu0 0.0
    %6058 = vmatpush1.msra.mxu0 %v4593
    %6059 = vmatprep.subr.mxu0 0.0
    %6060 = vmatpush1.msra.mxu0 0.0
    %6061 = vmatprep.subr.mxu0 0.0
    %6062 = vmatpush1.msra.mxu0 0.0
    %6063 = vmatprep.subr.mxu0 0.0
    %6064 = vmatpush1.msra.mxu0 0.0
    %6065 = vmatprep.subr.mxu0 0.0
    %6066 = vmatpush1.msra.mxu0 0.0
    %6067 = vmatprep.subr.mxu0 0.0
    %6068 = vmatpush1.msra.mxu0 0.0
    %6069 = vmatprep.subr.mxu0 0.0
    %6070 = vmatpush1.msra.mxu0 0.0
    %6071 = vmatprep.subr.mxu0 0.0
    %6072 = vmatpush1.msra.mxu0 0.0
    %6073 = vmatprep.subr.mxu0 0.0
    %6074 = vmatpush1.msra.mxu0 0.0
    %6075 = vmatprep.subr.mxu0 0.0
    %6076 = vmatpush1.msra.mxu0 0.0
    %6077 = vmatprep.subr.mxu0 0.0
    %6078 = vmatpush1.msra.mxu0 0.0
    %6079 = vmatprep.subr.mxu0 0.0
    %6080 = vmatpush1.msra.mxu0 0.0
    %6081 = vmatprep.subr.mxu0 0.0
    %6082 = vmatpush1.msra.mxu0 0.0
    %6083 = vmatprep.subr.mxu0 0.0
    %6084 = vmatpush1.msra.mxu0 0.0
    %6085 = vmatprep.subr.mxu0 0.0
    %6086 = vmatpush1.msra.mxu0 0.0
    %6087 = vmatprep.subr.mxu0 0.0
    %6088 = vmatpush1.msra.mxu0 0.0
    %6089 = vmatprep.subr.mxu0 0.0
    %6090 = vmatpush1.msra.mxu0 0.0
    %6091 = vmatprep.subr.mxu0 0.0
    %6092 = vmatpush1.msra.mxu0 0.0
    %6093 = vmatprep.subr.mxu0 0.0
    %6094 = vmatpush1.msra.mxu0 0.0
    %6095 = vmatprep.subr.mxu0 0.0
    %6096 = vmatpush1.msra.mxu0 0.0
    %6097 = vmatprep.subr.mxu0 0.0
    %6098 = vmatpush1.msra.mxu0 0.0
    %6099 = vmatprep.subr.mxu0 0.0
    %6100 = vmatpush1.msra.mxu0 0.0
    %6101 = vmatprep.subr.mxu0 0.0
    %6102 = vmatpush1.msra.mxu0 0.0
    %6103 = vmatprep.subr.mxu0 0.0
    %6104 = vmatpush1.msra.mxu0 0.0
    %6105 = vmatprep.subr.mxu0 0.0
    %6106 = vmatpush1.msra.mxu0 0.0
    %6107 = vmatprep.subr.mxu0 0.0
    %6108 = vmatpush1.msra.mxu0 0.0
    %6109 = vmatprep.subr.mxu0 0.0
    %6110 = vmatpush1.msra.mxu0 0.0
    %6111 = vmatprep.subr.mxu0 0.0
    %6112 = vmatpush1.msra.mxu0 0.0
    %6113 = vmatprep.subr.mxu0 0.0
    %6114 = vmatpush1.msra.mxu0 0.0
    %6115 = vmatprep.mubr.f32.mxu0 0.0
    %6116 = vmatmul.mubr.f32.gmra.mrb[0].mxu0 %v6019
    %v6117 = vpop.f32.mrb[0].mxu0
    %v6118 = vadd.f32 0.0, %v6117
    %v6119 = vpop.f32.mrb[0].mxu0
    %6120 = vmatprep.mubr.f32.mxu0 0.0
    %6121 = vmatmul.mubr.f32.gmra.mrb[0].mxu0 %v6021
    %v6122 = vpop.f32.mrb[0].mxu0
    %v6123 = vadd.f32 0.0, %v6122
    %v6124 = vpop.f32.mrb[0].mxu0
    %6125 = vmatprep.mubr.f32.mxu0 0.0
    %6126 = vmatmul.mubr.f32.gmra.mrb[0].mxu0 %v6023
    %v6127 = vpop.f32.mrb[0].mxu0
    %v6128 = vadd.f32 0.0, %v6127
    %v6129 = vpop.f32.mrb[0].mxu0
    %6130 = vmatprep.mubr.f32.mxu0 0.0
    %6131 = vmatmul.mubr.f32.gmra.mrb[0].mxu0 %v6025
    %v6132 = vpop.f32.mrb[0].mxu0
    %v6133 = vadd.f32 0.0, %v6132
    %v6134 = vpop.f32.mrb[0].mxu0
    %6135 = vmatprep.mubr.f32.mxu0 0.0
    %6136 = vmatmul.mubr.f32.gmra.mrb[0].mxu0 %v6027
    %v6137 = vpop.f32.mrb[0].mxu0
    %v6138 = vadd.f32 0.0, %v6137
    %v6139 = vpop.f32.mrb[0].mxu0
    %6140 = vmatprep.mubr.f32.mxu0 0.0
    %6141 = vmatmul.mubr.f32.gmra.mrb[0].mxu0 %v6029
    %v6142 = vpop.f32.mrb[0].mxu0
    %v6143 = vadd.f32 0.0, %v6142
    %v6144 = vpop.f32.mrb[0].mxu0
    %6145 = vmatprep.mubr.f32.mxu0 0.0
    %6146 = vmatmul.mubr.f32.gmra.mrb[0].mxu0 %v6031
    %v6147 = vpop.f32.mrb[0].mxu0
    %v6148 = vadd.f32 0.0, %v6147
    %v6149 = vpop.f32.mrb[0].mxu0
    %6150 = vmatprep.mubr.f32.mxu0 0.0
    %6151 = vmatmul.mubr.f32.gmra.mrb[0].mxu0 %v6033
    %v6152 = vpop.f32.mrb[0].mxu0
    %v6153 = vadd.f32 0.0, %v6152
    %v6154 = vpop.f32.mrb[0].mxu0
    %6155 = vmatprep.mubr.f32.mxu0 0.0
    %6156 = vmatmul.mubr.f32.gmra.mrb[0].mxu0 %v6035
    %v6157 = vpop.f32.mrb[0].mxu0
    %v6158 = vadd.f32 0.0, %v6157
    %v6159 = vpop.f32.mrb[0].mxu0
    %6160 = vmatprep.mubr.f32.mxu0 0.0
    %6161 = vmatmul.mubr.f32.gmra.mrb[0].mxu0 %v6037
    %v6162 = vpop.f32.mrb[0].mxu0
    %v6163 = vadd.f32 0.0, %v6162
    %v6164 = vpop.f32.mrb[0].mxu0
    %6165 = vmatprep.mubr.f32.mxu0 0.0
    %6166 = vmatmul.mubr.f32.gmra.mrb[0].mxu0 %v6039
    %v6167 = vpop.f32.mrb[0].mxu0
    %v6168 = vadd.f32 0.0, %v6167
    %v6169 = vpop.f32.mrb[0].mxu0
    %6170 = vmatprep.mubr.f32.mxu0 0.0
    %6171 = vmatmul.mubr.f32.gmra.mrb[0].mxu0 %v6041
    %v6172 = vpop.f32.mrb[0].mxu0
    %v6173 = vadd.f32 0.0, %v6172
    %v6174 = vpop.f32.mrb[0].mxu0
    %6175 = vmatprep.mubr.f32.mxu0 0.0
    %6176 = vmatmul.mubr.f32.gmra.mrb[0].mxu0 %v6043
    %v6177 = vpop.f32.mrb[0].mxu0
    %v6178 = vadd.f32 0.0, %v6177
    %v6179 = vpop.f32.mrb[0].mxu0
    %6180 = vmatprep.mubr.f32.mxu0 0.0
    %6181 = vmatmul.mubr.f32.gmra.mrb[0].mxu0 %v6045
    %v6182 = vpop.f32.mrb[0].mxu0
    %v6183 = vadd.f32 0.0, %v6182
    %v6184 = vpop.f32.mrb[0].mxu0
    %6185 = vmatprep.mubr.f32.mxu0 0.0
    %6186 = vmatmul.mubr.f32.gmra.mrb[0].mxu0 %v6047
    %v6187 = vpop.f32.mrb[0].mxu0
    %v6188 = vadd.f32 0.0, %v6187
    %v6189 = vpop.f32.mrb[0].mxu0
    %6190 = vmatprep.mubr.f32.mxu0 0.0
    %6191 = vmatmul.mubr.f32.gmra.mrb[0].mxu0 %v6049
    %v6192 = vpop.f32.mrb[0].mxu0
    %v6193 = vadd.f32 0.0, %v6192
    %v6194 = vpop.f32.mrb[0].mxu0
    %6195 = vdwg.mxu0
    %v6196 = vmul.f32 %v6118, 0.17677669
    %v6197 = vmul.f32 %v6123, 0.17677669
    %v6198 = vmul.f32 %v6128, 0.17677669
    %v6199 = vmul.f32 %v6133, 0.17677669
    %v6200 = vmul.f32 %v6138, 0.17677669
    %v6201 = vmul.f32 %v6143, 0.17677669
    %v6202 = vmul.f32 %v6148, 0.17677669
    %v6203 = vmul.f32 %v6153, 0.17677669
    %v6204 = vmul.f32 %v6158, 0.17677669
    %v6205 = vmul.f32 %v6163, 0.17677669
    %v6206 = vmul.f32 %v6168, 0.17677669
    %v6207 = vmul.f32 %v6173, 0.17677669
    %v6208 = vmul.f32 %v6178, 0.17677669
    %v6209 = vmul.f32 %v6183, 0.17677669
    %v6210 = vmul.f32 %v6188, 0.17677669
    %v6211 = vmul.f32 %v6193, 0.17677669
    %v6212 = vmax.f32 %v6196, %v6200
    %v6213 = vmax.f32 %v6197, %v6201
    %v6214 = vmax.f32 %v6198, %v6202
    %v6215 = vmax.f32 %v6199, %v6203
    %v6216 = vmax.f32 %v6212, %v6204
    %v6217 = vmax.f32 %v6213, %v6205
    %v6218 = vmax.f32 %v6214, %v6206
    %v6219 = vmax.f32 %v6215, %v6207
    %v6220 = vmax.f32 %v6216, %v6208
    %v6221 = vmax.f32 %v6217, %v6209
    %v6222 = vmax.f32 %v6218, %v6210
    %v6223 = vmax.f32 %v6219, %v6211
    %v6224 = vmax.f32 %v6220, %v6221
    %v6225 = vmax.f32 %v6222, %v6223
    %v6226 = vmax.f32 %v6224, %v6225
    %v6227 = vrot.slane %v6226, 4
    %v6228 = vmax.f32 %v6226, %v6227
    %v6229 = vrot.slane %v6228, 2
    %v6230 = vmax.f32 %v6228, %v6229
    %v6231 = vrot.slane %v6230, 1
    %v6232 = vmax.f32 %v6230, %v6231
    %v6233 = vsub.f32 %v6196, %v6232
    %v6234 = vsub.f32 %v6197, %v6232
    %v6235 = vsub.f32 %v6198, %v6232
    %v6236 = vsub.f32 %v6199, %v6232
    %v6237 = vsub.f32 %v6200, %v6232
    %v6238 = vsub.f32 %v6201, %v6232
    %v6239 = vsub.f32 %v6202, %v6232
    %v6240 = vsub.f32 %v6203, %v6232
    %v6241 = vsub.f32 %v6204, %v6232
    %v6242 = vsub.f32 %v6205, %v6232
    %v6243 = vsub.f32 %v6206, %v6232
    %v6244 = vsub.f32 %v6207, %v6232
    %v6245 = vsub.f32 %v6208, %v6232
    %v6246 = vsub.f32 %v6209, %v6232
    %v6247 = vsub.f32 %v6210, %v6232
    %v6248 = vsub.f32 %v6211, %v6232
    %v6249 = vmul.f32 %v6233, 1.442695
    %v6250 = vpow.pop %v6249
    %v6251 = vmul.f32 %v6234, 1.442695
    %v6252 = vpow.pop %v6251
    %v6253 = vmul.f32 %v6235, 1.442695
    %v6254 = vpow.pop %v6253
    %v6255 = vmul.f32 %v6236, 1.442695
    %v6256 = vpow.pop %v6255
    %v6257 = vmul.f32 %v6237, 1.442695
    %v6258 = vpow.pop %v6257
    %v6259 = vmul.f32 %v6238, 1.442695
    %v6260 = vpow.pop %v6259
    %v6261 = vmul.f32 %v6239, 1.442695
    %v6262 = vpow.pop %v6261
    %v6263 = vmul.f32 %v6240, 1.442695
    %v6264 = vpow.pop %v6263
    %v6265 = vmul.f32 %v6241, 1.442695
    %v6266 = vpow.pop %v6265
    %v6267 = vmul.f32 %v6242, 1.442695
    %v6268 = vpow.pop %v6267
    %v6269 = vmul.f32 %v6243, 1.442695
    %v6270 = vpow.pop %v6269
    %v6271 = vmul.f32 %v6244, 1.442695
    %v6272 = vpow.pop %v6271
    %v6273 = vmul.f32 %v6245, 1.442695
    %v6274 = vpow.pop %v6273
    %v6275 = vmul.f32 %v6246, 1.442695
    %v6276 = vpow.pop %v6275
    %v6277 = vmul.f32 %v6247, 1.442695
    %v6278 = vpow.pop %v6277
    %v6279 = vmul.f32 %v6248, 1.442695
    %v6280 = vpow.pop %v6279
    %v6281 = vadd.f32 %v6250, %v6252
    %v6282 = vadd.f32 %v6281, %v6254
    %v6283 = vadd.f32 %v6282, %v6256
    %v6284 = vadd.f32 %v6283, %v6258
    %v6285 = vadd.f32 %v6284, %v6260
    %v6286 = vadd.f32 %v6285, %v6262
    %v6287 = vadd.f32 %v6286, %v6264
    %v6288 = vadd.f32 %v6287, %v6266
    %v6289 = vadd.f32 %v6288, %v6268
    %v6290 = vadd.f32 %v6289, %v6270
    %v6291 = vadd.f32 %v6290, %v6272
    %v6292 = vadd.f32 %v6291, %v6274
    %v6293 = vadd.f32 %v6292, %v6276
    %v6294 = vadd.f32 %v6293, %v6278
    %v6295 = vadd.f32 %v6294, %v6280
    %v6296 = vrot.slane %v6295, 4
    %v6297 = vadd.f32 %v6295, %v6296
    %v6298 = vrot.slane %v6297, 2
    %v6299 = vadd.f32 %v6297, %v6298
    %v6300 = vrot.slane %v6299, 1
    %v6301 = vadd.f32 %v6299, %v6300
    %6302 = vmatprep.subr.mxu0 0.0
    %6303 = vmatpush1.msra.mxu0 %v6250
    %6304 = vmatprep.subr.mxu0 0.0
    %6305 = vmatpush1.msra.mxu0 %v6252
    %6306 = vmatprep.subr.mxu0 0.0
    %6307 = vmatpush1.msra.mxu0 %v6254
    %6308 = vmatprep.subr.mxu0 0.0
    %6309 = vmatpush1.msra.mxu0 %v6256
    %6310 = vmatprep.subr.mxu0 0.0
    %6311 = vmatpush1.msra.mxu0 %v6258
    %6312 = vmatprep.subr.mxu0 0.0
    %6313 = vmatpush1.msra.mxu0 %v6260
    %6314 = vmatprep.subr.mxu0 0.0
    %6315 = vmatpush1.msra.mxu0 %v6262
    %6316 = vmatprep.subr.mxu0 0.0
    %6317 = vmatpush1.msra.mxu0 %v6264
    %6318 = vmatprep.subr.mxu0 0.0
    %6319 = vmatpush1.msra.mxu0 %v6266
    %6320 = vmatprep.subr.mxu0 0.0
    %6321 = vmatpush1.msra.mxu0 %v6268
    %6322 = vmatprep.subr.mxu0 0.0
    %6323 = vmatpush1.msra.mxu0 %v6270
    %6324 = vmatprep.subr.mxu0 0.0
    %6325 = vmatpush1.msra.mxu0 %v6272
    %6326 = vmatprep.subr.mxu0 0.0
    %6327 = vmatpush1.msra.mxu0 %v6274
    %6328 = vmatprep.subr.mxu0 0.0
    %6329 = vmatpush1.msra.mxu0 %v6276
    %6330 = vmatprep.subr.mxu0 0.0
    %6331 = vmatpush1.msra.mxu0 %v6278
    %6332 = vmatprep.subr.mxu0 0.0
    %6333 = vmatpush1.msra.mxu0 %v6280
    %6334 = vmatprep.subr.mxu0 0.0
    %6335 = vmatpush1.msra.mxu0 0.0
    %6336 = vmatprep.subr.mxu0 0.0
    %6337 = vmatpush1.msra.mxu0 0.0
    %6338 = vmatprep.subr.mxu0 0.0
    %6339 = vmatpush1.msra.mxu0 0.0
    %6340 = vmatprep.subr.mxu0 0.0
    %6341 = vmatpush1.msra.mxu0 0.0
    %6342 = vmatprep.subr.mxu0 0.0
    %6343 = vmatpush1.msra.mxu0 0.0
    %6344 = vmatprep.subr.mxu0 0.0
    %6345 = vmatpush1.msra.mxu0 0.0
    %6346 = vmatprep.subr.mxu0 0.0
    %6347 = vmatpush1.msra.mxu0 0.0
    %6348 = vmatprep.subr.mxu0 0.0
    %6349 = vmatpush1.msra.mxu0 0.0
    %6350 = vmatprep.subr.mxu0 0.0
    %6351 = vmatpush1.msra.mxu0 0.0
    %6352 = vmatprep.subr.mxu0 0.0
    %6353 = vmatpush1.msra.mxu0 0.0
    %6354 = vmatprep.subr.mxu0 0.0
    %6355 = vmatpush1.msra.mxu0 0.0
    %6356 = vmatprep.subr.mxu0 0.0
    %6357 = vmatpush1.msra.mxu0 0.0
    %6358 = vmatprep.subr.mxu0 0.0
    %6359 = vmatpush1.msra.mxu0 0.0
    %6360 = vmatprep.subr.mxu0 0.0
    %6361 = vmatpush1.msra.mxu0 0.0
    %6362 = vmatprep.subr.mxu0 0.0
    %6363 = vmatpush1.msra.mxu0 0.0
    %6364 = vmatprep.subr.mxu0 0.0
    %6365 = vmatpush1.msra.mxu0 0.0
    %6366 = vmatprep.mubr.f32.mxu0 0.0
    %6367 = vmatmul.mubr.f32.gmra.mrb[0].mxu0 %v4738
    %v6368 = vpop.f32.mrb[0].mxu0
    %v6369 = vadd.f32 0.0, %v6368
    %v6370 = vpop.f32.mrb[0].mxu0
    %6371 = vmatprep.mubr.f32.mxu0 0.0
    %6372 = vmatmul.mubr.f32.gmra.mrb[0].mxu0 %v4743
    %v6373 = vpop.f32.mrb[0].mxu0
    %v6374 = vadd.f32 0.0, %v6373
    %v6375 = vpop.f32.mrb[0].mxu0
    %6376 = vmatprep.mubr.f32.mxu0 0.0
    %6377 = vmatmul.mubr.f32.gmra.mrb[0].mxu0 %v4748
    %v6378 = vpop.f32.mrb[0].mxu0
    %v6379 = vadd.f32 0.0, %v6378
    %v6380 = vpop.f32.mrb[0].mxu0
    %6381 = vmatprep.mubr.f32.mxu0 0.0
    %6382 = vmatmul.mubr.f32.gmra.mrb[0].mxu0 %v4753
    %v6383 = vpop.f32.mrb[0].mxu0
    %v6384 = vadd.f32 0.0, %v6383
    %v6385 = vpop.f32.mrb[0].mxu0
    %6386 = vdwg.mxu0
    %v6387 = vrcp.pop %v6301
    %v6388 = vmul.f32 %v6369, %v6387
    %v6389 = vmul.f32 %v6374, %v6387
    %v6390 = vmul.f32 %v6379, %v6387
    %v6391 = vmul.f32 %v6384, %v6387
    %6392 = vmatprep.subr.mxu0 0.0
    %6393 = vmatpush1.msra.mxu0 %v5173
    %6394 = vmatprep.subr.mxu0 0.0
    %6395 = vmatpush1.msra.mxu0 %v5174
    %6396 = vmatprep.subr.mxu0 0.0
    %6397 = vmatpush1.msra.mxu0 %v5175
    %6398 = vmatprep.subr.mxu0 0.0
    %6399 = vmatpush1.msra.mxu0 %v5176
    %6400 = vmatprep.subr.mxu0 0.0
    %6401 = vmatpush1.msra.mxu0 %v5578
    %6402 = vmatprep.subr.mxu0 0.0
    %6403 = vmatpush1.msra.mxu0 %v5579
    %6404 = vmatprep.subr.mxu0 0.0
    %6405 = vmatpush1.msra.mxu0 %v5580
    %6406 = vmatprep.subr.mxu0 0.0
    %6407 = vmatpush1.msra.mxu0 %v5581
    %6408 = vmatprep.subr.mxu0 0.0
    %6409 = vmatpush1.msra.mxu0 %v5983
    %6410 = vmatprep.subr.mxu0 0.0
    %6411 = vmatpush1.msra.mxu0 %v5984
    %6412 = vmatprep.subr.mxu0 0.0
    %6413 = vmatpush1.msra.mxu0 %v5985
    %6414 = vmatprep.subr.mxu0 0.0
    %6415 = vmatpush1.msra.mxu0 %v5986
    %6416 = vmatprep.subr.mxu0 0.0
    %6417 = vmatpush1.msra.mxu0 %v6388
    %6418 = vmatprep.subr.mxu0 0.0
    %6419 = vmatpush1.msra.mxu0 %v6389
    %6420 = vmatprep.subr.mxu0 0.0
    %6421 = vmatpush1.msra.mxu0 %v6390
    %6422 = vmatprep.subr.mxu0 0.0
    %6423 = vmatpush1.msra.mxu0 %v6391
    %6424 = vmatprep.subr.mxu0 0.0
    %6425 = vmatpush1.msra.mxu0 0.0
    %6426 = vmatprep.subr.mxu0 0.0
    %6427 = vmatpush1.msra.mxu0 0.0
    %6428 = vmatprep.subr.mxu0 0.0
    %6429 = vmatpush1.msra.mxu0 0.0
    %6430 = vmatprep.subr.mxu0 0.0
    %6431 = vmatpush1.msra.mxu0 0.0
    %6432 = vmatprep.subr.mxu0 0.0
    %6433 = vmatpush1.msra.mxu0 0.0
    %6434 = vmatprep.subr.mxu0 0.0
    %6435 = vmatpush1.msra.mxu0 0.0
    %6436 = vmatprep.subr.mxu0 0.0
    %6437 = vmatpush1.msra.mxu0 0.0
    %6438 = vmatprep.subr.mxu0 0.0
    %6439 = vmatpush1.msra.mxu0 0.0
    %6440 = vmatprep.subr.mxu0 0.0
    %6441 = vmatpush1.msra.mxu0 0.0
    %6442 = vmatprep.subr.mxu0 0.0
    %6443 = vmatpush1.msra.mxu0 0.0
    %6444 = vmatprep.subr.mxu0 0.0
    %6445 = vmatpush1.msra.mxu0 0.0
    %6446 = vmatprep.subr.mxu0 0.0
    %6447 = vmatpush1.msra.mxu0 0.0
    %6448 = vmatprep.subr.mxu0 0.0
    %6449 = vmatpush1.msra.mxu0 0.0
    %6450 = vmatprep.subr.mxu0 0.0
    %6451 = vmatpush1.msra.mxu0 0.0
    %6452 = vmatprep.subr.mxu0 0.0
    %6453 = vmatpush1.msra.mxu0 0.0
    %6454 = vmatprep.subr.mxu0 0.0
    %6455 = vmatpush1.msra.mxu0 0.0
    %6456 = vmatprep.mubr.f32.mxu0 0.0
    %6457 = vmatmul.mubr.f32.gmra.mrb[0].mxu0 %v116
    %v6458 = vpop.f32.mrb[0].mxu0
    %v6459 = vadd.f32 %v3025, %v6458
    %v6460 = vpop.f32.mrb[0].mxu0
    %6461 = vmatprep.mubr.f32.mxu0 0.0
    %6462 = vmatmul.mubr.f32.gmra.mrb[0].mxu0 %v117
    %v6463 = vpop.f32.mrb[0].mxu0
    %v6464 = vadd.f32 %v3030, %v6463
    %v6465 = vpop.f32.mrb[0].mxu0
    %6466 = vmatprep.mubr.f32.mxu0 0.0
    %6467 = vmatmul.mubr.f32.gmra.mrb[0].mxu0 %v118
    %v6468 = vpop.f32.mrb[0].mxu0
    %v6469 = vadd.f32 %v3035, %v6468
    %v6470 = vpop.f32.mrb[0].mxu0
    %6471 = vmatprep.mubr.f32.mxu0 0.0
    %6472 = vmatmul.mubr.f32.gmra.mrb[0].mxu0 %v119
    %v6473 = vpop.f32.mrb[0].mxu0
    %v6474 = vadd.f32 %v3040, %v6473
    %v6475 = vpop.f32.mrb[0].mxu0
    %6476 = vmatprep.mubr.f32.mxu0 0.0
    %6477 = vmatmul.mubr.f32.gmra.mrb[0].mxu0 %v120
    %v6478 = vpop.f32.mrb[0].mxu0
    %v6479 = vadd.f32 %v3045, %v6478
    %v6480 = vpop.f32.mrb[0].mxu0
    %6481 = vmatprep.mubr.f32.mxu0 0.0
    %6482 = vmatmul.mubr.f32.gmra.mrb[0].mxu0 %v121
    %v6483 = vpop.f32.mrb[0].mxu0
    %v6484 = vadd.f32 %v3050, %v6483
    %v6485 = vpop.f32.mrb[0].mxu0
    %6486 = vmatprep.mubr.f32.mxu0 0.0
    %6487 = vmatmul.mubr.f32.gmra.mrb[0].mxu0 %v122
    %v6488 = vpop.f32.mrb[0].mxu0
    %v6489 = vadd.f32 %v3055, %v6488
    %v6490 = vpop.f32.mrb[0].mxu0
    %6491 = vmatprep.mubr.f32.mxu0 0.0
    %6492 = vmatmul.mubr.f32.gmra.mrb[0].mxu0 %v123
    %v6493 = vpop.f32.mrb[0].mxu0
    %v6494 = vadd.f32 %v3060, %v6493
    %v6495 = vpop.f32.mrb[0].mxu0
    %6496 = vdwg.mxu0
    %v6497 = vadd.f32 %v6459, %v4443
    %v6498 = vadd.f32 %v6464, %v4444
    %v6499 = vadd.f32 %v6469, %v4445
    %v6500 = vadd.f32 %v6474, %v4446
    %v6501 = vadd.f32 %v6479, %v4447
    %v6502 = vadd.f32 %v6484, %v4448
    %v6503 = vadd.f32 %v6489, %v4449
    %v6504 = vadd.f32 %v6494, %v4450
    %v6505 = vmul.f32 %v6497, 0.5
    %v6506 = vmul.f32 %v6498, 0.5
    %v6507 = vmul.f32 %v6499, 0.5
    %v6508 = vmul.f32 %v6500, 0.5
    %v6509 = vmul.f32 %v6501, 0.5
    %v6510 = vmul.f32 %v6502, 0.5
    %v6511 = vmul.f32 %v6503, 0.5
    %v6512 = vmul.f32 %v6504, 0.5
    %v6513 = vmul.f32 %v6497, %v334
    %v6514 = vmul.f32 %v6498, %v334
    %v6515 = vmul.f32 %v6499, %v334
    %v6516 = vmul.f32 %v6500, %v334
    %v6517 = vmul.f32 %v6501, %v334
    %v6518 = vmul.f32 %v6502, %v334
    %v6519 = vmul.f32 %v6503, %v334
    %v6520 = vmul.f32 %v6504, %v334
    %vm6521 = vcmp.ge.f32.partialorder %v6513, 0.0
    %vm6522 = vcmp.ge.f32.partialorder %v6514, 0.0
    %vm6523 = vcmp.ge.f32.partialorder %v6515, 0.0
    %vm6524 = vcmp.ge.f32.partialorder %v6516, 0.0
    %vm6525 = vcmp.ge.f32.partialorder %v6517, 0.0
    %vm6526 = vcmp.ge.f32.partialorder %v6518, 0.0
    %vm6527 = vcmp.ge.f32.partialorder %v6519, 0.0
    %vm6528 = vcmp.ge.f32.partialorder %v6520, 0.0
    %v6529 = vsel %vm6521, 1.0, -1.0
    %v6530 = vsel %vm6522, 1.0, -1.0
    %v6531 = vsel %vm6523, 1.0, -1.0
    %v6532 = vsel %vm6524, 1.0, -1.0
    %v6533 = vsel %vm6525, 1.0, -1.0
    %v6534 = vsel %vm6526, 1.0, -1.0
    %v6535 = vsel %vm6527, 1.0, -1.0
    %v6536 = vsel %vm6528, 1.0, -1.0
    %v6537 = vand.u32 2147483647, %v6513
    %v6538 = vand.u32 2147483647, %v6514
    %v6539 = vand.u32 2147483647, %v6515
    %v6540 = vand.u32 2147483647, %v6516
    %v6541 = vand.u32 2147483647, %v6517
    %v6542 = vand.u32 2147483647, %v6518
    %v6543 = vand.u32 2147483647, %v6519
    %v6544 = vand.u32 2147483647, %v6520
    %v6545 = vmul.f32 %v6537, 0.3275911
    %v6546 = vmul.f32 %v6538, 0.3275911
    %v6547 = vmul.f32 %v6539, 0.3275911
    %v6548 = vmul.f32 %v6540, 0.3275911
    %v6549 = vmul.f32 %v6541, 0.3275911
    %v6550 = vmul.f32 %v6542, 0.3275911
    %v6551 = vmul.f32 %v6543, 0.3275911
    %v6552 = vmul.f32 %v6544, 0.3275911
    %v6553 = vadd.f32 %v6545, 1.0
    %v6554 = vadd.f32 %v6546, 1.0
    %v6555 = vadd.f32 %v6547, 1.0
    %v6556 = vadd.f32 %v6548, 1.0
    %v6557 = vadd.f32 %v6549, 1.0
    %v6558 = vadd.f32 %v6550, 1.0
    %v6559 = vadd.f32 %v6551, 1.0
    %v6560 = vadd.f32 %v6552, 1.0
    %v6561 = vrcp.pop %v6553
    %v6562 = vmul.f32 1.0, %v6561
    %v6563 = vrcp.pop %v6554
    %v6564 = vmul.f32 1.0, %v6563
    %v6565 = vrcp.pop %v6555
    %v6566 = vmul.f32 1.0, %v6565
    %v6567 = vrcp.pop %v6556
    %v6568 = vmul.f32 1.0, %v6567
    %v6569 = vrcp.pop %v6557
    %v6570 = vmul.f32 1.0, %v6569
    %v6571 = vrcp.pop %v6558
    %v6572 = vmul.f32 1.0, %v6571
    %v6573 = vrcp.pop %v6559
    %v6574 = vmul.f32 1.0, %v6573
    %v6575 = vrcp.pop %v6560
    %v6576 = vmul.f32 1.0, %v6575
    %v6577 = vmul.f32 %v6562, 1.0614054
    %v6578 = vmul.f32 %v6564, 1.0614054
    %v6579 = vmul.f32 %v6566, 1.0614054
    %v6580 = vmul.f32 %v6568, 1.0614054
    %v6581 = vmul.f32 %v6570, 1.0614054
    %v6582 = vmul.f32 %v6572, 1.0614054
    %v6583 = vmul.f32 %v6574, 1.0614054
    %v6584 = vmul.f32 %v6576, 1.0614054
    %v6585 = vadd.f32 %v6577, -1.4531521
    %v6586 = vadd.f32 %v6578, -1.4531521
    %v6587 = vadd.f32 %v6579, -1.4531521
    %v6588 = vadd.f32 %v6580, -1.4531521
    %v6589 = vadd.f32 %v6581, -1.4531521
    %v6590 = vadd.f32 %v6582, -1.4531521
    %v6591 = vadd.f32 %v6583, -1.4531521
    %v6592 = vadd.f32 %v6584, -1.4531521
    %v6593 = vmul.f32 %v6585, %v6562
    %v6594 = vmul.f32 %v6586, %v6564
    %v6595 = vmul.f32 %v6587, %v6566
    %v6596 = vmul.f32 %v6588, %v6568
    %v6597 = vmul.f32 %v6589, %v6570
    %v6598 = vmul.f32 %v6590, %v6572
    %v6599 = vmul.f32 %v6591, %v6574
    %v6600 = vmul.f32 %v6592, %v6576
    %v6601 = vadd.f32 %v6593, 1.4214138
    %v6602 = vadd.f32 %v6594, 1.4214138
    %v6603 = vadd.f32 %v6595, 1.4214138
    %v6604 = vadd.f32 %v6596, 1.4214138
    %v6605 = vadd.f32 %v6597, 1.4214138
    %v6606 = vadd.f32 %v6598, 1.4214138
    %v6607 = vadd.f32 %v6599, 1.4214138
    %v6608 = vadd.f32 %v6600, 1.4214138
    %v6609 = vmul.f32 %v6601, %v6562
    %v6610 = vmul.f32 %v6602, %v6564
    %v6611 = vmul.f32 %v6603, %v6566
    %v6612 = vmul.f32 %v6604, %v6568
    %v6613 = vmul.f32 %v6605, %v6570
    %v6614 = vmul.f32 %v6606, %v6572
    %v6615 = vmul.f32 %v6607, %v6574
    %v6616 = vmul.f32 %v6608, %v6576
    %v6617 = vadd.f32 %v6609, -0.28449672
    %v6618 = vadd.f32 %v6610, -0.28449672
    %v6619 = vadd.f32 %v6611, -0.28449672
    %v6620 = vadd.f32 %v6612, -0.28449672
    %v6621 = vadd.f32 %v6613, -0.28449672
    %v6622 = vadd.f32 %v6614, -0.28449672
    %v6623 = vadd.f32 %v6615, -0.28449672
    %v6624 = vadd.f32 %v6616, -0.28449672
    %v6625 = vmul.f32 %v6617, %v6562
    %v6626 = vmul.f32 %v6618, %v6564
    %v6627 = vmul.f32 %v6619, %v6566
    %v6628 = vmul.f32 %v6620, %v6568
    %v6629 = vmul.f32 %v6621, %v6570
    %v6630 = vmul.f32 %v6622, %v6572
    %v6631 = vmul.f32 %v6623, %v6574
    %v6632 = vmul.f32 %v6624, %v6576
    %v6633 = vadd.f32 %v6625, 0.2548296
    %v6634 = vadd.f32 %v6626, 0.2548296
    %v6635 = vadd.f32 %v6627, 0.2548296
    %v6636 = vadd.f32 %v6628, 0.2548296
    %v6637 = vadd.f32 %v6629, 0.2548296
    %v6638 = vadd.f32 %v6630, 0.2548296
    %v6639 = vadd.f32 %v6631, 0.2548296
    %v6640 = vadd.f32 %v6632, 0.2548296
    %v6641 = vmul.f32 %v6633, %v6562
    %v6642 = vmul.f32 %v6634, %v6564
    %v6643 = vmul.f32 %v6635, %v6566
    %v6644 = vmul.f32 %v6636, %v6568
    %v6645 = vmul.f32 %v6637, %v6570
    %v6646 = vmul.f32 %v6638, %v6572
    %v6647 = vmul.f32 %v6639, %v6574
    %v6648 = vmul.f32 %v6640, %v6576
    %v6649 = vsub.f32 0.0, %v6537
    %v6650 = vsub.f32 0.0, %v6538
    %v6651 = vsub.f32 0.0, %v6539
    %v6652 = vsub.f32 0.0, %v6540
    %v6653 = vsub.f32 0.0, %v6541
    %v6654 = vsub.f32 0.0, %v6542
    %v6655 = vsub.f32 0.0, %v6543
    %v6656 = vsub.f32 0.0, %v6544
    %v6657 = vmul.f32 %v6649, %v6537
    %v6658 = vmul.f32 %v6650, %v6538
    %v6659 = vmul.f32 %v6651, %v6539
    %v6660 = vmul.f32 %v6652, %v6540
    %v6661 = vmul.f32 %v6653, %v6541
    %v6662 = vmul.f32 %v6654, %v6542
    %v6663 = vmul.f32 %v6655, %v6543
    %v6664 = vmul.f32 %v6656, %v6544
    %v6665 = vmul.f32 %v6657, 1.442695
    %v6666 = vpow.pop %v6665
    %v6667 = vmul.f32 %v6658, 1.442695
    %v6668 = vpow.pop %v6667
    %v6669 = vmul.f32 %v6659, 1.442695
    %v6670 = vpow.pop %v6669
    %v6671 = vmul.f32 %v6660, 1.442695
    %v6672 = vpow.pop %v6671
    %v6673 = vmul.f32 %v6661, 1.442695
    %v6674 = vpow.pop %v6673
    %v6675 = vmul.f32 %v6662, 1.442695
    %v6676 = vpow.pop %v6675
    %v6677 = vmul.f32 %v6663, 1.442695
    %v6678 = vpow.pop %v6677
    %v6679 = vmul.f32 %v6664, 1.442695
    %v6680 = vpow.pop %v6679
    %v6681 = vmul.f32 %v6641, %v6666
    %v6682 = vmul.f32 %v6642, %v6668
    %v6683 = vmul.f32 %v6643, %v6670
    %v6684 = vmul.f32 %v6644, %v6672
    %v6685 = vmul.f32 %v6645, %v6674
    %v6686 = vmul.f32 %v6646, %v6676
    %v6687 = vmul.f32 %v6647, %v6678
    %v6688 = vmul.f32 %v6648, %v6680
    %v6689 = vsub.f32 1.0, %v6681
    %v6690 = vsub.f32 1.0, %v6682
    %v6691 = vsub.f32 1.0, %v6683
    %v6692 = vsub.f32 1.0, %v6684
    %v6693 = vsub.f32 1.0, %v6685
    %v6694 = vsub.f32 1.0, %v6686
    %v6695 = vsub.f32 1.0, %v6687
    %v6696 = vsub.f32 1.0, %v6688
    %v6697 = vmul.f32 %v6529, %v6689
    %v6698 = vmul.f32 %v6530, %v6690
    %v6699 = vmul.f32 %v6531, %v6691
    %v6700 = vmul.f32 %v6532, %v6692
    %v6701 = vmul.f32 %v6533, %v6693
    %v6702 = vmul.f32 %v6534, %v6694
    %v6703 = vmul.f32 %v6535, %v6695
    %v6704 = vmul.f32 %v6536, %v6696
    %v6705 = vadd.f32 %v6697, 1.0
    %v6706 = vadd.f32 %v6698, 1.0
    %v6707 = vadd.f32 %v6699, 1.0
    %v6708 = vadd.f32 %v6700, 1.0
    %v6709 = vadd.f32 %v6701, 1.0
    %v6710 = vadd.f32 %v6702, 1.0
    %v6711 = vadd.f32 %v6703, 1.0
    %v6712 = vadd.f32 %v6704, 1.0
    %v6713 = vmul.f32 %v6505, %v6705
    %v6714 = vmul.f32 %v6506, %v6706
    %v6715 = vmul.f32 %v6507, %v6707
    %v6716 = vmul.f32 %v6508, %v6708
    %v6717 = vmul.f32 %v6509, %v6709
    %v6718 = vmul.f32 %v6510, %v6710
    %v6719 = vmul.f32 %v6511, %v6711
    %v6720 = vmul.f32 %v6512, %v6712
    %6721 = vmatprep.subr.mxu0 0.0
    %6722 = vmatpush1.msra.mxu0 %v6713
    %6723 = vmatprep.subr.mxu0 0.0
    %6724 = vmatpush1.msra.mxu0 %v6714
    %6725 = vmatprep.subr.mxu0 0.0
    %6726 = vmatpush1.msra.mxu0 %v6715
    %6727 = vmatprep.subr.mxu0 0.0
    %6728 = vmatpush1.msra.mxu0 %v6716
    %6729 = vmatprep.subr.mxu0 0.0
    %6730 = vmatpush1.msra.mxu0 %v6717
    %6731 = vmatprep.subr.mxu0 0.0
    %6732 = vmatpush1.msra.mxu0 %v6718
    %6733 = vmatprep.subr.mxu0 0.0
    %6734 = vmatpush1.msra.mxu0 %v6719
    %6735 = vmatprep.subr.mxu0 0.0
    %6736 = vmatpush1.msra.mxu0 %v6720
    %6737 = vmatprep.subr.mxu0 0.0
    %6738 = vmatpush1.msra.mxu0 0.0
    %6739 = vmatprep.subr.mxu0 0.0
    %6740 = vmatpush1.msra.mxu0 0.0
    %6741 = vmatprep.subr.mxu0 0.0
    %6742 = vmatpush1.msra.mxu0 0.0
    %6743 = vmatprep.subr.mxu0 0.0
    %6744 = vmatpush1.msra.mxu0 0.0
    %6745 = vmatprep.subr.mxu0 0.0
    %6746 = vmatpush1.msra.mxu0 0.0
    %6747 = vmatprep.subr.mxu0 0.0
    %6748 = vmatpush1.msra.mxu0 0.0
    %6749 = vmatprep.subr.mxu0 0.0
    %6750 = vmatpush1.msra.mxu0 0.0
    %6751 = vmatprep.subr.mxu0 0.0
    %6752 = vmatpush1.msra.mxu0 0.0
    %6753 = vmatprep.subr.mxu0 0.0
    %6754 = vmatpush1.msra.mxu0 0.0
    %6755 = vmatprep.subr.mxu0 0.0
    %6756 = vmatpush1.msra.mxu0 0.0
    %6757 = vmatprep.subr.mxu0 0.0
    %6758 = vmatpush1.msra.mxu0 0.0
    %6759 = vmatprep.subr.mxu0 0.0
    %6760 = vmatpush1.msra.mxu0 0.0
    %6761 = vmatprep.subr.mxu0 0.0
    %6762 = vmatpush1.msra.mxu0 0.0
    %6763 = vmatprep.subr.mxu0 0.0
    %6764 = vmatpush1.msra.mxu0 0.0
    %6765 = vmatprep.subr.mxu0 0.0
    %6766 = vmatpush1.msra.mxu0 0.0
    %6767 = vmatprep.subr.mxu0 0.0
    %6768 = vmatpush1.msra.mxu0 0.0
    %6769 = vmatprep.subr.mxu0 0.0
    %6770 = vmatpush1.msra.mxu0 0.0
    %6771 = vmatprep.subr.mxu0 0.0
    %6772 = vmatpush1.msra.mxu0 0.0
    %6773 = vmatprep.subr.mxu0 0.0
    %6774 = vmatpush1.msra.mxu0 0.0
    %6775 = vmatprep.subr.mxu0 0.0
    %6776 = vmatpush1.msra.mxu0 0.0
    %6777 = vmatprep.subr.mxu0 0.0
    %6778 = vmatpush1.msra.mxu0 0.0
    %6779 = vmatprep.subr.mxu0 0.0
    %6780 = vmatpush1.msra.mxu0 0.0
    %6781 = vmatprep.subr.mxu0 0.0
    %6782 = vmatpush1.msra.mxu0 0.0
    %6783 = vmatprep.subr.mxu0 0.0
    %6784 = vmatpush1.msra.mxu0 0.0
    %6785 = vmatprep.mubr.f32.mxu0 0.0
    %6786 = vmatmul.mubr.f32.gmra.mrb[0].mxu0 %v3432
    %v6787 = vpop.f32.mrb[0].mxu0
    %v6788 = vadd.f32 %v3394, %v6787
    %v6789 = vpop.f32.mrb[0].mxu0
    %6790 = vmatprep.mubr.f32.mxu0 0.0
    %6791 = vmatmul.mubr.f32.gmra.mrb[0].mxu0 %v3435
    %v6792 = vpop.f32.mrb[0].mxu0
    %v6793 = vadd.f32 %v3399, %v6792
    %v6794 = vpop.f32.mrb[0].mxu0
    %6795 = vmatprep.mubr.f32.mxu0 0.0
    %6796 = vmatmul.mubr.f32.gmra.mrb[0].mxu0 %v3438
    %v6797 = vpop.f32.mrb[0].mxu0
    %v6798 = vadd.f32 %v3404, %v6797
    %v6799 = vpop.f32.mrb[0].mxu0
    %6800 = vmatprep.mubr.f32.mxu0 0.0
    %6801 = vmatmul.mubr.f32.gmra.mrb[0].mxu0 %v3441
    %v6802 = vpop.f32.mrb[0].mxu0
    %v6803 = vadd.f32 %v3409, %v6802
    %v6804 = vpop.f32.mrb[0].mxu0
    %6805 = vmatprep.mubr.f32.mxu0 0.0
    %6806 = vmatmul.mubr.f32.gmra.mrb[0].mxu0 %v3444
    %v6807 = vpop.f32.mrb[0].mxu0
    %v6808 = vadd.f32 %v3414, %v6807
    %v6809 = vpop.f32.mrb[0].mxu0
    %6810 = vmatprep.mubr.f32.mxu0 0.0
    %6811 = vmatmul.mubr.f32.gmra.mrb[0].mxu0 %v3447
    %v6812 = vpop.f32.mrb[0].mxu0
    %v6813 = vadd.f32 %v3419, %v6812
    %v6814 = vpop.f32.mrb[0].mxu0
    %6815 = vmatprep.mubr.f32.mxu0 0.0
    %6816 = vmatmul.mubr.f32.gmra.mrb[0].mxu0 %v3450
    %v6817 = vpop.f32.mrb[0].mxu0
    %v6818 = vadd.f32 %v3424, %v6817
    %v6819 = vpop.f32.mrb[0].mxu0
    %6820 = vmatprep.mubr.f32.mxu0 0.0
    %6821 = vmatmul.mubr.f32.gmra.mrb[0].mxu0 %v3453
    %v6822 = vpop.f32.mrb[0].mxu0
    %v6823 = vadd.f32 %v3429, %v6822
    %v6824 = vpop.f32.mrb[0].mxu0
    %6825 = vdwg.mxu0
    %v6826 = vadd.f32 %v6713, %v6788
    %v6827 = vadd.f32 %v6714, %v6793
    %v6828 = vadd.f32 %v6715, %v6798
    %v6829 = vadd.f32 %v6716, %v6803
    %v6830 = vadd.f32 %v6717, %v6808
    %v6831 = vadd.f32 %v6718, %v6813
    %v6832 = vadd.f32 %v6719, %v6818
    %v6833 = vadd.f32 %v6720, %v6823
    %v6834 = vmul.f32 %v6826, 0.5
    %v6835 = vmul.f32 %v6827, 0.5
    %v6836 = vmul.f32 %v6828, 0.5
    %v6837 = vmul.f32 %v6829, 0.5
    %v6838 = vmul.f32 %v6830, 0.5
    %v6839 = vmul.f32 %v6831, 0.5
    %v6840 = vmul.f32 %v6832, 0.5
    %v6841 = vmul.f32 %v6833, 0.5
    %v6842 = vmul.f32 %v6826, %v334
    %v6843 = vmul.f32 %v6827, %v334
    %v6844 = vmul.f32 %v6828, %v334
    %v6845 = vmul.f32 %v6829, %v334
    %v6846 = vmul.f32 %v6830, %v334
    %v6847 = vmul.f32 %v6831, %v334
    %v6848 = vmul.f32 %v6832, %v334
    %v6849 = vmul.f32 %v6833, %v334
    %vm6850 = vcmp.ge.f32.partialorder %v6842, 0.0
    %vm6851 = vcmp.ge.f32.partialorder %v6843, 0.0
    %vm6852 = vcmp.ge.f32.partialorder %v6844, 0.0
    %vm6853 = vcmp.ge.f32.partialorder %v6845, 0.0
    %vm6854 = vcmp.ge.f32.partialorder %v6846, 0.0
    %vm6855 = vcmp.ge.f32.partialorder %v6847, 0.0
    %vm6856 = vcmp.ge.f32.partialorder %v6848, 0.0
    %vm6857 = vcmp.ge.f32.partialorder %v6849, 0.0
    %v6858 = vsel %vm6850, 1.0, -1.0
    %v6859 = vsel %vm6851, 1.0, -1.0
    %v6860 = vsel %vm6852, 1.0, -1.0
    %v6861 = vsel %vm6853, 1.0, -1.0
    %v6862 = vsel %vm6854, 1.0, -1.0
    %v6863 = vsel %vm6855, 1.0, -1.0
    %v6864 = vsel %vm6856, 1.0, -1.0
    %v6865 = vsel %vm6857, 1.0, -1.0
    %v6866 = vand.u32 2147483647, %v6842
    %v6867 = vand.u32 2147483647, %v6843
    %v6868 = vand.u32 2147483647, %v6844
    %v6869 = vand.u32 2147483647, %v6845
    %v6870 = vand.u32 2147483647, %v6846
    %v6871 = vand.u32 2147483647, %v6847
    %v6872 = vand.u32 2147483647, %v6848
    %v6873 = vand.u32 2147483647, %v6849
    %v6874 = vmul.f32 %v6866, 0.3275911
    %v6875 = vmul.f32 %v6867, 0.3275911
    %v6876 = vmul.f32 %v6868, 0.3275911
    %v6877 = vmul.f32 %v6869, 0.3275911
    %v6878 = vmul.f32 %v6870, 0.3275911
    %v6879 = vmul.f32 %v6871, 0.3275911
    %v6880 = vmul.f32 %v6872, 0.3275911
    %v6881 = vmul.f32 %v6873, 0.3275911
    %v6882 = vadd.f32 %v6874, 1.0
    %v6883 = vadd.f32 %v6875, 1.0
    %v6884 = vadd.f32 %v6876, 1.0
    %v6885 = vadd.f32 %v6877, 1.0
    %v6886 = vadd.f32 %v6878, 1.0
    %v6887 = vadd.f32 %v6879, 1.0
    %v6888 = vadd.f32 %v6880, 1.0
    %v6889 = vadd.f32 %v6881, 1.0
    %v6890 = vrcp.pop %v6882
    %v6891 = vmul.f32 1.0, %v6890
    %v6892 = vrcp.pop %v6883
    %v6893 = vmul.f32 1.0, %v6892
    %v6894 = vrcp.pop %v6884
    %v6895 = vmul.f32 1.0, %v6894
    %v6896 = vrcp.pop %v6885
    %v6897 = vmul.f32 1.0, %v6896
    %v6898 = vrcp.pop %v6886
    %v6899 = vmul.f32 1.0, %v6898
    %v6900 = vrcp.pop %v6887
    %v6901 = vmul.f32 1.0, %v6900
    %v6902 = vrcp.pop %v6888
    %v6903 = vmul.f32 1.0, %v6902
    %v6904 = vrcp.pop %v6889
    %v6905 = vmul.f32 1.0, %v6904
    %v6906 = vmul.f32 %v6891, 1.0614054
    %v6907 = vmul.f32 %v6893, 1.0614054
    %v6908 = vmul.f32 %v6895, 1.0614054
    %v6909 = vmul.f32 %v6897, 1.0614054
    %v6910 = vmul.f32 %v6899, 1.0614054
    %v6911 = vmul.f32 %v6901, 1.0614054
    %v6912 = vmul.f32 %v6903, 1.0614054
    %v6913 = vmul.f32 %v6905, 1.0614054
    %v6914 = vadd.f32 %v6906, -1.4531521
    %v6915 = vadd.f32 %v6907, -1.4531521
    %v6916 = vadd.f32 %v6908, -1.4531521
    %v6917 = vadd.f32 %v6909, -1.4531521
    %v6918 = vadd.f32 %v6910, -1.4531521
    %v6919 = vadd.f32 %v6911, -1.4531521
    %v6920 = vadd.f32 %v6912, -1.4531521
    %v6921 = vadd.f32 %v6913, -1.4531521
    %v6922 = vmul.f32 %v6914, %v6891
    %v6923 = vmul.f32 %v6915, %v6893
    %v6924 = vmul.f32 %v6916, %v6895
    %v6925 = vmul.f32 %v6917, %v6897
    %v6926 = vmul.f32 %v6918, %v6899
    %v6927 = vmul.f32 %v6919, %v6901
    %v6928 = vmul.f32 %v6920, %v6903
    %v6929 = vmul.f32 %v6921, %v6905
    %v6930 = vadd.f32 %v6922, 1.4214138
    %v6931 = vadd.f32 %v6923, 1.4214138
    %v6932 = vadd.f32 %v6924, 1.4214138
    %v6933 = vadd.f32 %v6925, 1.4214138
    %v6934 = vadd.f32 %v6926, 1.4214138
    %v6935 = vadd.f32 %v6927, 1.4214138
    %v6936 = vadd.f32 %v6928, 1.4214138
    %v6937 = vadd.f32 %v6929, 1.4214138
    %v6938 = vmul.f32 %v6930, %v6891
    %v6939 = vmul.f32 %v6931, %v6893
    %v6940 = vmul.f32 %v6932, %v6895
    %v6941 = vmul.f32 %v6933, %v6897
    %v6942 = vmul.f32 %v6934, %v6899
    %v6943 = vmul.f32 %v6935, %v6901
    %v6944 = vmul.f32 %v6936, %v6903
    %v6945 = vmul.f32 %v6937, %v6905
    %v6946 = vadd.f32 %v6938, -0.28449672
    %v6947 = vadd.f32 %v6939, -0.28449672
    %v6948 = vadd.f32 %v6940, -0.28449672
    %v6949 = vadd.f32 %v6941, -0.28449672
    %v6950 = vadd.f32 %v6942, -0.28449672
    %v6951 = vadd.f32 %v6943, -0.28449672
    %v6952 = vadd.f32 %v6944, -0.28449672
    %v6953 = vadd.f32 %v6945, -0.28449672
    %v6954 = vmul.f32 %v6946, %v6891
    %v6955 = vmul.f32 %v6947, %v6893
    %v6956 = vmul.f32 %v6948, %v6895
    %v6957 = vmul.f32 %v6949, %v6897
    %v6958 = vmul.f32 %v6950, %v6899
    %v6959 = vmul.f32 %v6951, %v6901
    %v6960 = vmul.f32 %v6952, %v6903
    %v6961 = vmul.f32 %v6953, %v6905
    %v6962 = vadd.f32 %v6954, 0.2548296
    %v6963 = vadd.f32 %v6955, 0.2548296
    %v6964 = vadd.f32 %v6956, 0.2548296
    %v6965 = vadd.f32 %v6957, 0.2548296
    %v6966 = vadd.f32 %v6958, 0.2548296
    %v6967 = vadd.f32 %v6959, 0.2548296
    %v6968 = vadd.f32 %v6960, 0.2548296
    %v6969 = vadd.f32 %v6961, 0.2548296
    %v6970 = vmul.f32 %v6962, %v6891
    %v6971 = vmul.f32 %v6963, %v6893
    %v6972 = vmul.f32 %v6964, %v6895
    %v6973 = vmul.f32 %v6965, %v6897
    %v6974 = vmul.f32 %v6966, %v6899
    %v6975 = vmul.f32 %v6967, %v6901
    %v6976 = vmul.f32 %v6968, %v6903
    %v6977 = vmul.f32 %v6969, %v6905
    %v6978 = vsub.f32 0.0, %v6866
    %v6979 = vsub.f32 0.0, %v6867
    %v6980 = vsub.f32 0.0, %v6868
    %v6981 = vsub.f32 0.0, %v6869
    %v6982 = vsub.f32 0.0, %v6870
    %v6983 = vsub.f32 0.0, %v6871
    %v6984 = vsub.f32 0.0, %v6872
    %v6985 = vsub.f32 0.0, %v6873
    %v6986 = vmul.f32 %v6978, %v6866
    %v6987 = vmul.f32 %v6979, %v6867
    %v6988 = vmul.f32 %v6980, %v6868
    %v6989 = vmul.f32 %v6981, %v6869
    %v6990 = vmul.f32 %v6982, %v6870
    %v6991 = vmul.f32 %v6983, %v6871
    %v6992 = vmul.f32 %v6984, %v6872
    %v6993 = vmul.f32 %v6985, %v6873
    %v6994 = vmul.f32 %v6986, 1.442695
    %v6995 = vpow.pop %v6994
    %v6996 = vmul.f32 %v6987, 1.442695
    %v6997 = vpow.pop %v6996
    %v6998 = vmul.f32 %v6988, 1.442695
    %v6999 = vpow.pop %v6998
    %v7000 = vmul.f32 %v6989, 1.442695
    %v7001 = vpow.pop %v7000
    %v7002 = vmul.f32 %v6990, 1.442695
    %v7003 = vpow.pop %v7002
    %v7004 = vmul.f32 %v6991, 1.442695
    %v7005 = vpow.pop %v7004
    %v7006 = vmul.f32 %v6992, 1.442695
    %v7007 = vpow.pop %v7006
    %v7008 = vmul.f32 %v6993, 1.442695
    %v7009 = vpow.pop %v7008
    %v7010 = vmul.f32 %v6970, %v6995
    %v7011 = vmul.f32 %v6971, %v6997
    %v7012 = vmul.f32 %v6972, %v6999
    %v7013 = vmul.f32 %v6973, %v7001
    %v7014 = vmul.f32 %v6974, %v7003
    %v7015 = vmul.f32 %v6975, %v7005
    %v7016 = vmul.f32 %v6976, %v7007
    %v7017 = vmul.f32 %v6977, %v7009
    %v7018 = vsub.f32 1.0, %v7010
    %v7019 = vsub.f32 1.0, %v7011
    %v7020 = vsub.f32 1.0, %v7012
    %v7021 = vsub.f32 1.0, %v7013
    %v7022 = vsub.f32 1.0, %v7014
    %v7023 = vsub.f32 1.0, %v7015
    %v7024 = vsub.f32 1.0, %v7016
    %v7025 = vsub.f32 1.0, %v7017
    %v7026 = vmul.f32 %v6858, %v7018
    %v7027 = vmul.f32 %v6859, %v7019
    %v7028 = vmul.f32 %v6860, %v7020
    %v7029 = vmul.f32 %v6861, %v7021
    %v7030 = vmul.f32 %v6862, %v7022
    %v7031 = vmul.f32 %v6863, %v7023
    %v7032 = vmul.f32 %v6864, %v7024
    %v7033 = vmul.f32 %v6865, %v7025
    %v7034 = vadd.f32 %v7026, 1.0
    %v7035 = vadd.f32 %v7027, 1.0
    %v7036 = vadd.f32 %v7028, 1.0
    %v7037 = vadd.f32 %v7029, 1.0
    %v7038 = vadd.f32 %v7030, 1.0
    %v7039 = vadd.f32 %v7031, 1.0
    %v7040 = vadd.f32 %v7032, 1.0
    %v7041 = vadd.f32 %v7033, 1.0
    %v7042 = vmul.f32 %v6834, %v7034
    %v7043 = vmul.f32 %v6835, %v7035
    %v7044 = vmul.f32 %v6836, %v7036
    %v7045 = vmul.f32 %v6837, %v7037
    %v7046 = vmul.f32 %v6838, %v7038
    %v7047 = vmul.f32 %v6839, %v7039
    %v7048 = vmul.f32 %v6840, %v7040
    %v7049 = vmul.f32 %v6841, %v7041
    %s7050 = scalar_lea.vmem [#allocation2], 64
    %7051 = vst [vmem:[%s7050] sm:$0xff] %v7042
    %7052 = vst [vmem:[%s7050 + $0x8] sm:$0xff] %v7043
    %7053 = vst [vmem:[%s7050 + $0x10] sm:$0xff] %v7044
    %7054 = vst [vmem:[%s7050 + $0x18] sm:$0xff] %v7045
    %7055 = vst [vmem:[%s7050 + $0x20] sm:$0xff] %v7046
    %7056 = vst [vmem:[%s7050 + $0x28] sm:$0xff] %v7047
    %7057 = vst [vmem:[%s7050 + $0x30] sm:$0xff] %v7048
    %7058 = vst [vmem:[%s7050 + $0x38] sm:$0xff] %v7049
    // Predicated region
    $region42: #{tpu_custom_call.1} parent=1 // pred_check
      _
    $region43: #{tpu_custom_call.1} parent=1 // pred_check_branch
      %7060 = sbr.rel (0) target = $region45
    $region44: #{tpu_custom_call.1} parent=1 // pred_region
      %s7062 = ssub.s32 2048, 2048
      %7063 = vsyncadd [#allocation3], %s7062
      %s7064 = sshll.u32 [#allocation2], 4
      %s7065 = int_to_ptr.vmem [resolvable:$true] %s7064
      %7070 = dma.vmem_to_hbm [thread:$0]  %s7065, 2048, %s10, [#allocation3], 128, 128, 8
    $region45: #{tpu_custom_call.1} parent=1 // pred_fallthru
      _
    // Predicated region
    $region46: #{tpu_custom_call.1} parent=1 // pred_check
      _
    $region47: #{tpu_custom_call.1} parent=1 // pred_check_branch
      %7072 = sbr.rel (0) target = $region49
    $region48: #{tpu_custom_call.1} parent=1 // pred_region
      %7073 = dma.done [#allocation3], 2048
    $region49: #{tpu_custom_call.1} parent=1 // pred_fallthru
      _
    %7074 = vsyncpa [#allocation3], 1

</llo_original>
